<compile_context>
chip_gen: v7x
topology: tpu7x:2x2x1
jax: 0.10.0
libtpu: 0.0.40
codegen_flags: <defaults>
</compile_context>

<pallas_src>
import math
from functools import partial

import jax
import jax.numpy as jnp
from jax import lax
from jax.experimental import pallas as pl
from jax.experimental.pallas import tpu as pltpu

TIGHT_USE = True              # stand-in for cfg.lam.tight_use
MXU_DTYPE = jnp.bfloat16      # MXU operand dtype; accumulation is always f32
LANE_MULTIPLE = 128           # bucket N to this multiple (lane-dense tiles)


def _round_up(x, m):
    return ((x + m - 1) // m) * m


# ---------------------------- in-kernel helpers ------------------------------

def _c(x):
    """Cast to MXU dtype only if needed (weights are pre-cast in the wrapper)."""
    return x if x.dtype == MXU_DTYPE else x.astype(MXU_DTYPE)


def _mm_t(x, w):
    """x @ w.T with PyTorch nn.Linear weight convention w=[out,in]."""
    return lax.dot_general(_c(x), _c(w), (((1,), (1,)), ((), ())),
                           preferred_element_type=jnp.float32)


def _mm(a, b):
    """a @ b (contract a dim1 with b dim0)."""
    return lax.dot_general(_c(a), _c(b), (((1,), (0,)), ((), ())),
                           preferred_element_type=jnp.float32)


def _layer_norm(x, g, b, eps=1e-5):
    mu = jnp.mean(x, axis=-1, keepdims=True)
    xc = x - mu
    var = jnp.mean(xc * xc, axis=-1, keepdims=True)
    return xc * lax.rsqrt(var + eps) * g + b


# erf via Abramowitz&Stegun 7.1.26 (|err| <= 1.5e-7): exact-GELU semantics
# without relying on a lax.erf lowering inside Mosaic.
_ERF_A = (0.254829592, -0.284496736, 1.421413741, -1.453152027, 1.061405429)
_ERF_P = 0.3275911


def _erf(x):
    sgn = jnp.where(x >= 0.0, 1.0, -1.0)
    ax = jnp.abs(x)
    t = 1.0 / (1.0 + _ERF_P * ax)
    a1, a2, a3, a4, a5 = _ERF_A
    poly = ((((a5 * t + a4) * t + a3) * t + a2) * t + a1) * t
    return sgn * (1.0 - poly * jnp.exp(-ax * ax))


def _gelu_exact(x):
    return 0.5 * x * (1.0 + _erf(x * (1.0 / math.sqrt(2.0))))


# ------------------------ fused EigenEncoding kernel --------------------------

def _eigen_encoding_kernel(
        eve_ref, vmask_ref,
        w_e_ref, w_sin_ref, w_cos_ref, b_eig_ref,
        mha_g_ref, mha_b_ref,
        w_qkv_ref, b_qkv_ref,
        w_out_t_ref, b_out_ref,
        ffn_g_ref, ffn_b_ref,
        w_f1_ref, b_f1_ref,
        w_f2_ref, b_f2_ref,
        pooled_ref,
        o_slab_ref,                       # (N, H) f32 VMEM scratch (head slab)
        *, hidden, nheads):
    H = hidden
    Dh = H // nheads
    half = H // 2

    e_col = eve_ref[0]                      # (N, 1)  eigenvalues
    vmask = vmask_ref[0]                    # (1, N)  1.0 valid / 0.0 padded

    # ---- SineEncoding + eig_w linear (matmul split per feature group so no
    #      in-kernel concat of [e, sin(pe), cos(pe)] is needed).
    k_idx = lax.broadcasted_iota(jnp.int32, (1, half), 1).astype(jnp.float32) * 2.0
    div = jnp.exp(k_idx * (-math.log(10000.0) / H))          # (1, half)
    pe = (e_col * 100.0) * div                               # (N, half)
    eig = (e_col * w_e_ref[...]                              # (N,1)*(1,H)
           + _mm_t(jnp.sin(pe), w_sin_ref[...])
           + _mm_t(jnp.cos(pe), w_cos_ref[...])
           + b_eig_ref[...])                                 # (N, H)

    # ---- MHA block: one fused QKV matmul, per-head softmax, one out-proj.
    x = _layer_norm(eig, mha_g_ref[...], mha_b_ref[...])
    kbias = jnp.where(vmask > 0.5, 0.0, -1e30)               # key padding bias
    scale = 1.0 / math.sqrt(Dh)

    qkv = _mm_t(x, w_qkv_ref[...]) + b_qkv_ref[...]          # (N, 3H) lane-dense
    for h in range(nheads):                                  # static unroll
        q = qkv[:, h * Dh:(h + 1) * Dh]                      # (N, Dh)
        k = qkv[:, H + h * Dh:H + (h + 1) * Dh]
        v = qkv[:, 2 * H + h * Dh:2 * H + (h + 1) * Dh]
        s = _mm_t(q, k) * scale + kbias                      # (N, N)
        m = jnp.max(s, axis=-1, keepdims=True)
        p = jnp.exp(s - m)
        p = p * pl.reciprocal(jnp.sum(p, axis=-1, keepdims=True), approx=True)
        o_slab_ref[:, h * Dh:(h + 1) * Dh] = _mm(p, v)       # (N, Dh) head out
    attn = _mm(o_slab_ref[...], w_out_t_ref[...]) + b_out_ref[...]   # single K=H
    eig = eig + attn

    # ---- FFN block
    y = _layer_norm(eig, ffn_g_ref[...], ffn_b_ref[...])
    y = _mm_t(y, w_f1_ref[...]) + b_f1_ref[...]
    y = _gelu_exact(y)
    y = _mm_t(y, w_f2_ref[...]) + b_f2_ref[...]
    eig = eig + y

    # ---- masked row-sum over valid nodes (feeds the coefficient decoders)
    pooled_ref[0] = lax.dot_general(vmask, eig, (((1,), (0,)), ((), ())),
                                    preferred_element_type=jnp.float32)


def eigen_encoding_pooled(eve_dense, vmask, params, hidden, nheads):
    """Returns sum over valid nodes of the EigenEncoding output, shape [B, H]."""
    B, N = eve_dense.shape
    H = hidden
    half = H // 2

    f32 = lambda a: jnp.asarray(a, jnp.float32)
    bf16 = lambda a: jnp.asarray(a, MXU_DTYPE)
    row = lambda a: jnp.asarray(a, jnp.float32).reshape(1, -1)

    eve3 = f32(eve_dense).reshape(B, N, 1)
    vm3 = f32(vmask).reshape(B, 1, N)

    W_eig, b_eig = params["eig_w"]             # [H, H+1], [H]
    W_eig = f32(W_eig)
    w_e = W_eig[:, 0:1].T                      # (1, H) — used elementwise, keep f32
    w_sin = bf16(W_eig[:, 1:1 + half])         # (H, half)
    w_cos = bf16(W_eig[:, 1 + half:])          # (H, half)
    g_mha, be_mha = params["mha_norm"]
    W_in, b_in = params["in_proj"]             # [3H, H], [3H]
    W_out, b_out = params["out_proj"]          # [H, H], [H]
    g_ffn, be_ffn = params["ffn_norm"]
    W_f1, b_f1 = params["ffn1"]
    W_f2, b_f2 = params["ffn2"]

    def const2(shape):
        return pl.BlockSpec(shape, lambda b: (0, 0))

    in_specs = [
        pl.BlockSpec((1, N, 1), lambda b: (b, 0, 0)),
        pl.BlockSpec((1, 1, N), lambda b: (b, 0, 0)),
        const2((1, H)), const2((H, half)), const2((H, half)), const2((1, H)),
        const2((1, H)), const2((1, H)),
        const2((3 * H, H)), const2((1, 3 * H)),
        const2((H, H)), const2((1, H)),
        const2((1, H)), const2((1, H)),
        const2((H, H)), const2((1, H)),
        const2((H, H)), const2((1, H)),
    ]
    args = (
        eve3, vm3,
        w_e, w_sin, w_cos, row(b_eig),
        row(g_mha), row(be_mha),
        bf16(W_in), row(b_in),
        bf16(jnp.asarray(W_out, jnp.float32).T),    # [in, out] pre-transposed + bf16
        row(b_out),
        row(g_ffn), row(be_ffn),
        bf16(W_f1), row(b_f1),
        bf16(W_f2), row(b_f2),
    )
    # TODO(synk): when N<=128, stack several graphs along the M axis per grid
    # step (attention per-graph via the key mask) to amortize step overhead.
    pooled = pl.pallas_call(
        partial(_eigen_encoding_kernel, hidden=hidden, nheads=nheads),
        out_shape=jax.ShapeDtypeStruct((B, 1, H), jnp.float32),
        grid=(B,),
        in_specs=in_specs,
        out_specs=pl.BlockSpec((1, 1, H), lambda b: (b, 0, 0)),
        scratch_shapes=[pltpu.VMEM((N, H), jnp.float32)],
        compiler_params=pltpu.CompilerParams(dimension_semantics=("parallel",)),
    )(*args)
    return pooled.reshape(B, H)


# ----------------- fused Chebyshev + spectral-filter kernel -------------------

def _spectral_kernel(coe_scal_ref, coe_wav_ref, coe_scale_ref,
                     eve_ref, evc_ref, o_ref, f_ref,
                     *, n_coe, n_scales, tight_use):
    b = pl.program_id(0)
    s = pl.program_id(1)
    S1 = n_scales + 1

    # ---- Chebyshev filter signals, computed once per batch into VMEM scratch.
    @pl.when(s == 0)
    def _():
        e = eve_ref[0]                                   # (1, N), N on lanes
        row_id = lax.broadcasted_iota(jnp.int32, (S1, 1), 0)
        is_scaling = row_id == 0                         # row 0 = scaling branch

        # Build y per row without concat: row 0 -> e, row k -> e * coe_scales[k-1].
        mult = jnp.where(is_scaling, 1.0, 0.0)
        for k in range(n_scales):
            mult = mult + jnp.where(row_id == k + 1,
                                    coe_scale_ref[b * n_scales + k], 0.0)
        yw = e * mult                                    # (S1, N)
        yw = jnp.where((row_id > 0) & (yw > 2.0), 0.0, yw)   # wavelet >2 -> 0
        y = yw - 1.0

        # Chebyshev recursion: scaling uses T1,T3,... ; wavelet uses T0,T2,...
        t_even = jnp.ones_like(y)                        # T0
        t_odd = y                                        # T1
        acc = jnp.zeros_like(y)
        for c in range(n_coe):
            if c > 0:
                t_even = 2.0 * y * t_odd - t_even        # T_{2c}
                t_odd = 2.0 * y * t_even - t_odd         # T_{2c+1}
            base = jnp.where(is_scaling, t_odd, t_even)
            w = jnp.where(is_scaling, coe_scal_ref[b * n_coe + c],
                          coe_wav_ref[b * n_coe + c])
            acc = acc + w * (0.5 * (1.0 - base))

        if tight_use:
            ss0 = jnp.sum(acc * acc, axis=0, keepdims=True)      # per-node, S1 rows
            acc = acc * lax.rsqrt(jnp.maximum(ss0, 1e-16))       # EUP rsqrt
        f_ref[...] = acc

    # ---- evc @ diag(f_s) @ evc^T  +  F.normalize(dim=1) (per-column norm).
    evc = evc_ref[0]                                     # (N, N) bf16, resident over s
    f_row = f_ref[pl.ds(s, 1), :].astype(MXU_DTYPE)      # (1, N)
    scaled = evc * f_row                                 # evc @ diag(f_s), bf16
    filt = lax.dot_general(scaled, evc, (((1,), (1,)), ((), ())),
                           preferred_element_type=jnp.float32)
    ss = jnp.sum(filt * filt, axis=0, keepdims=True)
    o_ref[0, 0] = (filt * lax.rsqrt(jnp.maximum(ss, 1e-24))).astype(o_ref.dtype)


def spectral_filters_pallas(evc, eve_dense, coe_scaling, coe_wavelet, coe_scales,
                            n_coe, n_scales, tight_use, out_dtype=jnp.float32):
    """evc:[B,N,N], eve:[B,N] -> column-normalised filters [B, S+1, N, N]."""
    B, N, _ = evc.shape
    S1 = n_scales + 1

    evc_bf16 = jnp.asarray(evc, MXU_DTYPE)                 # cast ONCE in wrapper
    eve3 = jnp.asarray(eve_dense, jnp.float32).reshape(B, 1, N)
    flat = lambda a: jnp.asarray(a, jnp.float32).reshape(-1)   # 1D SMEM layout

    # vmem budget: bf16 evc + out, both double-buffered, + scratch/headroom.
    itemsize_out = jnp.dtype(out_dtype).itemsize
    need = N * N * (2 * 2 + 2 * itemsize_out) + (4 << 20)
    vmem_limit = int(min(max(need, 32 << 20), 64 << 20))

    # TODO(synk): for very large N (v7x 64 MiB VMEM), add a row-tile grid axis
    # over N//TM with evc LHS blocked (TM,N) and the full bf16 evc RHS resident.
    return pl.pallas_call(
        partial(_spectral_kernel, n_coe=n_coe, n_scales=n_scales,
                tight_use=tight_use),
        out_shape=jax.ShapeDtypeStruct((B, S1, N, N), out_dtype),
        grid=(B, S1),
        in_specs=[
            pl.BlockSpec(memory_space=pltpu.MemorySpace.SMEM),   # coe_scaling (B*n_coe,)
            pl.BlockSpec(memory_space=pltpu.MemorySpace.SMEM),   # coe_wavelet (B*n_coe,)
            pl.BlockSpec(memory_space=pltpu.MemorySpace.SMEM),   # coe_scales  (B*n_scales,)
            pl.BlockSpec((1, 1, N), lambda b, s: (b, 0, 0)),     # eve, resident over s
            pl.BlockSpec((1, N, N), lambda b, s: (b, 0, 0)),     # evc bf16, resident over s
        ],
        out_specs=pl.BlockSpec((1, 1, N, N), lambda b, s: (b, s, 0, 0)),
        scratch_shapes=[pltpu.VMEM((S1, N), jnp.float32)],       # filter signals f
        compiler_params=pltpu.CompilerParams(
            dimension_semantics=("parallel", "arbitrary"),
            vmem_limit_bytes=vmem_limit),
    )(flat(coe_scaling), flat(coe_wavelet), flat(coe_scales), eve3, evc_bf16)


# --------------------------------- forward ------------------------------------

def wave_generator_forward(params, eigenvector, eigenvalue, lengths, *,
                           hidden, nheads, n_coe, n_scales, thre, tight_use,
                           lane_multiple=LANE_MULTIPLE, out_dtype=jnp.float32):
    max_node = eigenvector.shape[-1]
    B = eigenvector.shape[0] // max_node
    # Bucket N up from the STATIC max_node (no host sync / per-batch recompile;
    # zero padding is inert thanks to the masks below).
    N = _round_up(max_node, lane_multiple)

    evc_dense = jnp.asarray(eigenvector, jnp.float32).reshape(B, max_node, max_node)
    eve_dense = jnp.asarray(eigenvalue, jnp.float32).reshape(B, max_node)
    if N > max_node:
        pad = N - max_node
        evc_dense = jnp.pad(evc_dense, ((0, 0), (0, pad), (0, pad)))
        eve_dense = jnp.pad(eve_dense, ((0, 0), (0, pad)))

    valid = jnp.arange(N)[None, :] < lengths[:, None]            # [B, N]
    vmask = valid.astype(jnp.float32)
    edge_idx = valid[:, :, None] & valid[:, None, :]              # [B, N, N]

    # Fused EigenEncoding -> masked row-sum of eig_filter.
    pooled = eigen_encoding_pooled(eve_dense, vmask, params, hidden, nheads)

    lengths_f = lengths.astype(jnp.float32)[:, None]

    def decode(Wb):
        # == Linear(eig_filter); c[pad]=0; c.sum(1)/(len+1e-8)  (affine identity)
        W, bb = Wb
        return (pooled @ W.T + lengths_f * bb[None, :]) / (lengths_f + 1e-8)

    coe_scaling = jax.nn.sigmoid(decode(params["dec_scaling"]))
    coe_scaling = coe_scaling / (coe_scaling.sum(-1, keepdims=True) + 1e-8)
    coe_wavelet = jax.nn.sigmoid(decode(params["dec_wavelet"]))
    coe_wavelet = coe_wavelet / (coe_wavelet.sum(-1, keepdims=True) + 1e-8)
    coe_scales_raw = decode(params["dec_scales"])               # batch.coe_scales
    coe_scales = jax.nn.sigmoid(coe_scales_raw) * thre

    # Chebyshev filter signals + evc @ diag(f_s) @ evc^T + F.normalize(dim=1),
    # fused into one kernel; adj_dropout = identity (eval).
    filters = spectral_filters_pallas(evc_dense, eve_dense, coe_scaling,
                                      coe_wavelet, coe_scales,
                                      n_coe, n_scales, tight_use, out_dtype)

    return {"coe_scales": coe_scales_raw, "filters": filters, "edge_idx": edge_idx}


def init_params(key, hidden, n_coe, n_scales):
    ks = jax.random.split(key, 8)

    def lin(k, out_dim, in_dim):
        kw, kb = jax.random.split(k)
        lim = 1.0 / math.sqrt(in_dim)
        W = jax.random.uniform(kw, (out_dim, in_dim), jnp.float32, -lim, lim)
        b = jax.random.uniform(kb, (out_dim,), jnp.float32, -lim, lim)
        return W, b

    ones = jnp.ones((hidden,), jnp.float32)
    zeros = jnp.zeros((hidden,), jnp.float32)
    return {
        "eig_w": lin(ks[0], hidden, hidden + 1),
        "mha_norm": (ones, zeros),
        "ffn_norm": (ones, zeros),
        "in_proj": lin(ks[1], 3 * hidden, hidden),
        "out_proj": lin(ks[2], hidden, hidden),
        "ffn1": lin(ks[3], hidden, hidden),
        "ffn2": lin(ks[4], hidden, hidden),
        "dec_scaling": lin(ks[5], n_coe, hidden),
        "dec_wavelet": lin(ks[6], n_coe, hidden),
        "dec_scales": lin(ks[7], n_scales, hidden),
    }


if __name__ == "__main__":
    key = jax.random.PRNGKey(0)
    B, max_node = 2, 16
    hidden, nheads = 32, 4
    n_coe, n_scales, thre = 8, 4, 5.0

    kp, kv_, ke = jax.random.split(key, 3)
    params = init_params(kp, hidden, n_coe, n_scales)
    eigenvector = jax.random.normal(kv_, (B * max_node, max_node), jnp.float32)
    eigenvalue = jax.random.uniform(ke, (B * max_node,), jnp.float32,
                                    minval=0.0, maxval=2.0)
    lengths = jnp.array([16, 12], dtype=jnp.int32)

    out = wave_generator_forward(params, eigenvector, eigenvalue, lengths,
                                 hidden=hidden, nheads=nheads, n_coe=n_coe,
                                 n_scales=n_scales, thre=thre,
                                 tight_use=TIGHT_USE)
    filters = jax.block_until_ready(out["filters"])              # [B,S+1,Np,Np]
    coe_scales = jax.block_until_ready(out["coe_scales"])        # [B,n_scales]
    edge_idx = out["edge_idx"]

    # batch.bases: per-scale gather of valid (i,j) entries (dynamic shape ->
    # done eagerly outside the kernels, like the reference's filters[edge_idx]).
    bases = [filters[:, i][edge_idx] for i in range(n_scales + 1)]
    jax.block_until_ready(bases)

    Npad = _round_up(max_node, LANE_MULTIPLE)
    n_valid = int(jnp.sum(lengths * lengths))
    assert filters.shape == (B, n_scales + 1, Npad, Npad)
    assert coe_scales.shape == (B, n_scales)
    assert all(b.shape == (n_valid,) for b in bases)
    assert all(bool(jnp.all(jnp.isfinite(b))) for b in bases)
    assert bool(jnp.all(jnp.isfinite(filters)))
    print("KERNEL_OK")
</pallas_src>

<mosaic_0001>
module attributes {stable_mosaic.version = 11 : i64} {
  func.func @_eigen_encoding_kernel(%arg0: i32, %arg1: memref<1x128x1xf32, #tpu.memory_space<vmem>>, %arg2: memref<1x1x128xf32, #tpu.memory_space<vmem>>, %arg3: memref<1x32xf32, #tpu.memory_space<vmem>>, %arg4: memref<32x16xbf16, #tpu.memory_space<vmem>>, %arg5: memref<32x16xbf16, #tpu.memory_space<vmem>>, %arg6: memref<1x32xf32, #tpu.memory_space<vmem>>, %arg7: memref<1x32xf32, #tpu.memory_space<vmem>>, %arg8: memref<1x32xf32, #tpu.memory_space<vmem>>, %arg9: memref<96x32xbf16, #tpu.memory_space<vmem>>, %arg10: memref<1x96xf32, #tpu.memory_space<vmem>>, %arg11: memref<32x32xbf16, #tpu.memory_space<vmem>>, %arg12: memref<1x32xf32, #tpu.memory_space<vmem>>, %arg13: memref<1x32xf32, #tpu.memory_space<vmem>>, %arg14: memref<1x32xf32, #tpu.memory_space<vmem>>, %arg15: memref<32x32xbf16, #tpu.memory_space<vmem>>, %arg16: memref<1x32xf32, #tpu.memory_space<vmem>>, %arg17: memref<32x32xbf16, #tpu.memory_space<vmem>>, %arg18: memref<1x32xf32, #tpu.memory_space<vmem>>, %arg19: memref<1x1x32xf32, #tpu.memory_space<vmem>>, %arg20: memref<128x32xf32, #tpu.memory_space<vmem>>) attributes {dimension_semantics = [#tpu.dimension_semantics<parallel>], iteration_bounds = array<i64: 2>, scalar_prefetch = 0 : i64, scratch_operands = 1 : i64, tpu.core_type = #tpu.core_type<tc>, window_params = [{transform_indices = @transform_0, window_bounds = array<i64: 1, 128, 1>}, {transform_indices = @transform_1, window_bounds = array<i64: 1, 1, 128>}, {pipeline_mode = #tpu.pipeline_mode<synchronous>, transform_indices = @transform_2, window_bounds = array<i64: 1, 32>}, {pipeline_mode = #tpu.pipeline_mode<synchronous>, transform_indices = @transform_3, window_bounds = array<i64: 32, 16>}, {pipeline_mode = #tpu.pipeline_mode<synchronous>, transform_indices = @transform_4, window_bounds = array<i64: 32, 16>}, {pipeline_mode = #tpu.pipeline_mode<synchronous>, transform_indices = @transform_5, window_bounds = array<i64: 1, 32>}, {pipeline_mode = #tpu.pipeline_mode<synchronous>, transform_indices = @transform_6, window_bounds = array<i64: 1, 32>}, {pipeline_mode = #tpu.pipeline_mode<synchronous>, transform_indices = @transform_7, window_bounds = array<i64: 1, 32>}, {pipeline_mode = #tpu.pipeline_mode<synchronous>, transform_indices = @transform_8, window_bounds = array<i64: 96, 32>}, {pipeline_mode = #tpu.pipeline_mode<synchronous>, transform_indices = @transform_9, window_bounds = array<i64: 1, 96>}, {pipeline_mode = #tpu.pipeline_mode<synchronous>, transform_indices = @transform_10, window_bounds = array<i64: 32, 32>}, {pipeline_mode = #tpu.pipeline_mode<synchronous>, transform_indices = @transform_11, window_bounds = array<i64: 1, 32>}, {pipeline_mode = #tpu.pipeline_mode<synchronous>, transform_indices = @transform_12, window_bounds = array<i64: 1, 32>}, {pipeline_mode = #tpu.pipeline_mode<synchronous>, transform_indices = @transform_13, window_bounds = array<i64: 1, 32>}, {pipeline_mode = #tpu.pipeline_mode<synchronous>, transform_indices = @transform_14, window_bounds = array<i64: 32, 32>}, {pipeline_mode = #tpu.pipeline_mode<synchronous>, transform_indices = @transform_15, window_bounds = array<i64: 1, 32>}, {pipeline_mode = #tpu.pipeline_mode<synchronous>, transform_indices = @transform_16, window_bounds = array<i64: 32, 32>}, {pipeline_mode = #tpu.pipeline_mode<synchronous>, transform_indices = @transform_17, window_bounds = array<i64: 1, 32>}, {transform_indices = @transform_18, window_bounds = array<i64: 1, 1, 32>}]} {
    %c0 = arith.constant 0 : index
    %c0_0 = arith.constant 0 : index
    %c0_1 = arith.constant 0 : index
    %0 = vector.load %arg1[%c0, %c0_0, %c0_1] : memref<1x128x1xf32, #tpu.memory_space<vmem>>, vector<1x128x1xf32>
    %1 = vector.shape_cast %0 : vector<1x128x1xf32> to vector<128x1xf32>
    %c0_2 = arith.constant 0 : index
    %c0_3 = arith.constant 0 : index
    %c0_4 = arith.constant 0 : index
    %2 = vector.load %arg2[%c0_2, %c0_3, %c0_4] : memref<1x1x128xf32, #tpu.memory_space<vmem>>, vector<1x1x128xf32>
    %3 = vector.shape_cast %2 : vector<1x1x128xf32> to vector<1x128xf32>
    %4 = tpu.iota {dimensions = array<i32: 1>} : vector<1x16xi32>
    %5 = arith.sitofp %4 : vector<1x16xi32> to vector<1x16xf32>
    %cst = arith.constant 2.000000e+00 : f32
    %6 = vector.broadcast %cst : f32 to vector<1x16xf32>
    %7 = arith.mulf %5, %6 : vector<1x16xf32>
    %cst_5 = arith.constant -0.287823141 : f32
    %8 = vector.broadcast %cst_5 : f32 to vector<1x16xf32>
    %9 = arith.mulf %7, %8 : vector<1x16xf32>
    %10 = math.exp %9 : vector<1x16xf32>
    %cst_6 = arith.constant 1.000000e+02 : f32
    %11 = vector.broadcast %cst_6 : f32 to vector<128x1xf32>
    %12 = arith.mulf %1, %11 : vector<128x1xf32>
    %13 = vector.broadcast %12 : vector<128x1xf32> to vector<128x16xf32>
    %14 = vector.broadcast %10 : vector<1x16xf32> to vector<128x16xf32>
    %15 = arith.mulf %13, %14 : vector<128x16xf32>
    %c0_7 = arith.constant 0 : index
    %c0_8 = arith.constant 0 : index
    %16 = vector.load %arg3[%c0_7, %c0_8] : memref<1x32xf32, #tpu.memory_space<vmem>>, vector<1x32xf32>
    %17 = vector.broadcast %1 : vector<128x1xf32> to vector<128x32xf32>
    %18 = vector.broadcast %16 : vector<1x32xf32> to vector<128x32xf32>
    %19 = arith.mulf %17, %18 : vector<128x32xf32>
    %20 = math.sin %15 : vector<128x16xf32>
    %c0_9 = arith.constant 0 : index
    %c0_10 = arith.constant 0 : index
    %21 = vector.load %arg4[%c0_9, %c0_10] : memref<32x16xbf16, #tpu.memory_space<vmem>>, vector<32x16xbf16>
    %22 = arith.truncf %20 : vector<128x16xf32> to vector<128x16xbf16>
    %cst_11 = arith.constant dense<0.000000e+00> : vector<128x32xf32>
    %23 = tpu.matmul %22, %21, %cst_11 {dimension_numbers = #tpu.dot_dimension_numbers<[1], [1], [0], [0], [0, 0, 1, 0], [], []>} : vector<128x16xbf16>, vector<32x16xbf16>, vector<128x32xf32> -> vector<128x32xf32>
    %24 = arith.addf %19, %23 : vector<128x32xf32>
    %25 = math.cos %15 : vector<128x16xf32>
    %c0_12 = arith.constant 0 : index
    %c0_13 = arith.constant 0 : index
    %26 = vector.load %arg5[%c0_12, %c0_13] : memref<32x16xbf16, #tpu.memory_space<vmem>>, vector<32x16xbf16>
    %27 = arith.truncf %25 : vector<128x16xf32> to vector<128x16xbf16>
    %cst_14 = arith.constant dense<0.000000e+00> : vector<128x32xf32>
    %28 = tpu.matmul %27, %26, %cst_14 {dimension_numbers = #tpu.dot_dimension_numbers<[1], [1], [0], [0], [0, 0, 1, 0], [], []>} : vector<128x16xbf16>, vector<32x16xbf16>, vector<128x32xf32> -> vector<128x32xf32>
    %29 = arith.addf %24, %28 : vector<128x32xf32>
    %c0_15 = arith.constant 0 : index
    %c0_16 = arith.constant 0 : index
    %30 = vector.load %arg6[%c0_15, %c0_16] : memref<1x32xf32, #tpu.memory_space<vmem>>, vector<1x32xf32>
    %31 = vector.broadcast %30 : vector<1x32xf32> to vector<128x32xf32>
    %32 = arith.addf %29, %31 : vector<128x32xf32>
    %c0_17 = arith.constant 0 : index
    %c0_18 = arith.constant 0 : index
    %33 = vector.load %arg7[%c0_17, %c0_18] : memref<1x32xf32, #tpu.memory_space<vmem>>, vector<1x32xf32>
    %c0_19 = arith.constant 0 : index
    %c0_20 = arith.constant 0 : index
    %34 = vector.load %arg8[%c0_19, %c0_20] : memref<1x32xf32, #tpu.memory_space<vmem>>, vector<1x32xf32>
    %cst_21 = arith.constant dense<0.000000e+00> : vector<128xf32>
    %35 = vector.multi_reduction <add>, %32, %cst_21 [1] : vector<128x32xf32> to vector<128xf32>
    %36 = vector.shape_cast %35 : vector<128xf32> to vector<128x1xf32>
    %cst_22 = arith.constant 3.200000e+01 : f32
    %37 = vector.broadcast %cst_22 : f32 to vector<128x1xf32>
    %38 = arith.divf %36, %37 : vector<128x1xf32>
    %39 = vector.broadcast %38 : vector<128x1xf32> to vector<128x32xf32>
    %40 = arith.subf %32, %39 : vector<128x32xf32>
    %41 = arith.mulf %40, %40 : vector<128x32xf32>
    %cst_23 = arith.constant dense<0.000000e+00> : vector<128xf32>
    %42 = vector.multi_reduction <add>, %41, %cst_23 [1] : vector<128x32xf32> to vector<128xf32>
    %43 = vector.shape_cast %42 : vector<128xf32> to vector<128x1xf32>
    %cst_24 = arith.constant 3.200000e+01 : f32
    %44 = vector.broadcast %cst_24 : f32 to vector<128x1xf32>
    %45 = arith.divf %43, %44 : vector<128x1xf32>
    %cst_25 = arith.constant 9.99999974E-6 : f32
    %46 = vector.broadcast %cst_25 : f32 to vector<128x1xf32>
    %47 = arith.addf %45, %46 : vector<128x1xf32>
    %48 = math.rsqrt %47 : vector<128x1xf32>
    %49 = vector.broadcast %48 : vector<128x1xf32> to vector<128x32xf32>
    %50 = arith.mulf %40, %49 : vector<128x32xf32>
    %51 = vector.broadcast %33 : vector<1x32xf32> to vector<128x32xf32>
    %52 = arith.mulf %50, %51 : vector<128x32xf32>
    %53 = vector.broadcast %34 : vector<1x32xf32> to vector<128x32xf32>
    %54 = arith.addf %52, %53 : vector<128x32xf32>
    %cst_26 = arith.constant 5.000000e-01 : f32
    %55 = vector.broadcast %cst_26 : f32 to vector<1x128xf32>
    %56 = arith.cmpf ogt, %3, %55 : vector<1x128xf32>
    %cst_27 = arith.constant 0.000000e+00 : f32
    %cst_28 = arith.constant -1.000000e+30 : f32
    %57 = vector.broadcast %cst_27 : f32 to vector<1x128xf32>
    %58 = vector.broadcast %cst_28 : f32 to vector<1x128xf32>
    %59 = arith.select %56, %57, %58 : vector<1x128xi1>, vector<1x128xf32>
    %c0_29 = arith.constant 0 : index
    %c0_30 = arith.constant 0 : index
    %60 = vector.load %arg9[%c0_29, %c0_30] : memref<96x32xbf16, #tpu.memory_space<vmem>>, vector<96x32xbf16>
    %61 = arith.truncf %54 : vector<128x32xf32> to vector<128x32xbf16>
    %cst_31 = arith.constant dense<0.000000e+00> : vector<128x96xf32>
    %62 = tpu.matmul %61, %60, %cst_31 {dimension_numbers = #tpu.dot_dimension_numbers<[1], [1], [0], [0], [0, 0, 1, 0], [], []>} : vector<128x32xbf16>, vector<96x32xbf16>, vector<128x96xf32> -> vector<128x96xf32>
    %c0_32 = arith.constant 0 : index
    %c0_33 = arith.constant 0 : index
    %63 = vector.load %arg10[%c0_32, %c0_33] : memref<1x96xf32, #tpu.memory_space<vmem>>, vector<1x96xf32>
    %64 = vector.broadcast %63 : vector<1x96xf32> to vector<128x96xf32>
    %65 = arith.addf %62, %64 : vector<128x96xf32>
    %66 = vector.extract_strided_slice %65 {offsets = [0, 0], sizes = [128, 8], strides = [1, 1]} : vector<128x96xf32> to vector<128x8xf32>
    %67 = vector.extract_strided_slice %65 {offsets = [0, 32], sizes = [128, 8], strides = [1, 1]} : vector<128x96xf32> to vector<128x8xf32>
    %68 = vector.extract_strided_slice %65 {offsets = [0, 64], sizes = [128, 8], strides = [1, 1]} : vector<128x96xf32> to vector<128x8xf32>
    %69 = arith.truncf %66 : vector<128x8xf32> to vector<128x8xbf16>
    %70 = arith.truncf %67 : vector<128x8xf32> to vector<128x8xbf16>
    %cst_34 = arith.constant dense<0.000000e+00> : vector<128x128xf32>
    %71 = tpu.matmul %69, %70, %cst_34 {dimension_numbers = #tpu.dot_dimension_numbers<[1], [1], [0], [0], [0, 0, 1, 0], [], []>} : vector<128x8xbf16>, vector<128x8xbf16>, vector<128x128xf32> -> vector<128x128xf32>
    %cst_35 = arith.constant 0.353553385 : f32
    %72 = vector.broadcast %cst_35 : f32 to vector<128x128xf32>
    %73 = arith.mulf %71, %72 : vector<128x128xf32>
    %74 = vector.broadcast %59 : vector<1x128xf32> to vector<128x128xf32>
    %75 = arith.addf %73, %74 : vector<128x128xf32>
    %cst_36 = arith.constant dense<0xFF800000> : vector<128xf32>
    %76 = vector.multi_reduction <maximumf>, %75, %cst_36 [1] : vector<128x128xf32> to vector<128xf32>
    %77 = vector.shape_cast %76 : vector<128xf32> to vector<128x1xf32>
    %78 = vector.broadcast %77 : vector<128x1xf32> to vector<128x128xf32>
    %79 = arith.subf %75, %78 : vector<128x128xf32>
    %80 = math.exp %79 : vector<128x128xf32>
    %cst_37 = arith.constant dense<0.000000e+00> : vector<128xf32>
    %81 = vector.multi_reduction <add>, %80, %cst_37 [1] : vector<128x128xf32> to vector<128xf32>
    %82 = vector.shape_cast %81 : vector<128xf32> to vector<128x1xf32>
    %83 = tpu.reciprocal %82 {approx = true} : vector<128x1xf32> -> vector<128x1xf32>
    %84 = vector.broadcast %83 : vector<128x1xf32> to vector<128x128xf32>
    %85 = arith.mulf %80, %84 : vector<128x128xf32>
    %86 = arith.truncf %85 : vector<128x128xf32> to vector<128x128xbf16>
    %87 = arith.truncf %68 : vector<128x8xf32> to vector<128x8xbf16>
    %cst_38 = arith.constant dense<0.000000e+00> : vector<128x8xf32>
    %88 = tpu.matmul %86, %87, %cst_38 {dimension_numbers = #tpu.dot_dimension_numbers<[1], [0], [0], [1], [0, 0, 1, 1], [], []>} : vector<128x128xbf16>, vector<128x8xbf16>, vector<128x8xf32> -> vector<128x8xf32>
    %c0_39 = arith.constant 0 : index
    %c0_40 = arith.constant 0 : index
    %89 = vector.load %arg20[%c0_39, %c0_40] : memref<128x32xf32, #tpu.memory_space<vmem>>, vector<128x8xf32>
    tpu.vector_store %arg20[%c0_39, %c0_40], %88 {strides = array<i32>} : memref<128x32xf32, #tpu.memory_space<vmem>>, vector<128x8xf32>,
    %90 = vector.extract_strided_slice %65 {offsets = [0, 8], sizes = [128, 8], strides = [1, 1]} : vector<128x96xf32> to vector<128x8xf32>
    %91 = vector.extract_strided_slice %65 {offsets = [0, 40], sizes = [128, 8], strides = [1, 1]} : vector<128x96xf32> to vector<128x8xf32>
    %92 = vector.extract_strided_slice %65 {offsets = [0, 72], sizes = [128, 8], strides = [1, 1]} : vector<128x96xf32> to vector<128x8xf32>
    %93 = arith.truncf %90 : vector<128x8xf32> to vector<128x8xbf16>
    %94 = arith.truncf %91 : vector<128x8xf32> to vector<128x8xbf16>
    %cst_41 = arith.constant dense<0.000000e+00> : vector<128x128xf32>
    %95 = tpu.matmul %93, %94, %cst_41 {dimension_numbers = #tpu.dot_dimension_numbers<[1], [1], [0], [0], [0, 0, 1, 0], [], []>} : vector<128x8xbf16>, vector<128x8xbf16>, vector<128x128xf32> -> vector<128x128xf32>
    %cst_42 = arith.constant 0.353553385 : f32
    %96 = vector.broadcast %cst_42 : f32 to vector<128x128xf32>
    %97 = arith.mulf %95, %96 : vector<128x128xf32>
    %98 = vector.broadcast %59 : vector<1x128xf32> to vector<128x128xf32>
    %99 = arith.addf %97, %98 : vector<128x128xf32>
    %cst_43 = arith.constant dense<0xFF800000> : vector<128xf32>
    %100 = vector.multi_reduction <maximumf>, %99, %cst_43 [1] : vector<128x128xf32> to vector<128xf32>
    %101 = vector.shape_cast %100 : vector<128xf32> to vector<128x1xf32>
    %102 = vector.broadcast %101 : vector<128x1xf32> to vector<128x128xf32>
    %103 = arith.subf %99, %102 : vector<128x128xf32>
    %104 = math.exp %103 : vector<128x128xf32>
    %cst_44 = arith.constant dense<0.000000e+00> : vector<128xf32>
    %105 = vector.multi_reduction <add>, %104, %cst_44 [1] : vector<128x128xf32> to vector<128xf32>
    %106 = vector.shape_cast %105 : vector<128xf32> to vector<128x1xf32>
    %107 = tpu.reciprocal %106 {approx = true} : vector<128x1xf32> -> vector<128x1xf32>
    %108 = vector.broadcast %107 : vector<128x1xf32> to vector<128x128xf32>
    %109 = arith.mulf %104, %108 : vector<128x128xf32>
    %110 = arith.truncf %109 : vector<128x128xf32> to vector<128x128xbf16>
    %111 = arith.truncf %92 : vector<128x8xf32> to vector<128x8xbf16>
    %cst_45 = arith.constant dense<0.000000e+00> : vector<128x8xf32>
    %112 = tpu.matmul %110, %111, %cst_45 {dimension_numbers = #tpu.dot_dimension_numbers<[1], [0], [0], [1], [0, 0, 1, 1], [], []>} : vector<128x128xbf16>, vector<128x8xbf16>, vector<128x8xf32> -> vector<128x8xf32>
    %c0_46 = arith.constant 0 : index
    %c8 = arith.constant 8 : index
    %113 = vector.load %arg20[%c0_46, %c8] : memref<128x32xf32, #tpu.memory_space<vmem>>, vector<128x8xf32>
    tpu.vector_store %arg20[%c0_46, %c8], %112 {strides = array<i32>} : memref<128x32xf32, #tpu.memory_space<vmem>>, vector<128x8xf32>,
    %114 = vector.extract_strided_slice %65 {offsets = [0, 16], sizes = [128, 8], strides = [1, 1]} : vector<128x96xf32> to vector<128x8xf32>
    %115 = vector.extract_strided_slice %65 {offsets = [0, 48], sizes = [128, 8], strides = [1, 1]} : vector<128x96xf32> to vector<128x8xf32>
    %116 = vector.extract_strided_slice %65 {offsets = [0, 80], sizes = [128, 8], strides = [1, 1]} : vector<128x96xf32> to vector<128x8xf32>
    %117 = arith.truncf %114 : vector<128x8xf32> to vector<128x8xbf16>
    %118 = arith.truncf %115 : vector<128x8xf32> to vector<128x8xbf16>
    %cst_47 = arith.constant dense<0.000000e+00> : vector<128x128xf32>
    %119 = tpu.matmul %117, %118, %cst_47 {dimension_numbers = #tpu.dot_dimension_numbers<[1], [1], [0], [0], [0, 0, 1, 0], [], []>} : vector<128x8xbf16>, vector<128x8xbf16>, vector<128x128xf32> -> vector<128x128xf32>
    %cst_48 = arith.constant 0.353553385 : f32
    %120 = vector.broadcast %cst_48 : f32 to vector<128x128xf32>
    %121 = arith.mulf %119, %120 : vector<128x128xf32>
    %122 = vector.broadcast %59 : vector<1x128xf32> to vector<128x128xf32>
    %123 = arith.addf %121, %122 : vector<128x128xf32>
    %cst_49 = arith.constant dense<0xFF800000> : vector<128xf32>
    %124 = vector.multi_reduction <maximumf>, %123, %cst_49 [1] : vector<128x128xf32> to vector<128xf32>
    %125 = vector.shape_cast %124 : vector<128xf32> to vector<128x1xf32>
    %126 = vector.broadcast %125 : vector<128x1xf32> to vector<128x128xf32>
    %127 = arith.subf %123, %126 : vector<128x128xf32>
    %128 = math.exp %127 : vector<128x128xf32>
    %cst_50 = arith.constant dense<0.000000e+00> : vector<128xf32>
    %129 = vector.multi_reduction <add>, %128, %cst_50 [1] : vector<128x128xf32> to vector<128xf32>
    %130 = vector.shape_cast %129 : vector<128xf32> to vector<128x1xf32>
    %131 = tpu.reciprocal %130 {approx = true} : vector<128x1xf32> -> vector<128x1xf32>
    %132 = vector.broadcast %131 : vector<128x1xf32> to vector<128x128xf32>
    %133 = arith.mulf %128, %132 : vector<128x128xf32>
    %134 = arith.truncf %133 : vector<128x128xf32> to vector<128x128xbf16>
    %135 = arith.truncf %116 : vector<128x8xf32> to vector<128x8xbf16>
    %cst_51 = arith.constant dense<0.000000e+00> : vector<128x8xf32>
    %136 = tpu.matmul %134, %135, %cst_51 {dimension_numbers = #tpu.dot_dimension_numbers<[1], [0], [0], [1], [0, 0, 1, 1], [], []>} : vector<128x128xbf16>, vector<128x8xbf16>, vector<128x8xf32> -> vector<128x8xf32>
    %c0_52 = arith.constant 0 : index
    %c16 = arith.constant 16 : index
    %137 = vector.load %arg20[%c0_52, %c16] : memref<128x32xf32, #tpu.memory_space<vmem>>, vector<128x8xf32>
    tpu.vector_store %arg20[%c0_52, %c16], %136 {strides = array<i32>} : memref<128x32xf32, #tpu.memory_space<vmem>>, vector<128x8xf32>,
    %138 = vector.extract_strided_slice %65 {offsets = [0, 24], sizes = [128, 8], strides = [1, 1]} : vector<128x96xf32> to vector<128x8xf32>
    %139 = vector.extract_strided_slice %65 {offsets = [0, 56], sizes = [128, 8], strides = [1, 1]} : vector<128x96xf32> to vector<128x8xf32>
    %140 = vector.extract_strided_slice %65 {offsets = [0, 88], sizes = [128, 8], strides = [1, 1]} : vector<128x96xf32> to vector<128x8xf32>
    %141 = arith.truncf %138 : vector<128x8xf32> to vector<128x8xbf16>
    %142 = arith.truncf %139 : vector<128x8xf32> to vector<128x8xbf16>
    %cst_53 = arith.constant dense<0.000000e+00> : vector<128x128xf32>
    %143 = tpu.matmul %141, %142, %cst_53 {dimension_numbers = #tpu.dot_dimension_numbers<[1], [1], [0], [0], [0, 0, 1, 0], [], []>} : vector<128x8xbf16>, vector<128x8xbf16>, vector<128x128xf32> -> vector<128x128xf32>
    %cst_54 = arith.constant 0.353553385 : f32
    %144 = vector.broadcast %cst_54 : f32 to vector<128x128xf32>
    %145 = arith.mulf %143, %144 : vector<128x128xf32>
    %146 = vector.broadcast %59 : vector<1x128xf32> to vector<128x128xf32>
    %147 = arith.addf %145, %146 : vector<128x128xf32>
    %cst_55 = arith.constant dense<0xFF800000> : vector<128xf32>
    %148 = vector.multi_reduction <maximumf>, %147, %cst_55 [1] : vector<128x128xf32> to vector<128xf32>
    %149 = vector.shape_cast %148 : vector<128xf32> to vector<128x1xf32>
    %150 = vector.broadcast %149 : vector<128x1xf32> to vector<128x128xf32>
    %151 = arith.subf %147, %150 : vector<128x128xf32>
    %152 = math.exp %151 : vector<128x128xf32>
    %cst_56 = arith.constant dense<0.000000e+00> : vector<128xf32>
    %153 = vector.multi_reduction <add>, %152, %cst_56 [1] : vector<128x128xf32> to vector<128xf32>
    %154 = vector.shape_cast %153 : vector<128xf32> to vector<128x1xf32>
    %155 = tpu.reciprocal %154 {approx = true} : vector<128x1xf32> -> vector<128x1xf32>
    %156 = vector.broadcast %155 : vector<128x1xf32> to vector<128x128xf32>
    %157 = arith.mulf %152, %156 : vector<128x128xf32>
    %158 = arith.truncf %157 : vector<128x128xf32> to vector<128x128xbf16>
    %159 = arith.truncf %140 : vector<128x8xf32> to vector<128x8xbf16>
    %cst_57 = arith.constant dense<0.000000e+00> : vector<128x8xf32>
    %160 = tpu.matmul %158, %159, %cst_57 {dimension_numbers = #tpu.dot_dimension_numbers<[1], [0], [0], [1], [0, 0, 1, 1], [], []>} : vector<128x128xbf16>, vector<128x8xbf16>, vector<128x8xf32> -> vector<128x8xf32>
    %c0_58 = arith.constant 0 : index
    %c24 = arith.constant 24 : index
    %161 = vector.load %arg20[%c0_58, %c24] : memref<128x32xf32, #tpu.memory_space<vmem>>, vector<128x8xf32>
    tpu.vector_store %arg20[%c0_58, %c24], %160 {strides = array<i32>} : memref<128x32xf32, #tpu.memory_space<vmem>>, vector<128x8xf32>,
    %c0_59 = arith.constant 0 : index
    %c0_60 = arith.constant 0 : index
    %162 = vector.load %arg20[%c0_59, %c0_60] : memref<128x32xf32, #tpu.memory_space<vmem>>, vector<128x32xf32>
    %c0_61 = arith.constant 0 : index
    %c0_62 = arith.constant 0 : index
    %163 = vector.load %arg11[%c0_61, %c0_62] : memref<32x32xbf16, #tpu.memory_space<vmem>>, vector<32x32xbf16>
    %164 = arith.truncf %162 : vector<128x32xf32> to vector<128x32xbf16>
    %cst_63 = arith.constant dense<0.000000e+00> : vector<128x32xf32>
    %165 = tpu.matmul %164, %163, %cst_63 {dimension_numbers = #tpu.dot_dimension_numbers<[1], [0], [0], [1], [0, 0, 1, 1], [], []>} : vector<128x32xbf16>, vector<32x32xbf16>, vector<128x32xf32> -> vector<128x32xf32>
    %c0_64 = arith.constant 0 : index
    %c0_65 = arith.constant 0 : index
    %166 = vector.load %arg12[%c0_64, %c0_65] : memref<1x32xf32, #tpu.memory_space<vmem>>, vector<1x32xf32>
    %167 = vector.broadcast %166 : vector<1x32xf32> to vector<128x32xf32>
    %168 = arith.addf %165, %167 : vector<128x32xf32>
    %169 = arith.addf %32, %168 : vector<128x32xf32>
    %c0_66 = arith.constant 0 : index
    %c0_67 = arith.constant 0 : index
    %170 = vector.load %arg13[%c0_66, %c0_67] : memref<1x32xf32, #tpu.memory_space<vmem>>, vector<1x32xf32>
    %c0_68 = arith.constant 0 : index
    %c0_69 = arith.constant 0 : index
    %171 = vector.load %arg14[%c0_68, %c0_69] : memref<1x32xf32, #tpu.memory_space<vmem>>, vector<1x32xf32>
    %cst_70 = arith.constant dense<0.000000e+00> : vector<128xf32>
    %172 = vector.multi_reduction <add>, %169, %cst_70 [1] : vector<128x32xf32> to vector<128xf32>
    %173 = vector.shape_cast %172 : vector<128xf32> to vector<128x1xf32>
    %cst_71 = arith.constant 3.200000e+01 : f32
    %174 = vector.broadcast %cst_71 : f32 to vector<128x1xf32>
    %175 = arith.divf %173, %174 : vector<128x1xf32>
    %176 = vector.broadcast %175 : vector<128x1xf32> to vector<128x32xf32>
    %177 = arith.subf %169, %176 : vector<128x32xf32>
    %178 = arith.mulf %177, %177 : vector<128x32xf32>
    %cst_72 = arith.constant dense<0.000000e+00> : vector<128xf32>
    %179 = vector.multi_reduction <add>, %178, %cst_72 [1] : vector<128x32xf32> to vector<128xf32>
    %180 = vector.shape_cast %179 : vector<128xf32> to vector<128x1xf32>
    %cst_73 = arith.constant 3.200000e+01 : f32
    %181 = vector.broadcast %cst_73 : f32 to vector<128x1xf32>
    %182 = arith.divf %180, %181 : vector<128x1xf32>
    %cst_74 = arith.constant 9.99999974E-6 : f32
    %183 = vector.broadcast %cst_74 : f32 to vector<128x1xf32>
    %184 = arith.addf %182, %183 : vector<128x1xf32>
    %185 = math.rsqrt %184 : vector<128x1xf32>
    %186 = vector.broadcast %185 : vector<128x1xf32> to vector<128x32xf32>
    %187 = arith.mulf %177, %186 : vector<128x32xf32>
    %188 = vector.broadcast %170 : vector<1x32xf32> to vector<128x32xf32>
    %189 = arith.mulf %187, %188 : vector<128x32xf32>
    %190 = vector.broadcast %171 : vector<1x32xf32> to vector<128x32xf32>
    %191 = arith.addf %189, %190 : vector<128x32xf32>
    %c0_75 = arith.constant 0 : index
    %c0_76 = arith.constant 0 : index
    %192 = vector.load %arg15[%c0_75, %c0_76] : memref<32x32xbf16, #tpu.memory_space<vmem>>, vector<32x32xbf16>
    %193 = arith.truncf %191 : vector<128x32xf32> to vector<128x32xbf16>
    %cst_77 = arith.constant dense<0.000000e+00> : vector<128x32xf32>
    %194 = tpu.matmul %193, %192, %cst_77 {dimension_numbers = #tpu.dot_dimension_numbers<[1], [1], [0], [0], [0, 0, 1, 0], [], []>} : vector<128x32xbf16>, vector<32x32xbf16>, vector<128x32xf32> -> vector<128x32xf32>
    %c0_78 = arith.constant 0 : index
    %c0_79 = arith.constant 0 : index
    %195 = vector.load %arg16[%c0_78, %c0_79] : memref<1x32xf32, #tpu.memory_space<vmem>>, vector<1x32xf32>
    %196 = vector.broadcast %195 : vector<1x32xf32> to vector<128x32xf32>
    %197 = arith.addf %194, %196 : vector<128x32xf32>
    %cst_80 = arith.constant 5.000000e-01 : f32
    %198 = vector.broadcast %cst_80 : f32 to vector<128x32xf32>
    %199 = arith.mulf %198, %197 : vector<128x32xf32>
    %cst_81 = arith.constant 0.707106769 : f32
    %200 = vector.broadcast %cst_81 : f32 to vector<128x32xf32>
    %201 = arith.mulf %197, %200 : vector<128x32xf32>
    %cst_82 = arith.constant 0.000000e+00 : f32
    %202 = vector.broadcast %cst_82 : f32 to vector<128x32xf32>
    %203 = arith.cmpf oge, %201, %202 : vector<128x32xf32>
    %cst_83 = arith.constant 1.000000e+00 : f32
    %cst_84 = arith.constant -1.000000e+00 : f32
    %204 = vector.broadcast %cst_83 : f32 to vector<128x32xf32>
    %205 = vector.broadcast %cst_84 : f32 to vector<128x32xf32>
    %206 = arith.select %203, %204, %205 : vector<128x32xi1>, vector<128x32xf32>
    %207 = math.absf %201 : vector<128x32xf32>
    %cst_85 = arith.constant 0.327591091 : f32
    %208 = vector.broadcast %cst_85 : f32 to vector<128x32xf32>
    %209 = arith.mulf %208, %207 : vector<128x32xf32>
    %cst_86 = arith.constant 1.000000e+00 : f32
    %210 = vector.broadcast %cst_86 : f32 to vector<128x32xf32>
    %211 = arith.addf %210, %209 : vector<128x32xf32>
    %cst_87 = arith.constant 1.000000e+00 : f32
    %212 = vector.broadcast %cst_87 : f32 to vector<128x32xf32>
    %213 = arith.divf %212, %211 : vector<128x32xf32>
    %cst_88 = arith.constant 1.06140542 : f32
    %214 = vector.broadcast %cst_88 : f32 to vector<128x32xf32>
    %215 = arith.mulf %214, %213 : vector<128x32xf32>
    %cst_89 = arith.constant -1.45315206 : f32
    %216 = vector.broadcast %cst_89 : f32 to vector<128x32xf32>
    %217 = arith.addf %215, %216 : vector<128x32xf32>
    %218 = arith.mulf %217, %213 : vector<128x32xf32>
    %cst_90 = arith.constant 1.42141378 : f32
    %219 = vector.broadcast %cst_90 : f32 to vector<128x32xf32>
    %220 = arith.addf %218, %219 : vector<128x32xf32>
    %221 = arith.mulf %220, %213 : vector<128x32xf32>
    %cst_91 = arith.constant -0.284496725 : f32
    %222 = vector.broadcast %cst_91 : f32 to vector<128x32xf32>
    %223 = arith.addf %221, %222 : vector<128x32xf32>
    %224 = arith.mulf %223, %213 : vector<128x32xf32>
    %cst_92 = arith.constant 0.254829586 : f32
    %225 = vector.broadcast %cst_92 : f32 to vector<128x32xf32>
    %226 = arith.addf %224, %225 : vector<128x32xf32>
    %227 = arith.mulf %226, %213 : vector<128x32xf32>
    %cst_93 = arith.constant 0.000000e+00 : f32
    %228 = vector.broadcast %cst_93 : f32 to vector<128x32xf32>
    %229 = arith.subf %228, %207 : vector<128x32xf32>
    %230 = arith.mulf %229, %207 : vector<128x32xf32>
    %231 = math.exp %230 : vector<128x32xf32>
    %232 = arith.mulf %227, %231 : vector<128x32xf32>
    %cst_94 = arith.constant 1.000000e+00 : f32
    %233 = vector.broadcast %cst_94 : f32 to vector<128x32xf32>
    %234 = arith.subf %233, %232 : vector<128x32xf32>
    %235 = arith.mulf %206, %234 : vector<128x32xf32>
    %cst_95 = arith.constant 1.000000e+00 : f32
    %236 = vector.broadcast %cst_95 : f32 to vector<128x32xf32>
    %237 = arith.addf %236, %235 : vector<128x32xf32>
    %238 = arith.mulf %199, %237 : vector<128x32xf32>
    %c0_96 = arith.constant 0 : index
    %c0_97 = arith.constant 0 : index
    %239 = vector.load %arg17[%c0_96, %c0_97] : memref<32x32xbf16, #tpu.memory_space<vmem>>, vector<32x32xbf16>
    %240 = arith.truncf %238 : vector<128x32xf32> to vector<128x32xbf16>
    %cst_98 = arith.constant dense<0.000000e+00> : vector<128x32xf32>
    %241 = tpu.matmul %240, %239, %cst_98 {dimension_numbers = #tpu.dot_dimension_numbers<[1], [1], [0], [0], [0, 0, 1, 0], [], []>} : vector<128x32xbf16>, vector<32x32xbf16>, vector<128x32xf32> -> vector<128x32xf32>
    %c0_99 = arith.constant 0 : index
    %c0_100 = arith.constant 0 : index
    %242 = vector.load %arg18[%c0_99, %c0_100] : memref<1x32xf32, #tpu.memory_space<vmem>>, vector<1x32xf32>
    %243 = vector.broadcast %242 : vector<1x32xf32> to vector<128x32xf32>
    %244 = arith.addf %241, %243 : vector<128x32xf32>
    %245 = arith.addf %169, %244 : vector<128x32xf32>
    %cst_101 = arith.constant dense<0.000000e+00> : vector<1x32xf32>
    %246 = tpu.matmul %3, %245, %cst_101 {dimension_numbers = #tpu.dot_dimension_numbers<[1], [0], [0], [1], [0, 0, 1, 1], [], []>} : vector<1x128xf32>, vector<128x32xf32>, vector<1x32xf32> -> vector<1x32xf32>
    %c0_102 = arith.constant 0 : index
    %c0_103 = arith.constant 0 : index
    %c0_104 = arith.constant 0 : index
    %247 = vector.load %arg19[%c0_102, %c0_103, %c0_104] : memref<1x1x32xf32, #tpu.memory_space<vmem>>, vector<1x1x32xf32>
    %248 = vector.shape_cast %247 : vector<1x1x32xf32> to vector<1x32xf32>
    %249 = vector.shape_cast %246 : vector<1x32xf32> to vector<1x1x32xf32>
    tpu.vector_store %arg19[%c0_102, %c0_103, %c0_104], %249 {strides = array<i32>} : memref<1x1x32xf32, #tpu.memory_space<vmem>>, vector<1x1x32xf32>,
    return
  }
  func.func @transform_0(%arg0: i32) -> (i32, i32, i32) {
    %c0_i32 = arith.constant 0 : i32
    %c0_i32_0 = arith.constant 0 : i32
    %c0_i32_1 = arith.constant 0 : i32
    return %arg0, %c0_i32, %c0_i32_0 : i32, i32, i32
  }
  func.func @transform_1(%arg0: i32) -> (i32, i32, i32) {
    %c0_i32 = arith.constant 0 : i32
    %c0_i32_0 = arith.constant 0 : i32
    %c0_i32_1 = arith.constant 0 : i32
    return %arg0, %c0_i32, %c0_i32_0 : i32, i32, i32
  }
  func.func @transform_2(%arg0: i32) -> (i32, i32) {
    %c0_i32 = arith.constant 0 : i32
    %c0_i32_0 = arith.constant 0 : i32
    %c0_i32_1 = arith.constant 0 : i32
    return %c0_i32, %c0_i32_0 : i32, i32
  }
  func.func @transform_3(%arg0: i32) -> (i32, i32) {
    %c0_i32 = arith.constant 0 : i32
    %c0_i32_0 = arith.constant 0 : i32
    %c0_i32_1 = arith.constant 0 : i32
    return %c0_i32, %c0_i32_0 : i32, i32
  }
  func.func @transform_4(%arg0: i32) -> (i32, i32) {
    %c0_i32 = arith.constant 0 : i32
    %c0_i32_0 = arith.constant 0 : i32
    %c0_i32_1 = arith.constant 0 : i32
    return %c0_i32, %c0_i32_0 : i32, i32
  }
  func.func @transform_5(%arg0: i32) -> (i32, i32) {
    %c0_i32 = arith.constant 0 : i32
    %c0_i32_0 = arith.constant 0 : i32
    %c0_i32_1 = arith.constant 0 : i32
    return %c0_i32, %c0_i32_0 : i32, i32
  }
  func.func @transform_6(%arg0: i32) -> (i32, i32) {
    %c0_i32 = arith.constant 0 : i32
    %c0_i32_0 = arith.constant 0 : i32
    %c0_i32_1 = arith.constant 0 : i32
    return %c0_i32, %c0_i32_0 : i32, i32
  }
  func.func @transform_7(%arg0: i32) -> (i32, i32) {
    %c0_i32 = arith.constant 0 : i32
    %c0_i32_0 = arith.constant 0 : i32
    %c0_i32_1 = arith.constant 0 : i32
    return %c0_i32, %c0_i32_0 : i32, i32
  }
  func.func @transform_8(%arg0: i32) -> (i32, i32) {
    %c0_i32 = arith.constant 0 : i32
    %c0_i32_0 = arith.constant 0 : i32
    %c0_i32_1 = arith.constant 0 : i32
    return %c0_i32, %c0_i32_0 : i32, i32
  }
  func.func @transform_9(%arg0: i32) -> (i32, i32) {
    %c0_i32 = arith.constant 0 : i32
    %c0_i32_0 = arith.constant 0 : i32
    %c0_i32_1 = arith.constant 0 : i32
    return %c0_i32, %c0_i32_0 : i32, i32
  }
  func.func @transform_10(%arg0: i32) -> (i32, i32) {
    %c0_i32 = arith.constant 0 : i32
    %c0_i32_0 = arith.constant 0 : i32
    %c0_i32_1 = arith.constant 0 : i32
    return %c0_i32, %c0_i32_0 : i32, i32
  }
  func.func @transform_11(%arg0: i32) -> (i32, i32) {
    %c0_i32 = arith.constant 0 : i32
    %c0_i32_0 = arith.constant 0 : i32
    %c0_i32_1 = arith.constant 0 : i32
    return %c0_i32, %c0_i32_0 : i32, i32
  }
  func.func @transform_12(%arg0: i32) -> (i32, i32) {
    %c0_i32 = arith.constant 0 : i32
    %c0_i32_0 = arith.constant 0 : i32
    %c0_i32_1 = arith.constant 0 : i32
    return %c0_i32, %c0_i32_0 : i32, i32
  }
  func.func @transform_13(%arg0: i32) -> (i32, i32) {
    %c0_i32 = arith.constant 0 : i32
    %c0_i32_0 = arith.constant 0 : i32
    %c0_i32_1 = arith.constant 0 : i32
    return %c0_i32, %c0_i32_0 : i32, i32
  }
  func.func @transform_14(%arg0: i32) -> (i32, i32) {
    %c0_i32 = arith.constant 0 : i32
    %c0_i32_0 = arith.constant 0 : i32
    %c0_i32_1 = arith.constant 0 : i32
    return %c0_i32, %c0_i32_0 : i32, i32
  }
  func.func @transform_15(%arg0: i32) -> (i32, i32) {
    %c0_i32 = arith.constant 0 : i32
    %c0_i32_0 = arith.constant 0 : i32
    %c0_i32_1 = arith.constant 0 : i32
    return %c0_i32, %c0_i32_0 : i32, i32
  }
  func.func @transform_16(%arg0: i32) -> (i32, i32) {
    %c0_i32 = arith.constant 0 : i32
    %c0_i32_0 = arith.constant 0 : i32
    %c0_i32_1 = arith.constant 0 : i32
    return %c0_i32, %c0_i32_0 : i32, i32
  }
  func.func @transform_17(%arg0: i32) -> (i32, i32) {
    %c0_i32 = arith.constant 0 : i32
    %c0_i32_0 = arith.constant 0 : i32
    %c0_i32_1 = arith.constant 0 : i32
    return %c0_i32, %c0_i32_0 : i32, i32
  }
  func.func @transform_18(%arg0: i32) -> (i32, i32, i32) {
    %c0_i32 = arith.constant 0 : i32
    %c0_i32_0 = arith.constant 0 : i32
    %c0_i32_1 = arith.constant 0 : i32
    return %arg0, %c0_i32, %c0_i32_0 : i32, i32, i32
  }
}

</mosaic_0001>

<llo_original>
// kernel: tpu_custom_call.1
$region0: #{tpu_custom_call.1}
  #allocation0 [shape = 'u32[]', space=smem, size = 0x4, offset = 0x4, fixed_abs, tag = 'smem constant byte address 0x4 - core index']
  #allocation1 [shape = 'u32[144,128]{1,0:T(1,128)}', space=vmem, size = 0x12000, scoped, tag = 'internal scratch']
  #allocation2 [shape = 'f32[128,32]{1,0:T(8,128)}', space=vmem, size = 0x10000, scoped, tag = 'scratch operand']
  %s0 = inlined_call_operand.vmem [shape: f32[2,128,1], index: 0, kind: input, shape index: {}]
  %s1 = inlined_call_operand.vmem [shape: f32[2,1,128], index: 1, kind: input, shape index: {}]
  %s2 = inlined_call_operand.vmem [shape: f32[1,32], index: 2, kind: input, shape index: {}]
  %s3 = inlined_call_operand.vmem [shape: bf16[32,16], index: 3, kind: input, shape index: {}]
  %s4 = inlined_call_operand.vmem [shape: bf16[32,16], index: 4, kind: input, shape index: {}]
  %s5 = inlined_call_operand.vmem [shape: f32[1,32], index: 5, kind: input, shape index: {}]
  %s6 = inlined_call_operand.vmem [shape: f32[1,32], index: 6, kind: input, shape index: {}]
  %s7 = inlined_call_operand.vmem [shape: f32[1,32], index: 7, kind: input, shape index: {}]
  %s8 = inlined_call_operand.vmem [shape: bf16[96,32], index: 8, kind: input, shape index: {}]
  %s9 = inlined_call_operand.vmem [shape: f32[1,96], index: 9, kind: input, shape index: {}]
  %s10 = inlined_call_operand.vmem [shape: bf16[32,32], index: 10, kind: input, shape index: {}]
  %s11 = inlined_call_operand.vmem [shape: f32[1,32], index: 11, kind: input, shape index: {}]
  %s12 = inlined_call_operand.vmem [shape: f32[1,32], index: 12, kind: input, shape index: {}]
  %s13 = inlined_call_operand.vmem [shape: f32[1,32], index: 13, kind: input, shape index: {}]
  %s14 = inlined_call_operand.vmem [shape: bf16[32,32], index: 14, kind: input, shape index: {}]
  %s15 = inlined_call_operand.vmem [shape: f32[1,32], index: 15, kind: input, shape index: {}]
  %s16 = inlined_call_operand.vmem [shape: bf16[32,32], index: 16, kind: input, shape index: {}]
  %s17 = inlined_call_operand.vmem [shape: f32[1,32], index: 17, kind: input, shape index: {}]
  %s18 = inlined_call_operand.hbm [shape: f32[2,1,32], index: 18, kind: output, shape index: {}]
  %s19 = sld [smem:[#allocation0]]
  $region105: #{tpu_custom_call.1} parent=0
    _
  %s21 = ssub.s32 1, %s19
  %s22 = scalar_select 0, %s21, %s19
  $region1: #{tpu_custom_call.1} parent=0
    #allocation3 [shape = 'u8[1024]{0}', space=vmem, size = 0x400, scoped, tag = 'output window, operand 0']
    #allocation4 [shape = 's32[2]{0}', space=sflag, size = 0x8, scoped, tag = 'scoped memory for tpu_custom_call.1']
    %23 = vsyncpa [#allocation4], 0
    %s24 = scalar_lea.sflag [#allocation4], 1
    %25 = vsyncpa %s24, 0
    loop: start=0, step=1, limit=4
    $region2: #{tpu_custom_call.1} parent=1 // loop_pre_header
      _
    $region3: #{tpu_custom_call.1} parent=1 // loop_header
      %s27 = sphi 0, %s31
      %p28 = scmp.ge.s32.totalorder %s27, 4
      %s37 = sphi 0, %s39
      %s40 = sphi 0, %s37
      %s41 = sphi 0, %s40
      %s57 = sphi 0, %s41
      %s63 = sphi 0, %s65
      %s66 = sphi 0, %s63
      %s67 = sphi 0, %s66
      %s83 = sphi 0, %s67
      %s87 = sphi 0, %s87
      %s89 = sphi 0, %s87
      %s90 = sphi 0, %s89
      %s104 = sphi 0, %s90
      %s108 = sphi 0, %s108
      %s110 = sphi 0, %s108
      %s111 = sphi 0, %s110
      %s125 = sphi 0, %s111
      %s129 = sphi 0, %s129
      %s131 = sphi 0, %s129
      %s132 = sphi 0, %s131
      %s146 = sphi 0, %s132
      %s150 = sphi 0, %s150
      %s152 = sphi 0, %s150
      %s153 = sphi 0, %s152
      %s167 = sphi 0, %s153
      %s171 = sphi 0, %s171
      %s173 = sphi 0, %s171
      %s174 = sphi 0, %s173
      %s188 = sphi 0, %s174
      %s192 = sphi 0, %s192
      %s194 = sphi 0, %s192
      %s195 = sphi 0, %s194
      %s209 = sphi 0, %s195
      %s213 = sphi 0, %s213
      %s215 = sphi 0, %s213
      %s216 = sphi 0, %s215
      %s230 = sphi 0, %s216
      %s234 = sphi 0, %s234
      %s236 = sphi 0, %s234
      %s237 = sphi 0, %s236
      %s251 = sphi 0, %s237
      %s255 = sphi 0, %s255
      %s257 = sphi 0, %s255
      %s258 = sphi 0, %s257
      %s272 = sphi 0, %s258
      %s276 = sphi 0, %s276
      %s278 = sphi 0, %s276
      %s279 = sphi 0, %s278
      %s293 = sphi 0, %s279
      %s297 = sphi 0, %s297
      %s299 = sphi 0, %s297
      %s300 = sphi 0, %s299
      %s314 = sphi 0, %s300
      %s318 = sphi 0, %s318
      %s320 = sphi 0, %s318
      %s321 = sphi 0, %s320
      %s335 = sphi 0, %s321
      %s339 = sphi 0, %s339
      %s341 = sphi 0, %s339
      %s342 = sphi 0, %s341
      %s356 = sphi 0, %s342
      %s360 = sphi 0, %s360
      %s362 = sphi 0, %s360
      %s363 = sphi 0, %s362
      %s377 = sphi 0, %s363
      %s381 = sphi 0, %s381
      %s383 = sphi 0, %s381
      %s384 = sphi 0, %s383
      %s398 = sphi 0, %s384
      %s402 = sphi 0, %s402
      %s404 = sphi 0, %s402
      %s405 = sphi 0, %s404
      %s419 = sphi 0, %s405
      %s425 = sphi 0, %s427
      %s428 = sphi 0, %s425
      %s429 = sphi 0, %s428
      %s445 = sphi 0, %s429
    $region4: #{tpu_custom_call.1} parent=1 // loop_header_branch
      %30 = sbr.rel (%p28) target = $region8
    $region5: #{tpu_custom_call.1} parent=1 // loop_body
      %s32 = ssub.s32 %s27, 1
      %s33 = ssub.s32 %s27, 2
      %s34 = sadd.s32 %s27, 1
      %s35 = ssub.s32 %s27, %s34
      %p36 = scmp.eq.s32.totalorder %s35, 0
      %s38 = sadd.s32 %s37, 1
      %s39 = scalar_select %p36, %s37, %s38
      %p42 = pneg %p36
      %p43 = scmp.eq.s32.totalorder %s27, 1
      %p44 = por %p42, %p43
      %p45 = scmp.ne.s32.totalorder %s37, %s40
      %p46 = scmp.eq.s32.totalorder %s27, 0
      %p47 = por %p45, %p46
      %p48 = scmp.ne.s32.totalorder %s37, %s40
      %p49 = scmp.eq.s32.totalorder %s32, 1
      %p50 = por %p48, %p49
      %p51 = scmp.ne.s32.totalorder %s40, %s41
      %p52 = scmp.eq.s32.totalorder %s32, 0
      %p53 = por %p51, %p52
      %p54 = scmp.ne.s32.totalorder %s40, %s41
      %p55 = scmp.eq.s32.totalorder %s33, 1
      %p56 = por %p54, %p55
      %p58 = scmp.ne.s32.totalorder %s41, %s57
      %p59 = scmp.eq.s32.totalorder %s33, 0
      %p60 = por %p58, %p59
      %s61 = ssub.s32 %s27, %s34
      %p62 = scmp.eq.s32.totalorder %s61, 0
      %s64 = sadd.s32 %s63, 1
      %s65 = scalar_select %p62, %s63, %s64
      %p68 = pneg %p62
      %p69 = scmp.eq.s32.totalorder %s27, 1
      %p70 = por %p68, %p69
      %p71 = scmp.ne.s32.totalorder %s63, %s66
      %p72 = scmp.eq.s32.totalorder %s27, 0
      %p73 = por %p71, %p72
      %p74 = scmp.ne.s32.totalorder %s63, %s66
      %p75 = scmp.eq.s32.totalorder %s32, 1
      %p76 = por %p74, %p75
      %p77 = scmp.ne.s32.totalorder %s66, %s67
      %p78 = scmp.eq.s32.totalorder %s32, 0
      %p79 = por %p77, %p78
      %p80 = scmp.ne.s32.totalorder %s66, %s67
      %p81 = scmp.eq.s32.totalorder %s33, 1
      %p82 = por %p80, %p81
      %p84 = scmp.ne.s32.totalorder %s67, %s83
      %p85 = scmp.eq.s32.totalorder %s33, 0
      %p86 = por %p84, %p85
      %s88 = sadd.s32 %s87, 1
      %p91 = scmp.eq.s32.totalorder %s27, 1
      %p92 = scmp.ne.s32.totalorder %s87, %s89
      %p93 = scmp.eq.s32.totalorder %s27, 0
      %p94 = por %p92, %p93
      %p95 = scmp.ne.s32.totalorder %s87, %s89
      %p96 = scmp.eq.s32.totalorder %s32, 1
      %p97 = por %p95, %p96
      %p98 = scmp.ne.s32.totalorder %s89, %s90
      %p99 = scmp.eq.s32.totalorder %s32, 0
      %p100 = por %p98, %p99
      %p101 = scmp.ne.s32.totalorder %s89, %s90
      %p102 = scmp.eq.s32.totalorder %s33, 1
      %p103 = por %p101, %p102
      %p105 = scmp.ne.s32.totalorder %s90, %s104
      %p106 = scmp.eq.s32.totalorder %s33, 0
      %p107 = por %p105, %p106
      %s109 = sadd.s32 %s108, 1
      %p112 = scmp.eq.s32.totalorder %s27, 1
      %p113 = scmp.ne.s32.totalorder %s108, %s110
      %p114 = scmp.eq.s32.totalorder %s27, 0
      %p115 = por %p113, %p114
      %p116 = scmp.ne.s32.totalorder %s108, %s110
      %p117 = scmp.eq.s32.totalorder %s32, 1
      %p118 = por %p116, %p117
      %p119 = scmp.ne.s32.totalorder %s110, %s111
      %p120 = scmp.eq.s32.totalorder %s32, 0
      %p121 = por %p119, %p120
      %p122 = scmp.ne.s32.totalorder %s110, %s111
      %p123 = scmp.eq.s32.totalorder %s33, 1
      %p124 = por %p122, %p123
      %p126 = scmp.ne.s32.totalorder %s111, %s125
      %p127 = scmp.eq.s32.totalorder %s33, 0
      %p128 = por %p126, %p127
      %s130 = sadd.s32 %s129, 1
      %p133 = scmp.eq.s32.totalorder %s27, 1
      %p134 = scmp.ne.s32.totalorder %s129, %s131
      %p135 = scmp.eq.s32.totalorder %s27, 0
      %p136 = por %p134, %p135
      %p137 = scmp.ne.s32.totalorder %s129, %s131
      %p138 = scmp.eq.s32.totalorder %s32, 1
      %p139 = por %p137, %p138
      %p140 = scmp.ne.s32.totalorder %s131, %s132
      %p141 = scmp.eq.s32.totalorder %s32, 0
      %p142 = por %p140, %p141
      %p143 = scmp.ne.s32.totalorder %s131, %s132
      %p144 = scmp.eq.s32.totalorder %s33, 1
      %p145 = por %p143, %p144
      %p147 = scmp.ne.s32.totalorder %s132, %s146
      %p148 = scmp.eq.s32.totalorder %s33, 0
      %p149 = por %p147, %p148
      %s151 = sadd.s32 %s150, 1
      %p154 = scmp.eq.s32.totalorder %s27, 1
      %p155 = scmp.ne.s32.totalorder %s150, %s152
      %p156 = scmp.eq.s32.totalorder %s27, 0
      %p157 = por %p155, %p156
      %p158 = scmp.ne.s32.totalorder %s150, %s152
      %p159 = scmp.eq.s32.totalorder %s32, 1
      %p160 = por %p158, %p159
      %p161 = scmp.ne.s32.totalorder %s152, %s153
      %p162 = scmp.eq.s32.totalorder %s32, 0
      %p163 = por %p161, %p162
      %p164 = scmp.ne.s32.totalorder %s152, %s153
      %p165 = scmp.eq.s32.totalorder %s33, 1
      %p166 = por %p164, %p165
      %p168 = scmp.ne.s32.totalorder %s153, %s167
      %p169 = scmp.eq.s32.totalorder %s33, 0
      %p170 = por %p168, %p169
      %s172 = sadd.s32 %s171, 1
      %p175 = scmp.eq.s32.totalorder %s27, 1
      %p176 = scmp.ne.s32.totalorder %s171, %s173
      %p177 = scmp.eq.s32.totalorder %s27, 0
      %p178 = por %p176, %p177
      %p179 = scmp.ne.s32.totalorder %s171, %s173
      %p180 = scmp.eq.s32.totalorder %s32, 1
      %p181 = por %p179, %p180
      %p182 = scmp.ne.s32.totalorder %s173, %s174
      %p183 = scmp.eq.s32.totalorder %s32, 0
      %p184 = por %p182, %p183
      %p185 = scmp.ne.s32.totalorder %s173, %s174
      %p186 = scmp.eq.s32.totalorder %s33, 1
      %p187 = por %p185, %p186
      %p189 = scmp.ne.s32.totalorder %s174, %s188
      %p190 = scmp.eq.s32.totalorder %s33, 0
      %p191 = por %p189, %p190
      %s193 = sadd.s32 %s192, 1
      %p196 = scmp.eq.s32.totalorder %s27, 1
      %p197 = scmp.ne.s32.totalorder %s192, %s194
      %p198 = scmp.eq.s32.totalorder %s27, 0
      %p199 = por %p197, %p198
      %p200 = scmp.ne.s32.totalorder %s192, %s194
      %p201 = scmp.eq.s32.totalorder %s32, 1
      %p202 = por %p200, %p201
      %p203 = scmp.ne.s32.totalorder %s194, %s195
      %p204 = scmp.eq.s32.totalorder %s32, 0
      %p205 = por %p203, %p204
      %p206 = scmp.ne.s32.totalorder %s194, %s195
      %p207 = scmp.eq.s32.totalorder %s33, 1
      %p208 = por %p206, %p207
      %p210 = scmp.ne.s32.totalorder %s195, %s209
      %p211 = scmp.eq.s32.totalorder %s33, 0
      %p212 = por %p210, %p211
      %s214 = sadd.s32 %s213, 1
      %p217 = scmp.eq.s32.totalorder %s27, 1
      %p218 = scmp.ne.s32.totalorder %s213, %s215
      %p219 = scmp.eq.s32.totalorder %s27, 0
      %p220 = por %p218, %p219
      %p221 = scmp.ne.s32.totalorder %s213, %s215
      %p222 = scmp.eq.s32.totalorder %s32, 1
      %p223 = por %p221, %p222
      %p224 = scmp.ne.s32.totalorder %s215, %s216
      %p225 = scmp.eq.s32.totalorder %s32, 0
      %p226 = por %p224, %p225
      %p227 = scmp.ne.s32.totalorder %s215, %s216
      %p228 = scmp.eq.s32.totalorder %s33, 1
      %p229 = por %p227, %p228
      %p231 = scmp.ne.s32.totalorder %s216, %s230
      %p232 = scmp.eq.s32.totalorder %s33, 0
      %p233 = por %p231, %p232
      %s235 = sadd.s32 %s234, 1
      %p238 = scmp.eq.s32.totalorder %s27, 1
      %p239 = scmp.ne.s32.totalorder %s234, %s236
      %p240 = scmp.eq.s32.totalorder %s27, 0
      %p241 = por %p239, %p240
      %p242 = scmp.ne.s32.totalorder %s234, %s236
      %p243 = scmp.eq.s32.totalorder %s32, 1
      %p244 = por %p242, %p243
      %p245 = scmp.ne.s32.totalorder %s236, %s237
      %p246 = scmp.eq.s32.totalorder %s32, 0
      %p247 = por %p245, %p246
      %p248 = scmp.ne.s32.totalorder %s236, %s237
      %p249 = scmp.eq.s32.totalorder %s33, 1
      %p250 = por %p248, %p249
      %p252 = scmp.ne.s32.totalorder %s237, %s251
      %p253 = scmp.eq.s32.totalorder %s33, 0
      %p254 = por %p252, %p253
      %s256 = sadd.s32 %s255, 1
      %p259 = scmp.eq.s32.totalorder %s27, 1
      %p260 = scmp.ne.s32.totalorder %s255, %s257
      %p261 = scmp.eq.s32.totalorder %s27, 0
      %p262 = por %p260, %p261
      %p263 = scmp.ne.s32.totalorder %s255, %s257
      %p264 = scmp.eq.s32.totalorder %s32, 1
      %p265 = por %p263, %p264
      %p266 = scmp.ne.s32.totalorder %s257, %s258
      %p267 = scmp.eq.s32.totalorder %s32, 0
      %p268 = por %p266, %p267
      %p269 = scmp.ne.s32.totalorder %s257, %s258
      %p270 = scmp.eq.s32.totalorder %s33, 1
      %p271 = por %p269, %p270
      %p273 = scmp.ne.s32.totalorder %s258, %s272
      %p274 = scmp.eq.s32.totalorder %s33, 0
      %p275 = por %p273, %p274
      %s277 = sadd.s32 %s276, 1
      %p280 = scmp.eq.s32.totalorder %s27, 1
      %p281 = scmp.ne.s32.totalorder %s276, %s278
      %p282 = scmp.eq.s32.totalorder %s27, 0
      %p283 = por %p281, %p282
      %p284 = scmp.ne.s32.totalorder %s276, %s278
      %p285 = scmp.eq.s32.totalorder %s32, 1
      %p286 = por %p284, %p285
      %p287 = scmp.ne.s32.totalorder %s278, %s279
      %p288 = scmp.eq.s32.totalorder %s32, 0
      %p289 = por %p287, %p288
      %p290 = scmp.ne.s32.totalorder %s278, %s279
      %p291 = scmp.eq.s32.totalorder %s33, 1
      %p292 = por %p290, %p291
      %p294 = scmp.ne.s32.totalorder %s279, %s293
      %p295 = scmp.eq.s32.totalorder %s33, 0
      %p296 = por %p294, %p295
      %s298 = sadd.s32 %s297, 1
      %p301 = scmp.eq.s32.totalorder %s27, 1
      %p302 = scmp.ne.s32.totalorder %s297, %s299
      %p303 = scmp.eq.s32.totalorder %s27, 0
      %p304 = por %p302, %p303
      %p305 = scmp.ne.s32.totalorder %s297, %s299
      %p306 = scmp.eq.s32.totalorder %s32, 1
      %p307 = por %p305, %p306
      %p308 = scmp.ne.s32.totalorder %s299, %s300
      %p309 = scmp.eq.s32.totalorder %s32, 0
      %p310 = por %p308, %p309
      %p311 = scmp.ne.s32.totalorder %s299, %s300
      %p312 = scmp.eq.s32.totalorder %s33, 1
      %p313 = por %p311, %p312
      %p315 = scmp.ne.s32.totalorder %s300, %s314
      %p316 = scmp.eq.s32.totalorder %s33, 0
      %p317 = por %p315, %p316
      %s319 = sadd.s32 %s318, 1
      %p322 = scmp.eq.s32.totalorder %s27, 1
      %p323 = scmp.ne.s32.totalorder %s318, %s320
      %p324 = scmp.eq.s32.totalorder %s27, 0
      %p325 = por %p323, %p324
      %p326 = scmp.ne.s32.totalorder %s318, %s320
      %p327 = scmp.eq.s32.totalorder %s32, 1
      %p328 = por %p326, %p327
      %p329 = scmp.ne.s32.totalorder %s320, %s321
      %p330 = scmp.eq.s32.totalorder %s32, 0
      %p331 = por %p329, %p330
      %p332 = scmp.ne.s32.totalorder %s320, %s321
      %p333 = scmp.eq.s32.totalorder %s33, 1
      %p334 = por %p332, %p333
      %p336 = scmp.ne.s32.totalorder %s321, %s335
      %p337 = scmp.eq.s32.totalorder %s33, 0
      %p338 = por %p336, %p337
      %s340 = sadd.s32 %s339, 1
      %p343 = scmp.eq.s32.totalorder %s27, 1
      %p344 = scmp.ne.s32.totalorder %s339, %s341
      %p345 = scmp.eq.s32.totalorder %s27, 0
      %p346 = por %p344, %p345
      %p347 = scmp.ne.s32.totalorder %s339, %s341
      %p348 = scmp.eq.s32.totalorder %s32, 1
      %p349 = por %p347, %p348
      %p350 = scmp.ne.s32.totalorder %s341, %s342
      %p351 = scmp.eq.s32.totalorder %s32, 0
      %p352 = por %p350, %p351
      %p353 = scmp.ne.s32.totalorder %s341, %s342
      %p354 = scmp.eq.s32.totalorder %s33, 1
      %p355 = por %p353, %p354
      %p357 = scmp.ne.s32.totalorder %s342, %s356
      %p358 = scmp.eq.s32.totalorder %s33, 0
      %p359 = por %p357, %p358
      %s361 = sadd.s32 %s360, 1
      %p364 = scmp.eq.s32.totalorder %s27, 1
      %p365 = scmp.ne.s32.totalorder %s360, %s362
      %p366 = scmp.eq.s32.totalorder %s27, 0
      %p367 = por %p365, %p366
      %p368 = scmp.ne.s32.totalorder %s360, %s362
      %p369 = scmp.eq.s32.totalorder %s32, 1
      %p370 = por %p368, %p369
      %p371 = scmp.ne.s32.totalorder %s362, %s363
      %p372 = scmp.eq.s32.totalorder %s32, 0
      %p373 = por %p371, %p372
      %p374 = scmp.ne.s32.totalorder %s362, %s363
      %p375 = scmp.eq.s32.totalorder %s33, 1
      %p376 = por %p374, %p375
      %p378 = scmp.ne.s32.totalorder %s363, %s377
      %p379 = scmp.eq.s32.totalorder %s33, 0
      %p380 = por %p378, %p379
      %s382 = sadd.s32 %s381, 1
      %p385 = scmp.eq.s32.totalorder %s27, 1
      %p386 = scmp.ne.s32.totalorder %s381, %s383
      %p387 = scmp.eq.s32.totalorder %s27, 0
      %p388 = por %p386, %p387
      %p389 = scmp.ne.s32.totalorder %s381, %s383
      %p390 = scmp.eq.s32.totalorder %s32, 1
      %p391 = por %p389, %p390
      %p392 = scmp.ne.s32.totalorder %s383, %s384
      %p393 = scmp.eq.s32.totalorder %s32, 0
      %p394 = por %p392, %p393
      %p395 = scmp.ne.s32.totalorder %s383, %s384
      %p396 = scmp.eq.s32.totalorder %s33, 1
      %p397 = por %p395, %p396
      %p399 = scmp.ne.s32.totalorder %s384, %s398
      %p400 = scmp.eq.s32.totalorder %s33, 0
      %p401 = por %p399, %p400
      %s403 = sadd.s32 %s402, 1
      %p406 = scmp.eq.s32.totalorder %s27, 1
      %p407 = scmp.ne.s32.totalorder %s402, %s404
      %p408 = scmp.eq.s32.totalorder %s27, 0
      %p409 = por %p407, %p408
      %p410 = scmp.ne.s32.totalorder %s402, %s404
      %p411 = scmp.eq.s32.totalorder %s32, 1
      %p412 = por %p410, %p411
      %p413 = scmp.ne.s32.totalorder %s404, %s405
      %p414 = scmp.eq.s32.totalorder %s32, 0
      %p415 = por %p413, %p414
      %p416 = scmp.ne.s32.totalorder %s404, %s405
      %p417 = scmp.eq.s32.totalorder %s33, 1
      %p418 = por %p416, %p417
      %p420 = scmp.ne.s32.totalorder %s405, %s419
      %p421 = scmp.eq.s32.totalorder %s33, 0
      %p422 = por %p420, %p421
      %s423 = ssub.s32 %s27, %s34
      %p424 = scmp.eq.s32.totalorder %s423, 0
      %s426 = sadd.s32 %s425, 1
      %s427 = scalar_select %p424, %s425, %s426
      %p430 = pneg %p424
      %p431 = scmp.eq.s32.totalorder %s27, 1
      %p432 = por %p430, %p431
      %p433 = scmp.ne.s32.totalorder %s425, %s428
      %p434 = scmp.eq.s32.totalorder %s27, 0
      %p435 = por %p433, %p434
      %p436 = scmp.ne.s32.totalorder %s425, %s428
      %p437 = scmp.eq.s32.totalorder %s32, 1
      %p438 = por %p436, %p437
      %p439 = scmp.ne.s32.totalorder %s428, %s429
      %p440 = scmp.eq.s32.totalorder %s32, 0
      %p441 = por %p439, %p440
      %p442 = scmp.ne.s32.totalorder %s428, %s429
      %p443 = scmp.eq.s32.totalorder %s33, 1
      %p444 = por %p442, %p443
      %p446 = scmp.ne.s32.totalorder %s429, %s445
      %p447 = scmp.eq.s32.totalorder %s33, 0
      %p448 = por %p446, %p447
      %p449 = scmp.le.s32.totalorder 1, %s27
      %p450 = scmp.lt.s32.totalorder %s27, 3
      %p451 = pnand %p449, %p450
      %p452 = pneg %p451
      // Predicated region
      $region9: #{tpu_custom_call.1} parent=5 // pred_check
        _
      $region10: #{tpu_custom_call.1} parent=5 // pred_check_branch
        %454 = sbr.rel (%p451) target = $region12
      $region11: #{tpu_custom_call.1} parent=5 // pred_region
        %s455 = ssub.s32 %s27, 1
        // Predicated region
        $region13: #{tpu_custom_call.1} parent=11 // pred_check
          %p456 = pneg %p100
        $region14: #{tpu_custom_call.1} parent=11 // pred_check_branch
          %458 = sbr.rel (%p456) target = $region16
        $region15: #{tpu_custom_call.1} parent=11 // pred_region
          _
        $region16: #{tpu_custom_call.1} parent=11 // pred_fallthru
          _
        // Predicated region
        $region17: #{tpu_custom_call.1} parent=11 // pred_check
          %p459 = pneg %p121
        $region18: #{tpu_custom_call.1} parent=11 // pred_check_branch
          %461 = sbr.rel (%p459) target = $region20
        $region19: #{tpu_custom_call.1} parent=11 // pred_region
          _
        $region20: #{tpu_custom_call.1} parent=11 // pred_fallthru
          _
        // Predicated region
        $region21: #{tpu_custom_call.1} parent=11 // pred_check
          %p462 = pneg %p142
        $region22: #{tpu_custom_call.1} parent=11 // pred_check_branch
          %464 = sbr.rel (%p462) target = $region24
        $region23: #{tpu_custom_call.1} parent=11 // pred_region
          _
        $region24: #{tpu_custom_call.1} parent=11 // pred_fallthru
          _
        // Predicated region
        $region25: #{tpu_custom_call.1} parent=11 // pred_check
          %p465 = pneg %p163
        $region26: #{tpu_custom_call.1} parent=11 // pred_check_branch
          %467 = sbr.rel (%p465) target = $region28
        $region27: #{tpu_custom_call.1} parent=11 // pred_region
          _
        $region28: #{tpu_custom_call.1} parent=11 // pred_fallthru
          _
        // Predicated region
        $region29: #{tpu_custom_call.1} parent=11 // pred_check
          %p468 = pneg %p184
        $region30: #{tpu_custom_call.1} parent=11 // pred_check_branch
          %470 = sbr.rel (%p468) target = $region32
        $region31: #{tpu_custom_call.1} parent=11 // pred_region
          _
        $region32: #{tpu_custom_call.1} parent=11 // pred_fallthru
          _
        // Predicated region
        $region33: #{tpu_custom_call.1} parent=11 // pred_check
          %p471 = pneg %p205
        $region34: #{tpu_custom_call.1} parent=11 // pred_check_branch
          %473 = sbr.rel (%p471) target = $region36
        $region35: #{tpu_custom_call.1} parent=11 // pred_region
          _
        $region36: #{tpu_custom_call.1} parent=11 // pred_fallthru
          _
        // Predicated region
        $region37: #{tpu_custom_call.1} parent=11 // pred_check
          %p474 = pneg %p226
        $region38: #{tpu_custom_call.1} parent=11 // pred_check_branch
          %476 = sbr.rel (%p474) target = $region40
        $region39: #{tpu_custom_call.1} parent=11 // pred_region
          _
        $region40: #{tpu_custom_call.1} parent=11 // pred_fallthru
          _
        // Predicated region
        $region41: #{tpu_custom_call.1} parent=11 // pred_check
          %p477 = pneg %p247
        $region42: #{tpu_custom_call.1} parent=11 // pred_check_branch
          %479 = sbr.rel (%p477) target = $region44
        $region43: #{tpu_custom_call.1} parent=11 // pred_region
          _
        $region44: #{tpu_custom_call.1} parent=11 // pred_fallthru
          _
        // Predicated region
        $region45: #{tpu_custom_call.1} parent=11 // pred_check
          %p480 = pneg %p268
        $region46: #{tpu_custom_call.1} parent=11 // pred_check_branch
          %482 = sbr.rel (%p480) target = $region48
        $region47: #{tpu_custom_call.1} parent=11 // pred_region
          _
        $region48: #{tpu_custom_call.1} parent=11 // pred_fallthru
          _
        // Predicated region
        $region49: #{tpu_custom_call.1} parent=11 // pred_check
          %p483 = pneg %p289
        $region50: #{tpu_custom_call.1} parent=11 // pred_check_branch
          %485 = sbr.rel (%p483) target = $region52
        $region51: #{tpu_custom_call.1} parent=11 // pred_region
          _
        $region52: #{tpu_custom_call.1} parent=11 // pred_fallthru
          _
        // Predicated region
        $region53: #{tpu_custom_call.1} parent=11 // pred_check
          %p486 = pneg %p310
        $region54: #{tpu_custom_call.1} parent=11 // pred_check_branch
          %488 = sbr.rel (%p486) target = $region56
        $region55: #{tpu_custom_call.1} parent=11 // pred_region
          _
        $region56: #{tpu_custom_call.1} parent=11 // pred_fallthru
          _
        // Predicated region
        $region57: #{tpu_custom_call.1} parent=11 // pred_check
          %p489 = pneg %p331
        $region58: #{tpu_custom_call.1} parent=11 // pred_check_branch
          %491 = sbr.rel (%p489) target = $region60
        $region59: #{tpu_custom_call.1} parent=11 // pred_region
          _
        $region60: #{tpu_custom_call.1} parent=11 // pred_fallthru
          _
        // Predicated region
        $region61: #{tpu_custom_call.1} parent=11 // pred_check
          %p492 = pneg %p352
        $region62: #{tpu_custom_call.1} parent=11 // pred_check_branch
          %494 = sbr.rel (%p492) target = $region64
        $region63: #{tpu_custom_call.1} parent=11 // pred_region
          _
        $region64: #{tpu_custom_call.1} parent=11 // pred_fallthru
          _
        // Predicated region
        $region65: #{tpu_custom_call.1} parent=11 // pred_check
          %p495 = pneg %p373
        $region66: #{tpu_custom_call.1} parent=11 // pred_check_branch
          %497 = sbr.rel (%p495) target = $region68
        $region67: #{tpu_custom_call.1} parent=11 // pred_region
          _
        $region68: #{tpu_custom_call.1} parent=11 // pred_fallthru
          _
        // Predicated region
        $region69: #{tpu_custom_call.1} parent=11 // pred_check
          %p498 = pneg %p394
        $region70: #{tpu_custom_call.1} parent=11 // pred_check_branch
          %500 = sbr.rel (%p498) target = $region72
        $region71: #{tpu_custom_call.1} parent=11 // pred_region
          _
        $region72: #{tpu_custom_call.1} parent=11 // pred_fallthru
          _
        // Predicated region
        $region73: #{tpu_custom_call.1} parent=11 // pred_check
          %p501 = pneg %p415
        $region74: #{tpu_custom_call.1} parent=11 // pred_check_branch
          %503 = sbr.rel (%p501) target = $region76
        $region75: #{tpu_custom_call.1} parent=11 // pred_region
          _
        $region76: #{tpu_custom_call.1} parent=11 // pred_fallthru
          _
      $region12: #{tpu_custom_call.1} parent=5 // pred_fallthru
        _
      %p504 = scmp.lt.s32.totalorder %s27, 2
      // Predicated region
      $region77: #{tpu_custom_call.1} parent=5 // pred_check
        %p505 = pneg %p504
      $region78: #{tpu_custom_call.1} parent=5 // pred_check_branch
        %507 = sbr.rel (%p505) target = $region80
      $region79: #{tpu_custom_call.1} parent=5 // pred_region
        // Predicated region
        $region81: #{tpu_custom_call.1} parent=79 // pred_check
          %p508 = pneg %p47
        $region82: #{tpu_custom_call.1} parent=79 // pred_check_branch
          %510 = sbr.rel (%p508) target = $region84
        $region83: #{tpu_custom_call.1} parent=79 // pred_region
          %p511 = scmp.lt.s32.totalorder %s27, 1
          %s512 = scalar_select %p511, %s27, 1
          %s513 = smul.addr %s512, 16
          %s514 = smul.addr %s513, 8
          %s515 = scalar_lea.vmem %s0, %s514
        $region84: #{tpu_custom_call.1} parent=79 // pred_fallthru
          _
        // Predicated region
        $region85: #{tpu_custom_call.1} parent=79 // pred_check
          %p516 = pneg %p73
        $region86: #{tpu_custom_call.1} parent=79 // pred_check_branch
          %518 = sbr.rel (%p516) target = $region88
        $region87: #{tpu_custom_call.1} parent=79 // pred_region
          %p519 = scmp.lt.s32.totalorder %s27, 1
          %s520 = scalar_select %p519, %s27, 1
          %s521 = scalar_lea.vmem %s1, %s520
        $region88: #{tpu_custom_call.1} parent=79 // pred_fallthru
          _
      $region80: #{tpu_custom_call.1} parent=5 // pred_fallthru
        _
      %p522 = scmp.le.s32.totalorder 1, %s27
      %p523 = scmp.lt.s32.totalorder %s27, 3
      %p524 = pnand %p522, %p523
      %p525 = pneg %p524
      // Predicated region
      $region89: #{tpu_custom_call.1} parent=5 // pred_check
        _
      $region90: #{tpu_custom_call.1} parent=5 // pred_check_branch
        %527 = sbr.rel (%p524) target = $region92
      $region91: #{tpu_custom_call.1} parent=5 // pred_region
        %s528 = ssub.s32 %s27, 1
        %p529 = scmp.lt.s32.totalorder %s32, 1
        %s530 = scalar_select %p529, %s32, 1
        %s531 = smul.addr %s530, 16
        %s532 = smul.addr %s531, 8
        %s533 = scalar_lea.vmem %s0, %s532
        %p534 = pneg %p53
        %p535 = pneg %p50
        %p536 = scmp.lt.s32.totalorder %s32, 1
        %s537 = scalar_select %p536, %s32, 1
        %s538 = scalar_lea.vmem %s1, %s537
        %p539 = pneg %p79
        %p540 = pneg %p76
        %p541 = pneg %p100
        %p542 = pneg %p97
        %p543 = pneg %p121
        %p544 = pneg %p118
        %p545 = pneg %p142
        %p546 = pneg %p139
        %p547 = pneg %p163
        %p548 = pneg %p160
        %p549 = pneg %p184
        %p550 = pneg %p181
        %p551 = pneg %p205
        %p552 = pneg %p202
        %p553 = pneg %p226
        %p554 = pneg %p223
        %p555 = pneg %p247
        %p556 = pneg %p244
        %p557 = pneg %p268
        %p558 = pneg %p265
        %p559 = pneg %p289
        %p560 = pneg %p286
        %p561 = pneg %p310
        %p562 = pneg %p307
        %p563 = pneg %p331
        %p564 = pneg %p328
        %p565 = pneg %p352
        %p566 = pneg %p349
        %p567 = pneg %p373
        %p568 = pneg %p370
        %p569 = pneg %p394
        %p570 = pneg %p391
        %p571 = pneg %p415
        %p572 = pneg %p412
        %p573 = pneg %p441
        %p574 = pneg %p438
        %s575 = sand.u32 %s428, 1
        %s576 = scalar_lea.sflag [#allocation4], %s575
        %s577 = sand.u32 %s428, 1
        %s578 = scalar_lea.vmem [#allocation3], %s577
        %p579 = scmp.lt.s32.totalorder %s32, 1
        %s580 = scalar_select %p579, %s32, 1
        %s581 = smul.addr %s580, 16
        %s582 = smul.addr %s581, 8
        %s583 = scalar_lea.vmem %s0, %s582
        %p584 = scmp.lt.s32.totalorder %s32, 1
        %s585 = scalar_select %p584, %s32, 1
        %s586 = scalar_lea.vmem %s1, %s585
        %v588 = vld [vmem:[%s583] sm:$0xff]
        %v589 = vld [vmem:[%s583 + $0x8] sm:$0xff]
        %v590 = vld [vmem:[%s583 + $0x10] sm:$0xff]
        %v591 = vld [vmem:[%s583 + $0x18] sm:$0xff]
        %v592 = vld [vmem:[%s583 + $0x20] sm:$0xff]
        %v593 = vld [vmem:[%s583 + $0x28] sm:$0xff]
        %v594 = vld [vmem:[%s583 + $0x30] sm:$0xff]
        %v595 = vld [vmem:[%s583 + $0x38] sm:$0xff]
        %v596 = vld [vmem:[%s583 + $0x40] sm:$0xff]
        %v597 = vld [vmem:[%s583 + $0x48] sm:$0xff]
        %v598 = vld [vmem:[%s583 + $0x50] sm:$0xff]
        %v599 = vld [vmem:[%s583 + $0x58] sm:$0xff]
        %v600 = vld [vmem:[%s583 + $0x60] sm:$0xff]
        %v601 = vld [vmem:[%s583 + $0x68] sm:$0xff]
        %v602 = vld [vmem:[%s583 + $0x70] sm:$0xff]
        %v603 = vld [vmem:[%s583 + $0x78] sm:$0xff]
        %v604 = vld [vmem:[%s586] sm:$0x1]
        %v605 = vlaneseq
        %v606 = vand.u32 %v605, 127
        %v607 = vcvt.s32.f32 %v606
        %v608 = vmul.f32 %v607, 2.0
        %v609 = vmul.f32 %v608, -0.28782314
        %v610 = vmul.f32 %v609, 1.442695
        %v611 = vpow.pop %v610
        %v612 = vmul.f32 %v588, 100.0
        %v613 = vmul.f32 %v589, 100.0
        %v614 = vmul.f32 %v590, 100.0
        %v615 = vmul.f32 %v591, 100.0
        %v616 = vmul.f32 %v592, 100.0
        %v617 = vmul.f32 %v593, 100.0
        %v618 = vmul.f32 %v594, 100.0
        %v619 = vmul.f32 %v595, 100.0
        %v620 = vmul.f32 %v596, 100.0
        %v621 = vmul.f32 %v597, 100.0
        %v622 = vmul.f32 %v598, 100.0
        %v623 = vmul.f32 %v599, 100.0
        %v624 = vmul.f32 %v600, 100.0
        %v625 = vmul.f32 %v601, 100.0
        %v626 = vmul.f32 %v602, 100.0
        %v627 = vmul.f32 %v603, 100.0
        %629 = vset.pattern.permute.xlu0 0
        %630 = vperm.xlu0 %629, %v612
        %v631 = vpop.permute.xlu0 %630
        %634 = vset.pattern.permute.xlu0 0
        %635 = vperm.xlu0 %634, %v613
        %v636 = vpop.permute.xlu0 %635
        %639 = vset.pattern.permute.xlu0 0
        %640 = vperm.xlu0 %639, %v614
        %v641 = vpop.permute.xlu0 %640
        %644 = vset.pattern.permute.xlu0 0
        %645 = vperm.xlu0 %644, %v615
        %v646 = vpop.permute.xlu0 %645
        %649 = vset.pattern.permute.xlu0 0
        %650 = vperm.xlu0 %649, %v616
        %v651 = vpop.permute.xlu0 %650
        %654 = vset.pattern.permute.xlu0 0
        %655 = vperm.xlu0 %654, %v617
        %v656 = vpop.permute.xlu0 %655
        %659 = vset.pattern.permute.xlu0 0
        %660 = vperm.xlu0 %659, %v618
        %v661 = vpop.permute.xlu0 %660
        %664 = vset.pattern.permute.xlu0 0
        %665 = vperm.xlu0 %664, %v619
        %v666 = vpop.permute.xlu0 %665
        %669 = vset.pattern.permute.xlu0 0
        %670 = vperm.xlu0 %669, %v620
        %v671 = vpop.permute.xlu0 %670
        %674 = vset.pattern.permute.xlu0 0
        %675 = vperm.xlu0 %674, %v621
        %v676 = vpop.permute.xlu0 %675
        %679 = vset.pattern.permute.xlu0 0
        %680 = vperm.xlu0 %679, %v622
        %v681 = vpop.permute.xlu0 %680
        %684 = vset.pattern.permute.xlu0 0
        %685 = vperm.xlu0 %684, %v623
        %v686 = vpop.permute.xlu0 %685
        %689 = vset.pattern.permute.xlu0 0
        %690 = vperm.xlu0 %689, %v624
        %v691 = vpop.permute.xlu0 %690
        %694 = vset.pattern.permute.xlu0 0
        %695 = vperm.xlu0 %694, %v625
        %v696 = vpop.permute.xlu0 %695
        %699 = vset.pattern.permute.xlu0 0
        %700 = vperm.xlu0 %699, %v626
        %v701 = vpop.permute.xlu0 %700
        %704 = vset.pattern.permute.xlu0 0
        %705 = vperm.xlu0 %704, %v627
        %v706 = vpop.permute.xlu0 %705
        %v708 = vmul.f32 %v631, %v611
        %v709 = vmul.f32 %v636, %v611
        %v710 = vmul.f32 %v641, %v611
        %v711 = vmul.f32 %v646, %v611
        %v712 = vmul.f32 %v651, %v611
        %v713 = vmul.f32 %v656, %v611
        %v714 = vmul.f32 %v661, %v611
        %v715 = vmul.f32 %v666, %v611
        %v716 = vmul.f32 %v671, %v611
        %v717 = vmul.f32 %v676, %v611
        %v718 = vmul.f32 %v681, %v611
        %v719 = vmul.f32 %v686, %v611
        %v720 = vmul.f32 %v691, %v611
        %v721 = vmul.f32 %v696, %v611
        %v722 = vmul.f32 %v701, %v611
        %v723 = vmul.f32 %v706, %v611
        %v724 = vld [vmem:[%s2] sm:$0x1]
        %726 = vset.pattern.permute.xlu0 0
        %727 = vperm.xlu0 %726, %v588
        %v728 = vpop.permute.xlu0 %727
        %731 = vset.pattern.permute.xlu0 0
        %732 = vperm.xlu0 %731, %v589
        %v733 = vpop.permute.xlu0 %732
        %736 = vset.pattern.permute.xlu0 0
        %737 = vperm.xlu0 %736, %v590
        %v738 = vpop.permute.xlu0 %737
        %741 = vset.pattern.permute.xlu0 0
        %742 = vperm.xlu0 %741, %v591
        %v743 = vpop.permute.xlu0 %742
        %746 = vset.pattern.permute.xlu0 0
        %747 = vperm.xlu0 %746, %v592
        %v748 = vpop.permute.xlu0 %747
        %751 = vset.pattern.permute.xlu0 0
        %752 = vperm.xlu0 %751, %v593
        %v753 = vpop.permute.xlu0 %752
        %756 = vset.pattern.permute.xlu0 0
        %757 = vperm.xlu0 %756, %v594
        %v758 = vpop.permute.xlu0 %757
        %761 = vset.pattern.permute.xlu0 0
        %762 = vperm.xlu0 %761, %v595
        %v763 = vpop.permute.xlu0 %762
        %766 = vset.pattern.permute.xlu0 0
        %767 = vperm.xlu0 %766, %v596
        %v768 = vpop.permute.xlu0 %767
        %771 = vset.pattern.permute.xlu0 0
        %772 = vperm.xlu0 %771, %v597
        %v773 = vpop.permute.xlu0 %772
        %776 = vset.pattern.permute.xlu0 0
        %777 = vperm.xlu0 %776, %v598
        %v778 = vpop.permute.xlu0 %777
        %781 = vset.pattern.permute.xlu0 0
        %782 = vperm.xlu0 %781, %v599
        %v783 = vpop.permute.xlu0 %782
        %786 = vset.pattern.permute.xlu0 0
        %787 = vperm.xlu0 %786, %v600
        %v788 = vpop.permute.xlu0 %787
        %791 = vset.pattern.permute.xlu0 0
        %792 = vperm.xlu0 %791, %v601
        %v793 = vpop.permute.xlu0 %792
        %796 = vset.pattern.permute.xlu0 0
        %797 = vperm.xlu0 %796, %v602
        %v798 = vpop.permute.xlu0 %797
        %801 = vset.pattern.permute.xlu0 0
        %802 = vperm.xlu0 %801, %v603
        %v803 = vpop.permute.xlu0 %802
        %v806 = vlaneseq
        %v807 = vshrl.u32 %v806, 7
        %v808 = vsub.s32 0, %v807
        %v809 = vrot.slane %v724, %v808
        %v811 = vmul.f32 %v728, %v809
        %v812 = vmul.f32 %v733, %v809
        %v813 = vmul.f32 %v738, %v809
        %v814 = vmul.f32 %v743, %v809
        %v815 = vmul.f32 %v748, %v809
        %v816 = vmul.f32 %v753, %v809
        %v817 = vmul.f32 %v758, %v809
        %v818 = vmul.f32 %v763, %v809
        %v819 = vmul.f32 %v768, %v809
        %v820 = vmul.f32 %v773, %v809
        %v821 = vmul.f32 %v778, %v809
        %v822 = vmul.f32 %v783, %v809
        %v823 = vmul.f32 %v788, %v809
        %v824 = vmul.f32 %v793, %v809
        %v825 = vmul.f32 %v798, %v809
        %v826 = vmul.f32 %v803, %v809
        %v827 = vand.u32 2147483647, %v708
        %vm828 = vcmp.le.f32.partialorder %v827, 0.7853982
        %vm829 = vcmp.lt.s32.totalorder %v708, 0
        %v830 = vand.u32 %v708, 2139095040
        %v831 = vshrl.u32 %v830, 23
        %v832 = vsub.s32 %v831, 127
        %v833 = vand.u32 2147483647, %v708
        %v834 = vand.u32 %v833, 8388607
        %v835 = vor.u32 %v834, 8388608
        %v836 = vsub.s32 0, %v835
        %v837 = vadd.s32 %v832, 1
        %vm838 = vcmp.gt.s32.totalorder %v837, 0
        %v839 = vsel %vm838, %v837, 0
        %v840 = vshrl.u32 %v839, 5
        %v841 = vand.u32 %v839, 31
        %v842 = vsub.s32 32, %v841
        %v843 = vshrl.u32 683565275, %v842
        %v844 = vshll.u32 683565275, %v841
        %v845 = vshrl.u32 2475754826, %v842
        %v846 = vor.u32 %v844, %v845
        %v847 = vshll.u32 2475754826, %v841
        %v848 = vshrl.u32 2131351028, %v842
        %v849 = vor.u32 %v847, %v848
        %v850 = vshll.u32 2131351028, %v841
        %v851 = vshrl.u32 2102212464, %v842
        %v852 = vor.u32 %v850, %v851
        %v853 = vshll.u32 2102212464, %v841
        %v854 = vshrl.u32 920167782, %v842
        %v855 = vor.u32 %v853, %v854
        %v856 = vshll.u32 920167782, %v841
        %v857 = vshrl.u32 1326507024, %v842
        %v858 = vor.u32 %v856, %v857
        %vm859 = vcmp.lt.s32.totalorder %v840, 1
        %vm860 = vcmp.lt.s32.totalorder %v840, 2
        %vm861 = vcmp.lt.s32.totalorder %v840, 3
        %vm862 = vcmp.lt.s32.totalorder %v840, 4
        %v863 = vsel %vm859, %v843, %v846
        %v864 = vsel %vm862, %v852, 2102212464
        %v865 = vsel %vm861, %v849, %v864
        %v866 = vsel %vm860, %v863, %v865
        %v867 = vsel %vm859, %v846, %v849
        %v868 = vsel %vm862, %v855, 920167782
        %v869 = vsel %vm861, %v852, %v868
        %v870 = vsel %vm860, %v867, %v869
        %v871 = vsel %vm859, %v849, %v852
        %v872 = vsel %vm862, %v858, 1326507024
        %v873 = vsel %vm861, %v855, %v872
        %v874 = vsel %vm860, %v871, %v873
        %v875 = vshll.u32 %v835, 8
        %v876 = vmul.u32.u64.compose %v875, %v874
        %v877 = vextract.low.u32 %v876
        %v878 = vextract.high.u32 %v876
        %v879 = vmul.u32.u64.compose %v875, %v870
        %v880 = vextract.low.u32 %v879
        %v881 = vextract.high.u32 %v879
        %v882 = vmul.u32 %v875, %v866
        %v883 = vadd.s32 %v878, %v880
        %vm884 = vc.u32 %v878, %v880
        %v885 = vadd.s32 %v881, 1
        %v886 = vsel %vm884, %v885, %v881
        %v887 = vadd.s32 %v882, %v886
        %v888 = vadd.s32 %v887, 536870912
        %v889 = vshrl.u32 %v888, 30
        %v890 = vshll.u32 %v889, 30
        %v891 = vsub.s32 %v887, %v890
        %vm892 = vcmp.lt.s32.totalorder %v891, 0
        %v893 = vsub.s32 0, %v891
        %v894 = vsel %vm892, %v893, %v891
        %v895 = vclz %v894
        %v896 = vsub.s32 %v895, 2
        %vm897 = vcmp.gt.s32.totalorder 0, %v896
        %v898 = vsel %vm897, 0, %v896
        %v899 = vsub.s32 32, %v898
        %v900 = vshll.u32 %v891, %v898
        %v901 = vshrl.u32 %v883, %v899
        %v902 = vor.u32 %v900, %v901
        %v903 = vsub.s32 4294967266, %v898
        %v904 = vadd.s32 %v903, 127
        %v905 = vshll.u32 %v904, 23
        %v906 = vor.u32 4788187, %v905
        %v907 = vand.u32 2147483647, %v906
        %v909 = vcvt.s32.f32 %v902
        %v910 = vmul.f32 %v909, %v907
        %v911 = vxor.u32 %v910, 2147483648
        %v912 = vsel %vm829, %v911, %v910
        %v913 = vsub.s32 4, %v889
        %v914 = vsel %vm829, %v913, %v889
        %v915 = vsel %vm828, %v708, %v912
        %v916 = vsel %vm828, 0, %v914
        %v917 = vcosq.f32.pop %v915
        %v918 = vsinq.f32.pop %v915
        %vm919 = vweird.f32 %v708
        %v920 = vadd.s32 %v916, 3
        %v921 = vand.u32 %v920, 3
        %vm922 = vcmp.lt.s32.totalorder %v921, 2
        %vm923 = vcmp.eq.s32.totalorder %v921, 0
        %v924 = vxor.u32 %v918, 2147483648
        %v925 = vsel %vm923, %v917, %v924
        %vm926 = vcmp.eq.s32.totalorder %v921, 2
        %v927 = vxor.u32 %v917, 2147483648
        %v928 = vsel %vm926, %v927, %v918
        %v929 = vsel %vm922, %v925, %v928
        %v930 = vsel %vm919, nan, %v929
        %v931 = vand.u32 2147483647, %v709
        %vm932 = vcmp.le.f32.partialorder %v931, 0.7853982
        %vm933 = vcmp.lt.s32.totalorder %v709, 0
        %v934 = vand.u32 %v709, 2139095040
        %v935 = vshrl.u32 %v934, 23
        %v936 = vsub.s32 %v935, 127
        %v937 = vand.u32 2147483647, %v709
        %v938 = vand.u32 %v937, 8388607
        %v939 = vor.u32 %v938, 8388608
        %v940 = vsub.s32 0, %v939
        %v941 = vadd.s32 %v936, 1
        %vm942 = vcmp.gt.s32.totalorder %v941, 0
        %v943 = vsel %vm942, %v941, 0
        %v944 = vshrl.u32 %v943, 5
        %v945 = vand.u32 %v943, 31
        %v946 = vsub.s32 32, %v945
        %v947 = vshrl.u32 683565275, %v946
        %v948 = vshll.u32 683565275, %v945
        %v949 = vshrl.u32 2475754826, %v946
        %v950 = vor.u32 %v948, %v949
        %v951 = vshll.u32 2475754826, %v945
        %v952 = vshrl.u32 2131351028, %v946
        %v953 = vor.u32 %v951, %v952
        %v954 = vshll.u32 2131351028, %v945
        %v955 = vshrl.u32 2102212464, %v946
        %v956 = vor.u32 %v954, %v955
        %v957 = vshll.u32 2102212464, %v945
        %v958 = vshrl.u32 920167782, %v946
        %v959 = vor.u32 %v957, %v958
        %v960 = vshll.u32 920167782, %v945
        %v961 = vshrl.u32 1326507024, %v946
        %v962 = vor.u32 %v960, %v961
        %vm963 = vcmp.lt.s32.totalorder %v944, 1
        %vm964 = vcmp.lt.s32.totalorder %v944, 2
        %vm965 = vcmp.lt.s32.totalorder %v944, 3
        %vm966 = vcmp.lt.s32.totalorder %v944, 4
        %v967 = vsel %vm963, %v947, %v950
        %v968 = vsel %vm966, %v956, 2102212464
        %v969 = vsel %vm965, %v953, %v968
        %v970 = vsel %vm964, %v967, %v969
        %v971 = vsel %vm963, %v950, %v953
        %v972 = vsel %vm966, %v959, 920167782
        %v973 = vsel %vm965, %v956, %v972
        %v974 = vsel %vm964, %v971, %v973
        %v975 = vsel %vm963, %v953, %v956
        %v976 = vsel %vm966, %v962, 1326507024
        %v977 = vsel %vm965, %v959, %v976
        %v978 = vsel %vm964, %v975, %v977
        %v979 = vshll.u32 %v939, 8
        %v980 = vmul.u32.u64.compose %v979, %v978
        %v981 = vextract.low.u32 %v980
        %v982 = vextract.high.u32 %v980
        %v983 = vmul.u32.u64.compose %v979, %v974
        %v984 = vextract.low.u32 %v983
        %v985 = vextract.high.u32 %v983
        %v986 = vmul.u32 %v979, %v970
        %v987 = vadd.s32 %v982, %v984
        %vm988 = vc.u32 %v982, %v984
        %v989 = vadd.s32 %v985, 1
        %v990 = vsel %vm988, %v989, %v985
        %v991 = vadd.s32 %v986, %v990
        %v992 = vadd.s32 %v991, 536870912
        %v993 = vshrl.u32 %v992, 30
        %v994 = vshll.u32 %v993, 30
        %v995 = vsub.s32 %v991, %v994
        %vm996 = vcmp.lt.s32.totalorder %v995, 0
        %v997 = vsub.s32 0, %v995
        %v998 = vsel %vm996, %v997, %v995
        %v999 = vclz %v998
        %v1000 = vsub.s32 %v999, 2
        %vm1001 = vcmp.gt.s32.totalorder 0, %v1000
        %v1002 = vsel %vm1001, 0, %v1000
        %v1003 = vsub.s32 32, %v1002
        %v1004 = vshll.u32 %v995, %v1002
        %v1005 = vshrl.u32 %v987, %v1003
        %v1006 = vor.u32 %v1004, %v1005
        %v1007 = vsub.s32 4294967266, %v1002
        %v1008 = vadd.s32 %v1007, 127
        %v1009 = vshll.u32 %v1008, 23
        %v1010 = vor.u32 4788187, %v1009
        %v1011 = vand.u32 2147483647, %v1010
        %v1013 = vcvt.s32.f32 %v1006
        %v1014 = vmul.f32 %v1013, %v1011
        %v1015 = vxor.u32 %v1014, 2147483648
        %v1016 = vsel %vm933, %v1015, %v1014
        %v1017 = vsub.s32 4, %v993
        %v1018 = vsel %vm933, %v1017, %v993
        %v1019 = vsel %vm932, %v709, %v1016
        %v1020 = vsel %vm932, 0, %v1018
        %v1021 = vcosq.f32.pop %v1019
        %v1022 = vsinq.f32.pop %v1019
        %vm1023 = vweird.f32 %v709
        %v1024 = vadd.s32 %v1020, 3
        %v1025 = vand.u32 %v1024, 3
        %vm1026 = vcmp.lt.s32.totalorder %v1025, 2
        %vm1027 = vcmp.eq.s32.totalorder %v1025, 0
        %v1028 = vxor.u32 %v1022, 2147483648
        %v1029 = vsel %vm1027, %v1021, %v1028
        %vm1030 = vcmp.eq.s32.totalorder %v1025, 2
        %v1031 = vxor.u32 %v1021, 2147483648
        %v1032 = vsel %vm1030, %v1031, %v1022
        %v1033 = vsel %vm1026, %v1029, %v1032
        %v1034 = vsel %vm1023, nan, %v1033
        %v1035 = vand.u32 2147483647, %v710
        %vm1036 = vcmp.le.f32.partialorder %v1035, 0.7853982
        %vm1037 = vcmp.lt.s32.totalorder %v710, 0
        %v1038 = vand.u32 %v710, 2139095040
        %v1039 = vshrl.u32 %v1038, 23
        %v1040 = vsub.s32 %v1039, 127
        %v1041 = vand.u32 2147483647, %v710
        %v1042 = vand.u32 %v1041, 8388607
        %v1043 = vor.u32 %v1042, 8388608
        %v1044 = vsub.s32 0, %v1043
        %v1045 = vadd.s32 %v1040, 1
        %vm1046 = vcmp.gt.s32.totalorder %v1045, 0
        %v1047 = vsel %vm1046, %v1045, 0
        %v1048 = vshrl.u32 %v1047, 5
        %v1049 = vand.u32 %v1047, 31
        %v1050 = vsub.s32 32, %v1049
        %v1051 = vshrl.u32 683565275, %v1050
        %v1052 = vshll.u32 683565275, %v1049
        %v1053 = vshrl.u32 2475754826, %v1050
        %v1054 = vor.u32 %v1052, %v1053
        %v1055 = vshll.u32 2475754826, %v1049
        %v1056 = vshrl.u32 2131351028, %v1050
        %v1057 = vor.u32 %v1055, %v1056
        %v1058 = vshll.u32 2131351028, %v1049
        %v1059 = vshrl.u32 2102212464, %v1050
        %v1060 = vor.u32 %v1058, %v1059
        %v1061 = vshll.u32 2102212464, %v1049
        %v1062 = vshrl.u32 920167782, %v1050
        %v1063 = vor.u32 %v1061, %v1062
        %v1064 = vshll.u32 920167782, %v1049
        %v1065 = vshrl.u32 1326507024, %v1050
        %v1066 = vor.u32 %v1064, %v1065
        %vm1067 = vcmp.lt.s32.totalorder %v1048, 1
        %vm1068 = vcmp.lt.s32.totalorder %v1048, 2
        %vm1069 = vcmp.lt.s32.totalorder %v1048, 3
        %vm1070 = vcmp.lt.s32.totalorder %v1048, 4
        %v1071 = vsel %vm1067, %v1051, %v1054
        %v1072 = vsel %vm1070, %v1060, 2102212464
        %v1073 = vsel %vm1069, %v1057, %v1072
        %v1074 = vsel %vm1068, %v1071, %v1073
        %v1075 = vsel %vm1067, %v1054, %v1057
        %v1076 = vsel %vm1070, %v1063, 920167782
        %v1077 = vsel %vm1069, %v1060, %v1076
        %v1078 = vsel %vm1068, %v1075, %v1077
        %v1079 = vsel %vm1067, %v1057, %v1060
        %v1080 = vsel %vm1070, %v1066, 1326507024
        %v1081 = vsel %vm1069, %v1063, %v1080
        %v1082 = vsel %vm1068, %v1079, %v1081
        %v1083 = vshll.u32 %v1043, 8
        %v1084 = vmul.u32.u64.compose %v1083, %v1082
        %v1085 = vextract.low.u32 %v1084
        %v1086 = vextract.high.u32 %v1084
        %v1087 = vmul.u32.u64.compose %v1083, %v1078
        %v1088 = vextract.low.u32 %v1087
        %v1089 = vextract.high.u32 %v1087
        %v1090 = vmul.u32 %v1083, %v1074
        %v1091 = vadd.s32 %v1086, %v1088
        %vm1092 = vc.u32 %v1086, %v1088
        %v1093 = vadd.s32 %v1089, 1
        %v1094 = vsel %vm1092, %v1093, %v1089
        %v1095 = vadd.s32 %v1090, %v1094
        %v1096 = vadd.s32 %v1095, 536870912
        %v1097 = vshrl.u32 %v1096, 30
        %v1098 = vshll.u32 %v1097, 30
        %v1099 = vsub.s32 %v1095, %v1098
        %vm1100 = vcmp.lt.s32.totalorder %v1099, 0
        %v1101 = vsub.s32 0, %v1099
        %v1102 = vsel %vm1100, %v1101, %v1099
        %v1103 = vclz %v1102
        %v1104 = vsub.s32 %v1103, 2
        %vm1105 = vcmp.gt.s32.totalorder 0, %v1104
        %v1106 = vsel %vm1105, 0, %v1104
        %v1107 = vsub.s32 32, %v1106
        %v1108 = vshll.u32 %v1099, %v1106
        %v1109 = vshrl.u32 %v1091, %v1107
        %v1110 = vor.u32 %v1108, %v1109
        %v1111 = vsub.s32 4294967266, %v1106
        %v1112 = vadd.s32 %v1111, 127
        %v1113 = vshll.u32 %v1112, 23
        %v1114 = vor.u32 4788187, %v1113
        %v1115 = vand.u32 2147483647, %v1114
        %v1117 = vcvt.s32.f32 %v1110
        %v1118 = vmul.f32 %v1117, %v1115
        %v1119 = vxor.u32 %v1118, 2147483648
        %v1120 = vsel %vm1037, %v1119, %v1118
        %v1121 = vsub.s32 4, %v1097
        %v1122 = vsel %vm1037, %v1121, %v1097
        %v1123 = vsel %vm1036, %v710, %v1120
        %v1124 = vsel %vm1036, 0, %v1122
        %v1125 = vcosq.f32.pop %v1123
        %v1126 = vsinq.f32.pop %v1123
        %vm1127 = vweird.f32 %v710
        %v1128 = vadd.s32 %v1124, 3
        %v1129 = vand.u32 %v1128, 3
        %vm1130 = vcmp.lt.s32.totalorder %v1129, 2
        %vm1131 = vcmp.eq.s32.totalorder %v1129, 0
        %v1132 = vxor.u32 %v1126, 2147483648
        %v1133 = vsel %vm1131, %v1125, %v1132
        %vm1134 = vcmp.eq.s32.totalorder %v1129, 2
        %v1135 = vxor.u32 %v1125, 2147483648
        %v1136 = vsel %vm1134, %v1135, %v1126
        %v1137 = vsel %vm1130, %v1133, %v1136
        %v1138 = vsel %vm1127, nan, %v1137
        %v1139 = vand.u32 2147483647, %v711
        %vm1140 = vcmp.le.f32.partialorder %v1139, 0.7853982
        %vm1141 = vcmp.lt.s32.totalorder %v711, 0
        %v1142 = vand.u32 %v711, 2139095040
        %v1143 = vshrl.u32 %v1142, 23
        %v1144 = vsub.s32 %v1143, 127
        %v1145 = vand.u32 2147483647, %v711
        %v1146 = vand.u32 %v1145, 8388607
        %v1147 = vor.u32 %v1146, 8388608
        %v1148 = vsub.s32 0, %v1147
        %v1149 = vadd.s32 %v1144, 1
        %vm1150 = vcmp.gt.s32.totalorder %v1149, 0
        %v1151 = vsel %vm1150, %v1149, 0
        %v1152 = vshrl.u32 %v1151, 5
        %v1153 = vand.u32 %v1151, 31
        %v1154 = vsub.s32 32, %v1153
        %v1155 = vshrl.u32 683565275, %v1154
        %v1156 = vshll.u32 683565275, %v1153
        %v1157 = vshrl.u32 2475754826, %v1154
        %v1158 = vor.u32 %v1156, %v1157
        %v1159 = vshll.u32 2475754826, %v1153
        %v1160 = vshrl.u32 2131351028, %v1154
        %v1161 = vor.u32 %v1159, %v1160
        %v1162 = vshll.u32 2131351028, %v1153
        %v1163 = vshrl.u32 2102212464, %v1154
        %v1164 = vor.u32 %v1162, %v1163
        %v1165 = vshll.u32 2102212464, %v1153
        %v1166 = vshrl.u32 920167782, %v1154
        %v1167 = vor.u32 %v1165, %v1166
        %v1168 = vshll.u32 920167782, %v1153
        %v1169 = vshrl.u32 1326507024, %v1154
        %v1170 = vor.u32 %v1168, %v1169
        %vm1171 = vcmp.lt.s32.totalorder %v1152, 1
        %vm1172 = vcmp.lt.s32.totalorder %v1152, 2
        %vm1173 = vcmp.lt.s32.totalorder %v1152, 3
        %vm1174 = vcmp.lt.s32.totalorder %v1152, 4
        %v1175 = vsel %vm1171, %v1155, %v1158
        %v1176 = vsel %vm1174, %v1164, 2102212464
        %v1177 = vsel %vm1173, %v1161, %v1176
        %v1178 = vsel %vm1172, %v1175, %v1177
        %v1179 = vsel %vm1171, %v1158, %v1161
        %v1180 = vsel %vm1174, %v1167, 920167782
        %v1181 = vsel %vm1173, %v1164, %v1180
        %v1182 = vsel %vm1172, %v1179, %v1181
        %v1183 = vsel %vm1171, %v1161, %v1164
        %v1184 = vsel %vm1174, %v1170, 1326507024
        %v1185 = vsel %vm1173, %v1167, %v1184
        %v1186 = vsel %vm1172, %v1183, %v1185
        %v1187 = vshll.u32 %v1147, 8
        %v1188 = vmul.u32.u64.compose %v1187, %v1186
        %v1189 = vextract.low.u32 %v1188
        %v1190 = vextract.high.u32 %v1188
        %v1191 = vmul.u32.u64.compose %v1187, %v1182
        %v1192 = vextract.low.u32 %v1191
        %v1193 = vextract.high.u32 %v1191
        %v1194 = vmul.u32 %v1187, %v1178
        %v1195 = vadd.s32 %v1190, %v1192
        %vm1196 = vc.u32 %v1190, %v1192
        %v1197 = vadd.s32 %v1193, 1
        %v1198 = vsel %vm1196, %v1197, %v1193
        %v1199 = vadd.s32 %v1194, %v1198
        %v1200 = vadd.s32 %v1199, 536870912
        %v1201 = vshrl.u32 %v1200, 30
        %v1202 = vshll.u32 %v1201, 30
        %v1203 = vsub.s32 %v1199, %v1202
        %vm1204 = vcmp.lt.s32.totalorder %v1203, 0
        %v1205 = vsub.s32 0, %v1203
        %v1206 = vsel %vm1204, %v1205, %v1203
        %v1207 = vclz %v1206
        %v1208 = vsub.s32 %v1207, 2
        %vm1209 = vcmp.gt.s32.totalorder 0, %v1208
        %v1210 = vsel %vm1209, 0, %v1208
        %v1211 = vsub.s32 32, %v1210
        %v1212 = vshll.u32 %v1203, %v1210
        %v1213 = vshrl.u32 %v1195, %v1211
        %v1214 = vor.u32 %v1212, %v1213
        %v1215 = vsub.s32 4294967266, %v1210
        %v1216 = vadd.s32 %v1215, 127
        %v1217 = vshll.u32 %v1216, 23
        %v1218 = vor.u32 4788187, %v1217
        %v1219 = vand.u32 2147483647, %v1218
        %v1221 = vcvt.s32.f32 %v1214
        %v1222 = vmul.f32 %v1221, %v1219
        %v1223 = vxor.u32 %v1222, 2147483648
        %v1224 = vsel %vm1141, %v1223, %v1222
        %v1225 = vsub.s32 4, %v1201
        %v1226 = vsel %vm1141, %v1225, %v1201
        %v1227 = vsel %vm1140, %v711, %v1224
        %v1228 = vsel %vm1140, 0, %v1226
        %v1229 = vcosq.f32.pop %v1227
        %v1230 = vsinq.f32.pop %v1227
        %vm1231 = vweird.f32 %v711
        %v1232 = vadd.s32 %v1228, 3
        %v1233 = vand.u32 %v1232, 3
        %vm1234 = vcmp.lt.s32.totalorder %v1233, 2
        %vm1235 = vcmp.eq.s32.totalorder %v1233, 0
        %v1236 = vxor.u32 %v1230, 2147483648
        %v1237 = vsel %vm1235, %v1229, %v1236
        %vm1238 = vcmp.eq.s32.totalorder %v1233, 2
        %v1239 = vxor.u32 %v1229, 2147483648
        %v1240 = vsel %vm1238, %v1239, %v1230
        %v1241 = vsel %vm1234, %v1237, %v1240
        %v1242 = vsel %vm1231, nan, %v1241
        %v1243 = vand.u32 2147483647, %v712
        %vm1244 = vcmp.le.f32.partialorder %v1243, 0.7853982
        %vm1245 = vcmp.lt.s32.totalorder %v712, 0
        %v1246 = vand.u32 %v712, 2139095040
        %v1247 = vshrl.u32 %v1246, 23
        %v1248 = vsub.s32 %v1247, 127
        %v1249 = vand.u32 2147483647, %v712
        %v1250 = vand.u32 %v1249, 8388607
        %v1251 = vor.u32 %v1250, 8388608
        %v1252 = vsub.s32 0, %v1251
        %v1253 = vadd.s32 %v1248, 1
        %vm1254 = vcmp.gt.s32.totalorder %v1253, 0
        %v1255 = vsel %vm1254, %v1253, 0
        %v1256 = vshrl.u32 %v1255, 5
        %v1257 = vand.u32 %v1255, 31
        %v1258 = vsub.s32 32, %v1257
        %v1259 = vshrl.u32 683565275, %v1258
        %v1260 = vshll.u32 683565275, %v1257
        %v1261 = vshrl.u32 2475754826, %v1258
        %v1262 = vor.u32 %v1260, %v1261
        %v1263 = vshll.u32 2475754826, %v1257
        %v1264 = vshrl.u32 2131351028, %v1258
        %v1265 = vor.u32 %v1263, %v1264
        %v1266 = vshll.u32 2131351028, %v1257
        %v1267 = vshrl.u32 2102212464, %v1258
        %v1268 = vor.u32 %v1266, %v1267
        %v1269 = vshll.u32 2102212464, %v1257
        %v1270 = vshrl.u32 920167782, %v1258
        %v1271 = vor.u32 %v1269, %v1270
        %v1272 = vshll.u32 920167782, %v1257
        %v1273 = vshrl.u32 1326507024, %v1258
        %v1274 = vor.u32 %v1272, %v1273
        %vm1275 = vcmp.lt.s32.totalorder %v1256, 1
        %vm1276 = vcmp.lt.s32.totalorder %v1256, 2
        %vm1277 = vcmp.lt.s32.totalorder %v1256, 3
        %vm1278 = vcmp.lt.s32.totalorder %v1256, 4
        %v1279 = vsel %vm1275, %v1259, %v1262
        %v1280 = vsel %vm1278, %v1268, 2102212464
        %v1281 = vsel %vm1277, %v1265, %v1280
        %v1282 = vsel %vm1276, %v1279, %v1281
        %v1283 = vsel %vm1275, %v1262, %v1265
        %v1284 = vsel %vm1278, %v1271, 920167782
        %v1285 = vsel %vm1277, %v1268, %v1284
        %v1286 = vsel %vm1276, %v1283, %v1285
        %v1287 = vsel %vm1275, %v1265, %v1268
        %v1288 = vsel %vm1278, %v1274, 1326507024
        %v1289 = vsel %vm1277, %v1271, %v1288
        %v1290 = vsel %vm1276, %v1287, %v1289
        %v1291 = vshll.u32 %v1251, 8
        %v1292 = vmul.u32.u64.compose %v1291, %v1290
        %v1293 = vextract.low.u32 %v1292
        %v1294 = vextract.high.u32 %v1292
        %v1295 = vmul.u32.u64.compose %v1291, %v1286
        %v1296 = vextract.low.u32 %v1295
        %v1297 = vextract.high.u32 %v1295
        %v1298 = vmul.u32 %v1291, %v1282
        %v1299 = vadd.s32 %v1294, %v1296
        %vm1300 = vc.u32 %v1294, %v1296
        %v1301 = vadd.s32 %v1297, 1
        %v1302 = vsel %vm1300, %v1301, %v1297
        %v1303 = vadd.s32 %v1298, %v1302
        %v1304 = vadd.s32 %v1303, 536870912
        %v1305 = vshrl.u32 %v1304, 30
        %v1306 = vshll.u32 %v1305, 30
        %v1307 = vsub.s32 %v1303, %v1306
        %vm1308 = vcmp.lt.s32.totalorder %v1307, 0
        %v1309 = vsub.s32 0, %v1307
        %v1310 = vsel %vm1308, %v1309, %v1307
        %v1311 = vclz %v1310
        %v1312 = vsub.s32 %v1311, 2
        %vm1313 = vcmp.gt.s32.totalorder 0, %v1312
        %v1314 = vsel %vm1313, 0, %v1312
        %v1315 = vsub.s32 32, %v1314
        %v1316 = vshll.u32 %v1307, %v1314
        %v1317 = vshrl.u32 %v1299, %v1315
        %v1318 = vor.u32 %v1316, %v1317
        %v1319 = vsub.s32 4294967266, %v1314
        %v1320 = vadd.s32 %v1319, 127
        %v1321 = vshll.u32 %v1320, 23
        %v1322 = vor.u32 4788187, %v1321
        %v1323 = vand.u32 2147483647, %v1322
        %v1325 = vcvt.s32.f32 %v1318
        %v1326 = vmul.f32 %v1325, %v1323
        %v1327 = vxor.u32 %v1326, 2147483648
        %v1328 = vsel %vm1245, %v1327, %v1326
        %v1329 = vsub.s32 4, %v1305
        %v1330 = vsel %vm1245, %v1329, %v1305
        %v1331 = vsel %vm1244, %v712, %v1328
        %v1332 = vsel %vm1244, 0, %v1330
        %v1333 = vcosq.f32.pop %v1331
        %v1334 = vsinq.f32.pop %v1331
        %vm1335 = vweird.f32 %v712
        %v1336 = vadd.s32 %v1332, 3
        %v1337 = vand.u32 %v1336, 3
        %vm1338 = vcmp.lt.s32.totalorder %v1337, 2
        %vm1339 = vcmp.eq.s32.totalorder %v1337, 0
        %v1340 = vxor.u32 %v1334, 2147483648
        %v1341 = vsel %vm1339, %v1333, %v1340
        %vm1342 = vcmp.eq.s32.totalorder %v1337, 2
        %v1343 = vxor.u32 %v1333, 2147483648
        %v1344 = vsel %vm1342, %v1343, %v1334
        %v1345 = vsel %vm1338, %v1341, %v1344
        %v1346 = vsel %vm1335, nan, %v1345
        %v1347 = vand.u32 2147483647, %v713
        %vm1348 = vcmp.le.f32.partialorder %v1347, 0.7853982
        %vm1349 = vcmp.lt.s32.totalorder %v713, 0
        %v1350 = vand.u32 %v713, 2139095040
        %v1351 = vshrl.u32 %v1350, 23
        %v1352 = vsub.s32 %v1351, 127
        %v1353 = vand.u32 2147483647, %v713
        %v1354 = vand.u32 %v1353, 8388607
        %v1355 = vor.u32 %v1354, 8388608
        %v1356 = vsub.s32 0, %v1355
        %v1357 = vadd.s32 %v1352, 1
        %vm1358 = vcmp.gt.s32.totalorder %v1357, 0
        %v1359 = vsel %vm1358, %v1357, 0
        %v1360 = vshrl.u32 %v1359, 5
        %v1361 = vand.u32 %v1359, 31
        %v1362 = vsub.s32 32, %v1361
        %v1363 = vshrl.u32 683565275, %v1362
        %v1364 = vshll.u32 683565275, %v1361
        %v1365 = vshrl.u32 2475754826, %v1362
        %v1366 = vor.u32 %v1364, %v1365
        %v1367 = vshll.u32 2475754826, %v1361
        %v1368 = vshrl.u32 2131351028, %v1362
        %v1369 = vor.u32 %v1367, %v1368
        %v1370 = vshll.u32 2131351028, %v1361
        %v1371 = vshrl.u32 2102212464, %v1362
        %v1372 = vor.u32 %v1370, %v1371
        %v1373 = vshll.u32 2102212464, %v1361
        %v1374 = vshrl.u32 920167782, %v1362
        %v1375 = vor.u32 %v1373, %v1374
        %v1376 = vshll.u32 920167782, %v1361
        %v1377 = vshrl.u32 1326507024, %v1362
        %v1378 = vor.u32 %v1376, %v1377
        %vm1379 = vcmp.lt.s32.totalorder %v1360, 1
        %vm1380 = vcmp.lt.s32.totalorder %v1360, 2
        %vm1381 = vcmp.lt.s32.totalorder %v1360, 3
        %vm1382 = vcmp.lt.s32.totalorder %v1360, 4
        %v1383 = vsel %vm1379, %v1363, %v1366
        %v1384 = vsel %vm1382, %v1372, 2102212464
        %v1385 = vsel %vm1381, %v1369, %v1384
        %v1386 = vsel %vm1380, %v1383, %v1385
        %v1387 = vsel %vm1379, %v1366, %v1369
        %v1388 = vsel %vm1382, %v1375, 920167782
        %v1389 = vsel %vm1381, %v1372, %v1388
        %v1390 = vsel %vm1380, %v1387, %v1389
        %v1391 = vsel %vm1379, %v1369, %v1372
        %v1392 = vsel %vm1382, %v1378, 1326507024
        %v1393 = vsel %vm1381, %v1375, %v1392
        %v1394 = vsel %vm1380, %v1391, %v1393
        %v1395 = vshll.u32 %v1355, 8
        %v1396 = vmul.u32.u64.compose %v1395, %v1394
        %v1397 = vextract.low.u32 %v1396
        %v1398 = vextract.high.u32 %v1396
        %v1399 = vmul.u32.u64.compose %v1395, %v1390
        %v1400 = vextract.low.u32 %v1399
        %v1401 = vextract.high.u32 %v1399
        %v1402 = vmul.u32 %v1395, %v1386
        %v1403 = vadd.s32 %v1398, %v1400
        %vm1404 = vc.u32 %v1398, %v1400
        %v1405 = vadd.s32 %v1401, 1
        %v1406 = vsel %vm1404, %v1405, %v1401
        %v1407 = vadd.s32 %v1402, %v1406
        %v1408 = vadd.s32 %v1407, 536870912
        %v1409 = vshrl.u32 %v1408, 30
        %v1410 = vshll.u32 %v1409, 30
        %v1411 = vsub.s32 %v1407, %v1410
        %vm1412 = vcmp.lt.s32.totalorder %v1411, 0
        %v1413 = vsub.s32 0, %v1411
        %v1414 = vsel %vm1412, %v1413, %v1411
        %v1415 = vclz %v1414
        %v1416 = vsub.s32 %v1415, 2
        %vm1417 = vcmp.gt.s32.totalorder 0, %v1416
        %v1418 = vsel %vm1417, 0, %v1416
        %v1419 = vsub.s32 32, %v1418
        %v1420 = vshll.u32 %v1411, %v1418
        %v1421 = vshrl.u32 %v1403, %v1419
        %v1422 = vor.u32 %v1420, %v1421
        %v1423 = vsub.s32 4294967266, %v1418
        %v1424 = vadd.s32 %v1423, 127
        %v1425 = vshll.u32 %v1424, 23
        %v1426 = vor.u32 4788187, %v1425
        %v1427 = vand.u32 2147483647, %v1426
        %v1429 = vcvt.s32.f32 %v1422
        %v1430 = vmul.f32 %v1429, %v1427
        %v1431 = vxor.u32 %v1430, 2147483648
        %v1432 = vsel %vm1349, %v1431, %v1430
        %v1433 = vsub.s32 4, %v1409
        %v1434 = vsel %vm1349, %v1433, %v1409
        %v1435 = vsel %vm1348, %v713, %v1432
        %v1436 = vsel %vm1348, 0, %v1434
        %v1437 = vcosq.f32.pop %v1435
        %v1438 = vsinq.f32.pop %v1435
        %vm1439 = vweird.f32 %v713
        %v1440 = vadd.s32 %v1436, 3
        %v1441 = vand.u32 %v1440, 3
        %vm1442 = vcmp.lt.s32.totalorder %v1441, 2
        %vm1443 = vcmp.eq.s32.totalorder %v1441, 0
        %v1444 = vxor.u32 %v1438, 2147483648
        %v1445 = vsel %vm1443, %v1437, %v1444
        %vm1446 = vcmp.eq.s32.totalorder %v1441, 2
        %v1447 = vxor.u32 %v1437, 2147483648
        %v1448 = vsel %vm1446, %v1447, %v1438
        %v1449 = vsel %vm1442, %v1445, %v1448
        %v1450 = vsel %vm1439, nan, %v1449
        %v1451 = vand.u32 2147483647, %v714
        %vm1452 = vcmp.le.f32.partialorder %v1451, 0.7853982
        %vm1453 = vcmp.lt.s32.totalorder %v714, 0
        %v1454 = vand.u32 %v714, 2139095040
        %v1455 = vshrl.u32 %v1454, 23
        %v1456 = vsub.s32 %v1455, 127
        %v1457 = vand.u32 2147483647, %v714
        %v1458 = vand.u32 %v1457, 8388607
        %v1459 = vor.u32 %v1458, 8388608
        %v1460 = vsub.s32 0, %v1459
        %v1461 = vadd.s32 %v1456, 1
        %vm1462 = vcmp.gt.s32.totalorder %v1461, 0
        %v1463 = vsel %vm1462, %v1461, 0
        %v1464 = vshrl.u32 %v1463, 5
        %v1465 = vand.u32 %v1463, 31
        %v1466 = vsub.s32 32, %v1465
        %v1467 = vshrl.u32 683565275, %v1466
        %v1468 = vshll.u32 683565275, %v1465
        %v1469 = vshrl.u32 2475754826, %v1466
        %v1470 = vor.u32 %v1468, %v1469
        %v1471 = vshll.u32 2475754826, %v1465
        %v1472 = vshrl.u32 2131351028, %v1466
        %v1473 = vor.u32 %v1471, %v1472
        %v1474 = vshll.u32 2131351028, %v1465
        %v1475 = vshrl.u32 2102212464, %v1466
        %v1476 = vor.u32 %v1474, %v1475
        %v1477 = vshll.u32 2102212464, %v1465
        %v1478 = vshrl.u32 920167782, %v1466
        %v1479 = vor.u32 %v1477, %v1478
        %v1480 = vshll.u32 920167782, %v1465
        %v1481 = vshrl.u32 1326507024, %v1466
        %v1482 = vor.u32 %v1480, %v1481
        %vm1483 = vcmp.lt.s32.totalorder %v1464, 1
        %vm1484 = vcmp.lt.s32.totalorder %v1464, 2
        %vm1485 = vcmp.lt.s32.totalorder %v1464, 3
        %vm1486 = vcmp.lt.s32.totalorder %v1464, 4
        %v1487 = vsel %vm1483, %v1467, %v1470
        %v1488 = vsel %vm1486, %v1476, 2102212464
        %v1489 = vsel %vm1485, %v1473, %v1488
        %v1490 = vsel %vm1484, %v1487, %v1489
        %v1491 = vsel %vm1483, %v1470, %v1473
        %v1492 = vsel %vm1486, %v1479, 920167782
        %v1493 = vsel %vm1485, %v1476, %v1492
        %v1494 = vsel %vm1484, %v1491, %v1493
        %v1495 = vsel %vm1483, %v1473, %v1476
        %v1496 = vsel %vm1486, %v1482, 1326507024
        %v1497 = vsel %vm1485, %v1479, %v1496
        %v1498 = vsel %vm1484, %v1495, %v1497
        %v1499 = vshll.u32 %v1459, 8
        %v1500 = vmul.u32.u64.compose %v1499, %v1498
        %v1501 = vextract.low.u32 %v1500
        %v1502 = vextract.high.u32 %v1500
        %v1503 = vmul.u32.u64.compose %v1499, %v1494
        %v1504 = vextract.low.u32 %v1503
        %v1505 = vextract.high.u32 %v1503
        %v1506 = vmul.u32 %v1499, %v1490
        %v1507 = vadd.s32 %v1502, %v1504
        %vm1508 = vc.u32 %v1502, %v1504
        %v1509 = vadd.s32 %v1505, 1
        %v1510 = vsel %vm1508, %v1509, %v1505
        %v1511 = vadd.s32 %v1506, %v1510
        %v1512 = vadd.s32 %v1511, 536870912
        %v1513 = vshrl.u32 %v1512, 30
        %v1514 = vshll.u32 %v1513, 30
        %v1515 = vsub.s32 %v1511, %v1514
        %vm1516 = vcmp.lt.s32.totalorder %v1515, 0
        %v1517 = vsub.s32 0, %v1515
        %v1518 = vsel %vm1516, %v1517, %v1515
        %v1519 = vclz %v1518
        %v1520 = vsub.s32 %v1519, 2
        %vm1521 = vcmp.gt.s32.totalorder 0, %v1520
        %v1522 = vsel %vm1521, 0, %v1520
        %v1523 = vsub.s32 32, %v1522
        %v1524 = vshll.u32 %v1515, %v1522
        %v1525 = vshrl.u32 %v1507, %v1523
        %v1526 = vor.u32 %v1524, %v1525
        %v1527 = vsub.s32 4294967266, %v1522
        %v1528 = vadd.s32 %v1527, 127
        %v1529 = vshll.u32 %v1528, 23
        %v1530 = vor.u32 4788187, %v1529
        %v1531 = vand.u32 2147483647, %v1530
        %v1533 = vcvt.s32.f32 %v1526
        %v1534 = vmul.f32 %v1533, %v1531
        %v1535 = vxor.u32 %v1534, 2147483648
        %v1536 = vsel %vm1453, %v1535, %v1534
        %v1537 = vsub.s32 4, %v1513
        %v1538 = vsel %vm1453, %v1537, %v1513
        %v1539 = vsel %vm1452, %v714, %v1536
        %v1540 = vsel %vm1452, 0, %v1538
        %v1541 = vcosq.f32.pop %v1539
        %v1542 = vsinq.f32.pop %v1539
        %vm1543 = vweird.f32 %v714
        %v1544 = vadd.s32 %v1540, 3
        %v1545 = vand.u32 %v1544, 3
        %vm1546 = vcmp.lt.s32.totalorder %v1545, 2
        %vm1547 = vcmp.eq.s32.totalorder %v1545, 0
        %v1548 = vxor.u32 %v1542, 2147483648
        %v1549 = vsel %vm1547, %v1541, %v1548
        %vm1550 = vcmp.eq.s32.totalorder %v1545, 2
        %v1551 = vxor.u32 %v1541, 2147483648
        %v1552 = vsel %vm1550, %v1551, %v1542
        %v1553 = vsel %vm1546, %v1549, %v1552
        %v1554 = vsel %vm1543, nan, %v1553
        %v1555 = vand.u32 2147483647, %v715
        %vm1556 = vcmp.le.f32.partialorder %v1555, 0.7853982
        %vm1557 = vcmp.lt.s32.totalorder %v715, 0
        %v1558 = vand.u32 %v715, 2139095040
        %v1559 = vshrl.u32 %v1558, 23
        %v1560 = vsub.s32 %v1559, 127
        %v1561 = vand.u32 2147483647, %v715
        %v1562 = vand.u32 %v1561, 8388607
        %v1563 = vor.u32 %v1562, 8388608
        %v1564 = vsub.s32 0, %v1563
        %v1565 = vadd.s32 %v1560, 1
        %vm1566 = vcmp.gt.s32.totalorder %v1565, 0
        %v1567 = vsel %vm1566, %v1565, 0
        %v1568 = vshrl.u32 %v1567, 5
        %v1569 = vand.u32 %v1567, 31
        %v1570 = vsub.s32 32, %v1569
        %v1571 = vshrl.u32 683565275, %v1570
        %v1572 = vshll.u32 683565275, %v1569
        %v1573 = vshrl.u32 2475754826, %v1570
        %v1574 = vor.u32 %v1572, %v1573
        %v1575 = vshll.u32 2475754826, %v1569
        %v1576 = vshrl.u32 2131351028, %v1570
        %v1577 = vor.u32 %v1575, %v1576
        %v1578 = vshll.u32 2131351028, %v1569
        %v1579 = vshrl.u32 2102212464, %v1570
        %v1580 = vor.u32 %v1578, %v1579
        %v1581 = vshll.u32 2102212464, %v1569
        %v1582 = vshrl.u32 920167782, %v1570
        %v1583 = vor.u32 %v1581, %v1582
        %v1584 = vshll.u32 920167782, %v1569
        %v1585 = vshrl.u32 1326507024, %v1570
        %v1586 = vor.u32 %v1584, %v1585
        %vm1587 = vcmp.lt.s32.totalorder %v1568, 1
        %vm1588 = vcmp.lt.s32.totalorder %v1568, 2
        %vm1589 = vcmp.lt.s32.totalorder %v1568, 3
        %vm1590 = vcmp.lt.s32.totalorder %v1568, 4
        %v1591 = vsel %vm1587, %v1571, %v1574
        %v1592 = vsel %vm1590, %v1580, 2102212464
        %v1593 = vsel %vm1589, %v1577, %v1592
        %v1594 = vsel %vm1588, %v1591, %v1593
        %v1595 = vsel %vm1587, %v1574, %v1577
        %v1596 = vsel %vm1590, %v1583, 920167782
        %v1597 = vsel %vm1589, %v1580, %v1596
        %v1598 = vsel %vm1588, %v1595, %v1597
        %v1599 = vsel %vm1587, %v1577, %v1580
        %v1600 = vsel %vm1590, %v1586, 1326507024
        %v1601 = vsel %vm1589, %v1583, %v1600
        %v1602 = vsel %vm1588, %v1599, %v1601
        %v1603 = vshll.u32 %v1563, 8
        %v1604 = vmul.u32.u64.compose %v1603, %v1602
        %v1605 = vextract.low.u32 %v1604
        %v1606 = vextract.high.u32 %v1604
        %v1607 = vmul.u32.u64.compose %v1603, %v1598
        %v1608 = vextract.low.u32 %v1607
        %v1609 = vextract.high.u32 %v1607
        %v1610 = vmul.u32 %v1603, %v1594
        %v1611 = vadd.s32 %v1606, %v1608
        %vm1612 = vc.u32 %v1606, %v1608
        %v1613 = vadd.s32 %v1609, 1
        %v1614 = vsel %vm1612, %v1613, %v1609
        %v1615 = vadd.s32 %v1610, %v1614
        %v1616 = vadd.s32 %v1615, 536870912
        %v1617 = vshrl.u32 %v1616, 30
        %v1618 = vshll.u32 %v1617, 30
        %v1619 = vsub.s32 %v1615, %v1618
        %vm1620 = vcmp.lt.s32.totalorder %v1619, 0
        %v1621 = vsub.s32 0, %v1619
        %v1622 = vsel %vm1620, %v1621, %v1619
        %v1623 = vclz %v1622
        %v1624 = vsub.s32 %v1623, 2
        %vm1625 = vcmp.gt.s32.totalorder 0, %v1624
        %v1626 = vsel %vm1625, 0, %v1624
        %v1627 = vsub.s32 32, %v1626
        %v1628 = vshll.u32 %v1619, %v1626
        %v1629 = vshrl.u32 %v1611, %v1627
        %v1630 = vor.u32 %v1628, %v1629
        %v1631 = vsub.s32 4294967266, %v1626
        %v1632 = vadd.s32 %v1631, 127
        %v1633 = vshll.u32 %v1632, 23
        %v1634 = vor.u32 4788187, %v1633
        %v1635 = vand.u32 2147483647, %v1634
        %v1637 = vcvt.s32.f32 %v1630
        %v1638 = vmul.f32 %v1637, %v1635
        %v1639 = vxor.u32 %v1638, 2147483648
        %v1640 = vsel %vm1557, %v1639, %v1638
        %v1641 = vsub.s32 4, %v1617
        %v1642 = vsel %vm1557, %v1641, %v1617
        %v1643 = vsel %vm1556, %v715, %v1640
        %v1644 = vsel %vm1556, 0, %v1642
        %v1645 = vcosq.f32.pop %v1643
        %v1646 = vsinq.f32.pop %v1643
        %vm1647 = vweird.f32 %v715
        %v1648 = vadd.s32 %v1644, 3
        %v1649 = vand.u32 %v1648, 3
        %vm1650 = vcmp.lt.s32.totalorder %v1649, 2
        %vm1651 = vcmp.eq.s32.totalorder %v1649, 0
        %v1652 = vxor.u32 %v1646, 2147483648
        %v1653 = vsel %vm1651, %v1645, %v1652
        %vm1654 = vcmp.eq.s32.totalorder %v1649, 2
        %v1655 = vxor.u32 %v1645, 2147483648
        %v1656 = vsel %vm1654, %v1655, %v1646
        %v1657 = vsel %vm1650, %v1653, %v1656
        %v1658 = vsel %vm1647, nan, %v1657
        %v1659 = vand.u32 2147483647, %v716
        %vm1660 = vcmp.le.f32.partialorder %v1659, 0.7853982
        %vm1661 = vcmp.lt.s32.totalorder %v716, 0
        %v1662 = vand.u32 %v716, 2139095040
        %v1663 = vshrl.u32 %v1662, 23
        %v1664 = vsub.s32 %v1663, 127
        %v1665 = vand.u32 2147483647, %v716
        %v1666 = vand.u32 %v1665, 8388607
        %v1667 = vor.u32 %v1666, 8388608
        %v1668 = vsub.s32 0, %v1667
        %v1669 = vadd.s32 %v1664, 1
        %vm1670 = vcmp.gt.s32.totalorder %v1669, 0
        %v1671 = vsel %vm1670, %v1669, 0
        %v1672 = vshrl.u32 %v1671, 5
        %v1673 = vand.u32 %v1671, 31
        %v1674 = vsub.s32 32, %v1673
        %v1675 = vshrl.u32 683565275, %v1674
        %v1676 = vshll.u32 683565275, %v1673
        %v1677 = vshrl.u32 2475754826, %v1674
        %v1678 = vor.u32 %v1676, %v1677
        %v1679 = vshll.u32 2475754826, %v1673
        %v1680 = vshrl.u32 2131351028, %v1674
        %v1681 = vor.u32 %v1679, %v1680
        %v1682 = vshll.u32 2131351028, %v1673
        %v1683 = vshrl.u32 2102212464, %v1674
        %v1684 = vor.u32 %v1682, %v1683
        %v1685 = vshll.u32 2102212464, %v1673
        %v1686 = vshrl.u32 920167782, %v1674
        %v1687 = vor.u32 %v1685, %v1686
        %v1688 = vshll.u32 920167782, %v1673
        %v1689 = vshrl.u32 1326507024, %v1674
        %v1690 = vor.u32 %v1688, %v1689
        %vm1691 = vcmp.lt.s32.totalorder %v1672, 1
        %vm1692 = vcmp.lt.s32.totalorder %v1672, 2
        %vm1693 = vcmp.lt.s32.totalorder %v1672, 3
        %vm1694 = vcmp.lt.s32.totalorder %v1672, 4
        %v1695 = vsel %vm1691, %v1675, %v1678
        %v1696 = vsel %vm1694, %v1684, 2102212464
        %v1697 = vsel %vm1693, %v1681, %v1696
        %v1698 = vsel %vm1692, %v1695, %v1697
        %v1699 = vsel %vm1691, %v1678, %v1681
        %v1700 = vsel %vm1694, %v1687, 920167782
        %v1701 = vsel %vm1693, %v1684, %v1700
        %v1702 = vsel %vm1692, %v1699, %v1701
        %v1703 = vsel %vm1691, %v1681, %v1684
        %v1704 = vsel %vm1694, %v1690, 1326507024
        %v1705 = vsel %vm1693, %v1687, %v1704
        %v1706 = vsel %vm1692, %v1703, %v1705
        %v1707 = vshll.u32 %v1667, 8
        %v1708 = vmul.u32.u64.compose %v1707, %v1706
        %v1709 = vextract.low.u32 %v1708
        %v1710 = vextract.high.u32 %v1708
        %v1711 = vmul.u32.u64.compose %v1707, %v1702
        %v1712 = vextract.low.u32 %v1711
        %v1713 = vextract.high.u32 %v1711
        %v1714 = vmul.u32 %v1707, %v1698
        %v1715 = vadd.s32 %v1710, %v1712
        %vm1716 = vc.u32 %v1710, %v1712
        %v1717 = vadd.s32 %v1713, 1
        %v1718 = vsel %vm1716, %v1717, %v1713
        %v1719 = vadd.s32 %v1714, %v1718
        %v1720 = vadd.s32 %v1719, 536870912
        %v1721 = vshrl.u32 %v1720, 30
        %v1722 = vshll.u32 %v1721, 30
        %v1723 = vsub.s32 %v1719, %v1722
        %vm1724 = vcmp.lt.s32.totalorder %v1723, 0
        %v1725 = vsub.s32 0, %v1723
        %v1726 = vsel %vm1724, %v1725, %v1723
        %v1727 = vclz %v1726
        %v1728 = vsub.s32 %v1727, 2
        %vm1729 = vcmp.gt.s32.totalorder 0, %v1728
        %v1730 = vsel %vm1729, 0, %v1728
        %v1731 = vsub.s32 32, %v1730
        %v1732 = vshll.u32 %v1723, %v1730
        %v1733 = vshrl.u32 %v1715, %v1731
        %v1734 = vor.u32 %v1732, %v1733
        %v1735 = vsub.s32 4294967266, %v1730
        %v1736 = vadd.s32 %v1735, 127
        %v1737 = vshll.u32 %v1736, 23
        %v1738 = vor.u32 4788187, %v1737
        %v1739 = vand.u32 2147483647, %v1738
        %v1741 = vcvt.s32.f32 %v1734
        %v1742 = vmul.f32 %v1741, %v1739
        %v1743 = vxor.u32 %v1742, 2147483648
        %v1744 = vsel %vm1661, %v1743, %v1742
        %v1745 = vsub.s32 4, %v1721
        %v1746 = vsel %vm1661, %v1745, %v1721
        %v1747 = vsel %vm1660, %v716, %v1744
        %v1748 = vsel %vm1660, 0, %v1746
        %v1749 = vcosq.f32.pop %v1747
        %v1750 = vsinq.f32.pop %v1747
        %vm1751 = vweird.f32 %v716
        %v1752 = vadd.s32 %v1748, 3
        %v1753 = vand.u32 %v1752, 3
        %vm1754 = vcmp.lt.s32.totalorder %v1753, 2
        %vm1755 = vcmp.eq.s32.totalorder %v1753, 0
        %v1756 = vxor.u32 %v1750, 2147483648
        %v1757 = vsel %vm1755, %v1749, %v1756
        %vm1758 = vcmp.eq.s32.totalorder %v1753, 2
        %v1759 = vxor.u32 %v1749, 2147483648
        %v1760 = vsel %vm1758, %v1759, %v1750
        %v1761 = vsel %vm1754, %v1757, %v1760
        %v1762 = vsel %vm1751, nan, %v1761
        %v1763 = vand.u32 2147483647, %v717
        %vm1764 = vcmp.le.f32.partialorder %v1763, 0.7853982
        %vm1765 = vcmp.lt.s32.totalorder %v717, 0
        %v1766 = vand.u32 %v717, 2139095040
        %v1767 = vshrl.u32 %v1766, 23
        %v1768 = vsub.s32 %v1767, 127
        %v1769 = vand.u32 2147483647, %v717
        %v1770 = vand.u32 %v1769, 8388607
        %v1771 = vor.u32 %v1770, 8388608
        %v1772 = vsub.s32 0, %v1771
        %v1773 = vadd.s32 %v1768, 1
        %vm1774 = vcmp.gt.s32.totalorder %v1773, 0
        %v1775 = vsel %vm1774, %v1773, 0
        %v1776 = vshrl.u32 %v1775, 5
        %v1777 = vand.u32 %v1775, 31
        %v1778 = vsub.s32 32, %v1777
        %v1779 = vshrl.u32 683565275, %v1778
        %v1780 = vshll.u32 683565275, %v1777
        %v1781 = vshrl.u32 2475754826, %v1778
        %v1782 = vor.u32 %v1780, %v1781
        %v1783 = vshll.u32 2475754826, %v1777
        %v1784 = vshrl.u32 2131351028, %v1778
        %v1785 = vor.u32 %v1783, %v1784
        %v1786 = vshll.u32 2131351028, %v1777
        %v1787 = vshrl.u32 2102212464, %v1778
        %v1788 = vor.u32 %v1786, %v1787
        %v1789 = vshll.u32 2102212464, %v1777
        %v1790 = vshrl.u32 920167782, %v1778
        %v1791 = vor.u32 %v1789, %v1790
        %v1792 = vshll.u32 920167782, %v1777
        %v1793 = vshrl.u32 1326507024, %v1778
        %v1794 = vor.u32 %v1792, %v1793
        %vm1795 = vcmp.lt.s32.totalorder %v1776, 1
        %vm1796 = vcmp.lt.s32.totalorder %v1776, 2
        %vm1797 = vcmp.lt.s32.totalorder %v1776, 3
        %vm1798 = vcmp.lt.s32.totalorder %v1776, 4
        %v1799 = vsel %vm1795, %v1779, %v1782
        %v1800 = vsel %vm1798, %v1788, 2102212464
        %v1801 = vsel %vm1797, %v1785, %v1800
        %v1802 = vsel %vm1796, %v1799, %v1801
        %v1803 = vsel %vm1795, %v1782, %v1785
        %v1804 = vsel %vm1798, %v1791, 920167782
        %v1805 = vsel %vm1797, %v1788, %v1804
        %v1806 = vsel %vm1796, %v1803, %v1805
        %v1807 = vsel %vm1795, %v1785, %v1788
        %v1808 = vsel %vm1798, %v1794, 1326507024
        %v1809 = vsel %vm1797, %v1791, %v1808
        %v1810 = vsel %vm1796, %v1807, %v1809
        %v1811 = vshll.u32 %v1771, 8
        %v1812 = vmul.u32.u64.compose %v1811, %v1810
        %v1813 = vextract.low.u32 %v1812
        %v1814 = vextract.high.u32 %v1812
        %v1815 = vmul.u32.u64.compose %v1811, %v1806
        %v1816 = vextract.low.u32 %v1815
        %v1817 = vextract.high.u32 %v1815
        %v1818 = vmul.u32 %v1811, %v1802
        %v1819 = vadd.s32 %v1814, %v1816
        %vm1820 = vc.u32 %v1814, %v1816
        %v1821 = vadd.s32 %v1817, 1
        %v1822 = vsel %vm1820, %v1821, %v1817
        %v1823 = vadd.s32 %v1818, %v1822
        %v1824 = vadd.s32 %v1823, 536870912
        %v1825 = vshrl.u32 %v1824, 30
        %v1826 = vshll.u32 %v1825, 30
        %v1827 = vsub.s32 %v1823, %v1826
        %vm1828 = vcmp.lt.s32.totalorder %v1827, 0
        %v1829 = vsub.s32 0, %v1827
        %v1830 = vsel %vm1828, %v1829, %v1827
        %v1831 = vclz %v1830
        %v1832 = vsub.s32 %v1831, 2
        %vm1833 = vcmp.gt.s32.totalorder 0, %v1832
        %v1834 = vsel %vm1833, 0, %v1832
        %v1835 = vsub.s32 32, %v1834
        %v1836 = vshll.u32 %v1827, %v1834
        %v1837 = vshrl.u32 %v1819, %v1835
        %v1838 = vor.u32 %v1836, %v1837
        %v1839 = vsub.s32 4294967266, %v1834
        %v1840 = vadd.s32 %v1839, 127
        %v1841 = vshll.u32 %v1840, 23
        %v1842 = vor.u32 4788187, %v1841
        %v1843 = vand.u32 2147483647, %v1842
        %v1845 = vcvt.s32.f32 %v1838
        %v1846 = vmul.f32 %v1845, %v1843
        %v1847 = vxor.u32 %v1846, 2147483648
        %v1848 = vsel %vm1765, %v1847, %v1846
        %v1849 = vsub.s32 4, %v1825
        %v1850 = vsel %vm1765, %v1849, %v1825
        %v1851 = vsel %vm1764, %v717, %v1848
        %v1852 = vsel %vm1764, 0, %v1850
        %v1853 = vcosq.f32.pop %v1851
        %v1854 = vsinq.f32.pop %v1851
        %vm1855 = vweird.f32 %v717
        %v1856 = vadd.s32 %v1852, 3
        %v1857 = vand.u32 %v1856, 3
        %vm1858 = vcmp.lt.s32.totalorder %v1857, 2
        %vm1859 = vcmp.eq.s32.totalorder %v1857, 0
        %v1860 = vxor.u32 %v1854, 2147483648
        %v1861 = vsel %vm1859, %v1853, %v1860
        %vm1862 = vcmp.eq.s32.totalorder %v1857, 2
        %v1863 = vxor.u32 %v1853, 2147483648
        %v1864 = vsel %vm1862, %v1863, %v1854
        %v1865 = vsel %vm1858, %v1861, %v1864
        %v1866 = vsel %vm1855, nan, %v1865
        %v1867 = vand.u32 2147483647, %v718
        %vm1868 = vcmp.le.f32.partialorder %v1867, 0.7853982
        %vm1869 = vcmp.lt.s32.totalorder %v718, 0
        %v1870 = vand.u32 %v718, 2139095040
        %v1871 = vshrl.u32 %v1870, 23
        %v1872 = vsub.s32 %v1871, 127
        %v1873 = vand.u32 2147483647, %v718
        %v1874 = vand.u32 %v1873, 8388607
        %v1875 = vor.u32 %v1874, 8388608
        %v1876 = vsub.s32 0, %v1875
        %v1877 = vadd.s32 %v1872, 1
        %vm1878 = vcmp.gt.s32.totalorder %v1877, 0
        %v1879 = vsel %vm1878, %v1877, 0
        %v1880 = vshrl.u32 %v1879, 5
        %v1881 = vand.u32 %v1879, 31
        %v1882 = vsub.s32 32, %v1881
        %v1883 = vshrl.u32 683565275, %v1882
        %v1884 = vshll.u32 683565275, %v1881
        %v1885 = vshrl.u32 2475754826, %v1882
        %v1886 = vor.u32 %v1884, %v1885
        %v1887 = vshll.u32 2475754826, %v1881
        %v1888 = vshrl.u32 2131351028, %v1882
        %v1889 = vor.u32 %v1887, %v1888
        %v1890 = vshll.u32 2131351028, %v1881
        %v1891 = vshrl.u32 2102212464, %v1882
        %v1892 = vor.u32 %v1890, %v1891
        %v1893 = vshll.u32 2102212464, %v1881
        %v1894 = vshrl.u32 920167782, %v1882
        %v1895 = vor.u32 %v1893, %v1894
        %v1896 = vshll.u32 920167782, %v1881
        %v1897 = vshrl.u32 1326507024, %v1882
        %v1898 = vor.u32 %v1896, %v1897
        %vm1899 = vcmp.lt.s32.totalorder %v1880, 1
        %vm1900 = vcmp.lt.s32.totalorder %v1880, 2
        %vm1901 = vcmp.lt.s32.totalorder %v1880, 3
        %vm1902 = vcmp.lt.s32.totalorder %v1880, 4
        %v1903 = vsel %vm1899, %v1883, %v1886
        %v1904 = vsel %vm1902, %v1892, 2102212464
        %v1905 = vsel %vm1901, %v1889, %v1904
        %v1906 = vsel %vm1900, %v1903, %v1905
        %v1907 = vsel %vm1899, %v1886, %v1889
        %v1908 = vsel %vm1902, %v1895, 920167782
        %v1909 = vsel %vm1901, %v1892, %v1908
        %v1910 = vsel %vm1900, %v1907, %v1909
        %v1911 = vsel %vm1899, %v1889, %v1892
        %v1912 = vsel %vm1902, %v1898, 1326507024
        %v1913 = vsel %vm1901, %v1895, %v1912
        %v1914 = vsel %vm1900, %v1911, %v1913
        %v1915 = vshll.u32 %v1875, 8
        %v1916 = vmul.u32.u64.compose %v1915, %v1914
        %v1917 = vextract.low.u32 %v1916
        %v1918 = vextract.high.u32 %v1916
        %v1919 = vmul.u32.u64.compose %v1915, %v1910
        %v1920 = vextract.low.u32 %v1919
        %v1921 = vextract.high.u32 %v1919
        %v1922 = vmul.u32 %v1915, %v1906
        %v1923 = vadd.s32 %v1918, %v1920
        %vm1924 = vc.u32 %v1918, %v1920
        %v1925 = vadd.s32 %v1921, 1
        %v1926 = vsel %vm1924, %v1925, %v1921
        %v1927 = vadd.s32 %v1922, %v1926
        %v1928 = vadd.s32 %v1927, 536870912
        %v1929 = vshrl.u32 %v1928, 30
        %v1930 = vshll.u32 %v1929, 30
        %v1931 = vsub.s32 %v1927, %v1930
        %vm1932 = vcmp.lt.s32.totalorder %v1931, 0
        %v1933 = vsub.s32 0, %v1931
        %v1934 = vsel %vm1932, %v1933, %v1931
        %v1935 = vclz %v1934
        %v1936 = vsub.s32 %v1935, 2
        %vm1937 = vcmp.gt.s32.totalorder 0, %v1936
        %v1938 = vsel %vm1937, 0, %v1936
        %v1939 = vsub.s32 32, %v1938
        %v1940 = vshll.u32 %v1931, %v1938
        %v1941 = vshrl.u32 %v1923, %v1939
        %v1942 = vor.u32 %v1940, %v1941
        %v1943 = vsub.s32 4294967266, %v1938
        %v1944 = vadd.s32 %v1943, 127
        %v1945 = vshll.u32 %v1944, 23
        %v1946 = vor.u32 4788187, %v1945
        %v1947 = vand.u32 2147483647, %v1946
        %v1949 = vcvt.s32.f32 %v1942
        %v1950 = vmul.f32 %v1949, %v1947
        %v1951 = vxor.u32 %v1950, 2147483648
        %v1952 = vsel %vm1869, %v1951, %v1950
        %v1953 = vsub.s32 4, %v1929
        %v1954 = vsel %vm1869, %v1953, %v1929
        %v1955 = vsel %vm1868, %v718, %v1952
        %v1956 = vsel %vm1868, 0, %v1954
        %v1957 = vcosq.f32.pop %v1955
        %v1958 = vsinq.f32.pop %v1955
        %vm1959 = vweird.f32 %v718
        %v1960 = vadd.s32 %v1956, 3
        %v1961 = vand.u32 %v1960, 3
        %vm1962 = vcmp.lt.s32.totalorder %v1961, 2
        %vm1963 = vcmp.eq.s32.totalorder %v1961, 0
        %v1964 = vxor.u32 %v1958, 2147483648
        %v1965 = vsel %vm1963, %v1957, %v1964
        %vm1966 = vcmp.eq.s32.totalorder %v1961, 2
        %v1967 = vxor.u32 %v1957, 2147483648
        %v1968 = vsel %vm1966, %v1967, %v1958
        %v1969 = vsel %vm1962, %v1965, %v1968
        %v1970 = vsel %vm1959, nan, %v1969
        %v1971 = vand.u32 2147483647, %v719
        %vm1972 = vcmp.le.f32.partialorder %v1971, 0.7853982
        %vm1973 = vcmp.lt.s32.totalorder %v719, 0
        %v1974 = vand.u32 %v719, 2139095040
        %v1975 = vshrl.u32 %v1974, 23
        %v1976 = vsub.s32 %v1975, 127
        %v1977 = vand.u32 2147483647, %v719
        %v1978 = vand.u32 %v1977, 8388607
        %v1979 = vor.u32 %v1978, 8388608
        %v1980 = vsub.s32 0, %v1979
        %v1981 = vadd.s32 %v1976, 1
        %vm1982 = vcmp.gt.s32.totalorder %v1981, 0
        %v1983 = vsel %vm1982, %v1981, 0
        %v1984 = vshrl.u32 %v1983, 5
        %v1985 = vand.u32 %v1983, 31
        %v1986 = vsub.s32 32, %v1985
        %v1987 = vshrl.u32 683565275, %v1986
        %v1988 = vshll.u32 683565275, %v1985
        %v1989 = vshrl.u32 2475754826, %v1986
        %v1990 = vor.u32 %v1988, %v1989
        %v1991 = vshll.u32 2475754826, %v1985
        %v1992 = vshrl.u32 2131351028, %v1986
        %v1993 = vor.u32 %v1991, %v1992
        %v1994 = vshll.u32 2131351028, %v1985
        %v1995 = vshrl.u32 2102212464, %v1986
        %v1996 = vor.u32 %v1994, %v1995
        %v1997 = vshll.u32 2102212464, %v1985
        %v1998 = vshrl.u32 920167782, %v1986
        %v1999 = vor.u32 %v1997, %v1998
        %v2000 = vshll.u32 920167782, %v1985
        %v2001 = vshrl.u32 1326507024, %v1986
        %v2002 = vor.u32 %v2000, %v2001
        %vm2003 = vcmp.lt.s32.totalorder %v1984, 1
        %vm2004 = vcmp.lt.s32.totalorder %v1984, 2
        %vm2005 = vcmp.lt.s32.totalorder %v1984, 3
        %vm2006 = vcmp.lt.s32.totalorder %v1984, 4
        %v2007 = vsel %vm2003, %v1987, %v1990
        %v2008 = vsel %vm2006, %v1996, 2102212464
        %v2009 = vsel %vm2005, %v1993, %v2008
        %v2010 = vsel %vm2004, %v2007, %v2009
        %v2011 = vsel %vm2003, %v1990, %v1993
        %v2012 = vsel %vm2006, %v1999, 920167782
        %v2013 = vsel %vm2005, %v1996, %v2012
        %v2014 = vsel %vm2004, %v2011, %v2013
        %v2015 = vsel %vm2003, %v1993, %v1996
        %v2016 = vsel %vm2006, %v2002, 1326507024
        %v2017 = vsel %vm2005, %v1999, %v2016
        %v2018 = vsel %vm2004, %v2015, %v2017
        %v2019 = vshll.u32 %v1979, 8
        %v2020 = vmul.u32.u64.compose %v2019, %v2018
        %v2021 = vextract.low.u32 %v2020
        %v2022 = vextract.high.u32 %v2020
        %v2023 = vmul.u32.u64.compose %v2019, %v2014
        %v2024 = vextract.low.u32 %v2023
        %v2025 = vextract.high.u32 %v2023
        %v2026 = vmul.u32 %v2019, %v2010
        %v2027 = vadd.s32 %v2022, %v2024
        %vm2028 = vc.u32 %v2022, %v2024
        %v2029 = vadd.s32 %v2025, 1
        %v2030 = vsel %vm2028, %v2029, %v2025
        %v2031 = vadd.s32 %v2026, %v2030
        %v2032 = vadd.s32 %v2031, 536870912
        %v2033 = vshrl.u32 %v2032, 30
        %v2034 = vshll.u32 %v2033, 30
        %v2035 = vsub.s32 %v2031, %v2034
        %vm2036 = vcmp.lt.s32.totalorder %v2035, 0
        %v2037 = vsub.s32 0, %v2035
        %v2038 = vsel %vm2036, %v2037, %v2035
        %v2039 = vclz %v2038
        %v2040 = vsub.s32 %v2039, 2
        %vm2041 = vcmp.gt.s32.totalorder 0, %v2040
        %v2042 = vsel %vm2041, 0, %v2040
        %v2043 = vsub.s32 32, %v2042
        %v2044 = vshll.u32 %v2035, %v2042
        %v2045 = vshrl.u32 %v2027, %v2043
        %v2046 = vor.u32 %v2044, %v2045
        %v2047 = vsub.s32 4294967266, %v2042
        %v2048 = vadd.s32 %v2047, 127
        %v2049 = vshll.u32 %v2048, 23
        %v2050 = vor.u32 4788187, %v2049
        %v2051 = vand.u32 2147483647, %v2050
        %v2053 = vcvt.s32.f32 %v2046
        %v2054 = vmul.f32 %v2053, %v2051
        %v2055 = vxor.u32 %v2054, 2147483648
        %v2056 = vsel %vm1973, %v2055, %v2054
        %v2057 = vsub.s32 4, %v2033
        %v2058 = vsel %vm1973, %v2057, %v2033
        %v2059 = vsel %vm1972, %v719, %v2056
        %v2060 = vsel %vm1972, 0, %v2058
        %v2061 = vcosq.f32.pop %v2059
        %v2062 = vsinq.f32.pop %v2059
        %vm2063 = vweird.f32 %v719
        %v2064 = vadd.s32 %v2060, 3
        %v2065 = vand.u32 %v2064, 3
        %vm2066 = vcmp.lt.s32.totalorder %v2065, 2
        %vm2067 = vcmp.eq.s32.totalorder %v2065, 0
        %v2068 = vxor.u32 %v2062, 2147483648
        %v2069 = vsel %vm2067, %v2061, %v2068
        %vm2070 = vcmp.eq.s32.totalorder %v2065, 2
        %v2071 = vxor.u32 %v2061, 2147483648
        %v2072 = vsel %vm2070, %v2071, %v2062
        %v2073 = vsel %vm2066, %v2069, %v2072
        %v2074 = vsel %vm2063, nan, %v2073
        %v2075 = vand.u32 2147483647, %v720
        %vm2076 = vcmp.le.f32.partialorder %v2075, 0.7853982
        %vm2077 = vcmp.lt.s32.totalorder %v720, 0
        %v2078 = vand.u32 %v720, 2139095040
        %v2079 = vshrl.u32 %v2078, 23
        %v2080 = vsub.s32 %v2079, 127
        %v2081 = vand.u32 2147483647, %v720
        %v2082 = vand.u32 %v2081, 8388607
        %v2083 = vor.u32 %v2082, 8388608
        %v2084 = vsub.s32 0, %v2083
        %v2085 = vadd.s32 %v2080, 1
        %vm2086 = vcmp.gt.s32.totalorder %v2085, 0
        %v2087 = vsel %vm2086, %v2085, 0
        %v2088 = vshrl.u32 %v2087, 5
        %v2089 = vand.u32 %v2087, 31
        %v2090 = vsub.s32 32, %v2089
        %v2091 = vshrl.u32 683565275, %v2090
        %v2092 = vshll.u32 683565275, %v2089
        %v2093 = vshrl.u32 2475754826, %v2090
        %v2094 = vor.u32 %v2092, %v2093
        %v2095 = vshll.u32 2475754826, %v2089
        %v2096 = vshrl.u32 2131351028, %v2090
        %v2097 = vor.u32 %v2095, %v2096
        %v2098 = vshll.u32 2131351028, %v2089
        %v2099 = vshrl.u32 2102212464, %v2090
        %v2100 = vor.u32 %v2098, %v2099
        %v2101 = vshll.u32 2102212464, %v2089
        %v2102 = vshrl.u32 920167782, %v2090
        %v2103 = vor.u32 %v2101, %v2102
        %v2104 = vshll.u32 920167782, %v2089
        %v2105 = vshrl.u32 1326507024, %v2090
        %v2106 = vor.u32 %v2104, %v2105
        %vm2107 = vcmp.lt.s32.totalorder %v2088, 1
        %vm2108 = vcmp.lt.s32.totalorder %v2088, 2
        %vm2109 = vcmp.lt.s32.totalorder %v2088, 3
        %vm2110 = vcmp.lt.s32.totalorder %v2088, 4
        %v2111 = vsel %vm2107, %v2091, %v2094
        %v2112 = vsel %vm2110, %v2100, 2102212464
        %v2113 = vsel %vm2109, %v2097, %v2112
        %v2114 = vsel %vm2108, %v2111, %v2113
        %v2115 = vsel %vm2107, %v2094, %v2097
        %v2116 = vsel %vm2110, %v2103, 920167782
        %v2117 = vsel %vm2109, %v2100, %v2116
        %v2118 = vsel %vm2108, %v2115, %v2117
        %v2119 = vsel %vm2107, %v2097, %v2100
        %v2120 = vsel %vm2110, %v2106, 1326507024
        %v2121 = vsel %vm2109, %v2103, %v2120
        %v2122 = vsel %vm2108, %v2119, %v2121
        %v2123 = vshll.u32 %v2083, 8
        %v2124 = vmul.u32.u64.compose %v2123, %v2122
        %v2125 = vextract.low.u32 %v2124
        %v2126 = vextract.high.u32 %v2124
        %v2127 = vmul.u32.u64.compose %v2123, %v2118
        %v2128 = vextract.low.u32 %v2127
        %v2129 = vextract.high.u32 %v2127
        %v2130 = vmul.u32 %v2123, %v2114
        %v2131 = vadd.s32 %v2126, %v2128
        %vm2132 = vc.u32 %v2126, %v2128
        %v2133 = vadd.s32 %v2129, 1
        %v2134 = vsel %vm2132, %v2133, %v2129
        %v2135 = vadd.s32 %v2130, %v2134
        %v2136 = vadd.s32 %v2135, 536870912
        %v2137 = vshrl.u32 %v2136, 30
        %v2138 = vshll.u32 %v2137, 30
        %v2139 = vsub.s32 %v2135, %v2138
        %vm2140 = vcmp.lt.s32.totalorder %v2139, 0
        %v2141 = vsub.s32 0, %v2139
        %v2142 = vsel %vm2140, %v2141, %v2139
        %v2143 = vclz %v2142
        %v2144 = vsub.s32 %v2143, 2
        %vm2145 = vcmp.gt.s32.totalorder 0, %v2144
        %v2146 = vsel %vm2145, 0, %v2144
        %v2147 = vsub.s32 32, %v2146
        %v2148 = vshll.u32 %v2139, %v2146
        %v2149 = vshrl.u32 %v2131, %v2147
        %v2150 = vor.u32 %v2148, %v2149
        %v2151 = vsub.s32 4294967266, %v2146
        %v2152 = vadd.s32 %v2151, 127
        %v2153 = vshll.u32 %v2152, 23
        %v2154 = vor.u32 4788187, %v2153
        %v2155 = vand.u32 2147483647, %v2154
        %v2157 = vcvt.s32.f32 %v2150
        %v2158 = vmul.f32 %v2157, %v2155
        %v2159 = vxor.u32 %v2158, 2147483648
        %v2160 = vsel %vm2077, %v2159, %v2158
        %v2161 = vsub.s32 4, %v2137
        %v2162 = vsel %vm2077, %v2161, %v2137
        %v2163 = vsel %vm2076, %v720, %v2160
        %v2164 = vsel %vm2076, 0, %v2162
        %v2165 = vcosq.f32.pop %v2163
        %v2166 = vsinq.f32.pop %v2163
        %vm2167 = vweird.f32 %v720
        %v2168 = vadd.s32 %v2164, 3
        %v2169 = vand.u32 %v2168, 3
        %vm2170 = vcmp.lt.s32.totalorder %v2169, 2
        %vm2171 = vcmp.eq.s32.totalorder %v2169, 0
        %v2172 = vxor.u32 %v2166, 2147483648
        %v2173 = vsel %vm2171, %v2165, %v2172
        %vm2174 = vcmp.eq.s32.totalorder %v2169, 2
        %v2175 = vxor.u32 %v2165, 2147483648
        %v2176 = vsel %vm2174, %v2175, %v2166
        %v2177 = vsel %vm2170, %v2173, %v2176
        %v2178 = vsel %vm2167, nan, %v2177
        %v2179 = vand.u32 2147483647, %v721
        %vm2180 = vcmp.le.f32.partialorder %v2179, 0.7853982
        %vm2181 = vcmp.lt.s32.totalorder %v721, 0
        %v2182 = vand.u32 %v721, 2139095040
        %v2183 = vshrl.u32 %v2182, 23
        %v2184 = vsub.s32 %v2183, 127
        %v2185 = vand.u32 2147483647, %v721
        %v2186 = vand.u32 %v2185, 8388607
        %v2187 = vor.u32 %v2186, 8388608
        %v2188 = vsub.s32 0, %v2187
        %v2189 = vadd.s32 %v2184, 1
        %vm2190 = vcmp.gt.s32.totalorder %v2189, 0
        %v2191 = vsel %vm2190, %v2189, 0
        %v2192 = vshrl.u32 %v2191, 5
        %v2193 = vand.u32 %v2191, 31
        %v2194 = vsub.s32 32, %v2193
        %v2195 = vshrl.u32 683565275, %v2194
        %v2196 = vshll.u32 683565275, %v2193
        %v2197 = vshrl.u32 2475754826, %v2194
        %v2198 = vor.u32 %v2196, %v2197
        %v2199 = vshll.u32 2475754826, %v2193
        %v2200 = vshrl.u32 2131351028, %v2194
        %v2201 = vor.u32 %v2199, %v2200
        %v2202 = vshll.u32 2131351028, %v2193
        %v2203 = vshrl.u32 2102212464, %v2194
        %v2204 = vor.u32 %v2202, %v2203
        %v2205 = vshll.u32 2102212464, %v2193
        %v2206 = vshrl.u32 920167782, %v2194
        %v2207 = vor.u32 %v2205, %v2206
        %v2208 = vshll.u32 920167782, %v2193
        %v2209 = vshrl.u32 1326507024, %v2194
        %v2210 = vor.u32 %v2208, %v2209
        %vm2211 = vcmp.lt.s32.totalorder %v2192, 1
        %vm2212 = vcmp.lt.s32.totalorder %v2192, 2
        %vm2213 = vcmp.lt.s32.totalorder %v2192, 3
        %vm2214 = vcmp.lt.s32.totalorder %v2192, 4
        %v2215 = vsel %vm2211, %v2195, %v2198
        %v2216 = vsel %vm2214, %v2204, 2102212464
        %v2217 = vsel %vm2213, %v2201, %v2216
        %v2218 = vsel %vm2212, %v2215, %v2217
        %v2219 = vsel %vm2211, %v2198, %v2201
        %v2220 = vsel %vm2214, %v2207, 920167782
        %v2221 = vsel %vm2213, %v2204, %v2220
        %v2222 = vsel %vm2212, %v2219, %v2221
        %v2223 = vsel %vm2211, %v2201, %v2204
        %v2224 = vsel %vm2214, %v2210, 1326507024
        %v2225 = vsel %vm2213, %v2207, %v2224
        %v2226 = vsel %vm2212, %v2223, %v2225
        %v2227 = vshll.u32 %v2187, 8
        %v2228 = vmul.u32.u64.compose %v2227, %v2226
        %v2229 = vextract.low.u32 %v2228
        %v2230 = vextract.high.u32 %v2228
        %v2231 = vmul.u32.u64.compose %v2227, %v2222
        %v2232 = vextract.low.u32 %v2231
        %v2233 = vextract.high.u32 %v2231
        %v2234 = vmul.u32 %v2227, %v2218
        %v2235 = vadd.s32 %v2230, %v2232
        %vm2236 = vc.u32 %v2230, %v2232
        %v2237 = vadd.s32 %v2233, 1
        %v2238 = vsel %vm2236, %v2237, %v2233
        %v2239 = vadd.s32 %v2234, %v2238
        %v2240 = vadd.s32 %v2239, 536870912
        %v2241 = vshrl.u32 %v2240, 30
        %v2242 = vshll.u32 %v2241, 30
        %v2243 = vsub.s32 %v2239, %v2242
        %vm2244 = vcmp.lt.s32.totalorder %v2243, 0
        %v2245 = vsub.s32 0, %v2243
        %v2246 = vsel %vm2244, %v2245, %v2243
        %v2247 = vclz %v2246
        %v2248 = vsub.s32 %v2247, 2
        %vm2249 = vcmp.gt.s32.totalorder 0, %v2248
        %v2250 = vsel %vm2249, 0, %v2248
        %v2251 = vsub.s32 32, %v2250
        %v2252 = vshll.u32 %v2243, %v2250
        %v2253 = vshrl.u32 %v2235, %v2251
        %v2254 = vor.u32 %v2252, %v2253
        %v2255 = vsub.s32 4294967266, %v2250
        %v2256 = vadd.s32 %v2255, 127
        %v2257 = vshll.u32 %v2256, 23
        %v2258 = vor.u32 4788187, %v2257
        %v2259 = vand.u32 2147483647, %v2258
        %v2261 = vcvt.s32.f32 %v2254
        %v2262 = vmul.f32 %v2261, %v2259
        %v2263 = vxor.u32 %v2262, 2147483648
        %v2264 = vsel %vm2181, %v2263, %v2262
        %v2265 = vsub.s32 4, %v2241
        %v2266 = vsel %vm2181, %v2265, %v2241
        %v2267 = vsel %vm2180, %v721, %v2264
        %v2268 = vsel %vm2180, 0, %v2266
        %v2269 = vcosq.f32.pop %v2267
        %v2270 = vsinq.f32.pop %v2267
        %vm2271 = vweird.f32 %v721
        %v2272 = vadd.s32 %v2268, 3
        %v2273 = vand.u32 %v2272, 3
        %vm2274 = vcmp.lt.s32.totalorder %v2273, 2
        %vm2275 = vcmp.eq.s32.totalorder %v2273, 0
        %v2276 = vxor.u32 %v2270, 2147483648
        %v2277 = vsel %vm2275, %v2269, %v2276
        %vm2278 = vcmp.eq.s32.totalorder %v2273, 2
        %v2279 = vxor.u32 %v2269, 2147483648
        %v2280 = vsel %vm2278, %v2279, %v2270
        %v2281 = vsel %vm2274, %v2277, %v2280
        %v2282 = vsel %vm2271, nan, %v2281
        %v2283 = vand.u32 2147483647, %v722
        %vm2284 = vcmp.le.f32.partialorder %v2283, 0.7853982
        %vm2285 = vcmp.lt.s32.totalorder %v722, 0
        %v2286 = vand.u32 %v722, 2139095040
        %v2287 = vshrl.u32 %v2286, 23
        %v2288 = vsub.s32 %v2287, 127
        %v2289 = vand.u32 2147483647, %v722
        %v2290 = vand.u32 %v2289, 8388607
        %v2291 = vor.u32 %v2290, 8388608
        %v2292 = vsub.s32 0, %v2291
        %v2293 = vadd.s32 %v2288, 1
        %vm2294 = vcmp.gt.s32.totalorder %v2293, 0
        %v2295 = vsel %vm2294, %v2293, 0
        %v2296 = vshrl.u32 %v2295, 5
        %v2297 = vand.u32 %v2295, 31
        %v2298 = vsub.s32 32, %v2297
        %v2299 = vshrl.u32 683565275, %v2298
        %v2300 = vshll.u32 683565275, %v2297
        %v2301 = vshrl.u32 2475754826, %v2298
        %v2302 = vor.u32 %v2300, %v2301
        %v2303 = vshll.u32 2475754826, %v2297
        %v2304 = vshrl.u32 2131351028, %v2298
        %v2305 = vor.u32 %v2303, %v2304
        %v2306 = vshll.u32 2131351028, %v2297
        %v2307 = vshrl.u32 2102212464, %v2298
        %v2308 = vor.u32 %v2306, %v2307
        %v2309 = vshll.u32 2102212464, %v2297
        %v2310 = vshrl.u32 920167782, %v2298
        %v2311 = vor.u32 %v2309, %v2310
        %v2312 = vshll.u32 920167782, %v2297
        %v2313 = vshrl.u32 1326507024, %v2298
        %v2314 = vor.u32 %v2312, %v2313
        %vm2315 = vcmp.lt.s32.totalorder %v2296, 1
        %vm2316 = vcmp.lt.s32.totalorder %v2296, 2
        %vm2317 = vcmp.lt.s32.totalorder %v2296, 3
        %vm2318 = vcmp.lt.s32.totalorder %v2296, 4
        %v2319 = vsel %vm2315, %v2299, %v2302
        %v2320 = vsel %vm2318, %v2308, 2102212464
        %v2321 = vsel %vm2317, %v2305, %v2320
        %v2322 = vsel %vm2316, %v2319, %v2321
        %v2323 = vsel %vm2315, %v2302, %v2305
        %v2324 = vsel %vm2318, %v2311, 920167782
        %v2325 = vsel %vm2317, %v2308, %v2324
        %v2326 = vsel %vm2316, %v2323, %v2325
        %v2327 = vsel %vm2315, %v2305, %v2308
        %v2328 = vsel %vm2318, %v2314, 1326507024
        %v2329 = vsel %vm2317, %v2311, %v2328
        %v2330 = vsel %vm2316, %v2327, %v2329
        %v2331 = vshll.u32 %v2291, 8
        %v2332 = vmul.u32.u64.compose %v2331, %v2330
        %v2333 = vextract.low.u32 %v2332
        %v2334 = vextract.high.u32 %v2332
        %v2335 = vmul.u32.u64.compose %v2331, %v2326
        %v2336 = vextract.low.u32 %v2335
        %v2337 = vextract.high.u32 %v2335
        %v2338 = vmul.u32 %v2331, %v2322
        %v2339 = vadd.s32 %v2334, %v2336
        %vm2340 = vc.u32 %v2334, %v2336
        %v2341 = vadd.s32 %v2337, 1
        %v2342 = vsel %vm2340, %v2341, %v2337
        %v2343 = vadd.s32 %v2338, %v2342
        %v2344 = vadd.s32 %v2343, 536870912
        %v2345 = vshrl.u32 %v2344, 30
        %v2346 = vshll.u32 %v2345, 30
        %v2347 = vsub.s32 %v2343, %v2346
        %vm2348 = vcmp.lt.s32.totalorder %v2347, 0
        %v2349 = vsub.s32 0, %v2347
        %v2350 = vsel %vm2348, %v2349, %v2347
        %v2351 = vclz %v2350
        %v2352 = vsub.s32 %v2351, 2
        %vm2353 = vcmp.gt.s32.totalorder 0, %v2352
        %v2354 = vsel %vm2353, 0, %v2352
        %v2355 = vsub.s32 32, %v2354
        %v2356 = vshll.u32 %v2347, %v2354
        %v2357 = vshrl.u32 %v2339, %v2355
        %v2358 = vor.u32 %v2356, %v2357
        %v2359 = vsub.s32 4294967266, %v2354
        %v2360 = vadd.s32 %v2359, 127
        %v2361 = vshll.u32 %v2360, 23
        %v2362 = vor.u32 4788187, %v2361
        %v2363 = vand.u32 2147483647, %v2362
        %v2365 = vcvt.s32.f32 %v2358
        %v2366 = vmul.f32 %v2365, %v2363
        %v2367 = vxor.u32 %v2366, 2147483648
        %v2368 = vsel %vm2285, %v2367, %v2366
        %v2369 = vsub.s32 4, %v2345
        %v2370 = vsel %vm2285, %v2369, %v2345
        %v2371 = vsel %vm2284, %v722, %v2368
        %v2372 = vsel %vm2284, 0, %v2370
        %v2373 = vcosq.f32.pop %v2371
        %v2374 = vsinq.f32.pop %v2371
        %vm2375 = vweird.f32 %v722
        %v2376 = vadd.s32 %v2372, 3
        %v2377 = vand.u32 %v2376, 3
        %vm2378 = vcmp.lt.s32.totalorder %v2377, 2
        %vm2379 = vcmp.eq.s32.totalorder %v2377, 0
        %v2380 = vxor.u32 %v2374, 2147483648
        %v2381 = vsel %vm2379, %v2373, %v2380
        %vm2382 = vcmp.eq.s32.totalorder %v2377, 2
        %v2383 = vxor.u32 %v2373, 2147483648
        %v2384 = vsel %vm2382, %v2383, %v2374
        %v2385 = vsel %vm2378, %v2381, %v2384
        %v2386 = vsel %vm2375, nan, %v2385
        %v2387 = vand.u32 2147483647, %v723
        %vm2388 = vcmp.le.f32.partialorder %v2387, 0.7853982
        %vm2389 = vcmp.lt.s32.totalorder %v723, 0
        %v2390 = vand.u32 %v723, 2139095040
        %v2391 = vshrl.u32 %v2390, 23
        %v2392 = vsub.s32 %v2391, 127
        %v2393 = vand.u32 2147483647, %v723
        %v2394 = vand.u32 %v2393, 8388607
        %v2395 = vor.u32 %v2394, 8388608
        %v2396 = vsub.s32 0, %v2395
        %v2397 = vadd.s32 %v2392, 1
        %vm2398 = vcmp.gt.s32.totalorder %v2397, 0
        %v2399 = vsel %vm2398, %v2397, 0
        %v2400 = vshrl.u32 %v2399, 5
        %v2401 = vand.u32 %v2399, 31
        %v2402 = vsub.s32 32, %v2401
        %v2403 = vshrl.u32 683565275, %v2402
        %v2404 = vshll.u32 683565275, %v2401
        %v2405 = vshrl.u32 2475754826, %v2402
        %v2406 = vor.u32 %v2404, %v2405
        %v2407 = vshll.u32 2475754826, %v2401
        %v2408 = vshrl.u32 2131351028, %v2402
        %v2409 = vor.u32 %v2407, %v2408
        %v2410 = vshll.u32 2131351028, %v2401
        %v2411 = vshrl.u32 2102212464, %v2402
        %v2412 = vor.u32 %v2410, %v2411
        %v2413 = vshll.u32 2102212464, %v2401
        %v2414 = vshrl.u32 920167782, %v2402
        %v2415 = vor.u32 %v2413, %v2414
        %v2416 = vshll.u32 920167782, %v2401
        %v2417 = vshrl.u32 1326507024, %v2402
        %v2418 = vor.u32 %v2416, %v2417
        %vm2419 = vcmp.lt.s32.totalorder %v2400, 1
        %vm2420 = vcmp.lt.s32.totalorder %v2400, 2
        %vm2421 = vcmp.lt.s32.totalorder %v2400, 3
        %vm2422 = vcmp.lt.s32.totalorder %v2400, 4
        %v2423 = vsel %vm2419, %v2403, %v2406
        %v2424 = vsel %vm2422, %v2412, 2102212464
        %v2425 = vsel %vm2421, %v2409, %v2424
        %v2426 = vsel %vm2420, %v2423, %v2425
        %v2427 = vsel %vm2419, %v2406, %v2409
        %v2428 = vsel %vm2422, %v2415, 920167782
        %v2429 = vsel %vm2421, %v2412, %v2428
        %v2430 = vsel %vm2420, %v2427, %v2429
        %v2431 = vsel %vm2419, %v2409, %v2412
        %v2432 = vsel %vm2422, %v2418, 1326507024
        %v2433 = vsel %vm2421, %v2415, %v2432
        %v2434 = vsel %vm2420, %v2431, %v2433
        %v2435 = vshll.u32 %v2395, 8
        %v2436 = vmul.u32.u64.compose %v2435, %v2434
        %v2437 = vextract.low.u32 %v2436
        %v2438 = vextract.high.u32 %v2436
        %v2439 = vmul.u32.u64.compose %v2435, %v2430
        %v2440 = vextract.low.u32 %v2439
        %v2441 = vextract.high.u32 %v2439
        %v2442 = vmul.u32 %v2435, %v2426
        %v2443 = vadd.s32 %v2438, %v2440
        %vm2444 = vc.u32 %v2438, %v2440
        %v2445 = vadd.s32 %v2441, 1
        %v2446 = vsel %vm2444, %v2445, %v2441
        %v2447 = vadd.s32 %v2442, %v2446
        %v2448 = vadd.s32 %v2447, 536870912
        %v2449 = vshrl.u32 %v2448, 30
        %v2450 = vshll.u32 %v2449, 30
        %v2451 = vsub.s32 %v2447, %v2450
        %vm2452 = vcmp.lt.s32.totalorder %v2451, 0
        %v2453 = vsub.s32 0, %v2451
        %v2454 = vsel %vm2452, %v2453, %v2451
        %v2455 = vclz %v2454
        %v2456 = vsub.s32 %v2455, 2
        %vm2457 = vcmp.gt.s32.totalorder 0, %v2456
        %v2458 = vsel %vm2457, 0, %v2456
        %v2459 = vsub.s32 32, %v2458
        %v2460 = vshll.u32 %v2451, %v2458
        %v2461 = vshrl.u32 %v2443, %v2459
        %v2462 = vor.u32 %v2460, %v2461
        %v2463 = vsub.s32 4294967266, %v2458
        %v2464 = vadd.s32 %v2463, 127
        %v2465 = vshll.u32 %v2464, 23
        %v2466 = vor.u32 4788187, %v2465
        %v2467 = vand.u32 2147483647, %v2466
        %v2469 = vcvt.s32.f32 %v2462
        %v2470 = vmul.f32 %v2469, %v2467
        %v2471 = vxor.u32 %v2470, 2147483648
        %v2472 = vsel %vm2389, %v2471, %v2470
        %v2473 = vsub.s32 4, %v2449
        %v2474 = vsel %vm2389, %v2473, %v2449
        %v2475 = vsel %vm2388, %v723, %v2472
        %v2476 = vsel %vm2388, 0, %v2474
        %v2477 = vcosq.f32.pop %v2475
        %v2478 = vsinq.f32.pop %v2475
        %vm2479 = vweird.f32 %v723
        %v2480 = vadd.s32 %v2476, 3
        %v2481 = vand.u32 %v2480, 3
        %vm2482 = vcmp.lt.s32.totalorder %v2481, 2
        %vm2483 = vcmp.eq.s32.totalorder %v2481, 0
        %v2484 = vxor.u32 %v2478, 2147483648
        %v2485 = vsel %vm2483, %v2477, %v2484
        %vm2486 = vcmp.eq.s32.totalorder %v2481, 2
        %v2487 = vxor.u32 %v2477, 2147483648
        %v2488 = vsel %vm2486, %v2487, %v2478
        %v2489 = vsel %vm2482, %v2485, %v2488
        %v2490 = vsel %vm2479, nan, %v2489
        %v2491 = vld [vmem:[%s3] sm:$0xf]
        %v2492 = vld [vmem:[%s3 + $0x4] sm:$0xf]
        %v2493 = vld [vmem:[%s3 + $0x8] sm:$0xf]
        %v2494 = vld [vmem:[%s3 + $0xc] sm:$0xf]
        %v2495 = vpack.c.bf16 %v1034, %v930
        %v2496 = vpack.c.bf16 %v1242, %v1138
        %v2497 = vpack.c.bf16 %v1450, %v1346
        %v2498 = vpack.c.bf16 %v1658, %v1554
        %v2499 = vpack.c.bf16 %v1866, %v1762
        %v2500 = vpack.c.bf16 %v2074, %v1970
        %v2501 = vpack.c.bf16 %v2282, %v2178
        %v2502 = vpack.c.bf16 %v2490, %v2386
        %v2507 = vunpack.c.l.b16 %v2491
        %v2508 = vunpack.c.l.b16 %v2492
        %v2509 = vunpack.c.l.b16 %v2493
        %v2510 = vunpack.c.l.b16 %v2494
        %v2511 = vpack.c.b16 %v2508, %v2507
        %v2512 = vpack.c.b16 %v2510, %v2509
        %vm2513 = vcmask 130048
        %v2515 = vsel %vm2513, %v2495, 0
        %v2518 = vsel %vm2513, %v2496, 0
        %v2521 = vsel %vm2513, %v2497, 0
        %v2524 = vsel %vm2513, %v2498, 0
        %v2527 = vsel %vm2513, %v2499, 0
        %v2530 = vsel %vm2513, %v2500, 0
        %v2533 = vsel %vm2513, %v2501, 0
        %v2536 = vsel %vm2513, %v2502, 0
        %v2539 = vsel %vm2513, %v2511, 0
        %v2542 = vsel %vm2513, %v2512, 0
        %2544 = vmatprep.subr.bf16.mxu0 0
        %2545 = vmatpush1.bf16.xpose.msra.mxu0 %v2539
        %2546 = vmatprep.subr.bf16.mxu0 0
        %2547 = vmatpush1.bf16.xpose.msra.mxu0 %v2542
        %2548 = vmatprep.subr.bf16.mxu0 0
        %2549 = vmatpush1.bf16.xpose.msra.mxu0 0
        %2550 = vmatprep.subr.bf16.mxu0 0
        %2551 = vmatpush1.bf16.xpose.msra.mxu0 0
        %2552 = vmatprep.subr.bf16.mxu0 0
        %2553 = vmatpush1.bf16.xpose.msra.mxu0 0
        %2554 = vmatprep.subr.bf16.mxu0 0
        %2555 = vmatpush1.bf16.xpose.msra.mxu0 0
        %2556 = vmatprep.subr.bf16.mxu0 0
        %2557 = vmatpush1.bf16.xpose.msra.mxu0 0
        %2558 = vmatprep.subr.bf16.mxu0 0
        %2559 = vmatpush1.bf16.xpose.msra.mxu0 0
        %2560 = vmatprep.subr.bf16.mxu0 0
        %2561 = vmatpush1.bf16.xpose.msra.mxu0 0
        %2562 = vmatprep.subr.bf16.mxu0 0
        %2563 = vmatpush1.bf16.xpose.msra.mxu0 0
        %2564 = vmatprep.subr.bf16.mxu0 0
        %2565 = vmatpush1.bf16.xpose.msra.mxu0 0
        %2566 = vmatprep.subr.bf16.mxu0 0
        %2567 = vmatpush1.bf16.xpose.msra.mxu0 0
        %2568 = vmatprep.subr.bf16.mxu0 0
        %2569 = vmatpush1.bf16.xpose.msra.mxu0 0
        %2570 = vmatprep.subr.bf16.mxu0 0
        %2571 = vmatpush1.bf16.xpose.msra.mxu0 0
        %2572 = vmatprep.subr.bf16.mxu0 0
        %2573 = vmatpush1.bf16.xpose.msra.mxu0 0
        %2574 = vmatprep.subr.bf16.mxu0 0
        %2575 = vmatpush1.bf16.xpose.msra.mxu0 0
        %2576 = vmatprep.mubr.bf16.mxu0 0
        %2577 = vmatmul.mubr.bf16.gmra.mrb[0].mxu0 %v2515
        %v2578 = vpop.f32.mrb[0].mxu0
        %v2579 = vadd.f32 0.0, %v2578
        %v2580 = vpop.f32.mrb[0].mxu0
        %v2581 = vpop.f32.mrb[0].mxu0
        %v2582 = vadd.f32 0.0, %v2581
        %v2583 = vpop.f32.mrb[0].mxu0
        %2584 = vmatprep.mubr.bf16.mxu0 0
        %2585 = vmatmul.mubr.bf16.gmra.mrb[0].mxu0 %v2518
        %v2586 = vpop.f32.mrb[0].mxu0
        %v2587 = vadd.f32 0.0, %v2586
        %v2588 = vpop.f32.mrb[0].mxu0
        %v2589 = vpop.f32.mrb[0].mxu0
        %v2590 = vadd.f32 0.0, %v2589
        %v2591 = vpop.f32.mrb[0].mxu0
        %2592 = vmatprep.mubr.bf16.mxu0 0
        %2593 = vmatmul.mubr.bf16.gmra.mrb[0].mxu0 %v2521
        %v2594 = vpop.f32.mrb[0].mxu0
        %v2595 = vadd.f32 0.0, %v2594
        %v2596 = vpop.f32.mrb[0].mxu0
        %v2597 = vpop.f32.mrb[0].mxu0
        %v2598 = vadd.f32 0.0, %v2597
        %v2599 = vpop.f32.mrb[0].mxu0
        %2600 = vmatprep.mubr.bf16.mxu0 0
        %2601 = vmatmul.mubr.bf16.gmra.mrb[0].mxu0 %v2524
        %v2602 = vpop.f32.mrb[0].mxu0
        %v2603 = vadd.f32 0.0, %v2602
        %v2604 = vpop.f32.mrb[0].mxu0
        %v2605 = vpop.f32.mrb[0].mxu0
        %v2606 = vadd.f32 0.0, %v2605
        %v2607 = vpop.f32.mrb[0].mxu0
        %2608 = vmatprep.mubr.bf16.mxu0 0
        %2609 = vmatmul.mubr.bf16.gmra.mrb[0].mxu0 %v2527
        %v2610 = vpop.f32.mrb[0].mxu0
        %v2611 = vadd.f32 0.0, %v2610
        %v2612 = vpop.f32.mrb[0].mxu0
        %v2613 = vpop.f32.mrb[0].mxu0
        %v2614 = vadd.f32 0.0, %v2613
        %v2615 = vpop.f32.mrb[0].mxu0
        %2616 = vmatprep.mubr.bf16.mxu0 0
        %2617 = vmatmul.mubr.bf16.gmra.mrb[0].mxu0 %v2530
        %v2618 = vpop.f32.mrb[0].mxu0
        %v2619 = vadd.f32 0.0, %v2618
        %v2620 = vpop.f32.mrb[0].mxu0
        %v2621 = vpop.f32.mrb[0].mxu0
        %v2622 = vadd.f32 0.0, %v2621
        %v2623 = vpop.f32.mrb[0].mxu0
        %2624 = vmatprep.mubr.bf16.mxu0 0
        %2625 = vmatmul.mubr.bf16.gmra.mrb[0].mxu0 %v2533
        %v2626 = vpop.f32.mrb[0].mxu0
        %v2627 = vadd.f32 0.0, %v2626
        %v2628 = vpop.f32.mrb[0].mxu0
        %v2629 = vpop.f32.mrb[0].mxu0
        %v2630 = vadd.f32 0.0, %v2629
        %v2631 = vpop.f32.mrb[0].mxu0
        %2632 = vmatprep.mubr.bf16.mxu0 0
        %2633 = vmatmul.mubr.bf16.gmra.mrb[0].mxu0 %v2536
        %v2634 = vpop.f32.mrb[0].mxu0
        %v2635 = vadd.f32 0.0, %v2634
        %v2636 = vpop.f32.mrb[0].mxu0
        %v2637 = vpop.f32.mrb[0].mxu0
        %v2638 = vadd.f32 0.0, %v2637
        %v2639 = vpop.f32.mrb[0].mxu0
        %2640 = vdwg.mxu0
        %v2641 = vadd.f32 %v811, %v2579
        %v2642 = vadd.f32 %v812, %v2582
        %v2643 = vadd.f32 %v813, %v2587
        %v2644 = vadd.f32 %v814, %v2590
        %v2645 = vadd.f32 %v815, %v2595
        %v2646 = vadd.f32 %v816, %v2598
        %v2647 = vadd.f32 %v817, %v2603
        %v2648 = vadd.f32 %v818, %v2606
        %v2649 = vadd.f32 %v819, %v2611
        %v2650 = vadd.f32 %v820, %v2614
        %v2651 = vadd.f32 %v821, %v2619
        %v2652 = vadd.f32 %v822, %v2622
        %v2653 = vadd.f32 %v823, %v2627
        %v2654 = vadd.f32 %v824, %v2630
        %v2655 = vadd.f32 %v825, %v2635
        %v2656 = vadd.f32 %v826, %v2638
        %v2657 = vand.u32 2147483647, %v708
        %vm2658 = vcmp.le.f32.partialorder %v2657, 0.7853982
        %vm2659 = vcmp.lt.s32.totalorder %v708, 0
        %v2660 = vand.u32 %v708, 2139095040
        %v2661 = vshrl.u32 %v2660, 23
        %v2662 = vsub.s32 %v2661, 127
        %v2663 = vand.u32 2147483647, %v708
        %v2664 = vand.u32 %v2663, 8388607
        %v2665 = vor.u32 %v2664, 8388608
        %v2666 = vsub.s32 0, %v2665
        %v2667 = vadd.s32 %v2662, 1
        %vm2668 = vcmp.gt.s32.totalorder %v2667, 0
        %v2669 = vsel %vm2668, %v2667, 0
        %v2670 = vshrl.u32 %v2669, 5
        %v2671 = vand.u32 %v2669, 31
        %v2672 = vsub.s32 32, %v2671
        %v2673 = vshrl.u32 683565275, %v2672
        %v2674 = vshll.u32 683565275, %v2671
        %v2675 = vshrl.u32 2475754826, %v2672
        %v2676 = vor.u32 %v2674, %v2675
        %v2677 = vshll.u32 2475754826, %v2671
        %v2678 = vshrl.u32 2131351028, %v2672
        %v2679 = vor.u32 %v2677, %v2678
        %v2680 = vshll.u32 2131351028, %v2671
        %v2681 = vshrl.u32 2102212464, %v2672
        %v2682 = vor.u32 %v2680, %v2681
        %v2683 = vshll.u32 2102212464, %v2671
        %v2684 = vshrl.u32 920167782, %v2672
        %v2685 = vor.u32 %v2683, %v2684
        %v2686 = vshll.u32 920167782, %v2671
        %v2687 = vshrl.u32 1326507024, %v2672
        %v2688 = vor.u32 %v2686, %v2687
        %vm2689 = vcmp.lt.s32.totalorder %v2670, 1
        %vm2690 = vcmp.lt.s32.totalorder %v2670, 2
        %vm2691 = vcmp.lt.s32.totalorder %v2670, 3
        %vm2692 = vcmp.lt.s32.totalorder %v2670, 4
        %v2693 = vsel %vm2689, %v2673, %v2676
        %v2694 = vsel %vm2692, %v2682, 2102212464
        %v2695 = vsel %vm2691, %v2679, %v2694
        %v2696 = vsel %vm2690, %v2693, %v2695
        %v2697 = vsel %vm2689, %v2676, %v2679
        %v2698 = vsel %vm2692, %v2685, 920167782
        %v2699 = vsel %vm2691, %v2682, %v2698
        %v2700 = vsel %vm2690, %v2697, %v2699
        %v2701 = vsel %vm2689, %v2679, %v2682
        %v2702 = vsel %vm2692, %v2688, 1326507024
        %v2703 = vsel %vm2691, %v2685, %v2702
        %v2704 = vsel %vm2690, %v2701, %v2703
        %v2705 = vshll.u32 %v2665, 8
        %v2706 = vmul.u32.u64.compose %v2705, %v2704
        %v2707 = vextract.low.u32 %v2706
        %v2708 = vextract.high.u32 %v2706
        %v2709 = vmul.u32.u64.compose %v2705, %v2700
        %v2710 = vextract.low.u32 %v2709
        %v2711 = vextract.high.u32 %v2709
        %v2712 = vmul.u32 %v2705, %v2696
        %v2713 = vadd.s32 %v2708, %v2710
        %vm2714 = vc.u32 %v2708, %v2710
        %v2715 = vadd.s32 %v2711, 1
        %v2716 = vsel %vm2714, %v2715, %v2711
        %v2717 = vadd.s32 %v2712, %v2716
        %v2718 = vadd.s32 %v2717, 536870912
        %v2719 = vshrl.u32 %v2718, 30
        %v2720 = vshll.u32 %v2719, 30
        %v2721 = vsub.s32 %v2717, %v2720
        %vm2722 = vcmp.lt.s32.totalorder %v2721, 0
        %v2723 = vsub.s32 0, %v2721
        %v2724 = vsel %vm2722, %v2723, %v2721
        %v2725 = vclz %v2724
        %v2726 = vsub.s32 %v2725, 2
        %vm2727 = vcmp.gt.s32.totalorder 0, %v2726
        %v2728 = vsel %vm2727, 0, %v2726
        %v2729 = vsub.s32 32, %v2728
        %v2730 = vshll.u32 %v2721, %v2728
        %v2731 = vshrl.u32 %v2713, %v2729
        %v2732 = vor.u32 %v2730, %v2731
        %v2733 = vsub.s32 4294967266, %v2728
        %v2734 = vadd.s32 %v2733, 127
        %v2735 = vshll.u32 %v2734, 23
        %v2736 = vor.u32 4788187, %v2735
        %v2737 = vand.u32 2147483647, %v2736
        %v2739 = vcvt.s32.f32 %v2732
        %v2740 = vmul.f32 %v2739, %v2737
        %v2741 = vxor.u32 %v2740, 2147483648
        %v2742 = vsel %vm2659, %v2741, %v2740
        %v2743 = vsub.s32 4, %v2719
        %v2744 = vsel %vm2659, %v2743, %v2719
        %v2745 = vsel %vm2658, %v708, %v2742
        %v2746 = vsel %vm2658, 0, %v2744
        %v2747 = vcosq.f32.pop %v2745
        %v2748 = vsinq.f32.pop %v2745
        %vm2749 = vweird.f32 %v708
        %v2750 = vand.u32 %v2746, 3
        %vm2751 = vcmp.lt.s32.totalorder %v2750, 2
        %vm2752 = vcmp.eq.s32.totalorder %v2750, 0
        %v2753 = vxor.u32 %v2748, 2147483648
        %v2754 = vsel %vm2752, %v2747, %v2753
        %vm2755 = vcmp.eq.s32.totalorder %v2750, 2
        %v2756 = vxor.u32 %v2747, 2147483648
        %v2757 = vsel %vm2755, %v2756, %v2748
        %v2758 = vsel %vm2751, %v2754, %v2757
        %v2759 = vsel %vm2749, nan, %v2758
        %v2760 = vand.u32 2147483647, %v709
        %vm2761 = vcmp.le.f32.partialorder %v2760, 0.7853982
        %vm2762 = vcmp.lt.s32.totalorder %v709, 0
        %v2763 = vand.u32 %v709, 2139095040
        %v2764 = vshrl.u32 %v2763, 23
        %v2765 = vsub.s32 %v2764, 127
        %v2766 = vand.u32 2147483647, %v709
        %v2767 = vand.u32 %v2766, 8388607
        %v2768 = vor.u32 %v2767, 8388608
        %v2769 = vsub.s32 0, %v2768
        %v2770 = vadd.s32 %v2765, 1
        %vm2771 = vcmp.gt.s32.totalorder %v2770, 0
        %v2772 = vsel %vm2771, %v2770, 0
        %v2773 = vshrl.u32 %v2772, 5
        %v2774 = vand.u32 %v2772, 31
        %v2775 = vsub.s32 32, %v2774
        %v2776 = vshrl.u32 683565275, %v2775
        %v2777 = vshll.u32 683565275, %v2774
        %v2778 = vshrl.u32 2475754826, %v2775
        %v2779 = vor.u32 %v2777, %v2778
        %v2780 = vshll.u32 2475754826, %v2774
        %v2781 = vshrl.u32 2131351028, %v2775
        %v2782 = vor.u32 %v2780, %v2781
        %v2783 = vshll.u32 2131351028, %v2774
        %v2784 = vshrl.u32 2102212464, %v2775
        %v2785 = vor.u32 %v2783, %v2784
        %v2786 = vshll.u32 2102212464, %v2774
        %v2787 = vshrl.u32 920167782, %v2775
        %v2788 = vor.u32 %v2786, %v2787
        %v2789 = vshll.u32 920167782, %v2774
        %v2790 = vshrl.u32 1326507024, %v2775
        %v2791 = vor.u32 %v2789, %v2790
        %vm2792 = vcmp.lt.s32.totalorder %v2773, 1
        %vm2793 = vcmp.lt.s32.totalorder %v2773, 2
        %vm2794 = vcmp.lt.s32.totalorder %v2773, 3
        %vm2795 = vcmp.lt.s32.totalorder %v2773, 4
        %v2796 = vsel %vm2792, %v2776, %v2779
        %v2797 = vsel %vm2795, %v2785, 2102212464
        %v2798 = vsel %vm2794, %v2782, %v2797
        %v2799 = vsel %vm2793, %v2796, %v2798
        %v2800 = vsel %vm2792, %v2779, %v2782
        %v2801 = vsel %vm2795, %v2788, 920167782
        %v2802 = vsel %vm2794, %v2785, %v2801
        %v2803 = vsel %vm2793, %v2800, %v2802
        %v2804 = vsel %vm2792, %v2782, %v2785
        %v2805 = vsel %vm2795, %v2791, 1326507024
        %v2806 = vsel %vm2794, %v2788, %v2805
        %v2807 = vsel %vm2793, %v2804, %v2806
        %v2808 = vshll.u32 %v2768, 8
        %v2809 = vmul.u32.u64.compose %v2808, %v2807
        %v2810 = vextract.low.u32 %v2809
        %v2811 = vextract.high.u32 %v2809
        %v2812 = vmul.u32.u64.compose %v2808, %v2803
        %v2813 = vextract.low.u32 %v2812
        %v2814 = vextract.high.u32 %v2812
        %v2815 = vmul.u32 %v2808, %v2799
        %v2816 = vadd.s32 %v2811, %v2813
        %vm2817 = vc.u32 %v2811, %v2813
        %v2818 = vadd.s32 %v2814, 1
        %v2819 = vsel %vm2817, %v2818, %v2814
        %v2820 = vadd.s32 %v2815, %v2819
        %v2821 = vadd.s32 %v2820, 536870912
        %v2822 = vshrl.u32 %v2821, 30
        %v2823 = vshll.u32 %v2822, 30
        %v2824 = vsub.s32 %v2820, %v2823
        %vm2825 = vcmp.lt.s32.totalorder %v2824, 0
        %v2826 = vsub.s32 0, %v2824
        %v2827 = vsel %vm2825, %v2826, %v2824
        %v2828 = vclz %v2827
        %v2829 = vsub.s32 %v2828, 2
        %vm2830 = vcmp.gt.s32.totalorder 0, %v2829
        %v2831 = vsel %vm2830, 0, %v2829
        %v2832 = vsub.s32 32, %v2831
        %v2833 = vshll.u32 %v2824, %v2831
        %v2834 = vshrl.u32 %v2816, %v2832
        %v2835 = vor.u32 %v2833, %v2834
        %v2836 = vsub.s32 4294967266, %v2831
        %v2837 = vadd.s32 %v2836, 127
        %v2838 = vshll.u32 %v2837, 23
        %v2839 = vor.u32 4788187, %v2838
        %v2840 = vand.u32 2147483647, %v2839
        %v2842 = vcvt.s32.f32 %v2835
        %v2843 = vmul.f32 %v2842, %v2840
        %v2844 = vxor.u32 %v2843, 2147483648
        %v2845 = vsel %vm2762, %v2844, %v2843
        %v2846 = vsub.s32 4, %v2822
        %v2847 = vsel %vm2762, %v2846, %v2822
        %v2848 = vsel %vm2761, %v709, %v2845
        %v2849 = vsel %vm2761, 0, %v2847
        %v2850 = vcosq.f32.pop %v2848
        %v2851 = vsinq.f32.pop %v2848
        %vm2852 = vweird.f32 %v709
        %v2853 = vand.u32 %v2849, 3
        %vm2854 = vcmp.lt.s32.totalorder %v2853, 2
        %vm2855 = vcmp.eq.s32.totalorder %v2853, 0
        %v2856 = vxor.u32 %v2851, 2147483648
        %v2857 = vsel %vm2855, %v2850, %v2856
        %vm2858 = vcmp.eq.s32.totalorder %v2853, 2
        %v2859 = vxor.u32 %v2850, 2147483648
        %v2860 = vsel %vm2858, %v2859, %v2851
        %v2861 = vsel %vm2854, %v2857, %v2860
        %v2862 = vsel %vm2852, nan, %v2861
        %v2863 = vand.u32 2147483647, %v710
        %vm2864 = vcmp.le.f32.partialorder %v2863, 0.7853982
        %vm2865 = vcmp.lt.s32.totalorder %v710, 0
        %v2866 = vand.u32 %v710, 2139095040
        %v2867 = vshrl.u32 %v2866, 23
        %v2868 = vsub.s32 %v2867, 127
        %v2869 = vand.u32 2147483647, %v710
        %v2870 = vand.u32 %v2869, 8388607
        %v2871 = vor.u32 %v2870, 8388608
        %v2872 = vsub.s32 0, %v2871
        %v2873 = vadd.s32 %v2868, 1
        %vm2874 = vcmp.gt.s32.totalorder %v2873, 0
        %v2875 = vsel %vm2874, %v2873, 0
        %v2876 = vshrl.u32 %v2875, 5
        %v2877 = vand.u32 %v2875, 31
        %v2878 = vsub.s32 32, %v2877
        %v2879 = vshrl.u32 683565275, %v2878
        %v2880 = vshll.u32 683565275, %v2877
        %v2881 = vshrl.u32 2475754826, %v2878
        %v2882 = vor.u32 %v2880, %v2881
        %v2883 = vshll.u32 2475754826, %v2877
        %v2884 = vshrl.u32 2131351028, %v2878
        %v2885 = vor.u32 %v2883, %v2884
        %v2886 = vshll.u32 2131351028, %v2877
        %v2887 = vshrl.u32 2102212464, %v2878
        %v2888 = vor.u32 %v2886, %v2887
        %v2889 = vshll.u32 2102212464, %v2877
        %v2890 = vshrl.u32 920167782, %v2878
        %v2891 = vor.u32 %v2889, %v2890
        %v2892 = vshll.u32 920167782, %v2877
        %v2893 = vshrl.u32 1326507024, %v2878
        %v2894 = vor.u32 %v2892, %v2893
        %vm2895 = vcmp.lt.s32.totalorder %v2876, 1
        %vm2896 = vcmp.lt.s32.totalorder %v2876, 2
        %vm2897 = vcmp.lt.s32.totalorder %v2876, 3
        %vm2898 = vcmp.lt.s32.totalorder %v2876, 4
        %v2899 = vsel %vm2895, %v2879, %v2882
        %v2900 = vsel %vm2898, %v2888, 2102212464
        %v2901 = vsel %vm2897, %v2885, %v2900
        %v2902 = vsel %vm2896, %v2899, %v2901
        %v2903 = vsel %vm2895, %v2882, %v2885
        %v2904 = vsel %vm2898, %v2891, 920167782
        %v2905 = vsel %vm2897, %v2888, %v2904
        %v2906 = vsel %vm2896, %v2903, %v2905
        %v2907 = vsel %vm2895, %v2885, %v2888
        %v2908 = vsel %vm2898, %v2894, 1326507024
        %v2909 = vsel %vm2897, %v2891, %v2908
        %v2910 = vsel %vm2896, %v2907, %v2909
        %v2911 = vshll.u32 %v2871, 8
        %v2912 = vmul.u32.u64.compose %v2911, %v2910
        %v2913 = vextract.low.u32 %v2912
        %v2914 = vextract.high.u32 %v2912
        %v2915 = vmul.u32.u64.compose %v2911, %v2906
        %v2916 = vextract.low.u32 %v2915
        %v2917 = vextract.high.u32 %v2915
        %v2918 = vmul.u32 %v2911, %v2902
        %v2919 = vadd.s32 %v2914, %v2916
        %vm2920 = vc.u32 %v2914, %v2916
        %v2921 = vadd.s32 %v2917, 1
        %v2922 = vsel %vm2920, %v2921, %v2917
        %v2923 = vadd.s32 %v2918, %v2922
        %v2924 = vadd.s32 %v2923, 536870912
        %v2925 = vshrl.u32 %v2924, 30
        %v2926 = vshll.u32 %v2925, 30
        %v2927 = vsub.s32 %v2923, %v2926
        %vm2928 = vcmp.lt.s32.totalorder %v2927, 0
        %v2929 = vsub.s32 0, %v2927
        %v2930 = vsel %vm2928, %v2929, %v2927
        %v2931 = vclz %v2930
        %v2932 = vsub.s32 %v2931, 2
        %vm2933 = vcmp.gt.s32.totalorder 0, %v2932
        %v2934 = vsel %vm2933, 0, %v2932
        %v2935 = vsub.s32 32, %v2934
        %v2936 = vshll.u32 %v2927, %v2934
        %v2937 = vshrl.u32 %v2919, %v2935
        %v2938 = vor.u32 %v2936, %v2937
        %v2939 = vsub.s32 4294967266, %v2934
        %v2940 = vadd.s32 %v2939, 127
        %v2941 = vshll.u32 %v2940, 23
        %v2942 = vor.u32 4788187, %v2941
        %v2943 = vand.u32 2147483647, %v2942
        %v2945 = vcvt.s32.f32 %v2938
        %v2946 = vmul.f32 %v2945, %v2943
        %v2947 = vxor.u32 %v2946, 2147483648
        %v2948 = vsel %vm2865, %v2947, %v2946
        %v2949 = vsub.s32 4, %v2925
        %v2950 = vsel %vm2865, %v2949, %v2925
        %v2951 = vsel %vm2864, %v710, %v2948
        %v2952 = vsel %vm2864, 0, %v2950
        %v2953 = vcosq.f32.pop %v2951
        %v2954 = vsinq.f32.pop %v2951
        %vm2955 = vweird.f32 %v710
        %v2956 = vand.u32 %v2952, 3
        %vm2957 = vcmp.lt.s32.totalorder %v2956, 2
        %vm2958 = vcmp.eq.s32.totalorder %v2956, 0
        %v2959 = vxor.u32 %v2954, 2147483648
        %v2960 = vsel %vm2958, %v2953, %v2959
        %vm2961 = vcmp.eq.s32.totalorder %v2956, 2
        %v2962 = vxor.u32 %v2953, 2147483648
        %v2963 = vsel %vm2961, %v2962, %v2954
        %v2964 = vsel %vm2957, %v2960, %v2963
        %v2965 = vsel %vm2955, nan, %v2964
        %v2966 = vand.u32 2147483647, %v711
        %vm2967 = vcmp.le.f32.partialorder %v2966, 0.7853982
        %vm2968 = vcmp.lt.s32.totalorder %v711, 0
        %v2969 = vand.u32 %v711, 2139095040
        %v2970 = vshrl.u32 %v2969, 23
        %v2971 = vsub.s32 %v2970, 127
        %v2972 = vand.u32 2147483647, %v711
        %v2973 = vand.u32 %v2972, 8388607
        %v2974 = vor.u32 %v2973, 8388608
        %v2975 = vsub.s32 0, %v2974
        %v2976 = vadd.s32 %v2971, 1
        %vm2977 = vcmp.gt.s32.totalorder %v2976, 0
        %v2978 = vsel %vm2977, %v2976, 0
        %v2979 = vshrl.u32 %v2978, 5
        %v2980 = vand.u32 %v2978, 31
        %v2981 = vsub.s32 32, %v2980
        %v2982 = vshrl.u32 683565275, %v2981
        %v2983 = vshll.u32 683565275, %v2980
        %v2984 = vshrl.u32 2475754826, %v2981
        %v2985 = vor.u32 %v2983, %v2984
        %v2986 = vshll.u32 2475754826, %v2980
        %v2987 = vshrl.u32 2131351028, %v2981
        %v2988 = vor.u32 %v2986, %v2987
        %v2989 = vshll.u32 2131351028, %v2980
        %v2990 = vshrl.u32 2102212464, %v2981
        %v2991 = vor.u32 %v2989, %v2990
        %v2992 = vshll.u32 2102212464, %v2980
        %v2993 = vshrl.u32 920167782, %v2981
        %v2994 = vor.u32 %v2992, %v2993
        %v2995 = vshll.u32 920167782, %v2980
        %v2996 = vshrl.u32 1326507024, %v2981
        %v2997 = vor.u32 %v2995, %v2996
        %vm2998 = vcmp.lt.s32.totalorder %v2979, 1
        %vm2999 = vcmp.lt.s32.totalorder %v2979, 2
        %vm3000 = vcmp.lt.s32.totalorder %v2979, 3
        %vm3001 = vcmp.lt.s32.totalorder %v2979, 4
        %v3002 = vsel %vm2998, %v2982, %v2985
        %v3003 = vsel %vm3001, %v2991, 2102212464
        %v3004 = vsel %vm3000, %v2988, %v3003
        %v3005 = vsel %vm2999, %v3002, %v3004
        %v3006 = vsel %vm2998, %v2985, %v2988
        %v3007 = vsel %vm3001, %v2994, 920167782
        %v3008 = vsel %vm3000, %v2991, %v3007
        %v3009 = vsel %vm2999, %v3006, %v3008
        %v3010 = vsel %vm2998, %v2988, %v2991
        %v3011 = vsel %vm3001, %v2997, 1326507024
        %v3012 = vsel %vm3000, %v2994, %v3011
        %v3013 = vsel %vm2999, %v3010, %v3012
        %v3014 = vshll.u32 %v2974, 8
        %v3015 = vmul.u32.u64.compose %v3014, %v3013
        %v3016 = vextract.low.u32 %v3015
        %v3017 = vextract.high.u32 %v3015
        %v3018 = vmul.u32.u64.compose %v3014, %v3009
        %v3019 = vextract.low.u32 %v3018
        %v3020 = vextract.high.u32 %v3018
        %v3021 = vmul.u32 %v3014, %v3005
        %v3022 = vadd.s32 %v3017, %v3019
        %vm3023 = vc.u32 %v3017, %v3019
        %v3024 = vadd.s32 %v3020, 1
        %v3025 = vsel %vm3023, %v3024, %v3020
        %v3026 = vadd.s32 %v3021, %v3025
        %v3027 = vadd.s32 %v3026, 536870912
        %v3028 = vshrl.u32 %v3027, 30
        %v3029 = vshll.u32 %v3028, 30
        %v3030 = vsub.s32 %v3026, %v3029
        %vm3031 = vcmp.lt.s32.totalorder %v3030, 0
        %v3032 = vsub.s32 0, %v3030
        %v3033 = vsel %vm3031, %v3032, %v3030
        %v3034 = vclz %v3033
        %v3035 = vsub.s32 %v3034, 2
        %vm3036 = vcmp.gt.s32.totalorder 0, %v3035
        %v3037 = vsel %vm3036, 0, %v3035
        %v3038 = vsub.s32 32, %v3037
        %v3039 = vshll.u32 %v3030, %v3037
        %v3040 = vshrl.u32 %v3022, %v3038
        %v3041 = vor.u32 %v3039, %v3040
        %v3042 = vsub.s32 4294967266, %v3037
        %v3043 = vadd.s32 %v3042, 127
        %v3044 = vshll.u32 %v3043, 23
        %v3045 = vor.u32 4788187, %v3044
        %v3046 = vand.u32 2147483647, %v3045
        %v3048 = vcvt.s32.f32 %v3041
        %v3049 = vmul.f32 %v3048, %v3046
        %v3050 = vxor.u32 %v3049, 2147483648
        %v3051 = vsel %vm2968, %v3050, %v3049
        %v3052 = vsub.s32 4, %v3028
        %v3053 = vsel %vm2968, %v3052, %v3028
        %v3054 = vsel %vm2967, %v711, %v3051
        %v3055 = vsel %vm2967, 0, %v3053
        %v3056 = vcosq.f32.pop %v3054
        %v3057 = vsinq.f32.pop %v3054
        %vm3058 = vweird.f32 %v711
        %v3059 = vand.u32 %v3055, 3
        %vm3060 = vcmp.lt.s32.totalorder %v3059, 2
        %vm3061 = vcmp.eq.s32.totalorder %v3059, 0
        %v3062 = vxor.u32 %v3057, 2147483648
        %v3063 = vsel %vm3061, %v3056, %v3062
        %vm3064 = vcmp.eq.s32.totalorder %v3059, 2
        %v3065 = vxor.u32 %v3056, 2147483648
        %v3066 = vsel %vm3064, %v3065, %v3057
        %v3067 = vsel %vm3060, %v3063, %v3066
        %v3068 = vsel %vm3058, nan, %v3067
        %v3069 = vand.u32 2147483647, %v712
        %vm3070 = vcmp.le.f32.partialorder %v3069, 0.7853982
        %vm3071 = vcmp.lt.s32.totalorder %v712, 0
        %v3072 = vand.u32 %v712, 2139095040
        %v3073 = vshrl.u32 %v3072, 23
        %v3074 = vsub.s32 %v3073, 127
        %v3075 = vand.u32 2147483647, %v712
        %v3076 = vand.u32 %v3075, 8388607
        %v3077 = vor.u32 %v3076, 8388608
        %v3078 = vsub.s32 0, %v3077
        %v3079 = vadd.s32 %v3074, 1
        %vm3080 = vcmp.gt.s32.totalorder %v3079, 0
        %v3081 = vsel %vm3080, %v3079, 0
        %v3082 = vshrl.u32 %v3081, 5
        %v3083 = vand.u32 %v3081, 31
        %v3084 = vsub.s32 32, %v3083
        %v3085 = vshrl.u32 683565275, %v3084
        %v3086 = vshll.u32 683565275, %v3083
        %v3087 = vshrl.u32 2475754826, %v3084
        %v3088 = vor.u32 %v3086, %v3087
        %v3089 = vshll.u32 2475754826, %v3083
        %v3090 = vshrl.u32 2131351028, %v3084
        %v3091 = vor.u32 %v3089, %v3090
        %v3092 = vshll.u32 2131351028, %v3083
        %v3093 = vshrl.u32 2102212464, %v3084
        %v3094 = vor.u32 %v3092, %v3093
        %v3095 = vshll.u32 2102212464, %v3083
        %v3096 = vshrl.u32 920167782, %v3084
        %v3097 = vor.u32 %v3095, %v3096
        %v3098 = vshll.u32 920167782, %v3083
        %v3099 = vshrl.u32 1326507024, %v3084
        %v3100 = vor.u32 %v3098, %v3099
        %vm3101 = vcmp.lt.s32.totalorder %v3082, 1
        %vm3102 = vcmp.lt.s32.totalorder %v3082, 2
        %vm3103 = vcmp.lt.s32.totalorder %v3082, 3
        %vm3104 = vcmp.lt.s32.totalorder %v3082, 4
        %v3105 = vsel %vm3101, %v3085, %v3088
        %v3106 = vsel %vm3104, %v3094, 2102212464
        %v3107 = vsel %vm3103, %v3091, %v3106
        %v3108 = vsel %vm3102, %v3105, %v3107
        %v3109 = vsel %vm3101, %v3088, %v3091
        %v3110 = vsel %vm3104, %v3097, 920167782
        %v3111 = vsel %vm3103, %v3094, %v3110
        %v3112 = vsel %vm3102, %v3109, %v3111
        %v3113 = vsel %vm3101, %v3091, %v3094
        %v3114 = vsel %vm3104, %v3100, 1326507024
        %v3115 = vsel %vm3103, %v3097, %v3114
        %v3116 = vsel %vm3102, %v3113, %v3115
        %v3117 = vshll.u32 %v3077, 8
        %v3118 = vmul.u32.u64.compose %v3117, %v3116
        %v3119 = vextract.low.u32 %v3118
        %v3120 = vextract.high.u32 %v3118
        %v3121 = vmul.u32.u64.compose %v3117, %v3112
        %v3122 = vextract.low.u32 %v3121
        %v3123 = vextract.high.u32 %v3121
        %v3124 = vmul.u32 %v3117, %v3108
        %v3125 = vadd.s32 %v3120, %v3122
        %vm3126 = vc.u32 %v3120, %v3122
        %v3127 = vadd.s32 %v3123, 1
        %v3128 = vsel %vm3126, %v3127, %v3123
        %v3129 = vadd.s32 %v3124, %v3128
        %v3130 = vadd.s32 %v3129, 536870912
        %v3131 = vshrl.u32 %v3130, 30
        %v3132 = vshll.u32 %v3131, 30
        %v3133 = vsub.s32 %v3129, %v3132
        %vm3134 = vcmp.lt.s32.totalorder %v3133, 0
        %v3135 = vsub.s32 0, %v3133
        %v3136 = vsel %vm3134, %v3135, %v3133
        %v3137 = vclz %v3136
        %v3138 = vsub.s32 %v3137, 2
        %vm3139 = vcmp.gt.s32.totalorder 0, %v3138
        %v3140 = vsel %vm3139, 0, %v3138
        %v3141 = vsub.s32 32, %v3140
        %v3142 = vshll.u32 %v3133, %v3140
        %v3143 = vshrl.u32 %v3125, %v3141
        %v3144 = vor.u32 %v3142, %v3143
        %v3145 = vsub.s32 4294967266, %v3140
        %v3146 = vadd.s32 %v3145, 127
        %v3147 = vshll.u32 %v3146, 23
        %v3148 = vor.u32 4788187, %v3147
        %v3149 = vand.u32 2147483647, %v3148
        %v3151 = vcvt.s32.f32 %v3144
        %v3152 = vmul.f32 %v3151, %v3149
        %v3153 = vxor.u32 %v3152, 2147483648
        %v3154 = vsel %vm3071, %v3153, %v3152
        %v3155 = vsub.s32 4, %v3131
        %v3156 = vsel %vm3071, %v3155, %v3131
        %v3157 = vsel %vm3070, %v712, %v3154
        %v3158 = vsel %vm3070, 0, %v3156
        %v3159 = vcosq.f32.pop %v3157
        %v3160 = vsinq.f32.pop %v3157
        %vm3161 = vweird.f32 %v712
        %v3162 = vand.u32 %v3158, 3
        %vm3163 = vcmp.lt.s32.totalorder %v3162, 2
        %vm3164 = vcmp.eq.s32.totalorder %v3162, 0
        %v3165 = vxor.u32 %v3160, 2147483648
        %v3166 = vsel %vm3164, %v3159, %v3165
        %vm3167 = vcmp.eq.s32.totalorder %v3162, 2
        %v3168 = vxor.u32 %v3159, 2147483648
        %v3169 = vsel %vm3167, %v3168, %v3160
        %v3170 = vsel %vm3163, %v3166, %v3169
        %v3171 = vsel %vm3161, nan, %v3170
        %v3172 = vand.u32 2147483647, %v713
        %vm3173 = vcmp.le.f32.partialorder %v3172, 0.7853982
        %vm3174 = vcmp.lt.s32.totalorder %v713, 0
        %v3175 = vand.u32 %v713, 2139095040
        %v3176 = vshrl.u32 %v3175, 23
        %v3177 = vsub.s32 %v3176, 127
        %v3178 = vand.u32 2147483647, %v713
        %v3179 = vand.u32 %v3178, 8388607
        %v3180 = vor.u32 %v3179, 8388608
        %v3181 = vsub.s32 0, %v3180
        %v3182 = vadd.s32 %v3177, 1
        %vm3183 = vcmp.gt.s32.totalorder %v3182, 0
        %v3184 = vsel %vm3183, %v3182, 0
        %v3185 = vshrl.u32 %v3184, 5
        %v3186 = vand.u32 %v3184, 31
        %v3187 = vsub.s32 32, %v3186
        %v3188 = vshrl.u32 683565275, %v3187
        %v3189 = vshll.u32 683565275, %v3186
        %v3190 = vshrl.u32 2475754826, %v3187
        %v3191 = vor.u32 %v3189, %v3190
        %v3192 = vshll.u32 2475754826, %v3186
        %v3193 = vshrl.u32 2131351028, %v3187
        %v3194 = vor.u32 %v3192, %v3193
        %v3195 = vshll.u32 2131351028, %v3186
        %v3196 = vshrl.u32 2102212464, %v3187
        %v3197 = vor.u32 %v3195, %v3196
        %v3198 = vshll.u32 2102212464, %v3186
        %v3199 = vshrl.u32 920167782, %v3187
        %v3200 = vor.u32 %v3198, %v3199
        %v3201 = vshll.u32 920167782, %v3186
        %v3202 = vshrl.u32 1326507024, %v3187
        %v3203 = vor.u32 %v3201, %v3202
        %vm3204 = vcmp.lt.s32.totalorder %v3185, 1
        %vm3205 = vcmp.lt.s32.totalorder %v3185, 2
        %vm3206 = vcmp.lt.s32.totalorder %v3185, 3
        %vm3207 = vcmp.lt.s32.totalorder %v3185, 4
        %v3208 = vsel %vm3204, %v3188, %v3191
        %v3209 = vsel %vm3207, %v3197, 2102212464
        %v3210 = vsel %vm3206, %v3194, %v3209
        %v3211 = vsel %vm3205, %v3208, %v3210
        %v3212 = vsel %vm3204, %v3191, %v3194
        %v3213 = vsel %vm3207, %v3200, 920167782
        %v3214 = vsel %vm3206, %v3197, %v3213
        %v3215 = vsel %vm3205, %v3212, %v3214
        %v3216 = vsel %vm3204, %v3194, %v3197
        %v3217 = vsel %vm3207, %v3203, 1326507024
        %v3218 = vsel %vm3206, %v3200, %v3217
        %v3219 = vsel %vm3205, %v3216, %v3218
        %v3220 = vshll.u32 %v3180, 8
        %v3221 = vmul.u32.u64.compose %v3220, %v3219
        %v3222 = vextract.low.u32 %v3221
        %v3223 = vextract.high.u32 %v3221
        %v3224 = vmul.u32.u64.compose %v3220, %v3215
        %v3225 = vextract.low.u32 %v3224
        %v3226 = vextract.high.u32 %v3224
        %v3227 = vmul.u32 %v3220, %v3211
        %v3228 = vadd.s32 %v3223, %v3225
        %vm3229 = vc.u32 %v3223, %v3225
        %v3230 = vadd.s32 %v3226, 1
        %v3231 = vsel %vm3229, %v3230, %v3226
        %v3232 = vadd.s32 %v3227, %v3231
        %v3233 = vadd.s32 %v3232, 536870912
        %v3234 = vshrl.u32 %v3233, 30
        %v3235 = vshll.u32 %v3234, 30
        %v3236 = vsub.s32 %v3232, %v3235
        %vm3237 = vcmp.lt.s32.totalorder %v3236, 0
        %v3238 = vsub.s32 0, %v3236
        %v3239 = vsel %vm3237, %v3238, %v3236
        %v3240 = vclz %v3239
        %v3241 = vsub.s32 %v3240, 2
        %vm3242 = vcmp.gt.s32.totalorder 0, %v3241
        %v3243 = vsel %vm3242, 0, %v3241
        %v3244 = vsub.s32 32, %v3243
        %v3245 = vshll.u32 %v3236, %v3243
        %v3246 = vshrl.u32 %v3228, %v3244
        %v3247 = vor.u32 %v3245, %v3246
        %v3248 = vsub.s32 4294967266, %v3243
        %v3249 = vadd.s32 %v3248, 127
        %v3250 = vshll.u32 %v3249, 23
        %v3251 = vor.u32 4788187, %v3250
        %v3252 = vand.u32 2147483647, %v3251
        %v3254 = vcvt.s32.f32 %v3247
        %v3255 = vmul.f32 %v3254, %v3252
        %v3256 = vxor.u32 %v3255, 2147483648
        %v3257 = vsel %vm3174, %v3256, %v3255
        %v3258 = vsub.s32 4, %v3234
        %v3259 = vsel %vm3174, %v3258, %v3234
        %v3260 = vsel %vm3173, %v713, %v3257
        %v3261 = vsel %vm3173, 0, %v3259
        %v3262 = vcosq.f32.pop %v3260
        %v3263 = vsinq.f32.pop %v3260
        %vm3264 = vweird.f32 %v713
        %v3265 = vand.u32 %v3261, 3
        %vm3266 = vcmp.lt.s32.totalorder %v3265, 2
        %vm3267 = vcmp.eq.s32.totalorder %v3265, 0
        %v3268 = vxor.u32 %v3263, 2147483648
        %v3269 = vsel %vm3267, %v3262, %v3268
        %vm3270 = vcmp.eq.s32.totalorder %v3265, 2
        %v3271 = vxor.u32 %v3262, 2147483648
        %v3272 = vsel %vm3270, %v3271, %v3263
        %v3273 = vsel %vm3266, %v3269, %v3272
        %v3274 = vsel %vm3264, nan, %v3273
        %v3275 = vand.u32 2147483647, %v714
        %vm3276 = vcmp.le.f32.partialorder %v3275, 0.7853982
        %vm3277 = vcmp.lt.s32.totalorder %v714, 0
        %v3278 = vand.u32 %v714, 2139095040
        %v3279 = vshrl.u32 %v3278, 23
        %v3280 = vsub.s32 %v3279, 127
        %v3281 = vand.u32 2147483647, %v714
        %v3282 = vand.u32 %v3281, 8388607
        %v3283 = vor.u32 %v3282, 8388608
        %v3284 = vsub.s32 0, %v3283
        %v3285 = vadd.s32 %v3280, 1
        %vm3286 = vcmp.gt.s32.totalorder %v3285, 0
        %v3287 = vsel %vm3286, %v3285, 0
        %v3288 = vshrl.u32 %v3287, 5
        %v3289 = vand.u32 %v3287, 31
        %v3290 = vsub.s32 32, %v3289
        %v3291 = vshrl.u32 683565275, %v3290
        %v3292 = vshll.u32 683565275, %v3289
        %v3293 = vshrl.u32 2475754826, %v3290
        %v3294 = vor.u32 %v3292, %v3293
        %v3295 = vshll.u32 2475754826, %v3289
        %v3296 = vshrl.u32 2131351028, %v3290
        %v3297 = vor.u32 %v3295, %v3296
        %v3298 = vshll.u32 2131351028, %v3289
        %v3299 = vshrl.u32 2102212464, %v3290
        %v3300 = vor.u32 %v3298, %v3299
        %v3301 = vshll.u32 2102212464, %v3289
        %v3302 = vshrl.u32 920167782, %v3290
        %v3303 = vor.u32 %v3301, %v3302
        %v3304 = vshll.u32 920167782, %v3289
        %v3305 = vshrl.u32 1326507024, %v3290
        %v3306 = vor.u32 %v3304, %v3305
        %vm3307 = vcmp.lt.s32.totalorder %v3288, 1
        %vm3308 = vcmp.lt.s32.totalorder %v3288, 2
        %vm3309 = vcmp.lt.s32.totalorder %v3288, 3
        %vm3310 = vcmp.lt.s32.totalorder %v3288, 4
        %v3311 = vsel %vm3307, %v3291, %v3294
        %v3312 = vsel %vm3310, %v3300, 2102212464
        %v3313 = vsel %vm3309, %v3297, %v3312
        %v3314 = vsel %vm3308, %v3311, %v3313
        %v3315 = vsel %vm3307, %v3294, %v3297
        %v3316 = vsel %vm3310, %v3303, 920167782
        %v3317 = vsel %vm3309, %v3300, %v3316
        %v3318 = vsel %vm3308, %v3315, %v3317
        %v3319 = vsel %vm3307, %v3297, %v3300
        %v3320 = vsel %vm3310, %v3306, 1326507024
        %v3321 = vsel %vm3309, %v3303, %v3320
        %v3322 = vsel %vm3308, %v3319, %v3321
        %v3323 = vshll.u32 %v3283, 8
        %v3324 = vmul.u32.u64.compose %v3323, %v3322
        %v3325 = vextract.low.u32 %v3324
        %v3326 = vextract.high.u32 %v3324
        %v3327 = vmul.u32.u64.compose %v3323, %v3318
        %v3328 = vextract.low.u32 %v3327
        %v3329 = vextract.high.u32 %v3327
        %v3330 = vmul.u32 %v3323, %v3314
        %v3331 = vadd.s32 %v3326, %v3328
        %vm3332 = vc.u32 %v3326, %v3328
        %v3333 = vadd.s32 %v3329, 1
        %v3334 = vsel %vm3332, %v3333, %v3329
        %v3335 = vadd.s32 %v3330, %v3334
        %v3336 = vadd.s32 %v3335, 536870912
        %v3337 = vshrl.u32 %v3336, 30
        %v3338 = vshll.u32 %v3337, 30
        %v3339 = vsub.s32 %v3335, %v3338
        %vm3340 = vcmp.lt.s32.totalorder %v3339, 0
        %v3341 = vsub.s32 0, %v3339
        %v3342 = vsel %vm3340, %v3341, %v3339
        %v3343 = vclz %v3342
        %v3344 = vsub.s32 %v3343, 2
        %vm3345 = vcmp.gt.s32.totalorder 0, %v3344
        %v3346 = vsel %vm3345, 0, %v3344
        %v3347 = vsub.s32 32, %v3346
        %v3348 = vshll.u32 %v3339, %v3346
        %v3349 = vshrl.u32 %v3331, %v3347
        %v3350 = vor.u32 %v3348, %v3349
        %v3351 = vsub.s32 4294967266, %v3346
        %v3352 = vadd.s32 %v3351, 127
        %v3353 = vshll.u32 %v3352, 23
        %v3354 = vor.u32 4788187, %v3353
        %v3355 = vand.u32 2147483647, %v3354
        %v3357 = vcvt.s32.f32 %v3350
        %v3358 = vmul.f32 %v3357, %v3355
        %v3359 = vxor.u32 %v3358, 2147483648
        %v3360 = vsel %vm3277, %v3359, %v3358
        %v3361 = vsub.s32 4, %v3337
        %v3362 = vsel %vm3277, %v3361, %v3337
        %v3363 = vsel %vm3276, %v714, %v3360
        %v3364 = vsel %vm3276, 0, %v3362
        %v3365 = vcosq.f32.pop %v3363
        %v3366 = vsinq.f32.pop %v3363
        %vm3367 = vweird.f32 %v714
        %v3368 = vand.u32 %v3364, 3
        %vm3369 = vcmp.lt.s32.totalorder %v3368, 2
        %vm3370 = vcmp.eq.s32.totalorder %v3368, 0
        %v3371 = vxor.u32 %v3366, 2147483648
        %v3372 = vsel %vm3370, %v3365, %v3371
        %vm3373 = vcmp.eq.s32.totalorder %v3368, 2
        %v3374 = vxor.u32 %v3365, 2147483648
        %v3375 = vsel %vm3373, %v3374, %v3366
        %v3376 = vsel %vm3369, %v3372, %v3375
        %v3377 = vsel %vm3367, nan, %v3376
        %v3378 = vand.u32 2147483647, %v715
        %vm3379 = vcmp.le.f32.partialorder %v3378, 0.7853982
        %vm3380 = vcmp.lt.s32.totalorder %v715, 0
        %v3381 = vand.u32 %v715, 2139095040
        %v3382 = vshrl.u32 %v3381, 23
        %v3383 = vsub.s32 %v3382, 127
        %v3384 = vand.u32 2147483647, %v715
        %v3385 = vand.u32 %v3384, 8388607
        %v3386 = vor.u32 %v3385, 8388608
        %v3387 = vsub.s32 0, %v3386
        %v3388 = vadd.s32 %v3383, 1
        %vm3389 = vcmp.gt.s32.totalorder %v3388, 0
        %v3390 = vsel %vm3389, %v3388, 0
        %v3391 = vshrl.u32 %v3390, 5
        %v3392 = vand.u32 %v3390, 31
        %v3393 = vsub.s32 32, %v3392
        %v3394 = vshrl.u32 683565275, %v3393
        %v3395 = vshll.u32 683565275, %v3392
        %v3396 = vshrl.u32 2475754826, %v3393
        %v3397 = vor.u32 %v3395, %v3396
        %v3398 = vshll.u32 2475754826, %v3392
        %v3399 = vshrl.u32 2131351028, %v3393
        %v3400 = vor.u32 %v3398, %v3399
        %v3401 = vshll.u32 2131351028, %v3392
        %v3402 = vshrl.u32 2102212464, %v3393
        %v3403 = vor.u32 %v3401, %v3402
        %v3404 = vshll.u32 2102212464, %v3392
        %v3405 = vshrl.u32 920167782, %v3393
        %v3406 = vor.u32 %v3404, %v3405
        %v3407 = vshll.u32 920167782, %v3392
        %v3408 = vshrl.u32 1326507024, %v3393
        %v3409 = vor.u32 %v3407, %v3408
        %vm3410 = vcmp.lt.s32.totalorder %v3391, 1
        %vm3411 = vcmp.lt.s32.totalorder %v3391, 2
        %vm3412 = vcmp.lt.s32.totalorder %v3391, 3
        %vm3413 = vcmp.lt.s32.totalorder %v3391, 4
        %v3414 = vsel %vm3410, %v3394, %v3397
        %v3415 = vsel %vm3413, %v3403, 2102212464
        %v3416 = vsel %vm3412, %v3400, %v3415
        %v3417 = vsel %vm3411, %v3414, %v3416
        %v3418 = vsel %vm3410, %v3397, %v3400
        %v3419 = vsel %vm3413, %v3406, 920167782
        %v3420 = vsel %vm3412, %v3403, %v3419
        %v3421 = vsel %vm3411, %v3418, %v3420
        %v3422 = vsel %vm3410, %v3400, %v3403
        %v3423 = vsel %vm3413, %v3409, 1326507024
        %v3424 = vsel %vm3412, %v3406, %v3423
        %v3425 = vsel %vm3411, %v3422, %v3424
        %v3426 = vshll.u32 %v3386, 8
        %v3427 = vmul.u32.u64.compose %v3426, %v3425
        %v3428 = vextract.low.u32 %v3427
        %v3429 = vextract.high.u32 %v3427
        %v3430 = vmul.u32.u64.compose %v3426, %v3421
        %v3431 = vextract.low.u32 %v3430
        %v3432 = vextract.high.u32 %v3430
        %v3433 = vmul.u32 %v3426, %v3417
        %v3434 = vadd.s32 %v3429, %v3431
        %vm3435 = vc.u32 %v3429, %v3431
        %v3436 = vadd.s32 %v3432, 1
        %v3437 = vsel %vm3435, %v3436, %v3432
        %v3438 = vadd.s32 %v3433, %v3437
        %v3439 = vadd.s32 %v3438, 536870912
        %v3440 = vshrl.u32 %v3439, 30
        %v3441 = vshll.u32 %v3440, 30
        %v3442 = vsub.s32 %v3438, %v3441
        %vm3443 = vcmp.lt.s32.totalorder %v3442, 0
        %v3444 = vsub.s32 0, %v3442
        %v3445 = vsel %vm3443, %v3444, %v3442
        %v3446 = vclz %v3445
        %v3447 = vsub.s32 %v3446, 2
        %vm3448 = vcmp.gt.s32.totalorder 0, %v3447
        %v3449 = vsel %vm3448, 0, %v3447
        %v3450 = vsub.s32 32, %v3449
        %v3451 = vshll.u32 %v3442, %v3449
        %v3452 = vshrl.u32 %v3434, %v3450
        %v3453 = vor.u32 %v3451, %v3452
        %v3454 = vsub.s32 4294967266, %v3449
        %v3455 = vadd.s32 %v3454, 127
        %v3456 = vshll.u32 %v3455, 23
        %v3457 = vor.u32 4788187, %v3456
        %v3458 = vand.u32 2147483647, %v3457
        %v3460 = vcvt.s32.f32 %v3453
        %v3461 = vmul.f32 %v3460, %v3458
        %v3462 = vxor.u32 %v3461, 2147483648
        %v3463 = vsel %vm3380, %v3462, %v3461
        %v3464 = vsub.s32 4, %v3440
        %v3465 = vsel %vm3380, %v3464, %v3440
        %v3466 = vsel %vm3379, %v715, %v3463
        %v3467 = vsel %vm3379, 0, %v3465
        %v3468 = vcosq.f32.pop %v3466
        %v3469 = vsinq.f32.pop %v3466
        %vm3470 = vweird.f32 %v715
        %v3471 = vand.u32 %v3467, 3
        %vm3472 = vcmp.lt.s32.totalorder %v3471, 2
        %vm3473 = vcmp.eq.s32.totalorder %v3471, 0
        %v3474 = vxor.u32 %v3469, 2147483648
        %v3475 = vsel %vm3473, %v3468, %v3474
        %vm3476 = vcmp.eq.s32.totalorder %v3471, 2
        %v3477 = vxor.u32 %v3468, 2147483648
        %v3478 = vsel %vm3476, %v3477, %v3469
        %v3479 = vsel %vm3472, %v3475, %v3478
        %v3480 = vsel %vm3470, nan, %v3479
        %v3481 = vand.u32 2147483647, %v716
        %vm3482 = vcmp.le.f32.partialorder %v3481, 0.7853982
        %vm3483 = vcmp.lt.s32.totalorder %v716, 0
        %v3484 = vand.u32 %v716, 2139095040
        %v3485 = vshrl.u32 %v3484, 23
        %v3486 = vsub.s32 %v3485, 127
        %v3487 = vand.u32 2147483647, %v716
        %v3488 = vand.u32 %v3487, 8388607
        %v3489 = vor.u32 %v3488, 8388608
        %v3490 = vsub.s32 0, %v3489
        %v3491 = vadd.s32 %v3486, 1
        %vm3492 = vcmp.gt.s32.totalorder %v3491, 0
        %v3493 = vsel %vm3492, %v3491, 0
        %v3494 = vshrl.u32 %v3493, 5
        %v3495 = vand.u32 %v3493, 31
        %v3496 = vsub.s32 32, %v3495
        %v3497 = vshrl.u32 683565275, %v3496
        %v3498 = vshll.u32 683565275, %v3495
        %v3499 = vshrl.u32 2475754826, %v3496
        %v3500 = vor.u32 %v3498, %v3499
        %v3501 = vshll.u32 2475754826, %v3495
        %v3502 = vshrl.u32 2131351028, %v3496
        %v3503 = vor.u32 %v3501, %v3502
        %v3504 = vshll.u32 2131351028, %v3495
        %v3505 = vshrl.u32 2102212464, %v3496
        %v3506 = vor.u32 %v3504, %v3505
        %v3507 = vshll.u32 2102212464, %v3495
        %v3508 = vshrl.u32 920167782, %v3496
        %v3509 = vor.u32 %v3507, %v3508
        %v3510 = vshll.u32 920167782, %v3495
        %v3511 = vshrl.u32 1326507024, %v3496
        %v3512 = vor.u32 %v3510, %v3511
        %vm3513 = vcmp.lt.s32.totalorder %v3494, 1
        %vm3514 = vcmp.lt.s32.totalorder %v3494, 2
        %vm3515 = vcmp.lt.s32.totalorder %v3494, 3
        %vm3516 = vcmp.lt.s32.totalorder %v3494, 4
        %v3517 = vsel %vm3513, %v3497, %v3500
        %v3518 = vsel %vm3516, %v3506, 2102212464
        %v3519 = vsel %vm3515, %v3503, %v3518
        %v3520 = vsel %vm3514, %v3517, %v3519
        %v3521 = vsel %vm3513, %v3500, %v3503
        %v3522 = vsel %vm3516, %v3509, 920167782
        %v3523 = vsel %vm3515, %v3506, %v3522
        %v3524 = vsel %vm3514, %v3521, %v3523
        %v3525 = vsel %vm3513, %v3503, %v3506
        %v3526 = vsel %vm3516, %v3512, 1326507024
        %v3527 = vsel %vm3515, %v3509, %v3526
        %v3528 = vsel %vm3514, %v3525, %v3527
        %v3529 = vshll.u32 %v3489, 8
        %v3530 = vmul.u32.u64.compose %v3529, %v3528
        %v3531 = vextract.low.u32 %v3530
        %v3532 = vextract.high.u32 %v3530
        %v3533 = vmul.u32.u64.compose %v3529, %v3524
        %v3534 = vextract.low.u32 %v3533
        %v3535 = vextract.high.u32 %v3533
        %v3536 = vmul.u32 %v3529, %v3520
        %v3537 = vadd.s32 %v3532, %v3534
        %vm3538 = vc.u32 %v3532, %v3534
        %v3539 = vadd.s32 %v3535, 1
        %v3540 = vsel %vm3538, %v3539, %v3535
        %v3541 = vadd.s32 %v3536, %v3540
        %v3542 = vadd.s32 %v3541, 536870912
        %v3543 = vshrl.u32 %v3542, 30
        %v3544 = vshll.u32 %v3543, 30
        %v3545 = vsub.s32 %v3541, %v3544
        %vm3546 = vcmp.lt.s32.totalorder %v3545, 0
        %v3547 = vsub.s32 0, %v3545
        %v3548 = vsel %vm3546, %v3547, %v3545
        %v3549 = vclz %v3548
        %v3550 = vsub.s32 %v3549, 2
        %vm3551 = vcmp.gt.s32.totalorder 0, %v3550
        %v3552 = vsel %vm3551, 0, %v3550
        %v3553 = vsub.s32 32, %v3552
        %v3554 = vshll.u32 %v3545, %v3552
        %v3555 = vshrl.u32 %v3537, %v3553
        %v3556 = vor.u32 %v3554, %v3555
        %v3557 = vsub.s32 4294967266, %v3552
        %v3558 = vadd.s32 %v3557, 127
        %v3559 = vshll.u32 %v3558, 23
        %v3560 = vor.u32 4788187, %v3559
        %v3561 = vand.u32 2147483647, %v3560
        %v3563 = vcvt.s32.f32 %v3556
        %v3564 = vmul.f32 %v3563, %v3561
        %v3565 = vxor.u32 %v3564, 2147483648
        %v3566 = vsel %vm3483, %v3565, %v3564
        %v3567 = vsub.s32 4, %v3543
        %v3568 = vsel %vm3483, %v3567, %v3543
        %v3569 = vsel %vm3482, %v716, %v3566
        %v3570 = vsel %vm3482, 0, %v3568
        %v3571 = vcosq.f32.pop %v3569
        %v3572 = vsinq.f32.pop %v3569
        %vm3573 = vweird.f32 %v716
        %v3574 = vand.u32 %v3570, 3
        %vm3575 = vcmp.lt.s32.totalorder %v3574, 2
        %vm3576 = vcmp.eq.s32.totalorder %v3574, 0
        %v3577 = vxor.u32 %v3572, 2147483648
        %v3578 = vsel %vm3576, %v3571, %v3577
        %vm3579 = vcmp.eq.s32.totalorder %v3574, 2
        %v3580 = vxor.u32 %v3571, 2147483648
        %v3581 = vsel %vm3579, %v3580, %v3572
        %v3582 = vsel %vm3575, %v3578, %v3581
        %v3583 = vsel %vm3573, nan, %v3582
        %v3584 = vand.u32 2147483647, %v717
        %vm3585 = vcmp.le.f32.partialorder %v3584, 0.7853982
        %vm3586 = vcmp.lt.s32.totalorder %v717, 0
        %v3587 = vand.u32 %v717, 2139095040
        %v3588 = vshrl.u32 %v3587, 23
        %v3589 = vsub.s32 %v3588, 127
        %v3590 = vand.u32 2147483647, %v717
        %v3591 = vand.u32 %v3590, 8388607
        %v3592 = vor.u32 %v3591, 8388608
        %v3593 = vsub.s32 0, %v3592
        %v3594 = vadd.s32 %v3589, 1
        %vm3595 = vcmp.gt.s32.totalorder %v3594, 0
        %v3596 = vsel %vm3595, %v3594, 0
        %v3597 = vshrl.u32 %v3596, 5
        %v3598 = vand.u32 %v3596, 31
        %v3599 = vsub.s32 32, %v3598
        %v3600 = vshrl.u32 683565275, %v3599
        %v3601 = vshll.u32 683565275, %v3598
        %v3602 = vshrl.u32 2475754826, %v3599
        %v3603 = vor.u32 %v3601, %v3602
        %v3604 = vshll.u32 2475754826, %v3598
        %v3605 = vshrl.u32 2131351028, %v3599
        %v3606 = vor.u32 %v3604, %v3605
        %v3607 = vshll.u32 2131351028, %v3598
        %v3608 = vshrl.u32 2102212464, %v3599
        %v3609 = vor.u32 %v3607, %v3608
        %v3610 = vshll.u32 2102212464, %v3598
        %v3611 = vshrl.u32 920167782, %v3599
        %v3612 = vor.u32 %v3610, %v3611
        %v3613 = vshll.u32 920167782, %v3598
        %v3614 = vshrl.u32 1326507024, %v3599
        %v3615 = vor.u32 %v3613, %v3614
        %vm3616 = vcmp.lt.s32.totalorder %v3597, 1
        %vm3617 = vcmp.lt.s32.totalorder %v3597, 2
        %vm3618 = vcmp.lt.s32.totalorder %v3597, 3
        %vm3619 = vcmp.lt.s32.totalorder %v3597, 4
        %v3620 = vsel %vm3616, %v3600, %v3603
        %v3621 = vsel %vm3619, %v3609, 2102212464
        %v3622 = vsel %vm3618, %v3606, %v3621
        %v3623 = vsel %vm3617, %v3620, %v3622
        %v3624 = vsel %vm3616, %v3603, %v3606
        %v3625 = vsel %vm3619, %v3612, 920167782
        %v3626 = vsel %vm3618, %v3609, %v3625
        %v3627 = vsel %vm3617, %v3624, %v3626
        %v3628 = vsel %vm3616, %v3606, %v3609
        %v3629 = vsel %vm3619, %v3615, 1326507024
        %v3630 = vsel %vm3618, %v3612, %v3629
        %v3631 = vsel %vm3617, %v3628, %v3630
        %v3632 = vshll.u32 %v3592, 8
        %v3633 = vmul.u32.u64.compose %v3632, %v3631
        %v3634 = vextract.low.u32 %v3633
        %v3635 = vextract.high.u32 %v3633
        %v3636 = vmul.u32.u64.compose %v3632, %v3627
        %v3637 = vextract.low.u32 %v3636
        %v3638 = vextract.high.u32 %v3636
        %v3639 = vmul.u32 %v3632, %v3623
        %v3640 = vadd.s32 %v3635, %v3637
        %vm3641 = vc.u32 %v3635, %v3637
        %v3642 = vadd.s32 %v3638, 1
        %v3643 = vsel %vm3641, %v3642, %v3638
        %v3644 = vadd.s32 %v3639, %v3643
        %v3645 = vadd.s32 %v3644, 536870912
        %v3646 = vshrl.u32 %v3645, 30
        %v3647 = vshll.u32 %v3646, 30
        %v3648 = vsub.s32 %v3644, %v3647
        %vm3649 = vcmp.lt.s32.totalorder %v3648, 0
        %v3650 = vsub.s32 0, %v3648
        %v3651 = vsel %vm3649, %v3650, %v3648
        %v3652 = vclz %v3651
        %v3653 = vsub.s32 %v3652, 2
        %vm3654 = vcmp.gt.s32.totalorder 0, %v3653
        %v3655 = vsel %vm3654, 0, %v3653
        %v3656 = vsub.s32 32, %v3655
        %v3657 = vshll.u32 %v3648, %v3655
        %v3658 = vshrl.u32 %v3640, %v3656
        %v3659 = vor.u32 %v3657, %v3658
        %v3660 = vsub.s32 4294967266, %v3655
        %v3661 = vadd.s32 %v3660, 127
        %v3662 = vshll.u32 %v3661, 23
        %v3663 = vor.u32 4788187, %v3662
        %v3664 = vand.u32 2147483647, %v3663
        %v3666 = vcvt.s32.f32 %v3659
        %v3667 = vmul.f32 %v3666, %v3664
        %v3668 = vxor.u32 %v3667, 2147483648
        %v3669 = vsel %vm3586, %v3668, %v3667
        %v3670 = vsub.s32 4, %v3646
        %v3671 = vsel %vm3586, %v3670, %v3646
        %v3672 = vsel %vm3585, %v717, %v3669
        %v3673 = vsel %vm3585, 0, %v3671
        %v3674 = vcosq.f32.pop %v3672
        %v3675 = vsinq.f32.pop %v3672
        %vm3676 = vweird.f32 %v717
        %v3677 = vand.u32 %v3673, 3
        %vm3678 = vcmp.lt.s32.totalorder %v3677, 2
        %vm3679 = vcmp.eq.s32.totalorder %v3677, 0
        %v3680 = vxor.u32 %v3675, 2147483648
        %v3681 = vsel %vm3679, %v3674, %v3680
        %vm3682 = vcmp.eq.s32.totalorder %v3677, 2
        %v3683 = vxor.u32 %v3674, 2147483648
        %v3684 = vsel %vm3682, %v3683, %v3675
        %v3685 = vsel %vm3678, %v3681, %v3684
        %v3686 = vsel %vm3676, nan, %v3685
        %v3687 = vand.u32 2147483647, %v718
        %vm3688 = vcmp.le.f32.partialorder %v3687, 0.7853982
        %vm3689 = vcmp.lt.s32.totalorder %v718, 0
        %v3690 = vand.u32 %v718, 2139095040
        %v3691 = vshrl.u32 %v3690, 23
        %v3692 = vsub.s32 %v3691, 127
        %v3693 = vand.u32 2147483647, %v718
        %v3694 = vand.u32 %v3693, 8388607
        %v3695 = vor.u32 %v3694, 8388608
        %v3696 = vsub.s32 0, %v3695
        %v3697 = vadd.s32 %v3692, 1
        %vm3698 = vcmp.gt.s32.totalorder %v3697, 0
        %v3699 = vsel %vm3698, %v3697, 0
        %v3700 = vshrl.u32 %v3699, 5
        %v3701 = vand.u32 %v3699, 31
        %v3702 = vsub.s32 32, %v3701
        %v3703 = vshrl.u32 683565275, %v3702
        %v3704 = vshll.u32 683565275, %v3701
        %v3705 = vshrl.u32 2475754826, %v3702
        %v3706 = vor.u32 %v3704, %v3705
        %v3707 = vshll.u32 2475754826, %v3701
        %v3708 = vshrl.u32 2131351028, %v3702
        %v3709 = vor.u32 %v3707, %v3708
        %v3710 = vshll.u32 2131351028, %v3701
        %v3711 = vshrl.u32 2102212464, %v3702
        %v3712 = vor.u32 %v3710, %v3711
        %v3713 = vshll.u32 2102212464, %v3701
        %v3714 = vshrl.u32 920167782, %v3702
        %v3715 = vor.u32 %v3713, %v3714
        %v3716 = vshll.u32 920167782, %v3701
        %v3717 = vshrl.u32 1326507024, %v3702
        %v3718 = vor.u32 %v3716, %v3717
        %vm3719 = vcmp.lt.s32.totalorder %v3700, 1
        %vm3720 = vcmp.lt.s32.totalorder %v3700, 2
        %vm3721 = vcmp.lt.s32.totalorder %v3700, 3
        %vm3722 = vcmp.lt.s32.totalorder %v3700, 4
        %v3723 = vsel %vm3719, %v3703, %v3706
        %v3724 = vsel %vm3722, %v3712, 2102212464
        %v3725 = vsel %vm3721, %v3709, %v3724
        %v3726 = vsel %vm3720, %v3723, %v3725
        %v3727 = vsel %vm3719, %v3706, %v3709
        %v3728 = vsel %vm3722, %v3715, 920167782
        %v3729 = vsel %vm3721, %v3712, %v3728
        %v3730 = vsel %vm3720, %v3727, %v3729
        %v3731 = vsel %vm3719, %v3709, %v3712
        %v3732 = vsel %vm3722, %v3718, 1326507024
        %v3733 = vsel %vm3721, %v3715, %v3732
        %v3734 = vsel %vm3720, %v3731, %v3733
        %v3735 = vshll.u32 %v3695, 8
        %v3736 = vmul.u32.u64.compose %v3735, %v3734
        %v3737 = vextract.low.u32 %v3736
        %v3738 = vextract.high.u32 %v3736
        %v3739 = vmul.u32.u64.compose %v3735, %v3730
        %v3740 = vextract.low.u32 %v3739
        %v3741 = vextract.high.u32 %v3739
        %v3742 = vmul.u32 %v3735, %v3726
        %v3743 = vadd.s32 %v3738, %v3740
        %vm3744 = vc.u32 %v3738, %v3740
        %v3745 = vadd.s32 %v3741, 1
        %v3746 = vsel %vm3744, %v3745, %v3741
        %v3747 = vadd.s32 %v3742, %v3746
        %v3748 = vadd.s32 %v3747, 536870912
        %v3749 = vshrl.u32 %v3748, 30
        %v3750 = vshll.u32 %v3749, 30
        %v3751 = vsub.s32 %v3747, %v3750
        %vm3752 = vcmp.lt.s32.totalorder %v3751, 0
        %v3753 = vsub.s32 0, %v3751
        %v3754 = vsel %vm3752, %v3753, %v3751
        %v3755 = vclz %v3754
        %v3756 = vsub.s32 %v3755, 2
        %vm3757 = vcmp.gt.s32.totalorder 0, %v3756
        %v3758 = vsel %vm3757, 0, %v3756
        %v3759 = vsub.s32 32, %v3758
        %v3760 = vshll.u32 %v3751, %v3758
        %v3761 = vshrl.u32 %v3743, %v3759
        %v3762 = vor.u32 %v3760, %v3761
        %v3763 = vsub.s32 4294967266, %v3758
        %v3764 = vadd.s32 %v3763, 127
        %v3765 = vshll.u32 %v3764, 23
        %v3766 = vor.u32 4788187, %v3765
        %v3767 = vand.u32 2147483647, %v3766
        %v3769 = vcvt.s32.f32 %v3762
        %v3770 = vmul.f32 %v3769, %v3767
        %v3771 = vxor.u32 %v3770, 2147483648
        %v3772 = vsel %vm3689, %v3771, %v3770
        %v3773 = vsub.s32 4, %v3749
        %v3774 = vsel %vm3689, %v3773, %v3749
        %v3775 = vsel %vm3688, %v718, %v3772
        %v3776 = vsel %vm3688, 0, %v3774
        %v3777 = vcosq.f32.pop %v3775
        %v3778 = vsinq.f32.pop %v3775
        %vm3779 = vweird.f32 %v718
        %v3780 = vand.u32 %v3776, 3
        %vm3781 = vcmp.lt.s32.totalorder %v3780, 2
        %vm3782 = vcmp.eq.s32.totalorder %v3780, 0
        %v3783 = vxor.u32 %v3778, 2147483648
        %v3784 = vsel %vm3782, %v3777, %v3783
        %vm3785 = vcmp.eq.s32.totalorder %v3780, 2
        %v3786 = vxor.u32 %v3777, 2147483648
        %v3787 = vsel %vm3785, %v3786, %v3778
        %v3788 = vsel %vm3781, %v3784, %v3787
        %v3789 = vsel %vm3779, nan, %v3788
        %v3790 = vand.u32 2147483647, %v719
        %vm3791 = vcmp.le.f32.partialorder %v3790, 0.7853982
        %vm3792 = vcmp.lt.s32.totalorder %v719, 0
        %v3793 = vand.u32 %v719, 2139095040
        %v3794 = vshrl.u32 %v3793, 23
        %v3795 = vsub.s32 %v3794, 127
        %v3796 = vand.u32 2147483647, %v719
        %v3797 = vand.u32 %v3796, 8388607
        %v3798 = vor.u32 %v3797, 8388608
        %v3799 = vsub.s32 0, %v3798
        %v3800 = vadd.s32 %v3795, 1
        %vm3801 = vcmp.gt.s32.totalorder %v3800, 0
        %v3802 = vsel %vm3801, %v3800, 0
        %v3803 = vshrl.u32 %v3802, 5
        %v3804 = vand.u32 %v3802, 31
        %v3805 = vsub.s32 32, %v3804
        %v3806 = vshrl.u32 683565275, %v3805
        %v3807 = vshll.u32 683565275, %v3804
        %v3808 = vshrl.u32 2475754826, %v3805
        %v3809 = vor.u32 %v3807, %v3808
        %v3810 = vshll.u32 2475754826, %v3804
        %v3811 = vshrl.u32 2131351028, %v3805
        %v3812 = vor.u32 %v3810, %v3811
        %v3813 = vshll.u32 2131351028, %v3804
        %v3814 = vshrl.u32 2102212464, %v3805
        %v3815 = vor.u32 %v3813, %v3814
        %v3816 = vshll.u32 2102212464, %v3804
        %v3817 = vshrl.u32 920167782, %v3805
        %v3818 = vor.u32 %v3816, %v3817
        %v3819 = vshll.u32 920167782, %v3804
        %v3820 = vshrl.u32 1326507024, %v3805
        %v3821 = vor.u32 %v3819, %v3820
        %vm3822 = vcmp.lt.s32.totalorder %v3803, 1
        %vm3823 = vcmp.lt.s32.totalorder %v3803, 2
        %vm3824 = vcmp.lt.s32.totalorder %v3803, 3
        %vm3825 = vcmp.lt.s32.totalorder %v3803, 4
        %v3826 = vsel %vm3822, %v3806, %v3809
        %v3827 = vsel %vm3825, %v3815, 2102212464
        %v3828 = vsel %vm3824, %v3812, %v3827
        %v3829 = vsel %vm3823, %v3826, %v3828
        %v3830 = vsel %vm3822, %v3809, %v3812
        %v3831 = vsel %vm3825, %v3818, 920167782
        %v3832 = vsel %vm3824, %v3815, %v3831
        %v3833 = vsel %vm3823, %v3830, %v3832
        %v3834 = vsel %vm3822, %v3812, %v3815
        %v3835 = vsel %vm3825, %v3821, 1326507024
        %v3836 = vsel %vm3824, %v3818, %v3835
        %v3837 = vsel %vm3823, %v3834, %v3836
        %v3838 = vshll.u32 %v3798, 8
        %v3839 = vmul.u32.u64.compose %v3838, %v3837
        %v3840 = vextract.low.u32 %v3839
        %v3841 = vextract.high.u32 %v3839
        %v3842 = vmul.u32.u64.compose %v3838, %v3833
        %v3843 = vextract.low.u32 %v3842
        %v3844 = vextract.high.u32 %v3842
        %v3845 = vmul.u32 %v3838, %v3829
        %v3846 = vadd.s32 %v3841, %v3843
        %vm3847 = vc.u32 %v3841, %v3843
        %v3848 = vadd.s32 %v3844, 1
        %v3849 = vsel %vm3847, %v3848, %v3844
        %v3850 = vadd.s32 %v3845, %v3849
        %v3851 = vadd.s32 %v3850, 536870912
        %v3852 = vshrl.u32 %v3851, 30
        %v3853 = vshll.u32 %v3852, 30
        %v3854 = vsub.s32 %v3850, %v3853
        %vm3855 = vcmp.lt.s32.totalorder %v3854, 0
        %v3856 = vsub.s32 0, %v3854
        %v3857 = vsel %vm3855, %v3856, %v3854
        %v3858 = vclz %v3857
        %v3859 = vsub.s32 %v3858, 2
        %vm3860 = vcmp.gt.s32.totalorder 0, %v3859
        %v3861 = vsel %vm3860, 0, %v3859
        %v3862 = vsub.s32 32, %v3861
        %v3863 = vshll.u32 %v3854, %v3861
        %v3864 = vshrl.u32 %v3846, %v3862
        %v3865 = vor.u32 %v3863, %v3864
        %v3866 = vsub.s32 4294967266, %v3861
        %v3867 = vadd.s32 %v3866, 127
        %v3868 = vshll.u32 %v3867, 23
        %v3869 = vor.u32 4788187, %v3868
        %v3870 = vand.u32 2147483647, %v3869
        %v3872 = vcvt.s32.f32 %v3865
        %v3873 = vmul.f32 %v3872, %v3870
        %v3874 = vxor.u32 %v3873, 2147483648
        %v3875 = vsel %vm3792, %v3874, %v3873
        %v3876 = vsub.s32 4, %v3852
        %v3877 = vsel %vm3792, %v3876, %v3852
        %v3878 = vsel %vm3791, %v719, %v3875
        %v3879 = vsel %vm3791, 0, %v3877
        %v3880 = vcosq.f32.pop %v3878
        %v3881 = vsinq.f32.pop %v3878
        %vm3882 = vweird.f32 %v719
        %v3883 = vand.u32 %v3879, 3
        %vm3884 = vcmp.lt.s32.totalorder %v3883, 2
        %vm3885 = vcmp.eq.s32.totalorder %v3883, 0
        %v3886 = vxor.u32 %v3881, 2147483648
        %v3887 = vsel %vm3885, %v3880, %v3886
        %vm3888 = vcmp.eq.s32.totalorder %v3883, 2
        %v3889 = vxor.u32 %v3880, 2147483648
        %v3890 = vsel %vm3888, %v3889, %v3881
        %v3891 = vsel %vm3884, %v3887, %v3890
        %v3892 = vsel %vm3882, nan, %v3891
        %v3893 = vand.u32 2147483647, %v720
        %vm3894 = vcmp.le.f32.partialorder %v3893, 0.7853982
        %vm3895 = vcmp.lt.s32.totalorder %v720, 0
        %v3896 = vand.u32 %v720, 2139095040
        %v3897 = vshrl.u32 %v3896, 23
        %v3898 = vsub.s32 %v3897, 127
        %v3899 = vand.u32 2147483647, %v720
        %v3900 = vand.u32 %v3899, 8388607
        %v3901 = vor.u32 %v3900, 8388608
        %v3902 = vsub.s32 0, %v3901
        %v3903 = vadd.s32 %v3898, 1
        %vm3904 = vcmp.gt.s32.totalorder %v3903, 0
        %v3905 = vsel %vm3904, %v3903, 0
        %v3906 = vshrl.u32 %v3905, 5
        %v3907 = vand.u32 %v3905, 31
        %v3908 = vsub.s32 32, %v3907
        %v3909 = vshrl.u32 683565275, %v3908
        %v3910 = vshll.u32 683565275, %v3907
        %v3911 = vshrl.u32 2475754826, %v3908
        %v3912 = vor.u32 %v3910, %v3911
        %v3913 = vshll.u32 2475754826, %v3907
        %v3914 = vshrl.u32 2131351028, %v3908
        %v3915 = vor.u32 %v3913, %v3914
        %v3916 = vshll.u32 2131351028, %v3907
        %v3917 = vshrl.u32 2102212464, %v3908
        %v3918 = vor.u32 %v3916, %v3917
        %v3919 = vshll.u32 2102212464, %v3907
        %v3920 = vshrl.u32 920167782, %v3908
        %v3921 = vor.u32 %v3919, %v3920
        %v3922 = vshll.u32 920167782, %v3907
        %v3923 = vshrl.u32 1326507024, %v3908
        %v3924 = vor.u32 %v3922, %v3923
        %vm3925 = vcmp.lt.s32.totalorder %v3906, 1
        %vm3926 = vcmp.lt.s32.totalorder %v3906, 2
        %vm3927 = vcmp.lt.s32.totalorder %v3906, 3
        %vm3928 = vcmp.lt.s32.totalorder %v3906, 4
        %v3929 = vsel %vm3925, %v3909, %v3912
        %v3930 = vsel %vm3928, %v3918, 2102212464
        %v3931 = vsel %vm3927, %v3915, %v3930
        %v3932 = vsel %vm3926, %v3929, %v3931
        %v3933 = vsel %vm3925, %v3912, %v3915
        %v3934 = vsel %vm3928, %v3921, 920167782
        %v3935 = vsel %vm3927, %v3918, %v3934
        %v3936 = vsel %vm3926, %v3933, %v3935
        %v3937 = vsel %vm3925, %v3915, %v3918
        %v3938 = vsel %vm3928, %v3924, 1326507024
        %v3939 = vsel %vm3927, %v3921, %v3938
        %v3940 = vsel %vm3926, %v3937, %v3939
        %v3941 = vshll.u32 %v3901, 8
        %v3942 = vmul.u32.u64.compose %v3941, %v3940
        %v3943 = vextract.low.u32 %v3942
        %v3944 = vextract.high.u32 %v3942
        %v3945 = vmul.u32.u64.compose %v3941, %v3936
        %v3946 = vextract.low.u32 %v3945
        %v3947 = vextract.high.u32 %v3945
        %v3948 = vmul.u32 %v3941, %v3932
        %v3949 = vadd.s32 %v3944, %v3946
        %vm3950 = vc.u32 %v3944, %v3946
        %v3951 = vadd.s32 %v3947, 1
        %v3952 = vsel %vm3950, %v3951, %v3947
        %v3953 = vadd.s32 %v3948, %v3952
        %v3954 = vadd.s32 %v3953, 536870912
        %v3955 = vshrl.u32 %v3954, 30
        %v3956 = vshll.u32 %v3955, 30
        %v3957 = vsub.s32 %v3953, %v3956
        %vm3958 = vcmp.lt.s32.totalorder %v3957, 0
        %v3959 = vsub.s32 0, %v3957
        %v3960 = vsel %vm3958, %v3959, %v3957
        %v3961 = vclz %v3960
        %v3962 = vsub.s32 %v3961, 2
        %vm3963 = vcmp.gt.s32.totalorder 0, %v3962
        %v3964 = vsel %vm3963, 0, %v3962
        %v3965 = vsub.s32 32, %v3964
        %v3966 = vshll.u32 %v3957, %v3964
        %v3967 = vshrl.u32 %v3949, %v3965
        %v3968 = vor.u32 %v3966, %v3967
        %v3969 = vsub.s32 4294967266, %v3964
        %v3970 = vadd.s32 %v3969, 127
        %v3971 = vshll.u32 %v3970, 23
        %v3972 = vor.u32 4788187, %v3971
        %v3973 = vand.u32 2147483647, %v3972
        %v3975 = vcvt.s32.f32 %v3968
        %v3976 = vmul.f32 %v3975, %v3973
        %v3977 = vxor.u32 %v3976, 2147483648
        %v3978 = vsel %vm3895, %v3977, %v3976
        %v3979 = vsub.s32 4, %v3955
        %v3980 = vsel %vm3895, %v3979, %v3955
        %v3981 = vsel %vm3894, %v720, %v3978
        %v3982 = vsel %vm3894, 0, %v3980
        %v3983 = vcosq.f32.pop %v3981
        %v3984 = vsinq.f32.pop %v3981
        %vm3985 = vweird.f32 %v720
        %v3986 = vand.u32 %v3982, 3
        %vm3987 = vcmp.lt.s32.totalorder %v3986, 2
        %vm3988 = vcmp.eq.s32.totalorder %v3986, 0
        %v3989 = vxor.u32 %v3984, 2147483648
        %v3990 = vsel %vm3988, %v3983, %v3989
        %vm3991 = vcmp.eq.s32.totalorder %v3986, 2
        %v3992 = vxor.u32 %v3983, 2147483648
        %v3993 = vsel %vm3991, %v3992, %v3984
        %v3994 = vsel %vm3987, %v3990, %v3993
        %v3995 = vsel %vm3985, nan, %v3994
        %v3996 = vand.u32 2147483647, %v721
        %vm3997 = vcmp.le.f32.partialorder %v3996, 0.7853982
        %vm3998 = vcmp.lt.s32.totalorder %v721, 0
        %v3999 = vand.u32 %v721, 2139095040
        %v4000 = vshrl.u32 %v3999, 23
        %v4001 = vsub.s32 %v4000, 127
        %v4002 = vand.u32 2147483647, %v721
        %v4003 = vand.u32 %v4002, 8388607
        %v4004 = vor.u32 %v4003, 8388608
        %v4005 = vsub.s32 0, %v4004
        %v4006 = vadd.s32 %v4001, 1
        %vm4007 = vcmp.gt.s32.totalorder %v4006, 0
        %v4008 = vsel %vm4007, %v4006, 0
        %v4009 = vshrl.u32 %v4008, 5
        %v4010 = vand.u32 %v4008, 31
        %v4011 = vsub.s32 32, %v4010
        %v4012 = vshrl.u32 683565275, %v4011
        %v4013 = vshll.u32 683565275, %v4010
        %v4014 = vshrl.u32 2475754826, %v4011
        %v4015 = vor.u32 %v4013, %v4014
        %v4016 = vshll.u32 2475754826, %v4010
        %v4017 = vshrl.u32 2131351028, %v4011
        %v4018 = vor.u32 %v4016, %v4017
        %v4019 = vshll.u32 2131351028, %v4010
        %v4020 = vshrl.u32 2102212464, %v4011
        %v4021 = vor.u32 %v4019, %v4020
        %v4022 = vshll.u32 2102212464, %v4010
        %v4023 = vshrl.u32 920167782, %v4011
        %v4024 = vor.u32 %v4022, %v4023
        %v4025 = vshll.u32 920167782, %v4010
        %v4026 = vshrl.u32 1326507024, %v4011
        %v4027 = vor.u32 %v4025, %v4026
        %vm4028 = vcmp.lt.s32.totalorder %v4009, 1
        %vm4029 = vcmp.lt.s32.totalorder %v4009, 2
        %vm4030 = vcmp.lt.s32.totalorder %v4009, 3
        %vm4031 = vcmp.lt.s32.totalorder %v4009, 4
        %v4032 = vsel %vm4028, %v4012, %v4015
        %v4033 = vsel %vm4031, %v4021, 2102212464
        %v4034 = vsel %vm4030, %v4018, %v4033
        %v4035 = vsel %vm4029, %v4032, %v4034
        %v4036 = vsel %vm4028, %v4015, %v4018
        %v4037 = vsel %vm4031, %v4024, 920167782
        %v4038 = vsel %vm4030, %v4021, %v4037
        %v4039 = vsel %vm4029, %v4036, %v4038
        %v4040 = vsel %vm4028, %v4018, %v4021
        %v4041 = vsel %vm4031, %v4027, 1326507024
        %v4042 = vsel %vm4030, %v4024, %v4041
        %v4043 = vsel %vm4029, %v4040, %v4042
        %v4044 = vshll.u32 %v4004, 8
        %v4045 = vmul.u32.u64.compose %v4044, %v4043
        %v4046 = vextract.low.u32 %v4045
        %v4047 = vextract.high.u32 %v4045
        %v4048 = vmul.u32.u64.compose %v4044, %v4039
        %v4049 = vextract.low.u32 %v4048
        %v4050 = vextract.high.u32 %v4048
        %v4051 = vmul.u32 %v4044, %v4035
        %v4052 = vadd.s32 %v4047, %v4049
        %vm4053 = vc.u32 %v4047, %v4049
        %v4054 = vadd.s32 %v4050, 1
        %v4055 = vsel %vm4053, %v4054, %v4050
        %v4056 = vadd.s32 %v4051, %v4055
        %v4057 = vadd.s32 %v4056, 536870912
        %v4058 = vshrl.u32 %v4057, 30
        %v4059 = vshll.u32 %v4058, 30
        %v4060 = vsub.s32 %v4056, %v4059
        %vm4061 = vcmp.lt.s32.totalorder %v4060, 0
        %v4062 = vsub.s32 0, %v4060
        %v4063 = vsel %vm4061, %v4062, %v4060
        %v4064 = vclz %v4063
        %v4065 = vsub.s32 %v4064, 2
        %vm4066 = vcmp.gt.s32.totalorder 0, %v4065
        %v4067 = vsel %vm4066, 0, %v4065
        %v4068 = vsub.s32 32, %v4067
        %v4069 = vshll.u32 %v4060, %v4067
        %v4070 = vshrl.u32 %v4052, %v4068
        %v4071 = vor.u32 %v4069, %v4070
        %v4072 = vsub.s32 4294967266, %v4067
        %v4073 = vadd.s32 %v4072, 127
        %v4074 = vshll.u32 %v4073, 23
        %v4075 = vor.u32 4788187, %v4074
        %v4076 = vand.u32 2147483647, %v4075
        %v4078 = vcvt.s32.f32 %v4071
        %v4079 = vmul.f32 %v4078, %v4076
        %v4080 = vxor.u32 %v4079, 2147483648
        %v4081 = vsel %vm3998, %v4080, %v4079
        %v4082 = vsub.s32 4, %v4058
        %v4083 = vsel %vm3998, %v4082, %v4058
        %v4084 = vsel %vm3997, %v721, %v4081
        %v4085 = vsel %vm3997, 0, %v4083
        %v4086 = vcosq.f32.pop %v4084
        %v4087 = vsinq.f32.pop %v4084
        %vm4088 = vweird.f32 %v721
        %v4089 = vand.u32 %v4085, 3
        %vm4090 = vcmp.lt.s32.totalorder %v4089, 2
        %vm4091 = vcmp.eq.s32.totalorder %v4089, 0
        %v4092 = vxor.u32 %v4087, 2147483648
        %v4093 = vsel %vm4091, %v4086, %v4092
        %vm4094 = vcmp.eq.s32.totalorder %v4089, 2
        %v4095 = vxor.u32 %v4086, 2147483648
        %v4096 = vsel %vm4094, %v4095, %v4087
        %v4097 = vsel %vm4090, %v4093, %v4096
        %v4098 = vsel %vm4088, nan, %v4097
        %v4099 = vand.u32 2147483647, %v722
        %vm4100 = vcmp.le.f32.partialorder %v4099, 0.7853982
        %vm4101 = vcmp.lt.s32.totalorder %v722, 0
        %v4102 = vand.u32 %v722, 2139095040
        %v4103 = vshrl.u32 %v4102, 23
        %v4104 = vsub.s32 %v4103, 127
        %v4105 = vand.u32 2147483647, %v722
        %v4106 = vand.u32 %v4105, 8388607
        %v4107 = vor.u32 %v4106, 8388608
        %v4108 = vsub.s32 0, %v4107
        %v4109 = vadd.s32 %v4104, 1
        %vm4110 = vcmp.gt.s32.totalorder %v4109, 0
        %v4111 = vsel %vm4110, %v4109, 0
        %v4112 = vshrl.u32 %v4111, 5
        %v4113 = vand.u32 %v4111, 31
        %v4114 = vsub.s32 32, %v4113
        %v4115 = vshrl.u32 683565275, %v4114
        %v4116 = vshll.u32 683565275, %v4113
        %v4117 = vshrl.u32 2475754826, %v4114
        %v4118 = vor.u32 %v4116, %v4117
        %v4119 = vshll.u32 2475754826, %v4113
        %v4120 = vshrl.u32 2131351028, %v4114
        %v4121 = vor.u32 %v4119, %v4120
        %v4122 = vshll.u32 2131351028, %v4113
        %v4123 = vshrl.u32 2102212464, %v4114
        %v4124 = vor.u32 %v4122, %v4123
        %v4125 = vshll.u32 2102212464, %v4113
        %v4126 = vshrl.u32 920167782, %v4114
        %v4127 = vor.u32 %v4125, %v4126
        %v4128 = vshll.u32 920167782, %v4113
        %v4129 = vshrl.u32 1326507024, %v4114
        %v4130 = vor.u32 %v4128, %v4129
        %vm4131 = vcmp.lt.s32.totalorder %v4112, 1
        %vm4132 = vcmp.lt.s32.totalorder %v4112, 2
        %vm4133 = vcmp.lt.s32.totalorder %v4112, 3
        %vm4134 = vcmp.lt.s32.totalorder %v4112, 4
        %v4135 = vsel %vm4131, %v4115, %v4118
        %v4136 = vsel %vm4134, %v4124, 2102212464
        %v4137 = vsel %vm4133, %v4121, %v4136
        %v4138 = vsel %vm4132, %v4135, %v4137
        %v4139 = vsel %vm4131, %v4118, %v4121
        %v4140 = vsel %vm4134, %v4127, 920167782
        %v4141 = vsel %vm4133, %v4124, %v4140
        %v4142 = vsel %vm4132, %v4139, %v4141
        %v4143 = vsel %vm4131, %v4121, %v4124
        %v4144 = vsel %vm4134, %v4130, 1326507024
        %v4145 = vsel %vm4133, %v4127, %v4144
        %v4146 = vsel %vm4132, %v4143, %v4145
        %v4147 = vshll.u32 %v4107, 8
        %v4148 = vmul.u32.u64.compose %v4147, %v4146
        %v4149 = vextract.low.u32 %v4148
        %v4150 = vextract.high.u32 %v4148
        %v4151 = vmul.u32.u64.compose %v4147, %v4142
        %v4152 = vextract.low.u32 %v4151
        %v4153 = vextract.high.u32 %v4151
        %v4154 = vmul.u32 %v4147, %v4138
        %v4155 = vadd.s32 %v4150, %v4152
        %vm4156 = vc.u32 %v4150, %v4152
        %v4157 = vadd.s32 %v4153, 1
        %v4158 = vsel %vm4156, %v4157, %v4153
        %v4159 = vadd.s32 %v4154, %v4158
        %v4160 = vadd.s32 %v4159, 536870912
        %v4161 = vshrl.u32 %v4160, 30
        %v4162 = vshll.u32 %v4161, 30
        %v4163 = vsub.s32 %v4159, %v4162
        %vm4164 = vcmp.lt.s32.totalorder %v4163, 0
        %v4165 = vsub.s32 0, %v4163
        %v4166 = vsel %vm4164, %v4165, %v4163
        %v4167 = vclz %v4166
        %v4168 = vsub.s32 %v4167, 2
        %vm4169 = vcmp.gt.s32.totalorder 0, %v4168
        %v4170 = vsel %vm4169, 0, %v4168
        %v4171 = vsub.s32 32, %v4170
        %v4172 = vshll.u32 %v4163, %v4170
        %v4173 = vshrl.u32 %v4155, %v4171
        %v4174 = vor.u32 %v4172, %v4173
        %v4175 = vsub.s32 4294967266, %v4170
        %v4176 = vadd.s32 %v4175, 127
        %v4177 = vshll.u32 %v4176, 23
        %v4178 = vor.u32 4788187, %v4177
        %v4179 = vand.u32 2147483647, %v4178
        %v4181 = vcvt.s32.f32 %v4174
        %v4182 = vmul.f32 %v4181, %v4179
        %v4183 = vxor.u32 %v4182, 2147483648
        %v4184 = vsel %vm4101, %v4183, %v4182
        %v4185 = vsub.s32 4, %v4161
        %v4186 = vsel %vm4101, %v4185, %v4161
        %v4187 = vsel %vm4100, %v722, %v4184
        %v4188 = vsel %vm4100, 0, %v4186
        %v4189 = vcosq.f32.pop %v4187
        %v4190 = vsinq.f32.pop %v4187
        %vm4191 = vweird.f32 %v722
        %v4192 = vand.u32 %v4188, 3
        %vm4193 = vcmp.lt.s32.totalorder %v4192, 2
        %vm4194 = vcmp.eq.s32.totalorder %v4192, 0
        %v4195 = vxor.u32 %v4190, 2147483648
        %v4196 = vsel %vm4194, %v4189, %v4195
        %vm4197 = vcmp.eq.s32.totalorder %v4192, 2
        %v4198 = vxor.u32 %v4189, 2147483648
        %v4199 = vsel %vm4197, %v4198, %v4190
        %v4200 = vsel %vm4193, %v4196, %v4199
        %v4201 = vsel %vm4191, nan, %v4200
        %v4202 = vand.u32 2147483647, %v723
        %vm4203 = vcmp.le.f32.partialorder %v4202, 0.7853982
        %vm4204 = vcmp.lt.s32.totalorder %v723, 0
        %v4205 = vand.u32 %v723, 2139095040
        %v4206 = vshrl.u32 %v4205, 23
        %v4207 = vsub.s32 %v4206, 127
        %v4208 = vand.u32 2147483647, %v723
        %v4209 = vand.u32 %v4208, 8388607
        %v4210 = vor.u32 %v4209, 8388608
        %v4211 = vsub.s32 0, %v4210
        %v4212 = vadd.s32 %v4207, 1
        %vm4213 = vcmp.gt.s32.totalorder %v4212, 0
        %v4214 = vsel %vm4213, %v4212, 0
        %v4215 = vshrl.u32 %v4214, 5
        %v4216 = vand.u32 %v4214, 31
        %v4217 = vsub.s32 32, %v4216
        %v4218 = vshrl.u32 683565275, %v4217
        %v4219 = vshll.u32 683565275, %v4216
        %v4220 = vshrl.u32 2475754826, %v4217
        %v4221 = vor.u32 %v4219, %v4220
        %v4222 = vshll.u32 2475754826, %v4216
        %v4223 = vshrl.u32 2131351028, %v4217
        %v4224 = vor.u32 %v4222, %v4223
        %v4225 = vshll.u32 2131351028, %v4216
        %v4226 = vshrl.u32 2102212464, %v4217
        %v4227 = vor.u32 %v4225, %v4226
        %v4228 = vshll.u32 2102212464, %v4216
        %v4229 = vshrl.u32 920167782, %v4217
        %v4230 = vor.u32 %v4228, %v4229
        %v4231 = vshll.u32 920167782, %v4216
        %v4232 = vshrl.u32 1326507024, %v4217
        %v4233 = vor.u32 %v4231, %v4232
        %vm4234 = vcmp.lt.s32.totalorder %v4215, 1
        %vm4235 = vcmp.lt.s32.totalorder %v4215, 2
        %vm4236 = vcmp.lt.s32.totalorder %v4215, 3
        %vm4237 = vcmp.lt.s32.totalorder %v4215, 4
        %v4238 = vsel %vm4234, %v4218, %v4221
        %v4239 = vsel %vm4237, %v4227, 2102212464
        %v4240 = vsel %vm4236, %v4224, %v4239
        %v4241 = vsel %vm4235, %v4238, %v4240
        %v4242 = vsel %vm4234, %v4221, %v4224
        %v4243 = vsel %vm4237, %v4230, 920167782
        %v4244 = vsel %vm4236, %v4227, %v4243
        %v4245 = vsel %vm4235, %v4242, %v4244
        %v4246 = vsel %vm4234, %v4224, %v4227
        %v4247 = vsel %vm4237, %v4233, 1326507024
        %v4248 = vsel %vm4236, %v4230, %v4247
        %v4249 = vsel %vm4235, %v4246, %v4248
        %v4250 = vshll.u32 %v4210, 8
        %v4251 = vmul.u32.u64.compose %v4250, %v4249
        %v4252 = vextract.low.u32 %v4251
        %v4253 = vextract.high.u32 %v4251
        %v4254 = vmul.u32.u64.compose %v4250, %v4245
        %v4255 = vextract.low.u32 %v4254
        %v4256 = vextract.high.u32 %v4254
        %v4257 = vmul.u32 %v4250, %v4241
        %v4258 = vadd.s32 %v4253, %v4255
        %vm4259 = vc.u32 %v4253, %v4255
        %v4260 = vadd.s32 %v4256, 1
        %v4261 = vsel %vm4259, %v4260, %v4256
        %v4262 = vadd.s32 %v4257, %v4261
        %v4263 = vadd.s32 %v4262, 536870912
        %v4264 = vshrl.u32 %v4263, 30
        %v4265 = vshll.u32 %v4264, 30
        %v4266 = vsub.s32 %v4262, %v4265
        %vm4267 = vcmp.lt.s32.totalorder %v4266, 0
        %v4268 = vsub.s32 0, %v4266
        %v4269 = vsel %vm4267, %v4268, %v4266
        %v4270 = vclz %v4269
        %v4271 = vsub.s32 %v4270, 2
        %vm4272 = vcmp.gt.s32.totalorder 0, %v4271
        %v4273 = vsel %vm4272, 0, %v4271
        %v4274 = vsub.s32 32, %v4273
        %v4275 = vshll.u32 %v4266, %v4273
        %v4276 = vshrl.u32 %v4258, %v4274
        %v4277 = vor.u32 %v4275, %v4276
        %v4278 = vsub.s32 4294967266, %v4273
        %v4279 = vadd.s32 %v4278, 127
        %v4280 = vshll.u32 %v4279, 23
        %v4281 = vor.u32 4788187, %v4280
        %v4282 = vand.u32 2147483647, %v4281
        %v4284 = vcvt.s32.f32 %v4277
        %v4285 = vmul.f32 %v4284, %v4282
        %v4286 = vxor.u32 %v4285, 2147483648
        %v4287 = vsel %vm4204, %v4286, %v4285
        %v4288 = vsub.s32 4, %v4264
        %v4289 = vsel %vm4204, %v4288, %v4264
        %v4290 = vsel %vm4203, %v723, %v4287
        %v4291 = vsel %vm4203, 0, %v4289
        %v4292 = vcosq.f32.pop %v4290
        %v4293 = vsinq.f32.pop %v4290
        %vm4294 = vweird.f32 %v723
        %v4295 = vand.u32 %v4291, 3
        %vm4296 = vcmp.lt.s32.totalorder %v4295, 2
        %vm4297 = vcmp.eq.s32.totalorder %v4295, 0
        %v4298 = vxor.u32 %v4293, 2147483648
        %v4299 = vsel %vm4297, %v4292, %v4298
        %vm4300 = vcmp.eq.s32.totalorder %v4295, 2
        %v4301 = vxor.u32 %v4292, 2147483648
        %v4302 = vsel %vm4300, %v4301, %v4293
        %v4303 = vsel %vm4296, %v4299, %v4302
        %v4304 = vsel %vm4294, nan, %v4303
        %v4305 = vld [vmem:[%s4] sm:$0xf]
        %v4306 = vld [vmem:[%s4 + $0x4] sm:$0xf]
        %v4307 = vld [vmem:[%s4 + $0x8] sm:$0xf]
        %v4308 = vld [vmem:[%s4 + $0xc] sm:$0xf]
        %v4309 = vpack.c.bf16 %v2862, %v2759
        %v4310 = vpack.c.bf16 %v3068, %v2965
        %v4311 = vpack.c.bf16 %v3274, %v3171
        %v4312 = vpack.c.bf16 %v3480, %v3377
        %v4313 = vpack.c.bf16 %v3686, %v3583
        %v4314 = vpack.c.bf16 %v3892, %v3789
        %v4315 = vpack.c.bf16 %v4098, %v3995
        %v4316 = vpack.c.bf16 %v4304, %v4201
        %v4321 = vunpack.c.l.b16 %v4305
        %v4322 = vunpack.c.l.b16 %v4306
        %v4323 = vunpack.c.l.b16 %v4307
        %v4324 = vunpack.c.l.b16 %v4308
        %v4325 = vpack.c.b16 %v4322, %v4321
        %v4326 = vpack.c.b16 %v4324, %v4323
        %v4328 = vsel %vm2513, %v4309, 0
        %v4331 = vsel %vm2513, %v4310, 0
        %v4334 = vsel %vm2513, %v4311, 0
        %v4337 = vsel %vm2513, %v4312, 0
        %v4340 = vsel %vm2513, %v4313, 0
        %v4343 = vsel %vm2513, %v4314, 0
        %v4346 = vsel %vm2513, %v4315, 0
        %v4349 = vsel %vm2513, %v4316, 0
        %v4352 = vsel %vm2513, %v4325, 0
        %v4355 = vsel %vm2513, %v4326, 0
        %4357 = vmatprep.subr.bf16.mxu0 0
        %4358 = vmatpush1.bf16.xpose.msra.mxu0 %v4352
        %4359 = vmatprep.subr.bf16.mxu0 0
        %4360 = vmatpush1.bf16.xpose.msra.mxu0 %v4355
        %4361 = vmatprep.subr.bf16.mxu0 0
        %4362 = vmatpush1.bf16.xpose.msra.mxu0 0
        %4363 = vmatprep.subr.bf16.mxu0 0
        %4364 = vmatpush1.bf16.xpose.msra.mxu0 0
        %4365 = vmatprep.subr.bf16.mxu0 0
        %4366 = vmatpush1.bf16.xpose.msra.mxu0 0
        %4367 = vmatprep.subr.bf16.mxu0 0
        %4368 = vmatpush1.bf16.xpose.msra.mxu0 0
        %4369 = vmatprep.subr.bf16.mxu0 0
        %4370 = vmatpush1.bf16.xpose.msra.mxu0 0
        %4371 = vmatprep.subr.bf16.mxu0 0
        %4372 = vmatpush1.bf16.xpose.msra.mxu0 0
        %4373 = vmatprep.subr.bf16.mxu0 0
        %4374 = vmatpush1.bf16.xpose.msra.mxu0 0
        %4375 = vmatprep.subr.bf16.mxu0 0
        %4376 = vmatpush1.bf16.xpose.msra.mxu0 0
        %4377 = vmatprep.subr.bf16.mxu0 0
        %4378 = vmatpush1.bf16.xpose.msra.mxu0 0
        %4379 = vmatprep.subr.bf16.mxu0 0
        %4380 = vmatpush1.bf16.xpose.msra.mxu0 0
        %4381 = vmatprep.subr.bf16.mxu0 0
        %4382 = vmatpush1.bf16.xpose.msra.mxu0 0
        %4383 = vmatprep.subr.bf16.mxu0 0
        %4384 = vmatpush1.bf16.xpose.msra.mxu0 0
        %4385 = vmatprep.subr.bf16.mxu0 0
        %4386 = vmatpush1.bf16.xpose.msra.mxu0 0
        %4387 = vmatprep.subr.bf16.mxu0 0
        %4388 = vmatpush1.bf16.xpose.msra.mxu0 0
        %4389 = vmatprep.mubr.bf16.mxu0 0
        %4390 = vmatmul.mubr.bf16.gmra.mrb[0].mxu0 %v4328
        %v4391 = vpop.f32.mrb[0].mxu0
        %v4392 = vadd.f32 0.0, %v4391
        %v4393 = vpop.f32.mrb[0].mxu0
        %v4394 = vpop.f32.mrb[0].mxu0
        %v4395 = vadd.f32 0.0, %v4394
        %v4396 = vpop.f32.mrb[0].mxu0
        %4397 = vmatprep.mubr.bf16.mxu0 0
        %4398 = vmatmul.mubr.bf16.gmra.mrb[0].mxu0 %v4331
        %v4399 = vpop.f32.mrb[0].mxu0
        %v4400 = vadd.f32 0.0, %v4399
        %v4401 = vpop.f32.mrb[0].mxu0
        %v4402 = vpop.f32.mrb[0].mxu0
        %v4403 = vadd.f32 0.0, %v4402
        %v4404 = vpop.f32.mrb[0].mxu0
        %4405 = vmatprep.mubr.bf16.mxu0 0
        %4406 = vmatmul.mubr.bf16.gmra.mrb[0].mxu0 %v4334
        %v4407 = vpop.f32.mrb[0].mxu0
        %v4408 = vadd.f32 0.0, %v4407
        %v4409 = vpop.f32.mrb[0].mxu0
        %v4410 = vpop.f32.mrb[0].mxu0
        %v4411 = vadd.f32 0.0, %v4410
        %v4412 = vpop.f32.mrb[0].mxu0
        %4413 = vmatprep.mubr.bf16.mxu0 0
        %4414 = vmatmul.mubr.bf16.gmra.mrb[0].mxu0 %v4337
        %v4415 = vpop.f32.mrb[0].mxu0
        %v4416 = vadd.f32 0.0, %v4415
        %v4417 = vpop.f32.mrb[0].mxu0
        %v4418 = vpop.f32.mrb[0].mxu0
        %v4419 = vadd.f32 0.0, %v4418
        %v4420 = vpop.f32.mrb[0].mxu0
        %4421 = vmatprep.mubr.bf16.mxu0 0
        %4422 = vmatmul.mubr.bf16.gmra.mrb[0].mxu0 %v4340
        %v4423 = vpop.f32.mrb[0].mxu0
        %v4424 = vadd.f32 0.0, %v4423
        %v4425 = vpop.f32.mrb[0].mxu0
        %v4426 = vpop.f32.mrb[0].mxu0
        %v4427 = vadd.f32 0.0, %v4426
        %v4428 = vpop.f32.mrb[0].mxu0
        %4429 = vmatprep.mubr.bf16.mxu0 0
        %4430 = vmatmul.mubr.bf16.gmra.mrb[0].mxu0 %v4343
        %v4431 = vpop.f32.mrb[0].mxu0
        %v4432 = vadd.f32 0.0, %v4431
        %v4433 = vpop.f32.mrb[0].mxu0
        %v4434 = vpop.f32.mrb[0].mxu0
        %v4435 = vadd.f32 0.0, %v4434
        %v4436 = vpop.f32.mrb[0].mxu0
        %4437 = vmatprep.mubr.bf16.mxu0 0
        %4438 = vmatmul.mubr.bf16.gmra.mrb[0].mxu0 %v4346
        %v4439 = vpop.f32.mrb[0].mxu0
        %v4440 = vadd.f32 0.0, %v4439
        %v4441 = vpop.f32.mrb[0].mxu0
        %v4442 = vpop.f32.mrb[0].mxu0
        %v4443 = vadd.f32 0.0, %v4442
        %v4444 = vpop.f32.mrb[0].mxu0
        %4445 = vmatprep.mubr.bf16.mxu0 0
        %4446 = vmatmul.mubr.bf16.gmra.mrb[0].mxu0 %v4349
        %v4447 = vpop.f32.mrb[0].mxu0
        %v4448 = vadd.f32 0.0, %v4447
        %v4449 = vpop.f32.mrb[0].mxu0
        %v4450 = vpop.f32.mrb[0].mxu0
        %v4451 = vadd.f32 0.0, %v4450
        %v4452 = vpop.f32.mrb[0].mxu0
        %4453 = vdwg.mxu0
        %v4454 = vadd.f32 %v2641, %v4392
        %v4455 = vadd.f32 %v2642, %v4395
        %v4456 = vadd.f32 %v2643, %v4400
        %v4457 = vadd.f32 %v2644, %v4403
        %v4458 = vadd.f32 %v2645, %v4408
        %v4459 = vadd.f32 %v2646, %v4411
        %v4460 = vadd.f32 %v2647, %v4416
        %v4461 = vadd.f32 %v2648, %v4419
        %v4462 = vadd.f32 %v2649, %v4424
        %v4463 = vadd.f32 %v2650, %v4427
        %v4464 = vadd.f32 %v2651, %v4432
        %v4465 = vadd.f32 %v2652, %v4435
        %v4466 = vadd.f32 %v2653, %v4440
        %v4467 = vadd.f32 %v2654, %v4443
        %v4468 = vadd.f32 %v2655, %v4448
        %v4469 = vadd.f32 %v2656, %v4451
        %v4470 = vld [vmem:[%s5] sm:$0x1]
        %v4472 = vlaneseq
        %v4473 = vshrl.u32 %v4472, 7
        %v4474 = vsub.s32 0, %v4473
        %v4475 = vrot.slane %v4470, %v4474
        %v4477 = vadd.f32 %v4454, %v4475
        %v4478 = vadd.f32 %v4455, %v4475
        %v4479 = vadd.f32 %v4456, %v4475
        %v4480 = vadd.f32 %v4457, %v4475
        %v4481 = vadd.f32 %v4458, %v4475
        %v4482 = vadd.f32 %v4459, %v4475
        %v4483 = vadd.f32 %v4460, %v4475
        %v4484 = vadd.f32 %v4461, %v4475
        %v4485 = vadd.f32 %v4462, %v4475
        %v4486 = vadd.f32 %v4463, %v4475
        %v4487 = vadd.f32 %v4464, %v4475
        %v4488 = vadd.f32 %v4465, %v4475
        %v4489 = vadd.f32 %v4466, %v4475
        %v4490 = vadd.f32 %v4467, %v4475
        %v4491 = vadd.f32 %v4468, %v4475
        %v4492 = vadd.f32 %v4469, %v4475
        %v4493 = vld [vmem:[%s6] sm:$0x1]
        %v4494 = vld [vmem:[%s7] sm:$0x1]
        %vm4495 = vcmask 261120
        %v4496 = vsel %vm4495, %v4477, 0.0
        %4497 = vadd.xlane.f32.xlu0 %v4496
        %v4498 = vpop.xlane.xlu0 %4497
        %v4499 = vsel %vm4495, %v4478, 0.0
        %4500 = vadd.xlane.f32.xlu0 %v4499
        %v4501 = vpop.xlane.xlu0 %4500
        %v4502 = vsel %vm4495, %v4479, 0.0
        %4503 = vadd.xlane.f32.xlu0 %v4502
        %v4504 = vpop.xlane.xlu0 %4503
        %v4505 = vsel %vm4495, %v4480, 0.0
        %4506 = vadd.xlane.f32.xlu0 %v4505
        %v4507 = vpop.xlane.xlu0 %4506
        %v4508 = vsel %vm4495, %v4481, 0.0
        %4509 = vadd.xlane.f32.xlu0 %v4508
        %v4510 = vpop.xlane.xlu0 %4509
        %v4511 = vsel %vm4495, %v4482, 0.0
        %4512 = vadd.xlane.f32.xlu0 %v4511
        %v4513 = vpop.xlane.xlu0 %4512
        %v4514 = vsel %vm4495, %v4483, 0.0
        %4515 = vadd.xlane.f32.xlu0 %v4514
        %v4516 = vpop.xlane.xlu0 %4515
        %v4517 = vsel %vm4495, %v4484, 0.0
        %4518 = vadd.xlane.f32.xlu0 %v4517
        %v4519 = vpop.xlane.xlu0 %4518
        %v4520 = vsel %vm4495, %v4485, 0.0
        %4521 = vadd.xlane.f32.xlu0 %v4520
        %v4522 = vpop.xlane.xlu0 %4521
        %v4523 = vsel %vm4495, %v4486, 0.0
        %4524 = vadd.xlane.f32.xlu0 %v4523
        %v4525 = vpop.xlane.xlu0 %4524
        %v4526 = vsel %vm4495, %v4487, 0.0
        %4527 = vadd.xlane.f32.xlu0 %v4526
        %v4528 = vpop.xlane.xlu0 %4527
        %v4529 = vsel %vm4495, %v4488, 0.0
        %4530 = vadd.xlane.f32.xlu0 %v4529
        %v4531 = vpop.xlane.xlu0 %4530
        %v4532 = vsel %vm4495, %v4489, 0.0
        %4533 = vadd.xlane.f32.xlu0 %v4532
        %v4534 = vpop.xlane.xlu0 %4533
        %v4535 = vsel %vm4495, %v4490, 0.0
        %4536 = vadd.xlane.f32.xlu0 %v4535
        %v4537 = vpop.xlane.xlu0 %4536
        %v4538 = vsel %vm4495, %v4491, 0.0
        %4539 = vadd.xlane.f32.xlu0 %v4538
        %v4540 = vpop.xlane.xlu0 %4539
        %v4541 = vsel %vm4495, %v4492, 0.0
        %4542 = vadd.xlane.f32.xlu0 %v4541
        %v4543 = vpop.xlane.xlu0 %4542
        %v4544 = vrcp.pop 32.0
        %v4545 = vmul.f32 %v4498, %v4544
        %v4546 = vmul.f32 %v4501, %v4544
        %v4547 = vmul.f32 %v4504, %v4544
        %v4548 = vmul.f32 %v4507, %v4544
        %v4549 = vmul.f32 %v4510, %v4544
        %v4550 = vmul.f32 %v4513, %v4544
        %v4551 = vmul.f32 %v4516, %v4544
        %v4552 = vmul.f32 %v4519, %v4544
        %v4553 = vmul.f32 %v4522, %v4544
        %v4554 = vmul.f32 %v4525, %v4544
        %v4555 = vmul.f32 %v4528, %v4544
        %v4556 = vmul.f32 %v4531, %v4544
        %v4557 = vmul.f32 %v4534, %v4544
        %v4558 = vmul.f32 %v4537, %v4544
        %v4559 = vmul.f32 %v4540, %v4544
        %v4560 = vmul.f32 %v4543, %v4544
        %v4561 = vsub.f32 %v4477, %v4545
        %v4562 = vsub.f32 %v4478, %v4546
        %v4563 = vsub.f32 %v4479, %v4547
        %v4564 = vsub.f32 %v4480, %v4548
        %v4565 = vsub.f32 %v4481, %v4549
        %v4566 = vsub.f32 %v4482, %v4550
        %v4567 = vsub.f32 %v4483, %v4551
        %v4568 = vsub.f32 %v4484, %v4552
        %v4569 = vsub.f32 %v4485, %v4553
        %v4570 = vsub.f32 %v4486, %v4554
        %v4571 = vsub.f32 %v4487, %v4555
        %v4572 = vsub.f32 %v4488, %v4556
        %v4573 = vsub.f32 %v4489, %v4557
        %v4574 = vsub.f32 %v4490, %v4558
        %v4575 = vsub.f32 %v4491, %v4559
        %v4576 = vsub.f32 %v4492, %v4560
        %v4577 = vmul.f32 %v4561, %v4561
        %v4578 = vmul.f32 %v4562, %v4562
        %v4579 = vmul.f32 %v4563, %v4563
        %v4580 = vmul.f32 %v4564, %v4564
        %v4581 = vmul.f32 %v4565, %v4565
        %v4582 = vmul.f32 %v4566, %v4566
        %v4583 = vmul.f32 %v4567, %v4567
        %v4584 = vmul.f32 %v4568, %v4568
        %v4585 = vmul.f32 %v4569, %v4569
        %v4586 = vmul.f32 %v4570, %v4570
        %v4587 = vmul.f32 %v4571, %v4571
        %v4588 = vmul.f32 %v4572, %v4572
        %v4589 = vmul.f32 %v4573, %v4573
        %v4590 = vmul.f32 %v4574, %v4574
        %v4591 = vmul.f32 %v4575, %v4575
        %v4592 = vmul.f32 %v4576, %v4576
        %v4593 = vsel %vm4495, %v4577, 0.0
        %4594 = vadd.xlane.f32.xlu0 %v4593
        %v4595 = vpop.xlane.xlu0 %4594
        %v4596 = vsel %vm4495, %v4578, 0.0
        %4597 = vadd.xlane.f32.xlu0 %v4596
        %v4598 = vpop.xlane.xlu0 %4597
        %v4599 = vsel %vm4495, %v4579, 0.0
        %4600 = vadd.xlane.f32.xlu0 %v4599
        %v4601 = vpop.xlane.xlu0 %4600
        %v4602 = vsel %vm4495, %v4580, 0.0
        %4603 = vadd.xlane.f32.xlu0 %v4602
        %v4604 = vpop.xlane.xlu0 %4603
        %v4605 = vsel %vm4495, %v4581, 0.0
        %4606 = vadd.xlane.f32.xlu0 %v4605
        %v4607 = vpop.xlane.xlu0 %4606
        %v4608 = vsel %vm4495, %v4582, 0.0
        %4609 = vadd.xlane.f32.xlu0 %v4608
        %v4610 = vpop.xlane.xlu0 %4609
        %v4611 = vsel %vm4495, %v4583, 0.0
        %4612 = vadd.xlane.f32.xlu0 %v4611
        %v4613 = vpop.xlane.xlu0 %4612
        %v4614 = vsel %vm4495, %v4584, 0.0
        %4615 = vadd.xlane.f32.xlu0 %v4614
        %v4616 = vpop.xlane.xlu0 %4615
        %v4617 = vsel %vm4495, %v4585, 0.0
        %4618 = vadd.xlane.f32.xlu0 %v4617
        %v4619 = vpop.xlane.xlu0 %4618
        %v4620 = vsel %vm4495, %v4586, 0.0
        %4621 = vadd.xlane.f32.xlu0 %v4620
        %v4622 = vpop.xlane.xlu0 %4621
        %v4623 = vsel %vm4495, %v4587, 0.0
        %4624 = vadd.xlane.f32.xlu0 %v4623
        %v4625 = vpop.xlane.xlu0 %4624
        %v4626 = vsel %vm4495, %v4588, 0.0
        %4627 = vadd.xlane.f32.xlu0 %v4626
        %v4628 = vpop.xlane.xlu0 %4627
        %v4629 = vsel %vm4495, %v4589, 0.0
        %4630 = vadd.xlane.f32.xlu0 %v4629
        %v4631 = vpop.xlane.xlu0 %4630
        %v4632 = vsel %vm4495, %v4590, 0.0
        %4633 = vadd.xlane.f32.xlu0 %v4632
        %v4634 = vpop.xlane.xlu0 %4633
        %v4635 = vsel %vm4495, %v4591, 0.0
        %4636 = vadd.xlane.f32.xlu0 %v4635
        %v4637 = vpop.xlane.xlu0 %4636
        %v4638 = vsel %vm4495, %v4592, 0.0
        %4639 = vadd.xlane.f32.xlu0 %v4638
        %v4640 = vpop.xlane.xlu0 %4639
        %v4641 = vmul.f32 %v4595, %v4544
        %v4642 = vmul.f32 %v4598, %v4544
        %v4643 = vmul.f32 %v4601, %v4544
        %v4644 = vmul.f32 %v4604, %v4544
        %v4645 = vmul.f32 %v4607, %v4544
        %v4646 = vmul.f32 %v4610, %v4544
        %v4647 = vmul.f32 %v4613, %v4544
        %v4648 = vmul.f32 %v4616, %v4544
        %v4649 = vmul.f32 %v4619, %v4544
        %v4650 = vmul.f32 %v4622, %v4544
        %v4651 = vmul.f32 %v4625, %v4544
        %v4652 = vmul.f32 %v4628, %v4544
        %v4653 = vmul.f32 %v4631, %v4544
        %v4654 = vmul.f32 %v4634, %v4544
        %v4655 = vmul.f32 %v4637, %v4544
        %v4656 = vmul.f32 %v4640, %v4544
        %v4657 = vadd.f32 %v4641, 1e-05
        %v4658 = vadd.f32 %v4642, 1e-05
        %v4659 = vadd.f32 %v4643, 1e-05
        %v4660 = vadd.f32 %v4644, 1e-05
        %v4661 = vadd.f32 %v4645, 1e-05
        %v4662 = vadd.f32 %v4646, 1e-05
        %v4663 = vadd.f32 %v4647, 1e-05
        %v4664 = vadd.f32 %v4648, 1e-05
        %v4665 = vadd.f32 %v4649, 1e-05
        %v4666 = vadd.f32 %v4650, 1e-05
        %v4667 = vadd.f32 %v4651, 1e-05
        %v4668 = vadd.f32 %v4652, 1e-05
        %v4669 = vadd.f32 %v4653, 1e-05
        %v4670 = vadd.f32 %v4654, 1e-05
        %v4671 = vadd.f32 %v4655, 1e-05
        %v4672 = vadd.f32 %v4656, 1e-05
        %v4673 = vrsqrt.pop %v4657
        %v4674 = vrsqrt.pop %v4658
        %v4675 = vrsqrt.pop %v4659
        %v4676 = vrsqrt.pop %v4660
        %v4677 = vrsqrt.pop %v4661
        %v4678 = vrsqrt.pop %v4662
        %v4679 = vrsqrt.pop %v4663
        %v4680 = vrsqrt.pop %v4664
        %v4681 = vrsqrt.pop %v4665
        %v4682 = vrsqrt.pop %v4666
        %v4683 = vrsqrt.pop %v4667
        %v4684 = vrsqrt.pop %v4668
        %v4685 = vrsqrt.pop %v4669
        %v4686 = vrsqrt.pop %v4670
        %v4687 = vrsqrt.pop %v4671
        %v4688 = vrsqrt.pop %v4672
        %v4689 = vmul.f32 %v4561, %v4673
        %v4690 = vmul.f32 %v4562, %v4674
        %v4691 = vmul.f32 %v4563, %v4675
        %v4692 = vmul.f32 %v4564, %v4676
        %v4693 = vmul.f32 %v4565, %v4677
        %v4694 = vmul.f32 %v4566, %v4678
        %v4695 = vmul.f32 %v4567, %v4679
        %v4696 = vmul.f32 %v4568, %v4680
        %v4697 = vmul.f32 %v4569, %v4681
        %v4698 = vmul.f32 %v4570, %v4682
        %v4699 = vmul.f32 %v4571, %v4683
        %v4700 = vmul.f32 %v4572, %v4684
        %v4701 = vmul.f32 %v4573, %v4685
        %v4702 = vmul.f32 %v4574, %v4686
        %v4703 = vmul.f32 %v4575, %v4687
        %v4704 = vmul.f32 %v4576, %v4688
        %v4706 = vlaneseq
        %v4707 = vshrl.u32 %v4706, 7
        %v4708 = vsub.s32 0, %v4707
        %v4709 = vrot.slane %v4493, %v4708
        %v4711 = vmul.f32 %v4689, %v4709
        %v4712 = vmul.f32 %v4690, %v4709
        %v4713 = vmul.f32 %v4691, %v4709
        %v4714 = vmul.f32 %v4692, %v4709
        %v4715 = vmul.f32 %v4693, %v4709
        %v4716 = vmul.f32 %v4694, %v4709
        %v4717 = vmul.f32 %v4695, %v4709
        %v4718 = vmul.f32 %v4696, %v4709
        %v4719 = vmul.f32 %v4697, %v4709
        %v4720 = vmul.f32 %v4698, %v4709
        %v4721 = vmul.f32 %v4699, %v4709
        %v4722 = vmul.f32 %v4700, %v4709
        %v4723 = vmul.f32 %v4701, %v4709
        %v4724 = vmul.f32 %v4702, %v4709
        %v4725 = vmul.f32 %v4703, %v4709
        %v4726 = vmul.f32 %v4704, %v4709
        %v4728 = vlaneseq
        %v4729 = vshrl.u32 %v4728, 7
        %v4730 = vsub.s32 0, %v4729
        %v4731 = vrot.slane %v4494, %v4730
        %v4733 = vadd.f32 %v4711, %v4731
        %v4734 = vadd.f32 %v4712, %v4731
        %v4735 = vadd.f32 %v4713, %v4731
        %v4736 = vadd.f32 %v4714, %v4731
        %v4737 = vadd.f32 %v4715, %v4731
        %v4738 = vadd.f32 %v4716, %v4731
        %v4739 = vadd.f32 %v4717, %v4731
        %v4740 = vadd.f32 %v4718, %v4731
        %v4741 = vadd.f32 %v4719, %v4731
        %v4742 = vadd.f32 %v4720, %v4731
        %v4743 = vadd.f32 %v4721, %v4731
        %v4744 = vadd.f32 %v4722, %v4731
        %v4745 = vadd.f32 %v4723, %v4731
        %v4746 = vadd.f32 %v4724, %v4731
        %v4747 = vadd.f32 %v4725, %v4731
        %v4748 = vadd.f32 %v4726, %v4731
        %vm4749 = vcmp.gt.f32.partialorder %v604, 0.5
        %v4750 = vsel %vm4749, 0.0, -1e+30
        %v4751 = vld [vmem:[%s8] sm:$0xf]
        %v4752 = vld [vmem:[%s8 + $0x4] sm:$0xf]
        %v4753 = vld [vmem:[%s8 + $0x8] sm:$0xf]
        %v4754 = vld [vmem:[%s8 + $0xc] sm:$0xf]
        %v4755 = vld [vmem:[%s8 + $0x10] sm:$0xf]
        %v4756 = vld [vmem:[%s8 + $0x14] sm:$0xf]
        %v4757 = vld [vmem:[%s8 + $0x18] sm:$0xf]
        %v4758 = vld [vmem:[%s8 + $0x1c] sm:$0xf]
        %v4759 = vld [vmem:[%s8 + $0x20] sm:$0xf]
        %v4760 = vld [vmem:[%s8 + $0x24] sm:$0xf]
        %v4761 = vld [vmem:[%s8 + $0x28] sm:$0xf]
        %v4762 = vld [vmem:[%s8 + $0x2c] sm:$0xf]
        %v4763 = vpack.c.bf16 %v4734, %v4733
        %v4764 = vpack.c.bf16 %v4736, %v4735
        %v4765 = vpack.c.bf16 %v4738, %v4737
        %v4766 = vpack.c.bf16 %v4740, %v4739
        %v4767 = vpack.c.bf16 %v4742, %v4741
        %v4768 = vpack.c.bf16 %v4744, %v4743
        %v4769 = vpack.c.bf16 %v4746, %v4745
        %v4770 = vpack.c.bf16 %v4748, %v4747
        %v4771 = vld [vmem:[%s9] sm:$0x1]
        %v4773 = vlaneseq
        %v4774 = vshrl.u32 %v4773, 7
        %v4775 = vsub.s32 0, %v4774
        %v4776 = vrot.slane %v4771, %v4775
        %v4790 = vunpack.c.l.b16 %v4751
        %v4791 = vunpack.c.l.b16 %v4752
        %v4792 = vunpack.c.l.b16 %v4753
        %v4793 = vunpack.c.l.b16 %v4754
        %v4794 = vunpack.c.l.b16 %v4755
        %v4795 = vunpack.c.l.b16 %v4756
        %v4796 = vunpack.c.l.b16 %v4757
        %v4797 = vunpack.c.l.b16 %v4758
        %v4798 = vunpack.c.l.b16 %v4759
        %v4799 = vunpack.c.l.b16 %v4760
        %v4800 = vunpack.c.l.b16 %v4761
        %v4801 = vunpack.c.l.b16 %v4762
        %v4802 = vpack.c.b16 %v4791, %v4790
        %v4803 = vpack.c.b16 %v4793, %v4792
        %v4804 = vpack.c.b16 %v4795, %v4794
        %v4805 = vpack.c.b16 %v4797, %v4796
        %v4806 = vpack.c.b16 %v4799, %v4798
        %v4807 = vpack.c.b16 %v4801, %v4800
        %v4809 = vsel %vm4495, %v4763, 0
        %v4812 = vsel %vm4495, %v4764, 0
        %v4815 = vsel %vm4495, %v4765, 0
        %v4818 = vsel %vm4495, %v4766, 0
        %v4821 = vsel %vm4495, %v4767, 0
        %v4824 = vsel %vm4495, %v4768, 0
        %v4827 = vsel %vm4495, %v4769, 0
        %v4830 = vsel %vm4495, %v4770, 0
        %v4833 = vsel %vm4495, %v4802, 0
        %v4836 = vsel %vm4495, %v4803, 0
        %v4839 = vsel %vm4495, %v4804, 0
        %v4842 = vsel %vm4495, %v4805, 0
        %v4845 = vsel %vm4495, %v4806, 0
        %v4848 = vsel %vm4495, %v4807, 0
        %4850 = vmatprep.subr.bf16.mxu0 0
        %4851 = vmatpush1.bf16.xpose.msra.mxu0 %v4833
        %4852 = vmatprep.subr.bf16.mxu0 0
        %4853 = vmatpush1.bf16.xpose.msra.mxu0 %v4836
        %4854 = vmatprep.subr.bf16.mxu0 0
        %4855 = vmatpush1.bf16.xpose.msra.mxu0 %v4839
        %4856 = vmatprep.subr.bf16.mxu0 0
        %4857 = vmatpush1.bf16.xpose.msra.mxu0 %v4842
        %4858 = vmatprep.subr.bf16.mxu0 0
        %4859 = vmatpush1.bf16.xpose.msra.mxu0 %v4845
        %4860 = vmatprep.subr.bf16.mxu0 0
        %4861 = vmatpush1.bf16.xpose.msra.mxu0 %v4848
        %4862 = vmatprep.subr.bf16.mxu0 0
        %4863 = vmatpush1.bf16.xpose.msra.mxu0 0
        %4864 = vmatprep.subr.bf16.mxu0 0
        %4865 = vmatpush1.bf16.xpose.msra.mxu0 0
        %4866 = vmatprep.subr.bf16.mxu0 0
        %4867 = vmatpush1.bf16.xpose.msra.mxu0 0
        %4868 = vmatprep.subr.bf16.mxu0 0
        %4869 = vmatpush1.bf16.xpose.msra.mxu0 0
        %4870 = vmatprep.subr.bf16.mxu0 0
        %4871 = vmatpush1.bf16.xpose.msra.mxu0 0
        %4872 = vmatprep.subr.bf16.mxu0 0
        %4873 = vmatpush1.bf16.xpose.msra.mxu0 0
        %4874 = vmatprep.subr.bf16.mxu0 0
        %4875 = vmatpush1.bf16.xpose.msra.mxu0 0
        %4876 = vmatprep.subr.bf16.mxu0 0
        %4877 = vmatpush1.bf16.xpose.msra.mxu0 0
        %4878 = vmatprep.subr.bf16.mxu0 0
        %4879 = vmatpush1.bf16.xpose.msra.mxu0 0
        %4880 = vmatprep.subr.bf16.mxu0 0
        %4881 = vmatpush1.bf16.xpose.msra.mxu0 0
        %4882 = vmatprep.mubr.bf16.mxu0 0
        %4883 = vmatmul.mubr.bf16.gmra.mrb[0].mxu0 %v4809
        %v4884 = vpop.f32.mrb[0].mxu0
        %v4885 = vadd.f32 %v4776, %v4884
        %v4886 = vpop.f32.mrb[0].mxu0
        %v4887 = vpop.f32.mrb[0].mxu0
        %v4888 = vadd.f32 %v4776, %v4887
        %v4889 = vpop.f32.mrb[0].mxu0
        %4890 = vmatprep.mubr.bf16.mxu0 0
        %4891 = vmatmul.mubr.bf16.gmra.mrb[0].mxu0 %v4812
        %v4892 = vpop.f32.mrb[0].mxu0
        %v4893 = vadd.f32 %v4776, %v4892
        %v4894 = vpop.f32.mrb[0].mxu0
        %v4895 = vpop.f32.mrb[0].mxu0
        %v4896 = vadd.f32 %v4776, %v4895
        %v4897 = vpop.f32.mrb[0].mxu0
        %4898 = vmatprep.mubr.bf16.mxu0 0
        %4899 = vmatmul.mubr.bf16.gmra.mrb[0].mxu0 %v4815
        %v4900 = vpop.f32.mrb[0].mxu0
        %v4901 = vadd.f32 %v4776, %v4900
        %v4902 = vpop.f32.mrb[0].mxu0
        %v4903 = vpop.f32.mrb[0].mxu0
        %v4904 = vadd.f32 %v4776, %v4903
        %v4905 = vpop.f32.mrb[0].mxu0
        %4906 = vmatprep.mubr.bf16.mxu0 0
        %4907 = vmatmul.mubr.bf16.gmra.mrb[0].mxu0 %v4818
        %v4908 = vpop.f32.mrb[0].mxu0
        %v4909 = vadd.f32 %v4776, %v4908
        %v4910 = vpop.f32.mrb[0].mxu0
        %v4911 = vpop.f32.mrb[0].mxu0
        %v4912 = vadd.f32 %v4776, %v4911
        %v4913 = vpop.f32.mrb[0].mxu0
        %4914 = vmatprep.mubr.bf16.mxu0 0
        %4915 = vmatmul.mubr.bf16.gmra.mrb[0].mxu0 %v4821
        %v4916 = vpop.f32.mrb[0].mxu0
        %v4917 = vadd.f32 %v4776, %v4916
        %v4918 = vpop.f32.mrb[0].mxu0
        %v4919 = vpop.f32.mrb[0].mxu0
        %v4920 = vadd.f32 %v4776, %v4919
        %v4921 = vpop.f32.mrb[0].mxu0
        %4922 = vmatprep.mubr.bf16.mxu0 0
        %4923 = vmatmul.mubr.bf16.gmra.mrb[0].mxu0 %v4824
        %v4924 = vpop.f32.mrb[0].mxu0
        %v4925 = vadd.f32 %v4776, %v4924
        %v4926 = vpop.f32.mrb[0].mxu0
        %v4927 = vpop.f32.mrb[0].mxu0
        %v4928 = vadd.f32 %v4776, %v4927
        %v4929 = vpop.f32.mrb[0].mxu0
        %4930 = vmatprep.mubr.bf16.mxu0 0
        %4931 = vmatmul.mubr.bf16.gmra.mrb[0].mxu0 %v4827
        %v4932 = vpop.f32.mrb[0].mxu0
        %v4933 = vadd.f32 %v4776, %v4932
        %v4934 = vpop.f32.mrb[0].mxu0
        %v4935 = vpop.f32.mrb[0].mxu0
        %v4936 = vadd.f32 %v4776, %v4935
        %v4937 = vpop.f32.mrb[0].mxu0
        %4938 = vmatprep.mubr.bf16.mxu0 0
        %4939 = vmatmul.mubr.bf16.gmra.mrb[0].mxu0 %v4830
        %v4940 = vpop.f32.mrb[0].mxu0
        %v4941 = vadd.f32 %v4776, %v4940
        %v4942 = vpop.f32.mrb[0].mxu0
        %v4943 = vpop.f32.mrb[0].mxu0
        %v4944 = vadd.f32 %v4776, %v4943
        %v4945 = vpop.f32.mrb[0].mxu0
        %4946 = vdwg.mxu0
        %v4947 = vpack.c.bf16 %v4888, %v4885
        %v4948 = vpack.c.bf16 %v4896, %v4893
        %v4949 = vpack.c.bf16 %v4904, %v4901
        %v4950 = vpack.c.bf16 %v4912, %v4909
        %v4951 = vpack.c.bf16 %v4920, %v4917
        %v4952 = vpack.c.bf16 %v4928, %v4925
        %v4953 = vpack.c.bf16 %v4936, %v4933
        %v4954 = vpack.c.bf16 %v4944, %v4941
        %4963 = vrot.lane.b32.xlu0 %v4947, 96
        %v4964 = vpop.permute.xlu0 %4963
        %4965 = vrot.lane.b32.xlu0 %v4948, 96
        %v4966 = vpop.permute.xlu0 %4965
        %4967 = vrot.lane.b32.xlu0 %v4949, 96
        %v4968 = vpop.permute.xlu0 %4967
        %4969 = vrot.lane.b32.xlu0 %v4950, 96
        %v4970 = vpop.permute.xlu0 %4969
        %4971 = vrot.lane.b32.xlu0 %v4951, 96
        %v4972 = vpop.permute.xlu0 %4971
        %4973 = vrot.lane.b32.xlu0 %v4952, 96
        %v4974 = vpop.permute.xlu0 %4973
        %4975 = vrot.lane.b32.xlu0 %v4953, 96
        %v4976 = vpop.permute.xlu0 %4975
        %4977 = vrot.lane.b32.xlu0 %v4954, 96
        %v4978 = vpop.permute.xlu0 %4977
        %vm4979 = vcmask 64512
        %v4981 = vsel %vm4979, %v4947, 0
        %v4984 = vsel %vm4979, %v4948, 0
        %v4987 = vsel %vm4979, %v4949, 0
        %v4990 = vsel %vm4979, %v4950, 0
        %v4993 = vsel %vm4979, %v4951, 0
        %v4996 = vsel %vm4979, %v4952, 0
        %v4999 = vsel %vm4979, %v4953, 0
        %v5002 = vsel %vm4979, %v4954, 0
        %v5005 = vsel %vm4979, %v4964, 0
        %v5008 = vsel %vm4979, %v4966, 0
        %v5011 = vsel %vm4979, %v4968, 0
        %v5014 = vsel %vm4979, %v4970, 0
        %v5017 = vsel %vm4979, %v4972, 0
        %v5020 = vsel %vm4979, %v4974, 0
        %v5023 = vsel %vm4979, %v4976, 0
        %v5026 = vsel %vm4979, %v4978, 0
        %5028 = vmatprep.subr.bf16.mxu0 0
        %5029 = vmatpush1.bf16.xpose.msra.mxu0 %v5005
        %5030 = vmatprep.subr.bf16.mxu0 0
        %5031 = vmatpush1.bf16.xpose.msra.mxu0 %v5008
        %5032 = vmatprep.subr.bf16.mxu0 0
        %5033 = vmatpush1.bf16.xpose.msra.mxu0 %v5011
        %5034 = vmatprep.subr.bf16.mxu0 0
        %5035 = vmatpush1.bf16.xpose.msra.mxu0 %v5014
        %5036 = vmatprep.subr.bf16.mxu0 0
        %5037 = vmatpush1.bf16.xpose.msra.mxu0 %v5017
        %5038 = vmatprep.subr.bf16.mxu0 0
        %5039 = vmatpush1.bf16.xpose.msra.mxu0 %v5020
        %5040 = vmatprep.subr.bf16.mxu0 0
        %5041 = vmatpush1.bf16.xpose.msra.mxu0 %v5023
        %5042 = vmatprep.subr.bf16.mxu0 0
        %5043 = vmatpush1.bf16.xpose.msra.mxu0 %v5026
        %5044 = vmatprep.subr.bf16.mxu0 0
        %5045 = vmatpush1.bf16.xpose.msra.mxu0 0
        %5046 = vmatprep.subr.bf16.mxu0 0
        %5047 = vmatpush1.bf16.xpose.msra.mxu0 0
        %5048 = vmatprep.subr.bf16.mxu0 0
        %5049 = vmatpush1.bf16.xpose.msra.mxu0 0
        %5050 = vmatprep.subr.bf16.mxu0 0
        %5051 = vmatpush1.bf16.xpose.msra.mxu0 0
        %5052 = vmatprep.subr.bf16.mxu0 0
        %5053 = vmatpush1.bf16.xpose.msra.mxu0 0
        %5054 = vmatprep.subr.bf16.mxu0 0
        %5055 = vmatpush1.bf16.xpose.msra.mxu0 0
        %5056 = vmatprep.subr.bf16.mxu0 0
        %5057 = vmatpush1.bf16.xpose.msra.mxu0 0
        %5058 = vmatprep.subr.bf16.mxu0 0
        %5059 = vmatpush1.bf16.xpose.msra.mxu0 0
        %5060 = vmatprep.mubr.bf16.mxu0 0
        %5061 = vmatmul.mubr.bf16.gmra.mrb[0].mxu0 %v4981
        %v5062 = vpop.f32.mrb[0].mxu0
        %v5063 = vadd.f32 0.0, %v5062
        %v5064 = vpop.f32.mrb[0].mxu0
        %v5065 = vpop.f32.mrb[0].mxu0
        %v5066 = vadd.f32 0.0, %v5065
        %v5067 = vpop.f32.mrb[0].mxu0
        %5068 = vmatprep.mubr.bf16.mxu0 0
        %5069 = vmatmul.mubr.bf16.gmra.mrb[0].mxu0 %v4984
        %v5070 = vpop.f32.mrb[0].mxu0
        %v5071 = vadd.f32 0.0, %v5070
        %v5072 = vpop.f32.mrb[0].mxu0
        %v5073 = vpop.f32.mrb[0].mxu0
        %v5074 = vadd.f32 0.0, %v5073
        %v5075 = vpop.f32.mrb[0].mxu0
        %5076 = vmatprep.mubr.bf16.mxu0 0
        %5077 = vmatmul.mubr.bf16.gmra.mrb[0].mxu0 %v4987
        %v5078 = vpop.f32.mrb[0].mxu0
        %v5079 = vadd.f32 0.0, %v5078
        %v5080 = vpop.f32.mrb[0].mxu0
        %v5081 = vpop.f32.mrb[0].mxu0
        %v5082 = vadd.f32 0.0, %v5081
        %v5083 = vpop.f32.mrb[0].mxu0
        %5084 = vmatprep.mubr.bf16.mxu0 0
        %5085 = vmatmul.mubr.bf16.gmra.mrb[0].mxu0 %v4990
        %v5086 = vpop.f32.mrb[0].mxu0
        %v5087 = vadd.f32 0.0, %v5086
        %v5088 = vpop.f32.mrb[0].mxu0
        %v5089 = vpop.f32.mrb[0].mxu0
        %v5090 = vadd.f32 0.0, %v5089
        %v5091 = vpop.f32.mrb[0].mxu0
        %5092 = vmatprep.mubr.bf16.mxu0 0
        %5093 = vmatmul.mubr.bf16.gmra.mrb[0].mxu0 %v4993
        %v5094 = vpop.f32.mrb[0].mxu0
        %v5095 = vadd.f32 0.0, %v5094
        %v5096 = vpop.f32.mrb[0].mxu0
        %v5097 = vpop.f32.mrb[0].mxu0
        %v5098 = vadd.f32 0.0, %v5097
        %v5099 = vpop.f32.mrb[0].mxu0
        %5100 = vmatprep.mubr.bf16.mxu0 0
        %5101 = vmatmul.mubr.bf16.gmra.mrb[0].mxu0 %v4996
        %v5102 = vpop.f32.mrb[0].mxu0
        %v5103 = vadd.f32 0.0, %v5102
        %v5104 = vpop.f32.mrb[0].mxu0
        %v5105 = vpop.f32.mrb[0].mxu0
        %v5106 = vadd.f32 0.0, %v5105
        %v5107 = vpop.f32.mrb[0].mxu0
        %5108 = vmatprep.mubr.bf16.mxu0 0
        %5109 = vmatmul.mubr.bf16.gmra.mrb[0].mxu0 %v4999
        %v5110 = vpop.f32.mrb[0].mxu0
        %v5111 = vadd.f32 0.0, %v5110
        %v5112 = vpop.f32.mrb[0].mxu0
        %v5113 = vpop.f32.mrb[0].mxu0
        %v5114 = vadd.f32 0.0, %v5113
        %v5115 = vpop.f32.mrb[0].mxu0
        %5116 = vmatprep.mubr.bf16.mxu0 0
        %5117 = vmatmul.mubr.bf16.gmra.mrb[0].mxu0 %v5002
        %v5118 = vpop.f32.mrb[0].mxu0
        %v5119 = vadd.f32 0.0, %v5118
        %v5120 = vpop.f32.mrb[0].mxu0
        %v5121 = vpop.f32.mrb[0].mxu0
        %v5122 = vadd.f32 0.0, %v5121
        %v5123 = vpop.f32.mrb[0].mxu0
        %5124 = vdwg.mxu0
        %v5125 = vmul.f32 %v5063, 0.35355338
        %v5126 = vmul.f32 %v5066, 0.35355338
        %v5127 = vmul.f32 %v5071, 0.35355338
        %v5128 = vmul.f32 %v5074, 0.35355338
        %v5129 = vmul.f32 %v5079, 0.35355338
        %v5130 = vmul.f32 %v5082, 0.35355338
        %v5131 = vmul.f32 %v5087, 0.35355338
        %v5132 = vmul.f32 %v5090, 0.35355338
        %v5133 = vmul.f32 %v5095, 0.35355338
        %v5134 = vmul.f32 %v5098, 0.35355338
        %v5135 = vmul.f32 %v5103, 0.35355338
        %v5136 = vmul.f32 %v5106, 0.35355338
        %v5137 = vmul.f32 %v5111, 0.35355338
        %v5138 = vmul.f32 %v5114, 0.35355338
        %v5139 = vmul.f32 %v5119, 0.35355338
        %v5140 = vmul.f32 %v5122, 0.35355338
        %v5142 = vlaneseq
        %v5143 = vshrl.u32 %v5142, 7
        %v5144 = vsub.s32 0, %v5143
        %v5145 = vrot.slane %v4750, %v5144
        %v5147 = vadd.f32 %v5125, %v5145
        %v5148 = vadd.f32 %v5126, %v5145
        %v5149 = vadd.f32 %v5127, %v5145
        %v5150 = vadd.f32 %v5128, %v5145
        %v5151 = vadd.f32 %v5129, %v5145
        %v5152 = vadd.f32 %v5130, %v5145
        %v5153 = vadd.f32 %v5131, %v5145
        %v5154 = vadd.f32 %v5132, %v5145
        %v5155 = vadd.f32 %v5133, %v5145
        %v5156 = vadd.f32 %v5134, %v5145
        %v5157 = vadd.f32 %v5135, %v5145
        %v5158 = vadd.f32 %v5136, %v5145
        %v5159 = vadd.f32 %v5137, %v5145
        %v5160 = vadd.f32 %v5138, %v5145
        %v5161 = vadd.f32 %v5139, %v5145
        %v5162 = vadd.f32 %v5140, %v5145
        %5163 = vmax.xlane.f32.xlu0 %v5147
        %v5164 = vpop.xlane.xlu0 %5163
        %5165 = vmax.xlane.f32.xlu0 %v5148
        %v5166 = vpop.xlane.xlu0 %5165
        %5167 = vmax.xlane.f32.xlu0 %v5149
        %v5168 = vpop.xlane.xlu0 %5167
        %5169 = vmax.xlane.f32.xlu0 %v5150
        %v5170 = vpop.xlane.xlu0 %5169
        %5171 = vmax.xlane.f32.xlu0 %v5151
        %v5172 = vpop.xlane.xlu0 %5171
        %5173 = vmax.xlane.f32.xlu0 %v5152
        %v5174 = vpop.xlane.xlu0 %5173
        %5175 = vmax.xlane.f32.xlu0 %v5153
        %v5176 = vpop.xlane.xlu0 %5175
        %5177 = vmax.xlane.f32.xlu0 %v5154
        %v5178 = vpop.xlane.xlu0 %5177
        %5179 = vmax.xlane.f32.xlu0 %v5155
        %v5180 = vpop.xlane.xlu0 %5179
        %5181 = vmax.xlane.f32.xlu0 %v5156
        %v5182 = vpop.xlane.xlu0 %5181
        %5183 = vmax.xlane.f32.xlu0 %v5157
        %v5184 = vpop.xlane.xlu0 %5183
        %5185 = vmax.xlane.f32.xlu0 %v5158
        %v5186 = vpop.xlane.xlu0 %5185
        %5187 = vmax.xlane.f32.xlu0 %v5159
        %v5188 = vpop.xlane.xlu0 %5187
        %5189 = vmax.xlane.f32.xlu0 %v5160
        %v5190 = vpop.xlane.xlu0 %5189
        %5191 = vmax.xlane.f32.xlu0 %v5161
        %v5192 = vpop.xlane.xlu0 %5191
        %5193 = vmax.xlane.f32.xlu0 %v5162
        %v5194 = vpop.xlane.xlu0 %5193
        %v5195 = vsub.f32 %v5147, %v5164
        %v5196 = vsub.f32 %v5148, %v5166
        %v5197 = vsub.f32 %v5149, %v5168
        %v5198 = vsub.f32 %v5150, %v5170
        %v5199 = vsub.f32 %v5151, %v5172
        %v5200 = vsub.f32 %v5152, %v5174
        %v5201 = vsub.f32 %v5153, %v5176
        %v5202 = vsub.f32 %v5154, %v5178
        %v5203 = vsub.f32 %v5155, %v5180
        %v5204 = vsub.f32 %v5156, %v5182
        %v5205 = vsub.f32 %v5157, %v5184
        %v5206 = vsub.f32 %v5158, %v5186
        %v5207 = vsub.f32 %v5159, %v5188
        %v5208 = vsub.f32 %v5160, %v5190
        %v5209 = vsub.f32 %v5161, %v5192
        %v5210 = vsub.f32 %v5162, %v5194
        %v5211 = vmul.f32 %v5195, 1.442695
        %v5212 = vpow.pop %v5211
        %v5213 = vmul.f32 %v5196, 1.442695
        %v5214 = vpow.pop %v5213
        %v5215 = vmul.f32 %v5197, 1.442695
        %v5216 = vpow.pop %v5215
        %v5217 = vmul.f32 %v5198, 1.442695
        %v5218 = vpow.pop %v5217
        %v5219 = vmul.f32 %v5199, 1.442695
        %v5220 = vpow.pop %v5219
        %v5221 = vmul.f32 %v5200, 1.442695
        %v5222 = vpow.pop %v5221
        %v5223 = vmul.f32 %v5201, 1.442695
        %v5224 = vpow.pop %v5223
        %v5225 = vmul.f32 %v5202, 1.442695
        %v5226 = vpow.pop %v5225
        %v5227 = vmul.f32 %v5203, 1.442695
        %v5228 = vpow.pop %v5227
        %v5229 = vmul.f32 %v5204, 1.442695
        %v5230 = vpow.pop %v5229
        %v5231 = vmul.f32 %v5205, 1.442695
        %v5232 = vpow.pop %v5231
        %v5233 = vmul.f32 %v5206, 1.442695
        %v5234 = vpow.pop %v5233
        %v5235 = vmul.f32 %v5207, 1.442695
        %v5236 = vpow.pop %v5235
        %v5237 = vmul.f32 %v5208, 1.442695
        %v5238 = vpow.pop %v5237
        %v5239 = vmul.f32 %v5209, 1.442695
        %v5240 = vpow.pop %v5239
        %v5241 = vmul.f32 %v5210, 1.442695
        %v5242 = vpow.pop %v5241
        %5243 = vadd.xlane.f32.xlu0 %v5212
        %v5244 = vpop.xlane.xlu0 %5243
        %5245 = vadd.xlane.f32.xlu0 %v5214
        %v5246 = vpop.xlane.xlu0 %5245
        %5247 = vadd.xlane.f32.xlu0 %v5216
        %v5248 = vpop.xlane.xlu0 %5247
        %5249 = vadd.xlane.f32.xlu0 %v5218
        %v5250 = vpop.xlane.xlu0 %5249
        %5251 = vadd.xlane.f32.xlu0 %v5220
        %v5252 = vpop.xlane.xlu0 %5251
        %5253 = vadd.xlane.f32.xlu0 %v5222
        %v5254 = vpop.xlane.xlu0 %5253
        %5255 = vadd.xlane.f32.xlu0 %v5224
        %v5256 = vpop.xlane.xlu0 %5255
        %5257 = vadd.xlane.f32.xlu0 %v5226
        %v5258 = vpop.xlane.xlu0 %5257
        %5259 = vadd.xlane.f32.xlu0 %v5228
        %v5260 = vpop.xlane.xlu0 %5259
        %5261 = vadd.xlane.f32.xlu0 %v5230
        %v5262 = vpop.xlane.xlu0 %5261
        %5263 = vadd.xlane.f32.xlu0 %v5232
        %v5264 = vpop.xlane.xlu0 %5263
        %5265 = vadd.xlane.f32.xlu0 %v5234
        %v5266 = vpop.xlane.xlu0 %5265
        %5267 = vadd.xlane.f32.xlu0 %v5236
        %v5268 = vpop.xlane.xlu0 %5267
        %5269 = vadd.xlane.f32.xlu0 %v5238
        %v5270 = vpop.xlane.xlu0 %5269
        %5271 = vadd.xlane.f32.xlu0 %v5240
        %v5272 = vpop.xlane.xlu0 %5271
        %5273 = vadd.xlane.f32.xlu0 %v5242
        %v5274 = vpop.xlane.xlu0 %5273
        %v5275 = vrcp.pop %v5244
        %v5276 = vrcp.pop %v5246
        %v5277 = vrcp.pop %v5248
        %v5278 = vrcp.pop %v5250
        %v5279 = vrcp.pop %v5252
        %v5280 = vrcp.pop %v5254
        %v5281 = vrcp.pop %v5256
        %v5282 = vrcp.pop %v5258
        %v5283 = vrcp.pop %v5260
        %v5284 = vrcp.pop %v5262
        %v5285 = vrcp.pop %v5264
        %v5286 = vrcp.pop %v5266
        %v5287 = vrcp.pop %v5268
        %v5288 = vrcp.pop %v5270
        %v5289 = vrcp.pop %v5272
        %v5290 = vrcp.pop %v5274
        %v5291 = vmul.f32 %v5212, %v5275
        %v5292 = vmul.f32 %v5214, %v5276
        %v5293 = vmul.f32 %v5216, %v5277
        %v5294 = vmul.f32 %v5218, %v5278
        %v5295 = vmul.f32 %v5220, %v5279
        %v5296 = vmul.f32 %v5222, %v5280
        %v5297 = vmul.f32 %v5224, %v5281
        %v5298 = vmul.f32 %v5226, %v5282
        %v5299 = vmul.f32 %v5228, %v5283
        %v5300 = vmul.f32 %v5230, %v5284
        %v5301 = vmul.f32 %v5232, %v5285
        %v5302 = vmul.f32 %v5234, %v5286
        %v5303 = vmul.f32 %v5236, %v5287
        %v5304 = vmul.f32 %v5238, %v5288
        %v5305 = vmul.f32 %v5240, %v5289
        %v5306 = vmul.f32 %v5242, %v5290
        %v5307 = vpack.c.bf16 %v5292, %v5291
        %v5308 = vpack.c.bf16 %v5294, %v5293
        %v5309 = vpack.c.bf16 %v5296, %v5295
        %v5310 = vpack.c.bf16 %v5298, %v5297
        %v5311 = vpack.c.bf16 %v5300, %v5299
        %v5312 = vpack.c.bf16 %v5302, %v5301
        %v5313 = vpack.c.bf16 %v5304, %v5303
        %v5314 = vpack.c.bf16 %v5306, %v5305
        %5315 = vrot.lane.b32.xlu0 %v4947, 64
        %v5316 = vpop.permute.xlu0 %5315
        %5317 = vrot.lane.b32.xlu0 %v4948, 64
        %v5318 = vpop.permute.xlu0 %5317
        %5319 = vrot.lane.b32.xlu0 %v4949, 64
        %v5320 = vpop.permute.xlu0 %5319
        %5321 = vrot.lane.b32.xlu0 %v4950, 64
        %v5322 = vpop.permute.xlu0 %5321
        %5323 = vrot.lane.b32.xlu0 %v4951, 64
        %v5324 = vpop.permute.xlu0 %5323
        %5325 = vrot.lane.b32.xlu0 %v4952, 64
        %v5326 = vpop.permute.xlu0 %5325
        %5327 = vrot.lane.b32.xlu0 %v4953, 64
        %v5328 = vpop.permute.xlu0 %5327
        %5329 = vrot.lane.b32.xlu0 %v4954, 64
        %v5330 = vpop.permute.xlu0 %5329
        %5339 = vmatprep.subr.bf16.mxu0 0
        %5340 = vmatpush1.bf16.msra.mxu0 %v5316
        %5341 = vmatprep.subr.bf16.mxu0 0
        %5342 = vmatpush1.bf16.msra.mxu0 %v5318
        %5343 = vmatprep.subr.bf16.mxu0 0
        %5344 = vmatpush1.bf16.msra.mxu0 %v5320
        %5345 = vmatprep.subr.bf16.mxu0 0
        %5346 = vmatpush1.bf16.msra.mxu0 %v5322
        %5347 = vmatprep.subr.bf16.mxu0 0
        %5348 = vmatpush1.bf16.msra.mxu0 %v5324
        %5349 = vmatprep.subr.bf16.mxu0 0
        %5350 = vmatpush1.bf16.msra.mxu0 %v5326
        %5351 = vmatprep.subr.bf16.mxu0 0
        %5352 = vmatpush1.bf16.msra.mxu0 %v5328
        %5353 = vmatprep.subr.bf16.mxu0 0
        %5354 = vmatpush1.bf16.msra.mxu0 %v5330
        %5355 = vmatprep.subr.bf16.mxu0 0
        %5356 = vmatpush1.bf16.msra.mxu0 0
        %5357 = vmatprep.subr.bf16.mxu0 0
        %5358 = vmatpush1.bf16.msra.mxu0 0
        %5359 = vmatprep.subr.bf16.mxu0 0
        %5360 = vmatpush1.bf16.msra.mxu0 0
        %5361 = vmatprep.subr.bf16.mxu0 0
        %5362 = vmatpush1.bf16.msra.mxu0 0
        %5363 = vmatprep.subr.bf16.mxu0 0
        %5364 = vmatpush1.bf16.msra.mxu0 0
        %5365 = vmatprep.subr.bf16.mxu0 0
        %5366 = vmatpush1.bf16.msra.mxu0 0
        %5367 = vmatprep.subr.bf16.mxu0 0
        %5368 = vmatpush1.bf16.msra.mxu0 0
        %5369 = vmatprep.subr.bf16.mxu0 0
        %5370 = vmatpush1.bf16.msra.mxu0 0
        %5371 = vmatprep.mubr.bf16.mxu0 0
        %5372 = vmatmul.mubr.bf16.gmra.mrb[0].mxu0 %v5307
        %v5373 = vpop.f32.mrb[0].mxu0
        %v5374 = vadd.f32 0.0, %v5373
        %v5375 = vpop.f32.mrb[0].mxu0
        %v5376 = vpop.f32.mrb[0].mxu0
        %v5377 = vadd.f32 0.0, %v5376
        %v5378 = vpop.f32.mrb[0].mxu0
        %5379 = vmatprep.mubr.bf16.mxu0 0
        %5380 = vmatmul.mubr.bf16.gmra.mrb[0].mxu0 %v5308
        %v5381 = vpop.f32.mrb[0].mxu0
        %v5382 = vadd.f32 0.0, %v5381
        %v5383 = vpop.f32.mrb[0].mxu0
        %v5384 = vpop.f32.mrb[0].mxu0
        %v5385 = vadd.f32 0.0, %v5384
        %v5386 = vpop.f32.mrb[0].mxu0
        %5387 = vmatprep.mubr.bf16.mxu0 0
        %5388 = vmatmul.mubr.bf16.gmra.mrb[0].mxu0 %v5309
        %v5389 = vpop.f32.mrb[0].mxu0
        %v5390 = vadd.f32 0.0, %v5389
        %v5391 = vpop.f32.mrb[0].mxu0
        %v5392 = vpop.f32.mrb[0].mxu0
        %v5393 = vadd.f32 0.0, %v5392
        %v5394 = vpop.f32.mrb[0].mxu0
        %5395 = vmatprep.mubr.bf16.mxu0 0
        %5396 = vmatmul.mubr.bf16.gmra.mrb[0].mxu0 %v5310
        %v5397 = vpop.f32.mrb[0].mxu0
        %v5398 = vadd.f32 0.0, %v5397
        %v5399 = vpop.f32.mrb[0].mxu0
        %v5400 = vpop.f32.mrb[0].mxu0
        %v5401 = vadd.f32 0.0, %v5400
        %v5402 = vpop.f32.mrb[0].mxu0
        %5403 = vmatprep.mubr.bf16.mxu0 0
        %5404 = vmatmul.mubr.bf16.gmra.mrb[0].mxu0 %v5311
        %v5405 = vpop.f32.mrb[0].mxu0
        %v5406 = vadd.f32 0.0, %v5405
        %v5407 = vpop.f32.mrb[0].mxu0
        %v5408 = vpop.f32.mrb[0].mxu0
        %v5409 = vadd.f32 0.0, %v5408
        %v5410 = vpop.f32.mrb[0].mxu0
        %5411 = vmatprep.mubr.bf16.mxu0 0
        %5412 = vmatmul.mubr.bf16.gmra.mrb[0].mxu0 %v5312
        %v5413 = vpop.f32.mrb[0].mxu0
        %v5414 = vadd.f32 0.0, %v5413
        %v5415 = vpop.f32.mrb[0].mxu0
        %v5416 = vpop.f32.mrb[0].mxu0
        %v5417 = vadd.f32 0.0, %v5416
        %v5418 = vpop.f32.mrb[0].mxu0
        %5419 = vmatprep.mubr.bf16.mxu0 0
        %5420 = vmatmul.mubr.bf16.gmra.mrb[0].mxu0 %v5313
        %v5421 = vpop.f32.mrb[0].mxu0
        %v5422 = vadd.f32 0.0, %v5421
        %v5423 = vpop.f32.mrb[0].mxu0
        %v5424 = vpop.f32.mrb[0].mxu0
        %v5425 = vadd.f32 0.0, %v5424
        %v5426 = vpop.f32.mrb[0].mxu0
        %5427 = vmatprep.mubr.bf16.mxu0 0
        %5428 = vmatmul.mubr.bf16.gmra.mrb[0].mxu0 %v5314
        %v5429 = vpop.f32.mrb[0].mxu0
        %v5430 = vadd.f32 0.0, %v5429
        %v5431 = vpop.f32.mrb[0].mxu0
        %v5432 = vpop.f32.mrb[0].mxu0
        %v5433 = vadd.f32 0.0, %v5432
        %v5434 = vpop.f32.mrb[0].mxu0
        %5435 = vdwg.mxu0
        %5436 = vst.msk [vmem:[#allocation2] sm:$0xff] %vm4979, %v5374
        %5437 = vst.msk [vmem:[#allocation2 + $0x8] sm:$0xff] %vm4979, %v5377
        %5438 = vst.msk [vmem:[#allocation2 + $0x10] sm:$0xff] %vm4979, %v5382
        %5439 = vst.msk [vmem:[#allocation2 + $0x18] sm:$0xff] %vm4979, %v5385
        %5440 = vst.msk [vmem:[#allocation2 + $0x20] sm:$0xff] %vm4979, %v5390
        %5441 = vst.msk [vmem:[#allocation2 + $0x28] sm:$0xff] %vm4979, %v5393
        %5442 = vst.msk [vmem:[#allocation2 + $0x30] sm:$0xff] %vm4979, %v5398
        %5443 = vst.msk [vmem:[#allocation2 + $0x38] sm:$0xff] %vm4979, %v5401
        %5444 = vst.msk [vmem:[#allocation2 + $0x40] sm:$0xff] %vm4979, %v5406
        %5445 = vst.msk [vmem:[#allocation2 + $0x48] sm:$0xff] %vm4979, %v5409
        %5446 = vst.msk [vmem:[#allocation2 + $0x50] sm:$0xff] %vm4979, %v5414
        %5447 = vst.msk [vmem:[#allocation2 + $0x58] sm:$0xff] %vm4979, %v5417
        %5448 = vst.msk [vmem:[#allocation2 + $0x60] sm:$0xff] %vm4979, %v5422
        %5449 = vst.msk [vmem:[#allocation2 + $0x68] sm:$0xff] %vm4979, %v5425
        %5450 = vst.msk [vmem:[#allocation2 + $0x70] sm:$0xff] %vm4979, %v5430
        %5451 = vst.msk [vmem:[#allocation2 + $0x78] sm:$0xff] %vm4979, %v5433
        %5452 = vrot.lane.b32.xlu0 %v4947, 120
        %v5453 = vpop.permute.xlu0 %5452
        %5454 = vrot.lane.b32.xlu0 %v4948, 120
        %v5455 = vpop.permute.xlu0 %5454
        %5456 = vrot.lane.b32.xlu0 %v4949, 120
        %v5457 = vpop.permute.xlu0 %5456
        %5458 = vrot.lane.b32.xlu0 %v4950, 120
        %v5459 = vpop.permute.xlu0 %5458
        %5460 = vrot.lane.b32.xlu0 %v4951, 120
        %v5461 = vpop.permute.xlu0 %5460
        %5462 = vrot.lane.b32.xlu0 %v4952, 120
        %v5463 = vpop.permute.xlu0 %5462
        %5464 = vrot.lane.b32.xlu0 %v4953, 120
        %v5465 = vpop.permute.xlu0 %5464
        %5466 = vrot.lane.b32.xlu0 %v4954, 120
        %v5467 = vpop.permute.xlu0 %5466
        %5468 = vrot.lane.b32.xlu0 %v4947, 88
        %v5469 = vpop.permute.xlu0 %5468
        %5470 = vrot.lane.b32.xlu0 %v4948, 88
        %v5471 = vpop.permute.xlu0 %5470
        %5472 = vrot.lane.b32.xlu0 %v4949, 88
        %v5473 = vpop.permute.xlu0 %5472
        %5474 = vrot.lane.b32.xlu0 %v4950, 88
        %v5475 = vpop.permute.xlu0 %5474
        %5476 = vrot.lane.b32.xlu0 %v4951, 88
        %v5477 = vpop.permute.xlu0 %5476
        %5478 = vrot.lane.b32.xlu0 %v4952, 88
        %v5479 = vpop.permute.xlu0 %5478
        %5480 = vrot.lane.b32.xlu0 %v4953, 88
        %v5481 = vpop.permute.xlu0 %5480
        %5482 = vrot.lane.b32.xlu0 %v4954, 88
        %v5483 = vpop.permute.xlu0 %5482
        %v5485 = vsel %vm4979, %v5453, 0
        %v5488 = vsel %vm4979, %v5455, 0
        %v5491 = vsel %vm4979, %v5457, 0
        %v5494 = vsel %vm4979, %v5459, 0
        %v5497 = vsel %vm4979, %v5461, 0
        %v5500 = vsel %vm4979, %v5463, 0
        %v5503 = vsel %vm4979, %v5465, 0
        %v5506 = vsel %vm4979, %v5467, 0
        %v5509 = vsel %vm4979, %v5469, 0
        %v5512 = vsel %vm4979, %v5471, 0
        %v5515 = vsel %vm4979, %v5473, 0
        %v5518 = vsel %vm4979, %v5475, 0
        %v5521 = vsel %vm4979, %v5477, 0
        %v5524 = vsel %vm4979, %v5479, 0
        %v5527 = vsel %vm4979, %v5481, 0
        %v5530 = vsel %vm4979, %v5483, 0
        %5532 = vmatprep.subr.bf16.mxu0 0
        %5533 = vmatpush1.bf16.xpose.msra.mxu0 %v5509
        %5534 = vmatprep.subr.bf16.mxu0 0
        %5535 = vmatpush1.bf16.xpose.msra.mxu0 %v5512
        %5536 = vmatprep.subr.bf16.mxu0 0
        %5537 = vmatpush1.bf16.xpose.msra.mxu0 %v5515
        %5538 = vmatprep.subr.bf16.mxu0 0
        %5539 = vmatpush1.bf16.xpose.msra.mxu0 %v5518
        %5540 = vmatprep.subr.bf16.mxu0 0
        %5541 = vmatpush1.bf16.xpose.msra.mxu0 %v5521
        %5542 = vmatprep.subr.bf16.mxu0 0
        %5543 = vmatpush1.bf16.xpose.msra.mxu0 %v5524
        %5544 = vmatprep.subr.bf16.mxu0 0
        %5545 = vmatpush1.bf16.xpose.msra.mxu0 %v5527
        %5546 = vmatprep.subr.bf16.mxu0 0
        %5547 = vmatpush1.bf16.xpose.msra.mxu0 %v5530
        %5548 = vmatprep.subr.bf16.mxu0 0
        %5549 = vmatpush1.bf16.xpose.msra.mxu0 0
        %5550 = vmatprep.subr.bf16.mxu0 0
        %5551 = vmatpush1.bf16.xpose.msra.mxu0 0
        %5552 = vmatprep.subr.bf16.mxu0 0
        %5553 = vmatpush1.bf16.xpose.msra.mxu0 0
        %5554 = vmatprep.subr.bf16.mxu0 0
        %5555 = vmatpush1.bf16.xpose.msra.mxu0 0
        %5556 = vmatprep.subr.bf16.mxu0 0
        %5557 = vmatpush1.bf16.xpose.msra.mxu0 0
        %5558 = vmatprep.subr.bf16.mxu0 0
        %5559 = vmatpush1.bf16.xpose.msra.mxu0 0
        %5560 = vmatprep.subr.bf16.mxu0 0
        %5561 = vmatpush1.bf16.xpose.msra.mxu0 0
        %5562 = vmatprep.subr.bf16.mxu0 0
        %5563 = vmatpush1.bf16.xpose.msra.mxu0 0
        %5564 = vmatprep.mubr.bf16.mxu0 0
        %5565 = vmatmul.mubr.bf16.gmra.mrb[0].mxu0 %v5485
        %v5566 = vpop.f32.mrb[0].mxu0
        %v5567 = vadd.f32 0.0, %v5566
        %v5568 = vpop.f32.mrb[0].mxu0
        %v5569 = vpop.f32.mrb[0].mxu0
        %v5570 = vadd.f32 0.0, %v5569
        %v5571 = vpop.f32.mrb[0].mxu0
        %5572 = vmatprep.mubr.bf16.mxu0 0
        %5573 = vmatmul.mubr.bf16.gmra.mrb[0].mxu0 %v5488
        %v5574 = vpop.f32.mrb[0].mxu0
        %v5575 = vadd.f32 0.0, %v5574
        %v5576 = vpop.f32.mrb[0].mxu0
        %v5577 = vpop.f32.mrb[0].mxu0
        %v5578 = vadd.f32 0.0, %v5577
        %v5579 = vpop.f32.mrb[0].mxu0
        %5580 = vmatprep.mubr.bf16.mxu0 0
        %5581 = vmatmul.mubr.bf16.gmra.mrb[0].mxu0 %v5491
        %v5582 = vpop.f32.mrb[0].mxu0
        %v5583 = vadd.f32 0.0, %v5582
        %v5584 = vpop.f32.mrb[0].mxu0
        %v5585 = vpop.f32.mrb[0].mxu0
        %v5586 = vadd.f32 0.0, %v5585
        %v5587 = vpop.f32.mrb[0].mxu0
        %5588 = vmatprep.mubr.bf16.mxu0 0
        %5589 = vmatmul.mubr.bf16.gmra.mrb[0].mxu0 %v5494
        %v5590 = vpop.f32.mrb[0].mxu0
        %v5591 = vadd.f32 0.0, %v5590
        %v5592 = vpop.f32.mrb[0].mxu0
        %v5593 = vpop.f32.mrb[0].mxu0
        %v5594 = vadd.f32 0.0, %v5593
        %v5595 = vpop.f32.mrb[0].mxu0
        %5596 = vmatprep.mubr.bf16.mxu0 0
        %5597 = vmatmul.mubr.bf16.gmra.mrb[0].mxu0 %v5497
        %v5598 = vpop.f32.mrb[0].mxu0
        %v5599 = vadd.f32 0.0, %v5598
        %v5600 = vpop.f32.mrb[0].mxu0
        %v5601 = vpop.f32.mrb[0].mxu0
        %v5602 = vadd.f32 0.0, %v5601
        %v5603 = vpop.f32.mrb[0].mxu0
        %5604 = vmatprep.mubr.bf16.mxu0 0
        %5605 = vmatmul.mubr.bf16.gmra.mrb[0].mxu0 %v5500
        %v5606 = vpop.f32.mrb[0].mxu0
        %v5607 = vadd.f32 0.0, %v5606
        %v5608 = vpop.f32.mrb[0].mxu0
        %v5609 = vpop.f32.mrb[0].mxu0
        %v5610 = vadd.f32 0.0, %v5609
        %v5611 = vpop.f32.mrb[0].mxu0
        %5612 = vmatprep.mubr.bf16.mxu0 0
        %5613 = vmatmul.mubr.bf16.gmra.mrb[0].mxu0 %v5503
        %v5614 = vpop.f32.mrb[0].mxu0
        %v5615 = vadd.f32 0.0, %v5614
        %v5616 = vpop.f32.mrb[0].mxu0
        %v5617 = vpop.f32.mrb[0].mxu0
        %v5618 = vadd.f32 0.0, %v5617
        %v5619 = vpop.f32.mrb[0].mxu0
        %5620 = vmatprep.mubr.bf16.mxu0 0
        %5621 = vmatmul.mubr.bf16.gmra.mrb[0].mxu0 %v5506
        %v5622 = vpop.f32.mrb[0].mxu0
        %v5623 = vadd.f32 0.0, %v5622
        %v5624 = vpop.f32.mrb[0].mxu0
        %v5625 = vpop.f32.mrb[0].mxu0
        %v5626 = vadd.f32 0.0, %v5625
        %v5627 = vpop.f32.mrb[0].mxu0
        %5628 = vdwg.mxu0
        %v5629 = vmul.f32 %v5567, 0.35355338
        %v5630 = vmul.f32 %v5570, 0.35355338
        %v5631 = vmul.f32 %v5575, 0.35355338
        %v5632 = vmul.f32 %v5578, 0.35355338
        %v5633 = vmul.f32 %v5583, 0.35355338
        %v5634 = vmul.f32 %v5586, 0.35355338
        %v5635 = vmul.f32 %v5591, 0.35355338
        %v5636 = vmul.f32 %v5594, 0.35355338
        %v5637 = vmul.f32 %v5599, 0.35355338
        %v5638 = vmul.f32 %v5602, 0.35355338
        %v5639 = vmul.f32 %v5607, 0.35355338
        %v5640 = vmul.f32 %v5610, 0.35355338
        %v5641 = vmul.f32 %v5615, 0.35355338
        %v5642 = vmul.f32 %v5618, 0.35355338
        %v5643 = vmul.f32 %v5623, 0.35355338
        %v5644 = vmul.f32 %v5626, 0.35355338
        %v5645 = vadd.f32 %v5629, %v5145
        %v5646 = vadd.f32 %v5630, %v5145
        %v5647 = vadd.f32 %v5631, %v5145
        %v5648 = vadd.f32 %v5632, %v5145
        %v5649 = vadd.f32 %v5633, %v5145
        %v5650 = vadd.f32 %v5634, %v5145
        %v5651 = vadd.f32 %v5635, %v5145
        %v5652 = vadd.f32 %v5636, %v5145
        %v5653 = vadd.f32 %v5637, %v5145
        %v5654 = vadd.f32 %v5638, %v5145
        %v5655 = vadd.f32 %v5639, %v5145
        %v5656 = vadd.f32 %v5640, %v5145
        %v5657 = vadd.f32 %v5641, %v5145
        %v5658 = vadd.f32 %v5642, %v5145
        %v5659 = vadd.f32 %v5643, %v5145
        %v5660 = vadd.f32 %v5644, %v5145
        %5661 = vmax.xlane.f32.xlu0 %v5645
        %v5662 = vpop.xlane.xlu0 %5661
        %5663 = vmax.xlane.f32.xlu0 %v5646
        %v5664 = vpop.xlane.xlu0 %5663
        %5665 = vmax.xlane.f32.xlu0 %v5647
        %v5666 = vpop.xlane.xlu0 %5665
        %5667 = vmax.xlane.f32.xlu0 %v5648
        %v5668 = vpop.xlane.xlu0 %5667
        %5669 = vmax.xlane.f32.xlu0 %v5649
        %v5670 = vpop.xlane.xlu0 %5669
        %5671 = vmax.xlane.f32.xlu0 %v5650
        %v5672 = vpop.xlane.xlu0 %5671
        %5673 = vmax.xlane.f32.xlu0 %v5651
        %v5674 = vpop.xlane.xlu0 %5673
        %5675 = vmax.xlane.f32.xlu0 %v5652
        %v5676 = vpop.xlane.xlu0 %5675
        %5677 = vmax.xlane.f32.xlu0 %v5653
        %v5678 = vpop.xlane.xlu0 %5677
        %5679 = vmax.xlane.f32.xlu0 %v5654
        %v5680 = vpop.xlane.xlu0 %5679
        %5681 = vmax.xlane.f32.xlu0 %v5655
        %v5682 = vpop.xlane.xlu0 %5681
        %5683 = vmax.xlane.f32.xlu0 %v5656
        %v5684 = vpop.xlane.xlu0 %5683
        %5685 = vmax.xlane.f32.xlu0 %v5657
        %v5686 = vpop.xlane.xlu0 %5685
        %5687 = vmax.xlane.f32.xlu0 %v5658
        %v5688 = vpop.xlane.xlu0 %5687
        %5689 = vmax.xlane.f32.xlu0 %v5659
        %v5690 = vpop.xlane.xlu0 %5689
        %5691 = vmax.xlane.f32.xlu0 %v5660
        %v5692 = vpop.xlane.xlu0 %5691
        %v5693 = vsub.f32 %v5645, %v5662
        %v5694 = vsub.f32 %v5646, %v5664
        %v5695 = vsub.f32 %v5647, %v5666
        %v5696 = vsub.f32 %v5648, %v5668
        %v5697 = vsub.f32 %v5649, %v5670
        %v5698 = vsub.f32 %v5650, %v5672
        %v5699 = vsub.f32 %v5651, %v5674
        %v5700 = vsub.f32 %v5652, %v5676
        %v5701 = vsub.f32 %v5653, %v5678
        %v5702 = vsub.f32 %v5654, %v5680
        %v5703 = vsub.f32 %v5655, %v5682
        %v5704 = vsub.f32 %v5656, %v5684
        %v5705 = vsub.f32 %v5657, %v5686
        %v5706 = vsub.f32 %v5658, %v5688
        %v5707 = vsub.f32 %v5659, %v5690
        %v5708 = vsub.f32 %v5660, %v5692
        %v5709 = vmul.f32 %v5693, 1.442695
        %v5710 = vpow.pop %v5709
        %v5711 = vmul.f32 %v5694, 1.442695
        %v5712 = vpow.pop %v5711
        %v5713 = vmul.f32 %v5695, 1.442695
        %v5714 = vpow.pop %v5713
        %v5715 = vmul.f32 %v5696, 1.442695
        %v5716 = vpow.pop %v5715
        %v5717 = vmul.f32 %v5697, 1.442695
        %v5718 = vpow.pop %v5717
        %v5719 = vmul.f32 %v5698, 1.442695
        %v5720 = vpow.pop %v5719
        %v5721 = vmul.f32 %v5699, 1.442695
        %v5722 = vpow.pop %v5721
        %v5723 = vmul.f32 %v5700, 1.442695
        %v5724 = vpow.pop %v5723
        %v5725 = vmul.f32 %v5701, 1.442695
        %v5726 = vpow.pop %v5725
        %v5727 = vmul.f32 %v5702, 1.442695
        %v5728 = vpow.pop %v5727
        %v5729 = vmul.f32 %v5703, 1.442695
        %v5730 = vpow.pop %v5729
        %v5731 = vmul.f32 %v5704, 1.442695
        %v5732 = vpow.pop %v5731
        %v5733 = vmul.f32 %v5705, 1.442695
        %v5734 = vpow.pop %v5733
        %v5735 = vmul.f32 %v5706, 1.442695
        %v5736 = vpow.pop %v5735
        %v5737 = vmul.f32 %v5707, 1.442695
        %v5738 = vpow.pop %v5737
        %v5739 = vmul.f32 %v5708, 1.442695
        %v5740 = vpow.pop %v5739
        %5741 = vadd.xlane.f32.xlu0 %v5710
        %v5742 = vpop.xlane.xlu0 %5741
        %5743 = vadd.xlane.f32.xlu0 %v5712
        %v5744 = vpop.xlane.xlu0 %5743
        %5745 = vadd.xlane.f32.xlu0 %v5714
        %v5746 = vpop.xlane.xlu0 %5745
        %5747 = vadd.xlane.f32.xlu0 %v5716
        %v5748 = vpop.xlane.xlu0 %5747
        %5749 = vadd.xlane.f32.xlu0 %v5718
        %v5750 = vpop.xlane.xlu0 %5749
        %5751 = vadd.xlane.f32.xlu0 %v5720
        %v5752 = vpop.xlane.xlu0 %5751
        %5753 = vadd.xlane.f32.xlu0 %v5722
        %v5754 = vpop.xlane.xlu0 %5753
        %5755 = vadd.xlane.f32.xlu0 %v5724
        %v5756 = vpop.xlane.xlu0 %5755
        %5757 = vadd.xlane.f32.xlu0 %v5726
        %v5758 = vpop.xlane.xlu0 %5757
        %5759 = vadd.xlane.f32.xlu0 %v5728
        %v5760 = vpop.xlane.xlu0 %5759
        %5761 = vadd.xlane.f32.xlu0 %v5730
        %v5762 = vpop.xlane.xlu0 %5761
        %5763 = vadd.xlane.f32.xlu0 %v5732
        %v5764 = vpop.xlane.xlu0 %5763
        %5765 = vadd.xlane.f32.xlu0 %v5734
        %v5766 = vpop.xlane.xlu0 %5765
        %5767 = vadd.xlane.f32.xlu0 %v5736
        %v5768 = vpop.xlane.xlu0 %5767
        %5769 = vadd.xlane.f32.xlu0 %v5738
        %v5770 = vpop.xlane.xlu0 %5769
        %5771 = vadd.xlane.f32.xlu0 %v5740
        %v5772 = vpop.xlane.xlu0 %5771
        %v5773 = vrcp.pop %v5742
        %v5774 = vrcp.pop %v5744
        %v5775 = vrcp.pop %v5746
        %v5776 = vrcp.pop %v5748
        %v5777 = vrcp.pop %v5750
        %v5778 = vrcp.pop %v5752
        %v5779 = vrcp.pop %v5754
        %v5780 = vrcp.pop %v5756
        %v5781 = vrcp.pop %v5758
        %v5782 = vrcp.pop %v5760
        %v5783 = vrcp.pop %v5762
        %v5784 = vrcp.pop %v5764
        %v5785 = vrcp.pop %v5766
        %v5786 = vrcp.pop %v5768
        %v5787 = vrcp.pop %v5770
        %v5788 = vrcp.pop %v5772
        %v5789 = vmul.f32 %v5710, %v5773
        %v5790 = vmul.f32 %v5712, %v5774
        %v5791 = vmul.f32 %v5714, %v5775
        %v5792 = vmul.f32 %v5716, %v5776
        %v5793 = vmul.f32 %v5718, %v5777
        %v5794 = vmul.f32 %v5720, %v5778
        %v5795 = vmul.f32 %v5722, %v5779
        %v5796 = vmul.f32 %v5724, %v5780
        %v5797 = vmul.f32 %v5726, %v5781
        %v5798 = vmul.f32 %v5728, %v5782
        %v5799 = vmul.f32 %v5730, %v5783
        %v5800 = vmul.f32 %v5732, %v5784
        %v5801 = vmul.f32 %v5734, %v5785
        %v5802 = vmul.f32 %v5736, %v5786
        %v5803 = vmul.f32 %v5738, %v5787
        %v5804 = vmul.f32 %v5740, %v5788
        %v5805 = vpack.c.bf16 %v5790, %v5789
        %v5806 = vpack.c.bf16 %v5792, %v5791
        %v5807 = vpack.c.bf16 %v5794, %v5793
        %v5808 = vpack.c.bf16 %v5796, %v5795
        %v5809 = vpack.c.bf16 %v5798, %v5797
        %v5810 = vpack.c.bf16 %v5800, %v5799
        %v5811 = vpack.c.bf16 %v5802, %v5801
        %v5812 = vpack.c.bf16 %v5804, %v5803
        %5813 = vrot.lane.b32.xlu0 %v4947, 56
        %v5814 = vpop.permute.xlu0 %5813
        %5815 = vrot.lane.b32.xlu0 %v4948, 56
        %v5816 = vpop.permute.xlu0 %5815
        %5817 = vrot.lane.b32.xlu0 %v4949, 56
        %v5818 = vpop.permute.xlu0 %5817
        %5819 = vrot.lane.b32.xlu0 %v4950, 56
        %v5820 = vpop.permute.xlu0 %5819
        %5821 = vrot.lane.b32.xlu0 %v4951, 56
        %v5822 = vpop.permute.xlu0 %5821
        %5823 = vrot.lane.b32.xlu0 %v4952, 56
        %v5824 = vpop.permute.xlu0 %5823
        %5825 = vrot.lane.b32.xlu0 %v4953, 56
        %v5826 = vpop.permute.xlu0 %5825
        %5827 = vrot.lane.b32.xlu0 %v4954, 56
        %v5828 = vpop.permute.xlu0 %5827
        %5837 = vmatprep.subr.bf16.mxu0 0
        %5838 = vmatpush1.bf16.msra.mxu0 %v5814
        %5839 = vmatprep.subr.bf16.mxu0 0
        %5840 = vmatpush1.bf16.msra.mxu0 %v5816
        %5841 = vmatprep.subr.bf16.mxu0 0
        %5842 = vmatpush1.bf16.msra.mxu0 %v5818
        %5843 = vmatprep.subr.bf16.mxu0 0
        %5844 = vmatpush1.bf16.msra.mxu0 %v5820
        %5845 = vmatprep.subr.bf16.mxu0 0
        %5846 = vmatpush1.bf16.msra.mxu0 %v5822
        %5847 = vmatprep.subr.bf16.mxu0 0
        %5848 = vmatpush1.bf16.msra.mxu0 %v5824
        %5849 = vmatprep.subr.bf16.mxu0 0
        %5850 = vmatpush1.bf16.msra.mxu0 %v5826
        %5851 = vmatprep.subr.bf16.mxu0 0
        %5852 = vmatpush1.bf16.msra.mxu0 %v5828
        %5853 = vmatprep.subr.bf16.mxu0 0
        %5854 = vmatpush1.bf16.msra.mxu0 0
        %5855 = vmatprep.subr.bf16.mxu0 0
        %5856 = vmatpush1.bf16.msra.mxu0 0
        %5857 = vmatprep.subr.bf16.mxu0 0
        %5858 = vmatpush1.bf16.msra.mxu0 0
        %5859 = vmatprep.subr.bf16.mxu0 0
        %5860 = vmatpush1.bf16.msra.mxu0 0
        %5861 = vmatprep.subr.bf16.mxu0 0
        %5862 = vmatpush1.bf16.msra.mxu0 0
        %5863 = vmatprep.subr.bf16.mxu0 0
        %5864 = vmatpush1.bf16.msra.mxu0 0
        %5865 = vmatprep.subr.bf16.mxu0 0
        %5866 = vmatpush1.bf16.msra.mxu0 0
        %5867 = vmatprep.subr.bf16.mxu0 0
        %5868 = vmatpush1.bf16.msra.mxu0 0
        %5869 = vmatprep.mubr.bf16.mxu0 0
        %5870 = vmatmul.mubr.bf16.gmra.mrb[0].mxu0 %v5805
        %v5871 = vpop.f32.mrb[0].mxu0
        %v5872 = vadd.f32 0.0, %v5871
        %v5873 = vpop.f32.mrb[0].mxu0
        %v5874 = vpop.f32.mrb[0].mxu0
        %v5875 = vadd.f32 0.0, %v5874
        %v5876 = vpop.f32.mrb[0].mxu0
        %5877 = vmatprep.mubr.bf16.mxu0 0
        %5878 = vmatmul.mubr.bf16.gmra.mrb[0].mxu0 %v5806
        %v5879 = vpop.f32.mrb[0].mxu0
        %v5880 = vadd.f32 0.0, %v5879
        %v5881 = vpop.f32.mrb[0].mxu0
        %v5882 = vpop.f32.mrb[0].mxu0
        %v5883 = vadd.f32 0.0, %v5882
        %v5884 = vpop.f32.mrb[0].mxu0
        %5885 = vmatprep.mubr.bf16.mxu0 0
        %5886 = vmatmul.mubr.bf16.gmra.mrb[0].mxu0 %v5807
        %v5887 = vpop.f32.mrb[0].mxu0
        %v5888 = vadd.f32 0.0, %v5887
        %v5889 = vpop.f32.mrb[0].mxu0
        %v5890 = vpop.f32.mrb[0].mxu0
        %v5891 = vadd.f32 0.0, %v5890
        %v5892 = vpop.f32.mrb[0].mxu0
        %5893 = vmatprep.mubr.bf16.mxu0 0
        %5894 = vmatmul.mubr.bf16.gmra.mrb[0].mxu0 %v5808
        %v5895 = vpop.f32.mrb[0].mxu0
        %v5896 = vadd.f32 0.0, %v5895
        %v5897 = vpop.f32.mrb[0].mxu0
        %v5898 = vpop.f32.mrb[0].mxu0
        %v5899 = vadd.f32 0.0, %v5898
        %v5900 = vpop.f32.mrb[0].mxu0
        %5901 = vmatprep.mubr.bf16.mxu0 0
        %5902 = vmatmul.mubr.bf16.gmra.mrb[0].mxu0 %v5809
        %v5903 = vpop.f32.mrb[0].mxu0
        %v5904 = vadd.f32 0.0, %v5903
        %v5905 = vpop.f32.mrb[0].mxu0
        %v5906 = vpop.f32.mrb[0].mxu0
        %v5907 = vadd.f32 0.0, %v5906
        %v5908 = vpop.f32.mrb[0].mxu0
        %5909 = vmatprep.mubr.bf16.mxu0 0
        %5910 = vmatmul.mubr.bf16.gmra.mrb[0].mxu0 %v5810
        %v5911 = vpop.f32.mrb[0].mxu0
        %v5912 = vadd.f32 0.0, %v5911
        %v5913 = vpop.f32.mrb[0].mxu0
        %v5914 = vpop.f32.mrb[0].mxu0
        %v5915 = vadd.f32 0.0, %v5914
        %v5916 = vpop.f32.mrb[0].mxu0
        %5917 = vmatprep.mubr.bf16.mxu0 0
        %5918 = vmatmul.mubr.bf16.gmra.mrb[0].mxu0 %v5811
        %v5919 = vpop.f32.mrb[0].mxu0
        %v5920 = vadd.f32 0.0, %v5919
        %v5921 = vpop.f32.mrb[0].mxu0
        %v5922 = vpop.f32.mrb[0].mxu0
        %v5923 = vadd.f32 0.0, %v5922
        %v5924 = vpop.f32.mrb[0].mxu0
        %5925 = vmatprep.mubr.bf16.mxu0 0
        %5926 = vmatmul.mubr.bf16.gmra.mrb[0].mxu0 %v5812
        %v5927 = vpop.f32.mrb[0].mxu0
        %v5928 = vadd.f32 0.0, %v5927
        %v5929 = vpop.f32.mrb[0].mxu0
        %v5930 = vpop.f32.mrb[0].mxu0
        %v5931 = vadd.f32 0.0, %v5930
        %v5932 = vpop.f32.mrb[0].mxu0
        %5933 = vdwg.mxu0
        %5950 = vrot.lane.b32.xlu0 %v5872, 8
        %v5951 = vpop.permute.xlu0 %5950
        %5952 = vrot.lane.b32.xlu0 %v5875, 8
        %v5953 = vpop.permute.xlu0 %5952
        %5954 = vrot.lane.b32.xlu0 %v5880, 8
        %v5955 = vpop.permute.xlu0 %5954
        %5956 = vrot.lane.b32.xlu0 %v5883, 8
        %v5957 = vpop.permute.xlu0 %5956
        %5958 = vrot.lane.b32.xlu0 %v5888, 8
        %v5959 = vpop.permute.xlu0 %5958
        %5960 = vrot.lane.b32.xlu0 %v5891, 8
        %v5961 = vpop.permute.xlu0 %5960
        %5962 = vrot.lane.b32.xlu0 %v5896, 8
        %v5963 = vpop.permute.xlu0 %5962
        %5964 = vrot.lane.b32.xlu0 %v5899, 8
        %v5965 = vpop.permute.xlu0 %5964
        %5966 = vrot.lane.b32.xlu0 %v5904, 8
        %v5967 = vpop.permute.xlu0 %5966
        %5968 = vrot.lane.b32.xlu0 %v5907, 8
        %v5969 = vpop.permute.xlu0 %5968
        %5970 = vrot.lane.b32.xlu0 %v5912, 8
        %v5971 = vpop.permute.xlu0 %5970
        %5972 = vrot.lane.b32.xlu0 %v5915, 8
        %v5973 = vpop.permute.xlu0 %5972
        %5974 = vrot.lane.b32.xlu0 %v5920, 8
        %v5975 = vpop.permute.xlu0 %5974
        %5976 = vrot.lane.b32.xlu0 %v5923, 8
        %v5977 = vpop.permute.xlu0 %5976
        %5978 = vrot.lane.b32.xlu0 %v5928, 8
        %v5979 = vpop.permute.xlu0 %5978
        %5980 = vrot.lane.b32.xlu0 %v5931, 8
        %v5981 = vpop.permute.xlu0 %5980
        %vm5998 = vcmask 130112
        %5999 = vst.msk [vmem:[#allocation2] sm:$0xff] %vm5998, %v5951
        %6000 = vst.msk [vmem:[#allocation2 + $0x8] sm:$0xff] %vm5998, %v5953
        %6001 = vst.msk [vmem:[#allocation2 + $0x10] sm:$0xff] %vm5998, %v5955
        %6002 = vst.msk [vmem:[#allocation2 + $0x18] sm:$0xff] %vm5998, %v5957
        %6003 = vst.msk [vmem:[#allocation2 + $0x20] sm:$0xff] %vm5998, %v5959
        %6004 = vst.msk [vmem:[#allocation2 + $0x28] sm:$0xff] %vm5998, %v5961
        %6005 = vst.msk [vmem:[#allocation2 + $0x30] sm:$0xff] %vm5998, %v5963
        %6006 = vst.msk [vmem:[#allocation2 + $0x38] sm:$0xff] %vm5998, %v5965
        %6007 = vst.msk [vmem:[#allocation2 + $0x40] sm:$0xff] %vm5998, %v5967
        %6008 = vst.msk [vmem:[#allocation2 + $0x48] sm:$0xff] %vm5998, %v5969
        %6009 = vst.msk [vmem:[#allocation2 + $0x50] sm:$0xff] %vm5998, %v5971
        %6010 = vst.msk [vmem:[#allocation2 + $0x58] sm:$0xff] %vm5998, %v5973
        %6011 = vst.msk [vmem:[#allocation2 + $0x60] sm:$0xff] %vm5998, %v5975
        %6012 = vst.msk [vmem:[#allocation2 + $0x68] sm:$0xff] %vm5998, %v5977
        %6013 = vst.msk [vmem:[#allocation2 + $0x70] sm:$0xff] %vm5998, %v5979
        %6014 = vst.msk [vmem:[#allocation2 + $0x78] sm:$0xff] %vm5998, %v5981
        %6015 = vrot.lane.b32.xlu0 %v4947, 112
        %v6016 = vpop.permute.xlu0 %6015
        %6017 = vrot.lane.b32.xlu0 %v4948, 112
        %v6018 = vpop.permute.xlu0 %6017
        %6019 = vrot.lane.b32.xlu0 %v4949, 112
        %v6020 = vpop.permute.xlu0 %6019
        %6021 = vrot.lane.b32.xlu0 %v4950, 112
        %v6022 = vpop.permute.xlu0 %6021
        %6023 = vrot.lane.b32.xlu0 %v4951, 112
        %v6024 = vpop.permute.xlu0 %6023
        %6025 = vrot.lane.b32.xlu0 %v4952, 112
        %v6026 = vpop.permute.xlu0 %6025
        %6027 = vrot.lane.b32.xlu0 %v4953, 112
        %v6028 = vpop.permute.xlu0 %6027
        %6029 = vrot.lane.b32.xlu0 %v4954, 112
        %v6030 = vpop.permute.xlu0 %6029
        %6031 = vrot.lane.b32.xlu0 %v4947, 80
        %v6032 = vpop.permute.xlu0 %6031
        %6033 = vrot.lane.b32.xlu0 %v4948, 80
        %v6034 = vpop.permute.xlu0 %6033
        %6035 = vrot.lane.b32.xlu0 %v4949, 80
        %v6036 = vpop.permute.xlu0 %6035
        %6037 = vrot.lane.b32.xlu0 %v4950, 80
        %v6038 = vpop.permute.xlu0 %6037
        %6039 = vrot.lane.b32.xlu0 %v4951, 80
        %v6040 = vpop.permute.xlu0 %6039
        %6041 = vrot.lane.b32.xlu0 %v4952, 80
        %v6042 = vpop.permute.xlu0 %6041
        %6043 = vrot.lane.b32.xlu0 %v4953, 80
        %v6044 = vpop.permute.xlu0 %6043
        %6045 = vrot.lane.b32.xlu0 %v4954, 80
        %v6046 = vpop.permute.xlu0 %6045
        %v6048 = vsel %vm4979, %v6016, 0
        %v6051 = vsel %vm4979, %v6018, 0
        %v6054 = vsel %vm4979, %v6020, 0
        %v6057 = vsel %vm4979, %v6022, 0
        %v6060 = vsel %vm4979, %v6024, 0
        %v6063 = vsel %vm4979, %v6026, 0
        %v6066 = vsel %vm4979, %v6028, 0
        %v6069 = vsel %vm4979, %v6030, 0
        %v6072 = vsel %vm4979, %v6032, 0
        %v6075 = vsel %vm4979, %v6034, 0
        %v6078 = vsel %vm4979, %v6036, 0
        %v6081 = vsel %vm4979, %v6038, 0
        %v6084 = vsel %vm4979, %v6040, 0
        %v6087 = vsel %vm4979, %v6042, 0
        %v6090 = vsel %vm4979, %v6044, 0
        %v6093 = vsel %vm4979, %v6046, 0
        %6095 = vmatprep.subr.bf16.mxu0 0
        %6096 = vmatpush1.bf16.xpose.msra.mxu0 %v6072
        %6097 = vmatprep.subr.bf16.mxu0 0
        %6098 = vmatpush1.bf16.xpose.msra.mxu0 %v6075
        %6099 = vmatprep.subr.bf16.mxu0 0
        %6100 = vmatpush1.bf16.xpose.msra.mxu0 %v6078
        %6101 = vmatprep.subr.bf16.mxu0 0
        %6102 = vmatpush1.bf16.xpose.msra.mxu0 %v6081
        %6103 = vmatprep.subr.bf16.mxu0 0
        %6104 = vmatpush1.bf16.xpose.msra.mxu0 %v6084
        %6105 = vmatprep.subr.bf16.mxu0 0
        %6106 = vmatpush1.bf16.xpose.msra.mxu0 %v6087
        %6107 = vmatprep.subr.bf16.mxu0 0
        %6108 = vmatpush1.bf16.xpose.msra.mxu0 %v6090
        %6109 = vmatprep.subr.bf16.mxu0 0
        %6110 = vmatpush1.bf16.xpose.msra.mxu0 %v6093
        %6111 = vmatprep.subr.bf16.mxu0 0
        %6112 = vmatpush1.bf16.xpose.msra.mxu0 0
        %6113 = vmatprep.subr.bf16.mxu0 0
        %6114 = vmatpush1.bf16.xpose.msra.mxu0 0
        %6115 = vmatprep.subr.bf16.mxu0 0
        %6116 = vmatpush1.bf16.xpose.msra.mxu0 0
        %6117 = vmatprep.subr.bf16.mxu0 0
        %6118 = vmatpush1.bf16.xpose.msra.mxu0 0
        %6119 = vmatprep.subr.bf16.mxu0 0
        %6120 = vmatpush1.bf16.xpose.msra.mxu0 0
        %6121 = vmatprep.subr.bf16.mxu0 0
        %6122 = vmatpush1.bf16.xpose.msra.mxu0 0
        %6123 = vmatprep.subr.bf16.mxu0 0
        %6124 = vmatpush1.bf16.xpose.msra.mxu0 0
        %6125 = vmatprep.subr.bf16.mxu0 0
        %6126 = vmatpush1.bf16.xpose.msra.mxu0 0
        %6127 = vmatprep.mubr.bf16.mxu0 0
        %6128 = vmatmul.mubr.bf16.gmra.mrb[0].mxu0 %v6048
        %v6129 = vpop.f32.mrb[0].mxu0
        %v6130 = vadd.f32 0.0, %v6129
        %v6131 = vpop.f32.mrb[0].mxu0
        %v6132 = vpop.f32.mrb[0].mxu0
        %v6133 = vadd.f32 0.0, %v6132
        %v6134 = vpop.f32.mrb[0].mxu0
        %6135 = vmatprep.mubr.bf16.mxu0 0
        %6136 = vmatmul.mubr.bf16.gmra.mrb[0].mxu0 %v6051
        %v6137 = vpop.f32.mrb[0].mxu0
        %v6138 = vadd.f32 0.0, %v6137
        %v6139 = vpop.f32.mrb[0].mxu0
        %v6140 = vpop.f32.mrb[0].mxu0
        %v6141 = vadd.f32 0.0, %v6140
        %v6142 = vpop.f32.mrb[0].mxu0
        %6143 = vmatprep.mubr.bf16.mxu0 0
        %6144 = vmatmul.mubr.bf16.gmra.mrb[0].mxu0 %v6054
        %v6145 = vpop.f32.mrb[0].mxu0
        %v6146 = vadd.f32 0.0, %v6145
        %v6147 = vpop.f32.mrb[0].mxu0
        %v6148 = vpop.f32.mrb[0].mxu0
        %v6149 = vadd.f32 0.0, %v6148
        %v6150 = vpop.f32.mrb[0].mxu0
        %6151 = vmatprep.mubr.bf16.mxu0 0
        %6152 = vmatmul.mubr.bf16.gmra.mrb[0].mxu0 %v6057
        %v6153 = vpop.f32.mrb[0].mxu0
        %v6154 = vadd.f32 0.0, %v6153
        %v6155 = vpop.f32.mrb[0].mxu0
        %v6156 = vpop.f32.mrb[0].mxu0
        %v6157 = vadd.f32 0.0, %v6156
        %v6158 = vpop.f32.mrb[0].mxu0
        %6159 = vmatprep.mubr.bf16.mxu0 0
        %6160 = vmatmul.mubr.bf16.gmra.mrb[0].mxu0 %v6060
        %v6161 = vpop.f32.mrb[0].mxu0
        %v6162 = vadd.f32 0.0, %v6161
        %v6163 = vpop.f32.mrb[0].mxu0
        %v6164 = vpop.f32.mrb[0].mxu0
        %v6165 = vadd.f32 0.0, %v6164
        %v6166 = vpop.f32.mrb[0].mxu0
        %6167 = vmatprep.mubr.bf16.mxu0 0
        %6168 = vmatmul.mubr.bf16.gmra.mrb[0].mxu0 %v6063
        %v6169 = vpop.f32.mrb[0].mxu0
        %v6170 = vadd.f32 0.0, %v6169
        %v6171 = vpop.f32.mrb[0].mxu0
        %v6172 = vpop.f32.mrb[0].mxu0
        %v6173 = vadd.f32 0.0, %v6172
        %v6174 = vpop.f32.mrb[0].mxu0
        %6175 = vmatprep.mubr.bf16.mxu0 0
        %6176 = vmatmul.mubr.bf16.gmra.mrb[0].mxu0 %v6066
        %v6177 = vpop.f32.mrb[0].mxu0
        %v6178 = vadd.f32 0.0, %v6177
        %v6179 = vpop.f32.mrb[0].mxu0
        %v6180 = vpop.f32.mrb[0].mxu0
        %v6181 = vadd.f32 0.0, %v6180
        %v6182 = vpop.f32.mrb[0].mxu0
        %6183 = vmatprep.mubr.bf16.mxu0 0
        %6184 = vmatmul.mubr.bf16.gmra.mrb[0].mxu0 %v6069
        %v6185 = vpop.f32.mrb[0].mxu0
        %v6186 = vadd.f32 0.0, %v6185
        %v6187 = vpop.f32.mrb[0].mxu0
        %v6188 = vpop.f32.mrb[0].mxu0
        %v6189 = vadd.f32 0.0, %v6188
        %v6190 = vpop.f32.mrb[0].mxu0
        %6191 = vdwg.mxu0
        %v6192 = vmul.f32 %v6130, 0.35355338
        %v6193 = vmul.f32 %v6133, 0.35355338
        %v6194 = vmul.f32 %v6138, 0.35355338
        %v6195 = vmul.f32 %v6141, 0.35355338
        %v6196 = vmul.f32 %v6146, 0.35355338
        %v6197 = vmul.f32 %v6149, 0.35355338
        %v6198 = vmul.f32 %v6154, 0.35355338
        %v6199 = vmul.f32 %v6157, 0.35355338
        %v6200 = vmul.f32 %v6162, 0.35355338
        %v6201 = vmul.f32 %v6165, 0.35355338
        %v6202 = vmul.f32 %v6170, 0.35355338
        %v6203 = vmul.f32 %v6173, 0.35355338
        %v6204 = vmul.f32 %v6178, 0.35355338
        %v6205 = vmul.f32 %v6181, 0.35355338
        %v6206 = vmul.f32 %v6186, 0.35355338
        %v6207 = vmul.f32 %v6189, 0.35355338
        %v6208 = vadd.f32 %v6192, %v5145
        %v6209 = vadd.f32 %v6193, %v5145
        %v6210 = vadd.f32 %v6194, %v5145
        %v6211 = vadd.f32 %v6195, %v5145
        %v6212 = vadd.f32 %v6196, %v5145
        %v6213 = vadd.f32 %v6197, %v5145
        %v6214 = vadd.f32 %v6198, %v5145
        %v6215 = vadd.f32 %v6199, %v5145
        %v6216 = vadd.f32 %v6200, %v5145
        %v6217 = vadd.f32 %v6201, %v5145
        %v6218 = vadd.f32 %v6202, %v5145
        %v6219 = vadd.f32 %v6203, %v5145
        %v6220 = vadd.f32 %v6204, %v5145
        %v6221 = vadd.f32 %v6205, %v5145
        %v6222 = vadd.f32 %v6206, %v5145
        %v6223 = vadd.f32 %v6207, %v5145
        %6224 = vmax.xlane.f32.xlu0 %v6208
        %v6225 = vpop.xlane.xlu0 %6224
        %6226 = vmax.xlane.f32.xlu0 %v6209
        %v6227 = vpop.xlane.xlu0 %6226
        %6228 = vmax.xlane.f32.xlu0 %v6210
        %v6229 = vpop.xlane.xlu0 %6228
        %6230 = vmax.xlane.f32.xlu0 %v6211
        %v6231 = vpop.xlane.xlu0 %6230
        %6232 = vmax.xlane.f32.xlu0 %v6212
        %v6233 = vpop.xlane.xlu0 %6232
        %6234 = vmax.xlane.f32.xlu0 %v6213
        %v6235 = vpop.xlane.xlu0 %6234
        %6236 = vmax.xlane.f32.xlu0 %v6214
        %v6237 = vpop.xlane.xlu0 %6236
        %6238 = vmax.xlane.f32.xlu0 %v6215
        %v6239 = vpop.xlane.xlu0 %6238
        %6240 = vmax.xlane.f32.xlu0 %v6216
        %v6241 = vpop.xlane.xlu0 %6240
        %6242 = vmax.xlane.f32.xlu0 %v6217
        %v6243 = vpop.xlane.xlu0 %6242
        %6244 = vmax.xlane.f32.xlu0 %v6218
        %v6245 = vpop.xlane.xlu0 %6244
        %6246 = vmax.xlane.f32.xlu0 %v6219
        %v6247 = vpop.xlane.xlu0 %6246
        %6248 = vmax.xlane.f32.xlu0 %v6220
        %v6249 = vpop.xlane.xlu0 %6248
        %6250 = vmax.xlane.f32.xlu0 %v6221
        %v6251 = vpop.xlane.xlu0 %6250
        %6252 = vmax.xlane.f32.xlu0 %v6222
        %v6253 = vpop.xlane.xlu0 %6252
        %6254 = vmax.xlane.f32.xlu0 %v6223
        %v6255 = vpop.xlane.xlu0 %6254
        %v6256 = vsub.f32 %v6208, %v6225
        %v6257 = vsub.f32 %v6209, %v6227
        %v6258 = vsub.f32 %v6210, %v6229
        %v6259 = vsub.f32 %v6211, %v6231
        %v6260 = vsub.f32 %v6212, %v6233
        %v6261 = vsub.f32 %v6213, %v6235
        %v6262 = vsub.f32 %v6214, %v6237
        %v6263 = vsub.f32 %v6215, %v6239
        %v6264 = vsub.f32 %v6216, %v6241
        %v6265 = vsub.f32 %v6217, %v6243
        %v6266 = vsub.f32 %v6218, %v6245
        %v6267 = vsub.f32 %v6219, %v6247
        %v6268 = vsub.f32 %v6220, %v6249
        %v6269 = vsub.f32 %v6221, %v6251
        %v6270 = vsub.f32 %v6222, %v6253
        %v6271 = vsub.f32 %v6223, %v6255
        %v6272 = vmul.f32 %v6256, 1.442695
        %v6273 = vpow.pop %v6272
        %v6274 = vmul.f32 %v6257, 1.442695
        %v6275 = vpow.pop %v6274
        %v6276 = vmul.f32 %v6258, 1.442695
        %v6277 = vpow.pop %v6276
        %v6278 = vmul.f32 %v6259, 1.442695
        %v6279 = vpow.pop %v6278
        %v6280 = vmul.f32 %v6260, 1.442695
        %v6281 = vpow.pop %v6280
        %v6282 = vmul.f32 %v6261, 1.442695
        %v6283 = vpow.pop %v6282
        %v6284 = vmul.f32 %v6262, 1.442695
        %v6285 = vpow.pop %v6284
        %v6286 = vmul.f32 %v6263, 1.442695
        %v6287 = vpow.pop %v6286
        %v6288 = vmul.f32 %v6264, 1.442695
        %v6289 = vpow.pop %v6288
        %v6290 = vmul.f32 %v6265, 1.442695
        %v6291 = vpow.pop %v6290
        %v6292 = vmul.f32 %v6266, 1.442695
        %v6293 = vpow.pop %v6292
        %v6294 = vmul.f32 %v6267, 1.442695
        %v6295 = vpow.pop %v6294
        %v6296 = vmul.f32 %v6268, 1.442695
        %v6297 = vpow.pop %v6296
        %v6298 = vmul.f32 %v6269, 1.442695
        %v6299 = vpow.pop %v6298
        %v6300 = vmul.f32 %v6270, 1.442695
        %v6301 = vpow.pop %v6300
        %v6302 = vmul.f32 %v6271, 1.442695
        %v6303 = vpow.pop %v6302
        %6304 = vadd.xlane.f32.xlu0 %v6273
        %v6305 = vpop.xlane.xlu0 %6304
        %6306 = vadd.xlane.f32.xlu0 %v6275
        %v6307 = vpop.xlane.xlu0 %6306
        %6308 = vadd.xlane.f32.xlu0 %v6277
        %v6309 = vpop.xlane.xlu0 %6308
        %6310 = vadd.xlane.f32.xlu0 %v6279
        %v6311 = vpop.xlane.xlu0 %6310
        %6312 = vadd.xlane.f32.xlu0 %v6281
        %v6313 = vpop.xlane.xlu0 %6312
        %6314 = vadd.xlane.f32.xlu0 %v6283
        %v6315 = vpop.xlane.xlu0 %6314
        %6316 = vadd.xlane.f32.xlu0 %v6285
        %v6317 = vpop.xlane.xlu0 %6316
        %6318 = vadd.xlane.f32.xlu0 %v6287
        %v6319 = vpop.xlane.xlu0 %6318
        %6320 = vadd.xlane.f32.xlu0 %v6289
        %v6321 = vpop.xlane.xlu0 %6320
        %6322 = vadd.xlane.f32.xlu0 %v6291
        %v6323 = vpop.xlane.xlu0 %6322
        %6324 = vadd.xlane.f32.xlu0 %v6293
        %v6325 = vpop.xlane.xlu0 %6324
        %6326 = vadd.xlane.f32.xlu0 %v6295
        %v6327 = vpop.xlane.xlu0 %6326
        %6328 = vadd.xlane.f32.xlu0 %v6297
        %v6329 = vpop.xlane.xlu0 %6328
        %6330 = vadd.xlane.f32.xlu0 %v6299
        %v6331 = vpop.xlane.xlu0 %6330
        %6332 = vadd.xlane.f32.xlu0 %v6301
        %v6333 = vpop.xlane.xlu0 %6332
        %6334 = vadd.xlane.f32.xlu0 %v6303
        %v6335 = vpop.xlane.xlu0 %6334
        %v6336 = vrcp.pop %v6305
        %v6337 = vrcp.pop %v6307
        %v6338 = vrcp.pop %v6309
        %v6339 = vrcp.pop %v6311
        %v6340 = vrcp.pop %v6313
        %v6341 = vrcp.pop %v6315
        %v6342 = vrcp.pop %v6317
        %v6343 = vrcp.pop %v6319
        %v6344 = vrcp.pop %v6321
        %v6345 = vrcp.pop %v6323
        %v6346 = vrcp.pop %v6325
        %v6347 = vrcp.pop %v6327
        %v6348 = vrcp.pop %v6329
        %v6349 = vrcp.pop %v6331
        %v6350 = vrcp.pop %v6333
        %v6351 = vrcp.pop %v6335
        %v6352 = vmul.f32 %v6273, %v6336
        %v6353 = vmul.f32 %v6275, %v6337
        %v6354 = vmul.f32 %v6277, %v6338
        %v6355 = vmul.f32 %v6279, %v6339
        %v6356 = vmul.f32 %v6281, %v6340
        %v6357 = vmul.f32 %v6283, %v6341
        %v6358 = vmul.f32 %v6285, %v6342
        %v6359 = vmul.f32 %v6287, %v6343
        %v6360 = vmul.f32 %v6289, %v6344
        %v6361 = vmul.f32 %v6291, %v6345
        %v6362 = vmul.f32 %v6293, %v6346
        %v6363 = vmul.f32 %v6295, %v6347
        %v6364 = vmul.f32 %v6297, %v6348
        %v6365 = vmul.f32 %v6299, %v6349
        %v6366 = vmul.f32 %v6301, %v6350
        %v6367 = vmul.f32 %v6303, %v6351
        %v6368 = vpack.c.bf16 %v6353, %v6352
        %v6369 = vpack.c.bf16 %v6355, %v6354
        %v6370 = vpack.c.bf16 %v6357, %v6356
        %v6371 = vpack.c.bf16 %v6359, %v6358
        %v6372 = vpack.c.bf16 %v6361, %v6360
        %v6373 = vpack.c.bf16 %v6363, %v6362
        %v6374 = vpack.c.bf16 %v6365, %v6364
        %v6375 = vpack.c.bf16 %v6367, %v6366
        %6376 = vrot.lane.b32.xlu0 %v4947, 48
        %v6377 = vpop.permute.xlu0 %6376
        %6378 = vrot.lane.b32.xlu0 %v4948, 48
        %v6379 = vpop.permute.xlu0 %6378
        %6380 = vrot.lane.b32.xlu0 %v4949, 48
        %v6381 = vpop.permute.xlu0 %6380
        %6382 = vrot.lane.b32.xlu0 %v4950, 48
        %v6383 = vpop.permute.xlu0 %6382
        %6384 = vrot.lane.b32.xlu0 %v4951, 48
        %v6385 = vpop.permute.xlu0 %6384
        %6386 = vrot.lane.b32.xlu0 %v4952, 48
        %v6387 = vpop.permute.xlu0 %6386
        %6388 = vrot.lane.b32.xlu0 %v4953, 48
        %v6389 = vpop.permute.xlu0 %6388
        %6390 = vrot.lane.b32.xlu0 %v4954, 48
        %v6391 = vpop.permute.xlu0 %6390
        %6400 = vmatprep.subr.bf16.mxu0 0
        %6401 = vmatpush1.bf16.msra.mxu0 %v6377
        %6402 = vmatprep.subr.bf16.mxu0 0
        %6403 = vmatpush1.bf16.msra.mxu0 %v6379
        %6404 = vmatprep.subr.bf16.mxu0 0
        %6405 = vmatpush1.bf16.msra.mxu0 %v6381
        %6406 = vmatprep.subr.bf16.mxu0 0
        %6407 = vmatpush1.bf16.msra.mxu0 %v6383
        %6408 = vmatprep.subr.bf16.mxu0 0
        %6409 = vmatpush1.bf16.msra.mxu0 %v6385
        %6410 = vmatprep.subr.bf16.mxu0 0
        %6411 = vmatpush1.bf16.msra.mxu0 %v6387
        %6412 = vmatprep.subr.bf16.mxu0 0
        %6413 = vmatpush1.bf16.msra.mxu0 %v6389
        %6414 = vmatprep.subr.bf16.mxu0 0
        %6415 = vmatpush1.bf16.msra.mxu0 %v6391
        %6416 = vmatprep.subr.bf16.mxu0 0
        %6417 = vmatpush1.bf16.msra.mxu0 0
        %6418 = vmatprep.subr.bf16.mxu0 0
        %6419 = vmatpush1.bf16.msra.mxu0 0
        %6420 = vmatprep.subr.bf16.mxu0 0
        %6421 = vmatpush1.bf16.msra.mxu0 0
        %6422 = vmatprep.subr.bf16.mxu0 0
        %6423 = vmatpush1.bf16.msra.mxu0 0
        %6424 = vmatprep.subr.bf16.mxu0 0
        %6425 = vmatpush1.bf16.msra.mxu0 0
        %6426 = vmatprep.subr.bf16.mxu0 0
        %6427 = vmatpush1.bf16.msra.mxu0 0
        %6428 = vmatprep.subr.bf16.mxu0 0
        %6429 = vmatpush1.bf16.msra.mxu0 0
        %6430 = vmatprep.subr.bf16.mxu0 0
        %6431 = vmatpush1.bf16.msra.mxu0 0
        %6432 = vmatprep.mubr.bf16.mxu0 0
        %6433 = vmatmul.mubr.bf16.gmra.mrb[0].mxu0 %v6368
        %v6434 = vpop.f32.mrb[0].mxu0
        %v6435 = vadd.f32 0.0, %v6434
        %v6436 = vpop.f32.mrb[0].mxu0
        %v6437 = vpop.f32.mrb[0].mxu0
        %v6438 = vadd.f32 0.0, %v6437
        %v6439 = vpop.f32.mrb[0].mxu0
        %6440 = vmatprep.mubr.bf16.mxu0 0
        %6441 = vmatmul.mubr.bf16.gmra.mrb[0].mxu0 %v6369
        %v6442 = vpop.f32.mrb[0].mxu0
        %v6443 = vadd.f32 0.0, %v6442
        %v6444 = vpop.f32.mrb[0].mxu0
        %v6445 = vpop.f32.mrb[0].mxu0
        %v6446 = vadd.f32 0.0, %v6445
        %v6447 = vpop.f32.mrb[0].mxu0
        %6448 = vmatprep.mubr.bf16.mxu0 0
        %6449 = vmatmul.mubr.bf16.gmra.mrb[0].mxu0 %v6370
        %v6450 = vpop.f32.mrb[0].mxu0
        %v6451 = vadd.f32 0.0, %v6450
        %v6452 = vpop.f32.mrb[0].mxu0
        %v6453 = vpop.f32.mrb[0].mxu0
        %v6454 = vadd.f32 0.0, %v6453
        %v6455 = vpop.f32.mrb[0].mxu0
        %6456 = vmatprep.mubr.bf16.mxu0 0
        %6457 = vmatmul.mubr.bf16.gmra.mrb[0].mxu0 %v6371
        %v6458 = vpop.f32.mrb[0].mxu0
        %v6459 = vadd.f32 0.0, %v6458
        %v6460 = vpop.f32.mrb[0].mxu0
        %v6461 = vpop.f32.mrb[0].mxu0
        %v6462 = vadd.f32 0.0, %v6461
        %v6463 = vpop.f32.mrb[0].mxu0
        %6464 = vmatprep.mubr.bf16.mxu0 0
        %6465 = vmatmul.mubr.bf16.gmra.mrb[0].mxu0 %v6372
        %v6466 = vpop.f32.mrb[0].mxu0
        %v6467 = vadd.f32 0.0, %v6466
        %v6468 = vpop.f32.mrb[0].mxu0
        %v6469 = vpop.f32.mrb[0].mxu0
        %v6470 = vadd.f32 0.0, %v6469
        %v6471 = vpop.f32.mrb[0].mxu0
        %6472 = vmatprep.mubr.bf16.mxu0 0
        %6473 = vmatmul.mubr.bf16.gmra.mrb[0].mxu0 %v6373
        %v6474 = vpop.f32.mrb[0].mxu0
        %v6475 = vadd.f32 0.0, %v6474
        %v6476 = vpop.f32.mrb[0].mxu0
        %v6477 = vpop.f32.mrb[0].mxu0
        %v6478 = vadd.f32 0.0, %v6477
        %v6479 = vpop.f32.mrb[0].mxu0
        %6480 = vmatprep.mubr.bf16.mxu0 0
        %6481 = vmatmul.mubr.bf16.gmra.mrb[0].mxu0 %v6374
        %v6482 = vpop.f32.mrb[0].mxu0
        %v6483 = vadd.f32 0.0, %v6482
        %v6484 = vpop.f32.mrb[0].mxu0
        %v6485 = vpop.f32.mrb[0].mxu0
        %v6486 = vadd.f32 0.0, %v6485
        %v6487 = vpop.f32.mrb[0].mxu0
        %6488 = vmatprep.mubr.bf16.mxu0 0
        %6489 = vmatmul.mubr.bf16.gmra.mrb[0].mxu0 %v6375
        %v6490 = vpop.f32.mrb[0].mxu0
        %v6491 = vadd.f32 0.0, %v6490
        %v6492 = vpop.f32.mrb[0].mxu0
        %v6493 = vpop.f32.mrb[0].mxu0
        %v6494 = vadd.f32 0.0, %v6493
        %v6495 = vpop.f32.mrb[0].mxu0
        %6496 = vdwg.mxu0
        %6513 = vrot.lane.b32.xlu0 %v6435, 16
        %v6514 = vpop.permute.xlu0 %6513
        %6515 = vrot.lane.b32.xlu0 %v6438, 16
        %v6516 = vpop.permute.xlu0 %6515
        %6517 = vrot.lane.b32.xlu0 %v6443, 16
        %v6518 = vpop.permute.xlu0 %6517
        %6519 = vrot.lane.b32.xlu0 %v6446, 16
        %v6520 = vpop.permute.xlu0 %6519
        %6521 = vrot.lane.b32.xlu0 %v6451, 16
        %v6522 = vpop.permute.xlu0 %6521
        %6523 = vrot.lane.b32.xlu0 %v6454, 16
        %v6524 = vpop.permute.xlu0 %6523
        %6525 = vrot.lane.b32.xlu0 %v6459, 16
        %v6526 = vpop.permute.xlu0 %6525
        %6527 = vrot.lane.b32.xlu0 %v6462, 16
        %v6528 = vpop.permute.xlu0 %6527
        %6529 = vrot.lane.b32.xlu0 %v6467, 16
        %v6530 = vpop.permute.xlu0 %6529
        %6531 = vrot.lane.b32.xlu0 %v6470, 16
        %v6532 = vpop.permute.xlu0 %6531
        %6533 = vrot.lane.b32.xlu0 %v6475, 16
        %v6534 = vpop.permute.xlu0 %6533
        %6535 = vrot.lane.b32.xlu0 %v6478, 16
        %v6536 = vpop.permute.xlu0 %6535
        %6537 = vrot.lane.b32.xlu0 %v6483, 16
        %v6538 = vpop.permute.xlu0 %6537
        %6539 = vrot.lane.b32.xlu0 %v6486, 16
        %v6540 = vpop.permute.xlu0 %6539
        %6541 = vrot.lane.b32.xlu0 %v6491, 16
        %v6542 = vpop.permute.xlu0 %6541
        %6543 = vrot.lane.b32.xlu0 %v6494, 16
        %v6544 = vpop.permute.xlu0 %6543
        %vm6561 = vcmask 195712
        %6562 = vst.msk [vmem:[#allocation2] sm:$0xff] %vm6561, %v6514
        %6563 = vst.msk [vmem:[#allocation2 + $0x8] sm:$0xff] %vm6561, %v6516
        %6564 = vst.msk [vmem:[#allocation2 + $0x10] sm:$0xff] %vm6561, %v6518
        %6565 = vst.msk [vmem:[#allocation2 + $0x18] sm:$0xff] %vm6561, %v6520
        %6566 = vst.msk [vmem:[#allocation2 + $0x20] sm:$0xff] %vm6561, %v6522
        %6567 = vst.msk [vmem:[#allocation2 + $0x28] sm:$0xff] %vm6561, %v6524
        %6568 = vst.msk [vmem:[#allocation2 + $0x30] sm:$0xff] %vm6561, %v6526
        %6569 = vst.msk [vmem:[#allocation2 + $0x38] sm:$0xff] %vm6561, %v6528
        %6570 = vst.msk [vmem:[#allocation2 + $0x40] sm:$0xff] %vm6561, %v6530
        %6571 = vst.msk [vmem:[#allocation2 + $0x48] sm:$0xff] %vm6561, %v6532
        %6572 = vst.msk [vmem:[#allocation2 + $0x50] sm:$0xff] %vm6561, %v6534
        %6573 = vst.msk [vmem:[#allocation2 + $0x58] sm:$0xff] %vm6561, %v6536
        %6574 = vst.msk [vmem:[#allocation2 + $0x60] sm:$0xff] %vm6561, %v6538
        %6575 = vst.msk [vmem:[#allocation2 + $0x68] sm:$0xff] %vm6561, %v6540
        %6576 = vst.msk [vmem:[#allocation2 + $0x70] sm:$0xff] %vm6561, %v6542
        %6577 = vst.msk [vmem:[#allocation2 + $0x78] sm:$0xff] %vm6561, %v6544
        %6578 = vrot.lane.b32.xlu0 %v4947, 104
        %v6579 = vpop.permute.xlu0 %6578
        %6580 = vrot.lane.b32.xlu0 %v4948, 104
        %v6581 = vpop.permute.xlu0 %6580
        %6582 = vrot.lane.b32.xlu0 %v4949, 104
        %v6583 = vpop.permute.xlu0 %6582
        %6584 = vrot.lane.b32.xlu0 %v4950, 104
        %v6585 = vpop.permute.xlu0 %6584
        %6586 = vrot.lane.b32.xlu0 %v4951, 104
        %v6587 = vpop.permute.xlu0 %6586
        %6588 = vrot.lane.b32.xlu0 %v4952, 104
        %v6589 = vpop.permute.xlu0 %6588
        %6590 = vrot.lane.b32.xlu0 %v4953, 104
        %v6591 = vpop.permute.xlu0 %6590
        %6592 = vrot.lane.b32.xlu0 %v4954, 104
        %v6593 = vpop.permute.xlu0 %6592
        %6594 = vrot.lane.b32.xlu0 %v4947, 72
        %v6595 = vpop.permute.xlu0 %6594
        %6596 = vrot.lane.b32.xlu0 %v4948, 72
        %v6597 = vpop.permute.xlu0 %6596
        %6598 = vrot.lane.b32.xlu0 %v4949, 72
        %v6599 = vpop.permute.xlu0 %6598
        %6600 = vrot.lane.b32.xlu0 %v4950, 72
        %v6601 = vpop.permute.xlu0 %6600
        %6602 = vrot.lane.b32.xlu0 %v4951, 72
        %v6603 = vpop.permute.xlu0 %6602
        %6604 = vrot.lane.b32.xlu0 %v4952, 72
        %v6605 = vpop.permute.xlu0 %6604
        %6606 = vrot.lane.b32.xlu0 %v4953, 72
        %v6607 = vpop.permute.xlu0 %6606
        %6608 = vrot.lane.b32.xlu0 %v4954, 72
        %v6609 = vpop.permute.xlu0 %6608
        %v6611 = vsel %vm4979, %v6579, 0
        %v6614 = vsel %vm4979, %v6581, 0
        %v6617 = vsel %vm4979, %v6583, 0
        %v6620 = vsel %vm4979, %v6585, 0
        %v6623 = vsel %vm4979, %v6587, 0
        %v6626 = vsel %vm4979, %v6589, 0
        %v6629 = vsel %vm4979, %v6591, 0
        %v6632 = vsel %vm4979, %v6593, 0
        %v6635 = vsel %vm4979, %v6595, 0
        %v6638 = vsel %vm4979, %v6597, 0
        %v6641 = vsel %vm4979, %v6599, 0
        %v6644 = vsel %vm4979, %v6601, 0
        %v6647 = vsel %vm4979, %v6603, 0
        %v6650 = vsel %vm4979, %v6605, 0
        %v6653 = vsel %vm4979, %v6607, 0
        %v6656 = vsel %vm4979, %v6609, 0
        %6658 = vmatprep.subr.bf16.mxu0 0
        %6659 = vmatpush1.bf16.xpose.msra.mxu0 %v6635
        %6660 = vmatprep.subr.bf16.mxu0 0
        %6661 = vmatpush1.bf16.xpose.msra.mxu0 %v6638
        %6662 = vmatprep.subr.bf16.mxu0 0
        %6663 = vmatpush1.bf16.xpose.msra.mxu0 %v6641
        %6664 = vmatprep.subr.bf16.mxu0 0
        %6665 = vmatpush1.bf16.xpose.msra.mxu0 %v6644
        %6666 = vmatprep.subr.bf16.mxu0 0
        %6667 = vmatpush1.bf16.xpose.msra.mxu0 %v6647
        %6668 = vmatprep.subr.bf16.mxu0 0
        %6669 = vmatpush1.bf16.xpose.msra.mxu0 %v6650
        %6670 = vmatprep.subr.bf16.mxu0 0
        %6671 = vmatpush1.bf16.xpose.msra.mxu0 %v6653
        %6672 = vmatprep.subr.bf16.mxu0 0
        %6673 = vmatpush1.bf16.xpose.msra.mxu0 %v6656
        %6674 = vmatprep.subr.bf16.mxu0 0
        %6675 = vmatpush1.bf16.xpose.msra.mxu0 0
        %6676 = vmatprep.subr.bf16.mxu0 0
        %6677 = vmatpush1.bf16.xpose.msra.mxu0 0
        %6678 = vmatprep.subr.bf16.mxu0 0
        %6679 = vmatpush1.bf16.xpose.msra.mxu0 0
        %6680 = vmatprep.subr.bf16.mxu0 0
        %6681 = vmatpush1.bf16.xpose.msra.mxu0 0
        %6682 = vmatprep.subr.bf16.mxu0 0
        %6683 = vmatpush1.bf16.xpose.msra.mxu0 0
        %6684 = vmatprep.subr.bf16.mxu0 0
        %6685 = vmatpush1.bf16.xpose.msra.mxu0 0
        %6686 = vmatprep.subr.bf16.mxu0 0
        %6687 = vmatpush1.bf16.xpose.msra.mxu0 0
        %6688 = vmatprep.subr.bf16.mxu0 0
        %6689 = vmatpush1.bf16.xpose.msra.mxu0 0
        %6690 = vmatprep.mubr.bf16.mxu0 0
        %6691 = vmatmul.mubr.bf16.gmra.mrb[0].mxu0 %v6611
        %v6692 = vpop.f32.mrb[0].mxu0
        %v6693 = vadd.f32 0.0, %v6692
        %v6694 = vpop.f32.mrb[0].mxu0
        %v6695 = vpop.f32.mrb[0].mxu0
        %v6696 = vadd.f32 0.0, %v6695
        %v6697 = vpop.f32.mrb[0].mxu0
        %6698 = vmatprep.mubr.bf16.mxu0 0
        %6699 = vmatmul.mubr.bf16.gmra.mrb[0].mxu0 %v6614
        %v6700 = vpop.f32.mrb[0].mxu0
        %v6701 = vadd.f32 0.0, %v6700
        %v6702 = vpop.f32.mrb[0].mxu0
        %v6703 = vpop.f32.mrb[0].mxu0
        %v6704 = vadd.f32 0.0, %v6703
        %v6705 = vpop.f32.mrb[0].mxu0
        %6706 = vmatprep.mubr.bf16.mxu0 0
        %6707 = vmatmul.mubr.bf16.gmra.mrb[0].mxu0 %v6617
        %v6708 = vpop.f32.mrb[0].mxu0
        %v6709 = vadd.f32 0.0, %v6708
        %v6710 = vpop.f32.mrb[0].mxu0
        %v6711 = vpop.f32.mrb[0].mxu0
        %v6712 = vadd.f32 0.0, %v6711
        %v6713 = vpop.f32.mrb[0].mxu0
        %6714 = vmatprep.mubr.bf16.mxu0 0
        %6715 = vmatmul.mubr.bf16.gmra.mrb[0].mxu0 %v6620
        %v6716 = vpop.f32.mrb[0].mxu0
        %v6717 = vadd.f32 0.0, %v6716
        %v6718 = vpop.f32.mrb[0].mxu0
        %v6719 = vpop.f32.mrb[0].mxu0
        %v6720 = vadd.f32 0.0, %v6719
        %v6721 = vpop.f32.mrb[0].mxu0
        %6722 = vmatprep.mubr.bf16.mxu0 0
        %6723 = vmatmul.mubr.bf16.gmra.mrb[0].mxu0 %v6623
        %v6724 = vpop.f32.mrb[0].mxu0
        %v6725 = vadd.f32 0.0, %v6724
        %v6726 = vpop.f32.mrb[0].mxu0
        %v6727 = vpop.f32.mrb[0].mxu0
        %v6728 = vadd.f32 0.0, %v6727
        %v6729 = vpop.f32.mrb[0].mxu0
        %6730 = vmatprep.mubr.bf16.mxu0 0
        %6731 = vmatmul.mubr.bf16.gmra.mrb[0].mxu0 %v6626
        %v6732 = vpop.f32.mrb[0].mxu0
        %v6733 = vadd.f32 0.0, %v6732
        %v6734 = vpop.f32.mrb[0].mxu0
        %v6735 = vpop.f32.mrb[0].mxu0
        %v6736 = vadd.f32 0.0, %v6735
        %v6737 = vpop.f32.mrb[0].mxu0
        %6738 = vmatprep.mubr.bf16.mxu0 0
        %6739 = vmatmul.mubr.bf16.gmra.mrb[0].mxu0 %v6629
        %v6740 = vpop.f32.mrb[0].mxu0
        %v6741 = vadd.f32 0.0, %v6740
        %v6742 = vpop.f32.mrb[0].mxu0
        %v6743 = vpop.f32.mrb[0].mxu0
        %v6744 = vadd.f32 0.0, %v6743
        %v6745 = vpop.f32.mrb[0].mxu0
        %6746 = vmatprep.mubr.bf16.mxu0 0
        %6747 = vmatmul.mubr.bf16.gmra.mrb[0].mxu0 %v6632
        %v6748 = vpop.f32.mrb[0].mxu0
        %v6749 = vadd.f32 0.0, %v6748
        %v6750 = vpop.f32.mrb[0].mxu0
        %v6751 = vpop.f32.mrb[0].mxu0
        %v6752 = vadd.f32 0.0, %v6751
        %v6753 = vpop.f32.mrb[0].mxu0
        %6754 = vdwg.mxu0
        %v6755 = vmul.f32 %v6693, 0.35355338
        %v6756 = vmul.f32 %v6696, 0.35355338
        %v6757 = vmul.f32 %v6701, 0.35355338
        %v6758 = vmul.f32 %v6704, 0.35355338
        %v6759 = vmul.f32 %v6709, 0.35355338
        %v6760 = vmul.f32 %v6712, 0.35355338
        %v6761 = vmul.f32 %v6717, 0.35355338
        %v6762 = vmul.f32 %v6720, 0.35355338
        %v6763 = vmul.f32 %v6725, 0.35355338
        %v6764 = vmul.f32 %v6728, 0.35355338
        %v6765 = vmul.f32 %v6733, 0.35355338
        %v6766 = vmul.f32 %v6736, 0.35355338
        %v6767 = vmul.f32 %v6741, 0.35355338
        %v6768 = vmul.f32 %v6744, 0.35355338
        %v6769 = vmul.f32 %v6749, 0.35355338
        %v6770 = vmul.f32 %v6752, 0.35355338
        %v6771 = vadd.f32 %v6755, %v5145
        %v6772 = vadd.f32 %v6756, %v5145
        %v6773 = vadd.f32 %v6757, %v5145
        %v6774 = vadd.f32 %v6758, %v5145
        %v6775 = vadd.f32 %v6759, %v5145
        %v6776 = vadd.f32 %v6760, %v5145
        %v6777 = vadd.f32 %v6761, %v5145
        %v6778 = vadd.f32 %v6762, %v5145
        %v6779 = vadd.f32 %v6763, %v5145
        %v6780 = vadd.f32 %v6764, %v5145
        %v6781 = vadd.f32 %v6765, %v5145
        %v6782 = vadd.f32 %v6766, %v5145
        %v6783 = vadd.f32 %v6767, %v5145
        %v6784 = vadd.f32 %v6768, %v5145
        %v6785 = vadd.f32 %v6769, %v5145
        %v6786 = vadd.f32 %v6770, %v5145
        %6787 = vmax.xlane.f32.xlu0 %v6771
        %v6788 = vpop.xlane.xlu0 %6787
        %6789 = vmax.xlane.f32.xlu0 %v6772
        %v6790 = vpop.xlane.xlu0 %6789
        %6791 = vmax.xlane.f32.xlu0 %v6773
        %v6792 = vpop.xlane.xlu0 %6791
        %6793 = vmax.xlane.f32.xlu0 %v6774
        %v6794 = vpop.xlane.xlu0 %6793
        %6795 = vmax.xlane.f32.xlu0 %v6775
        %v6796 = vpop.xlane.xlu0 %6795
        %6797 = vmax.xlane.f32.xlu0 %v6776
        %v6798 = vpop.xlane.xlu0 %6797
        %6799 = vmax.xlane.f32.xlu0 %v6777
        %v6800 = vpop.xlane.xlu0 %6799
        %6801 = vmax.xlane.f32.xlu0 %v6778
        %v6802 = vpop.xlane.xlu0 %6801
        %6803 = vmax.xlane.f32.xlu0 %v6779
        %v6804 = vpop.xlane.xlu0 %6803
        %6805 = vmax.xlane.f32.xlu0 %v6780
        %v6806 = vpop.xlane.xlu0 %6805
        %6807 = vmax.xlane.f32.xlu0 %v6781
        %v6808 = vpop.xlane.xlu0 %6807
        %6809 = vmax.xlane.f32.xlu0 %v6782
        %v6810 = vpop.xlane.xlu0 %6809
        %6811 = vmax.xlane.f32.xlu0 %v6783
        %v6812 = vpop.xlane.xlu0 %6811
        %6813 = vmax.xlane.f32.xlu0 %v6784
        %v6814 = vpop.xlane.xlu0 %6813
        %6815 = vmax.xlane.f32.xlu0 %v6785
        %v6816 = vpop.xlane.xlu0 %6815
        %6817 = vmax.xlane.f32.xlu0 %v6786
        %v6818 = vpop.xlane.xlu0 %6817
        %v6819 = vsub.f32 %v6771, %v6788
        %v6820 = vsub.f32 %v6772, %v6790
        %v6821 = vsub.f32 %v6773, %v6792
        %v6822 = vsub.f32 %v6774, %v6794
        %v6823 = vsub.f32 %v6775, %v6796
        %v6824 = vsub.f32 %v6776, %v6798
        %v6825 = vsub.f32 %v6777, %v6800
        %v6826 = vsub.f32 %v6778, %v6802
        %v6827 = vsub.f32 %v6779, %v6804
        %v6828 = vsub.f32 %v6780, %v6806
        %v6829 = vsub.f32 %v6781, %v6808
        %v6830 = vsub.f32 %v6782, %v6810
        %v6831 = vsub.f32 %v6783, %v6812
        %v6832 = vsub.f32 %v6784, %v6814
        %v6833 = vsub.f32 %v6785, %v6816
        %v6834 = vsub.f32 %v6786, %v6818
        %v6835 = vmul.f32 %v6819, 1.442695
        %v6836 = vpow.pop %v6835
        %v6837 = vmul.f32 %v6820, 1.442695
        %v6838 = vpow.pop %v6837
        %v6839 = vmul.f32 %v6821, 1.442695
        %v6840 = vpow.pop %v6839
        %v6841 = vmul.f32 %v6822, 1.442695
        %v6842 = vpow.pop %v6841
        %v6843 = vmul.f32 %v6823, 1.442695
        %v6844 = vpow.pop %v6843
        %v6845 = vmul.f32 %v6824, 1.442695
        %v6846 = vpow.pop %v6845
        %v6847 = vmul.f32 %v6825, 1.442695
        %v6848 = vpow.pop %v6847
        %v6849 = vmul.f32 %v6826, 1.442695
        %v6850 = vpow.pop %v6849
        %v6851 = vmul.f32 %v6827, 1.442695
        %v6852 = vpow.pop %v6851
        %v6853 = vmul.f32 %v6828, 1.442695
        %v6854 = vpow.pop %v6853
        %v6855 = vmul.f32 %v6829, 1.442695
        %v6856 = vpow.pop %v6855
        %v6857 = vmul.f32 %v6830, 1.442695
        %v6858 = vpow.pop %v6857
        %v6859 = vmul.f32 %v6831, 1.442695
        %v6860 = vpow.pop %v6859
        %v6861 = vmul.f32 %v6832, 1.442695
        %v6862 = vpow.pop %v6861
        %v6863 = vmul.f32 %v6833, 1.442695
        %v6864 = vpow.pop %v6863
        %v6865 = vmul.f32 %v6834, 1.442695
        %v6866 = vpow.pop %v6865
        %6867 = vadd.xlane.f32.xlu0 %v6836
        %v6868 = vpop.xlane.xlu0 %6867
        %6869 = vadd.xlane.f32.xlu0 %v6838
        %v6870 = vpop.xlane.xlu0 %6869
        %6871 = vadd.xlane.f32.xlu0 %v6840
        %v6872 = vpop.xlane.xlu0 %6871
        %6873 = vadd.xlane.f32.xlu0 %v6842
        %v6874 = vpop.xlane.xlu0 %6873
        %6875 = vadd.xlane.f32.xlu0 %v6844
        %v6876 = vpop.xlane.xlu0 %6875
        %6877 = vadd.xlane.f32.xlu0 %v6846
        %v6878 = vpop.xlane.xlu0 %6877
        %6879 = vadd.xlane.f32.xlu0 %v6848
        %v6880 = vpop.xlane.xlu0 %6879
        %6881 = vadd.xlane.f32.xlu0 %v6850
        %v6882 = vpop.xlane.xlu0 %6881
        %6883 = vadd.xlane.f32.xlu0 %v6852
        %v6884 = vpop.xlane.xlu0 %6883
        %6885 = vadd.xlane.f32.xlu0 %v6854
        %v6886 = vpop.xlane.xlu0 %6885
        %6887 = vadd.xlane.f32.xlu0 %v6856
        %v6888 = vpop.xlane.xlu0 %6887
        %6889 = vadd.xlane.f32.xlu0 %v6858
        %v6890 = vpop.xlane.xlu0 %6889
        %6891 = vadd.xlane.f32.xlu0 %v6860
        %v6892 = vpop.xlane.xlu0 %6891
        %6893 = vadd.xlane.f32.xlu0 %v6862
        %v6894 = vpop.xlane.xlu0 %6893
        %6895 = vadd.xlane.f32.xlu0 %v6864
        %v6896 = vpop.xlane.xlu0 %6895
        %6897 = vadd.xlane.f32.xlu0 %v6866
        %v6898 = vpop.xlane.xlu0 %6897
        %v6899 = vrcp.pop %v6868
        %v6900 = vrcp.pop %v6870
        %v6901 = vrcp.pop %v6872
        %v6902 = vrcp.pop %v6874
        %v6903 = vrcp.pop %v6876
        %v6904 = vrcp.pop %v6878
        %v6905 = vrcp.pop %v6880
        %v6906 = vrcp.pop %v6882
        %v6907 = vrcp.pop %v6884
        %v6908 = vrcp.pop %v6886
        %v6909 = vrcp.pop %v6888
        %v6910 = vrcp.pop %v6890
        %v6911 = vrcp.pop %v6892
        %v6912 = vrcp.pop %v6894
        %v6913 = vrcp.pop %v6896
        %v6914 = vrcp.pop %v6898
        %v6915 = vmul.f32 %v6836, %v6899
        %v6916 = vmul.f32 %v6838, %v6900
        %v6917 = vmul.f32 %v6840, %v6901
        %v6918 = vmul.f32 %v6842, %v6902
        %v6919 = vmul.f32 %v6844, %v6903
        %v6920 = vmul.f32 %v6846, %v6904
        %v6921 = vmul.f32 %v6848, %v6905
        %v6922 = vmul.f32 %v6850, %v6906
        %v6923 = vmul.f32 %v6852, %v6907
        %v6924 = vmul.f32 %v6854, %v6908
        %v6925 = vmul.f32 %v6856, %v6909
        %v6926 = vmul.f32 %v6858, %v6910
        %v6927 = vmul.f32 %v6860, %v6911
        %v6928 = vmul.f32 %v6862, %v6912
        %v6929 = vmul.f32 %v6864, %v6913
        %v6930 = vmul.f32 %v6866, %v6914
        %v6931 = vpack.c.bf16 %v6916, %v6915
        %v6932 = vpack.c.bf16 %v6918, %v6917
        %v6933 = vpack.c.bf16 %v6920, %v6919
        %v6934 = vpack.c.bf16 %v6922, %v6921
        %v6935 = vpack.c.bf16 %v6924, %v6923
        %v6936 = vpack.c.bf16 %v6926, %v6925
        %v6937 = vpack.c.bf16 %v6928, %v6927
        %v6938 = vpack.c.bf16 %v6930, %v6929
        %6939 = vrot.lane.b32.xlu0 %v4947, 40
        %v6940 = vpop.permute.xlu0 %6939
        %6941 = vrot.lane.b32.xlu0 %v4948, 40
        %v6942 = vpop.permute.xlu0 %6941
        %6943 = vrot.lane.b32.xlu0 %v4949, 40
        %v6944 = vpop.permute.xlu0 %6943
        %6945 = vrot.lane.b32.xlu0 %v4950, 40
        %v6946 = vpop.permute.xlu0 %6945
        %6947 = vrot.lane.b32.xlu0 %v4951, 40
        %v6948 = vpop.permute.xlu0 %6947
        %6949 = vrot.lane.b32.xlu0 %v4952, 40
        %v6950 = vpop.permute.xlu0 %6949
        %6951 = vrot.lane.b32.xlu0 %v4953, 40
        %v6952 = vpop.permute.xlu0 %6951
        %6953 = vrot.lane.b32.xlu0 %v4954, 40
        %v6954 = vpop.permute.xlu0 %6953
        %6963 = vmatprep.subr.bf16.mxu0 0
        %6964 = vmatpush1.bf16.msra.mxu0 %v6940
        %6965 = vmatprep.subr.bf16.mxu0 0
        %6966 = vmatpush1.bf16.msra.mxu0 %v6942
        %6967 = vmatprep.subr.bf16.mxu0 0
        %6968 = vmatpush1.bf16.msra.mxu0 %v6944
        %6969 = vmatprep.subr.bf16.mxu0 0
        %6970 = vmatpush1.bf16.msra.mxu0 %v6946
        %6971 = vmatprep.subr.bf16.mxu0 0
        %6972 = vmatpush1.bf16.msra.mxu0 %v6948
        %6973 = vmatprep.subr.bf16.mxu0 0
        %6974 = vmatpush1.bf16.msra.mxu0 %v6950
        %6975 = vmatprep.subr.bf16.mxu0 0
        %6976 = vmatpush1.bf16.msra.mxu0 %v6952
        %6977 = vmatprep.subr.bf16.mxu0 0
        %6978 = vmatpush1.bf16.msra.mxu0 %v6954
        %6979 = vmatprep.subr.bf16.mxu0 0
        %6980 = vmatpush1.bf16.msra.mxu0 0
        %6981 = vmatprep.subr.bf16.mxu0 0
        %6982 = vmatpush1.bf16.msra.mxu0 0
        %6983 = vmatprep.subr.bf16.mxu0 0
        %6984 = vmatpush1.bf16.msra.mxu0 0
        %6985 = vmatprep.subr.bf16.mxu0 0
        %6986 = vmatpush1.bf16.msra.mxu0 0
        %6987 = vmatprep.subr.bf16.mxu0 0
        %6988 = vmatpush1.bf16.msra.mxu0 0
        %6989 = vmatprep.subr.bf16.mxu0 0
        %6990 = vmatpush1.bf16.msra.mxu0 0
        %6991 = vmatprep.subr.bf16.mxu0 0
        %6992 = vmatpush1.bf16.msra.mxu0 0
        %6993 = vmatprep.subr.bf16.mxu0 0
        %6994 = vmatpush1.bf16.msra.mxu0 0
        %6995 = vmatprep.mubr.bf16.mxu0 0
        %6996 = vmatmul.mubr.bf16.gmra.mrb[0].mxu0 %v6931
        %v6997 = vpop.f32.mrb[0].mxu0
        %v6998 = vadd.f32 0.0, %v6997
        %v6999 = vpop.f32.mrb[0].mxu0
        %v7000 = vpop.f32.mrb[0].mxu0
        %v7001 = vadd.f32 0.0, %v7000
        %v7002 = vpop.f32.mrb[0].mxu0
        %7003 = vmatprep.mubr.bf16.mxu0 0
        %7004 = vmatmul.mubr.bf16.gmra.mrb[0].mxu0 %v6932
        %v7005 = vpop.f32.mrb[0].mxu0
        %v7006 = vadd.f32 0.0, %v7005
        %v7007 = vpop.f32.mrb[0].mxu0
        %v7008 = vpop.f32.mrb[0].mxu0
        %v7009 = vadd.f32 0.0, %v7008
        %v7010 = vpop.f32.mrb[0].mxu0
        %7011 = vmatprep.mubr.bf16.mxu0 0
        %7012 = vmatmul.mubr.bf16.gmra.mrb[0].mxu0 %v6933
        %v7013 = vpop.f32.mrb[0].mxu0
        %v7014 = vadd.f32 0.0, %v7013
        %v7015 = vpop.f32.mrb[0].mxu0
        %v7016 = vpop.f32.mrb[0].mxu0
        %v7017 = vadd.f32 0.0, %v7016
        %v7018 = vpop.f32.mrb[0].mxu0
        %7019 = vmatprep.mubr.bf16.mxu0 0
        %7020 = vmatmul.mubr.bf16.gmra.mrb[0].mxu0 %v6934
        %v7021 = vpop.f32.mrb[0].mxu0
        %v7022 = vadd.f32 0.0, %v7021
        %v7023 = vpop.f32.mrb[0].mxu0
        %v7024 = vpop.f32.mrb[0].mxu0
        %v7025 = vadd.f32 0.0, %v7024
        %v7026 = vpop.f32.mrb[0].mxu0
        %7027 = vmatprep.mubr.bf16.mxu0 0
        %7028 = vmatmul.mubr.bf16.gmra.mrb[0].mxu0 %v6935
        %v7029 = vpop.f32.mrb[0].mxu0
        %v7030 = vadd.f32 0.0, %v7029
        %v7031 = vpop.f32.mrb[0].mxu0
        %v7032 = vpop.f32.mrb[0].mxu0
        %v7033 = vadd.f32 0.0, %v7032
        %v7034 = vpop.f32.mrb[0].mxu0
        %7035 = vmatprep.mubr.bf16.mxu0 0
        %7036 = vmatmul.mubr.bf16.gmra.mrb[0].mxu0 %v6936
        %v7037 = vpop.f32.mrb[0].mxu0
        %v7038 = vadd.f32 0.0, %v7037
        %v7039 = vpop.f32.mrb[0].mxu0
        %v7040 = vpop.f32.mrb[0].mxu0
        %v7041 = vadd.f32 0.0, %v7040
        %v7042 = vpop.f32.mrb[0].mxu0
        %7043 = vmatprep.mubr.bf16.mxu0 0
        %7044 = vmatmul.mubr.bf16.gmra.mrb[0].mxu0 %v6937
        %v7045 = vpop.f32.mrb[0].mxu0
        %v7046 = vadd.f32 0.0, %v7045
        %v7047 = vpop.f32.mrb[0].mxu0
        %v7048 = vpop.f32.mrb[0].mxu0
        %v7049 = vadd.f32 0.0, %v7048
        %v7050 = vpop.f32.mrb[0].mxu0
        %7051 = vmatprep.mubr.bf16.mxu0 0
        %7052 = vmatmul.mubr.bf16.gmra.mrb[0].mxu0 %v6938
        %v7053 = vpop.f32.mrb[0].mxu0
        %v7054 = vadd.f32 0.0, %v7053
        %v7055 = vpop.f32.mrb[0].mxu0
        %v7056 = vpop.f32.mrb[0].mxu0
        %v7057 = vadd.f32 0.0, %v7056
        %v7058 = vpop.f32.mrb[0].mxu0
        %7059 = vdwg.mxu0
        %7076 = vrot.lane.b32.xlu0 %v6998, 24
        %v7077 = vpop.permute.xlu0 %7076
        %7078 = vrot.lane.b32.xlu0 %v7001, 24
        %v7079 = vpop.permute.xlu0 %7078
        %7080 = vrot.lane.b32.xlu0 %v7006, 24
        %v7081 = vpop.permute.xlu0 %7080
        %7082 = vrot.lane.b32.xlu0 %v7009, 24
        %v7083 = vpop.permute.xlu0 %7082
        %7084 = vrot.lane.b32.xlu0 %v7014, 24
        %v7085 = vpop.permute.xlu0 %7084
        %7086 = vrot.lane.b32.xlu0 %v7017, 24
        %v7087 = vpop.permute.xlu0 %7086
        %7088 = vrot.lane.b32.xlu0 %v7022, 24
        %v7089 = vpop.permute.xlu0 %7088
        %7090 = vrot.lane.b32.xlu0 %v7025, 24
        %v7091 = vpop.permute.xlu0 %7090
        %7092 = vrot.lane.b32.xlu0 %v7030, 24
        %v7093 = vpop.permute.xlu0 %7092
        %7094 = vrot.lane.b32.xlu0 %v7033, 24
        %v7095 = vpop.permute.xlu0 %7094
        %7096 = vrot.lane.b32.xlu0 %v7038, 24
        %v7097 = vpop.permute.xlu0 %7096
        %7098 = vrot.lane.b32.xlu0 %v7041, 24
        %v7099 = vpop.permute.xlu0 %7098
        %7100 = vrot.lane.b32.xlu0 %v7046, 24
        %v7101 = vpop.permute.xlu0 %7100
        %7102 = vrot.lane.b32.xlu0 %v7049, 24
        %v7103 = vpop.permute.xlu0 %7102
        %7104 = vrot.lane.b32.xlu0 %v7054, 24
        %v7105 = vpop.permute.xlu0 %7104
        %7106 = vrot.lane.b32.xlu0 %v7057, 24
        %v7107 = vpop.permute.xlu0 %7106
        %vm7124 = vcmask 261312
        %7125 = vst.msk [vmem:[#allocation2] sm:$0xff] %vm7124, %v7077
        %7126 = vst.msk [vmem:[#allocation2 + $0x8] sm:$0xff] %vm7124, %v7079
        %7127 = vst.msk [vmem:[#allocation2 + $0x10] sm:$0xff] %vm7124, %v7081
        %7128 = vst.msk [vmem:[#allocation2 + $0x18] sm:$0xff] %vm7124, %v7083
        %7129 = vst.msk [vmem:[#allocation2 + $0x20] sm:$0xff] %vm7124, %v7085
        %7130 = vst.msk [vmem:[#allocation2 + $0x28] sm:$0xff] %vm7124, %v7087
        %7131 = vst.msk [vmem:[#allocation2 + $0x30] sm:$0xff] %vm7124, %v7089
        %7132 = vst.msk [vmem:[#allocation2 + $0x38] sm:$0xff] %vm7124, %v7091
        %7133 = vst.msk [vmem:[#allocation2 + $0x40] sm:$0xff] %vm7124, %v7093
        %7134 = vst.msk [vmem:[#allocation2 + $0x48] sm:$0xff] %vm7124, %v7095
        %7135 = vst.msk [vmem:[#allocation2 + $0x50] sm:$0xff] %vm7124, %v7097
        %7136 = vst.msk [vmem:[#allocation2 + $0x58] sm:$0xff] %vm7124, %v7099
        %7137 = vst.msk [vmem:[#allocation2 + $0x60] sm:$0xff] %vm7124, %v7101
        %7138 = vst.msk [vmem:[#allocation2 + $0x68] sm:$0xff] %vm7124, %v7103
        %7139 = vst.msk [vmem:[#allocation2 + $0x70] sm:$0xff] %vm7124, %v7105
        %7140 = vst.msk [vmem:[#allocation2 + $0x78] sm:$0xff] %vm7124, %v7107
        %v7141 = vld [vmem:[#allocation2] sm:$0xff]
        %v7142 = vld [vmem:[#allocation2 + $0x8] sm:$0xff]
        %v7143 = vld [vmem:[#allocation2 + $0x10] sm:$0xff]
        %v7144 = vld [vmem:[#allocation2 + $0x18] sm:$0xff]
        %v7145 = vld [vmem:[#allocation2 + $0x20] sm:$0xff]
        %v7146 = vld [vmem:[#allocation2 + $0x28] sm:$0xff]
        %v7147 = vld [vmem:[#allocation2 + $0x30] sm:$0xff]
        %v7148 = vld [vmem:[#allocation2 + $0x38] sm:$0xff]
        %v7149 = vld [vmem:[#allocation2 + $0x40] sm:$0xff]
        %v7150 = vld [vmem:[#allocation2 + $0x48] sm:$0xff]
        %v7151 = vld [vmem:[#allocation2 + $0x50] sm:$0xff]
        %v7152 = vld [vmem:[#allocation2 + $0x58] sm:$0xff]
        %v7153 = vld [vmem:[#allocation2 + $0x60] sm:$0xff]
        %v7154 = vld [vmem:[#allocation2 + $0x68] sm:$0xff]
        %v7155 = vld [vmem:[#allocation2 + $0x70] sm:$0xff]
        %v7156 = vld [vmem:[#allocation2 + $0x78] sm:$0xff]
        %v7157 = vld [vmem:[%s10] sm:$0xf]
        %v7158 = vld [vmem:[%s10 + $0x4] sm:$0xf]
        %v7159 = vld [vmem:[%s10 + $0x8] sm:$0xf]
        %v7160 = vld [vmem:[%s10 + $0xc] sm:$0xf]
        %v7161 = vpack.c.bf16 %v7142, %v7141
        %v7162 = vpack.c.bf16 %v7144, %v7143
        %v7163 = vpack.c.bf16 %v7146, %v7145
        %v7164 = vpack.c.bf16 %v7148, %v7147
        %v7165 = vpack.c.bf16 %v7150, %v7149
        %v7166 = vpack.c.bf16 %v7152, %v7151
        %v7167 = vpack.c.bf16 %v7154, %v7153
        %v7168 = vpack.c.bf16 %v7156, %v7155
        %v7169 = vld [vmem:[%s11] sm:$0x1]
        %v7171 = vlaneseq
        %v7172 = vshrl.u32 %v7171, 7
        %v7173 = vsub.s32 0, %v7172
        %v7174 = vrot.slane %v7169, %v7173
        %v7180 = vunpack.c.l.b16 %v7157
        %v7181 = vunpack.c.l.b16 %v7158
        %v7182 = vunpack.c.l.b16 %v7159
        %v7183 = vunpack.c.l.b16 %v7160
        %v7184 = vpack.c.b16 %v7181, %v7180
        %v7185 = vpack.c.b16 %v7183, %v7182
        %v7189 = vsel %vm4495, %v7161, 0
        %v7192 = vsel %vm4495, %v7162, 0
        %v7195 = vsel %vm4495, %v7163, 0
        %v7198 = vsel %vm4495, %v7164, 0
        %v7201 = vsel %vm4495, %v7165, 0
        %v7204 = vsel %vm4495, %v7166, 0
        %v7207 = vsel %vm4495, %v7167, 0
        %v7210 = vsel %vm4495, %v7168, 0
        %7212 = vmatprep.subr.bf16.mxu0 0
        %7213 = vmatpush1.bf16.msra.mxu0 %v7184
        %7214 = vmatprep.subr.bf16.mxu0 0
        %7215 = vmatpush1.bf16.msra.mxu0 %v7185
        %7216 = vmatprep.subr.bf16.mxu0 0
        %7217 = vmatpush1.bf16.msra.mxu0 0
        %7218 = vmatprep.subr.bf16.mxu0 0
        %7219 = vmatpush1.bf16.msra.mxu0 0
        %7220 = vmatprep.subr.bf16.mxu0 0
        %7221 = vmatpush1.bf16.msra.mxu0 0
        %7222 = vmatprep.subr.bf16.mxu0 0
        %7223 = vmatpush1.bf16.msra.mxu0 0
        %7224 = vmatprep.subr.bf16.mxu0 0
        %7225 = vmatpush1.bf16.msra.mxu0 0
        %7226 = vmatprep.subr.bf16.mxu0 0
        %7227 = vmatpush1.bf16.msra.mxu0 0
        %7228 = vmatprep.subr.bf16.mxu0 0
        %7229 = vmatpush1.bf16.msra.mxu0 0
        %7230 = vmatprep.subr.bf16.mxu0 0
        %7231 = vmatpush1.bf16.msra.mxu0 0
        %7232 = vmatprep.subr.bf16.mxu0 0
        %7233 = vmatpush1.bf16.msra.mxu0 0
        %7234 = vmatprep.subr.bf16.mxu0 0
        %7235 = vmatpush1.bf16.msra.mxu0 0
        %7236 = vmatprep.subr.bf16.mxu0 0
        %7237 = vmatpush1.bf16.msra.mxu0 0
        %7238 = vmatprep.subr.bf16.mxu0 0
        %7239 = vmatpush1.bf16.msra.mxu0 0
        %7240 = vmatprep.subr.bf16.mxu0 0
        %7241 = vmatpush1.bf16.msra.mxu0 0
        %7242 = vmatprep.subr.bf16.mxu0 0
        %7243 = vmatpush1.bf16.msra.mxu0 0
        %7244 = vmatprep.mubr.bf16.mxu0 0
        %7245 = vmatmul.mubr.bf16.gmra.mrb[0].mxu0 %v7189
        %v7246 = vpop.f32.mrb[0].mxu0
        %v7247 = vadd.f32 %v7174, %v7246
        %v7248 = vpop.f32.mrb[0].mxu0
        %v7249 = vpop.f32.mrb[0].mxu0
        %v7250 = vadd.f32 %v7174, %v7249
        %v7251 = vpop.f32.mrb[0].mxu0
        %7252 = vmatprep.mubr.bf16.mxu0 0
        %7253 = vmatmul.mubr.bf16.gmra.mrb[0].mxu0 %v7192
        %v7254 = vpop.f32.mrb[0].mxu0
        %v7255 = vadd.f32 %v7174, %v7254
        %v7256 = vpop.f32.mrb[0].mxu0
        %v7257 = vpop.f32.mrb[0].mxu0
        %v7258 = vadd.f32 %v7174, %v7257
        %v7259 = vpop.f32.mrb[0].mxu0
        %7260 = vmatprep.mubr.bf16.mxu0 0
        %7261 = vmatmul.mubr.bf16.gmra.mrb[0].mxu0 %v7195
        %v7262 = vpop.f32.mrb[0].mxu0
        %v7263 = vadd.f32 %v7174, %v7262
        %v7264 = vpop.f32.mrb[0].mxu0
        %v7265 = vpop.f32.mrb[0].mxu0
        %v7266 = vadd.f32 %v7174, %v7265
        %v7267 = vpop.f32.mrb[0].mxu0
        %7268 = vmatprep.mubr.bf16.mxu0 0
        %7269 = vmatmul.mubr.bf16.gmra.mrb[0].mxu0 %v7198
        %v7270 = vpop.f32.mrb[0].mxu0
        %v7271 = vadd.f32 %v7174, %v7270
        %v7272 = vpop.f32.mrb[0].mxu0
        %v7273 = vpop.f32.mrb[0].mxu0
        %v7274 = vadd.f32 %v7174, %v7273
        %v7275 = vpop.f32.mrb[0].mxu0
        %7276 = vmatprep.mubr.bf16.mxu0 0
        %7277 = vmatmul.mubr.bf16.gmra.mrb[0].mxu0 %v7201
        %v7278 = vpop.f32.mrb[0].mxu0
        %v7279 = vadd.f32 %v7174, %v7278
        %v7280 = vpop.f32.mrb[0].mxu0
        %v7281 = vpop.f32.mrb[0].mxu0
        %v7282 = vadd.f32 %v7174, %v7281
        %v7283 = vpop.f32.mrb[0].mxu0
        %7284 = vmatprep.mubr.bf16.mxu0 0
        %7285 = vmatmul.mubr.bf16.gmra.mrb[0].mxu0 %v7204
        %v7286 = vpop.f32.mrb[0].mxu0
        %v7287 = vadd.f32 %v7174, %v7286
        %v7288 = vpop.f32.mrb[0].mxu0
        %v7289 = vpop.f32.mrb[0].mxu0
        %v7290 = vadd.f32 %v7174, %v7289
        %v7291 = vpop.f32.mrb[0].mxu0
        %7292 = vmatprep.mubr.bf16.mxu0 0
        %7293 = vmatmul.mubr.bf16.gmra.mrb[0].mxu0 %v7207
        %v7294 = vpop.f32.mrb[0].mxu0
        %v7295 = vadd.f32 %v7174, %v7294
        %v7296 = vpop.f32.mrb[0].mxu0
        %v7297 = vpop.f32.mrb[0].mxu0
        %v7298 = vadd.f32 %v7174, %v7297
        %v7299 = vpop.f32.mrb[0].mxu0
        %7300 = vmatprep.mubr.bf16.mxu0 0
        %7301 = vmatmul.mubr.bf16.gmra.mrb[0].mxu0 %v7210
        %v7302 = vpop.f32.mrb[0].mxu0
        %v7303 = vadd.f32 %v7174, %v7302
        %v7304 = vpop.f32.mrb[0].mxu0
        %v7305 = vpop.f32.mrb[0].mxu0
        %v7306 = vadd.f32 %v7174, %v7305
        %v7307 = vpop.f32.mrb[0].mxu0
        %7308 = vdwg.mxu0
        %v7309 = vadd.f32 %v4477, %v7247
        %v7310 = vadd.f32 %v4478, %v7250
        %v7311 = vadd.f32 %v4479, %v7255
        %v7312 = vadd.f32 %v4480, %v7258
        %v7313 = vadd.f32 %v4481, %v7263
        %v7314 = vadd.f32 %v4482, %v7266
        %v7315 = vadd.f32 %v4483, %v7271
        %v7316 = vadd.f32 %v4484, %v7274
        %v7317 = vadd.f32 %v4485, %v7279
        %v7318 = vadd.f32 %v4486, %v7282
        %v7319 = vadd.f32 %v4487, %v7287
        %v7320 = vadd.f32 %v4488, %v7290
        %v7321 = vadd.f32 %v4489, %v7295
        %v7322 = vadd.f32 %v4490, %v7298
        %v7323 = vadd.f32 %v4491, %v7303
        %v7324 = vadd.f32 %v4492, %v7306
        %v7325 = vld [vmem:[%s12] sm:$0x1]
        %v7326 = vld [vmem:[%s13] sm:$0x1]
        %v7327 = vsel %vm4495, %v7309, 0.0
        %7328 = vadd.xlane.f32.xlu0 %v7327
        %v7329 = vpop.xlane.xlu0 %7328
        %v7330 = vsel %vm4495, %v7310, 0.0
        %7331 = vadd.xlane.f32.xlu0 %v7330
        %v7332 = vpop.xlane.xlu0 %7331
        %v7333 = vsel %vm4495, %v7311, 0.0
        %7334 = vadd.xlane.f32.xlu0 %v7333
        %v7335 = vpop.xlane.xlu0 %7334
        %v7336 = vsel %vm4495, %v7312, 0.0
        %7337 = vadd.xlane.f32.xlu0 %v7336
        %v7338 = vpop.xlane.xlu0 %7337
        %v7339 = vsel %vm4495, %v7313, 0.0
        %7340 = vadd.xlane.f32.xlu0 %v7339
        %v7341 = vpop.xlane.xlu0 %7340
        %v7342 = vsel %vm4495, %v7314, 0.0
        %7343 = vadd.xlane.f32.xlu0 %v7342
        %v7344 = vpop.xlane.xlu0 %7343
        %v7345 = vsel %vm4495, %v7315, 0.0
        %7346 = vadd.xlane.f32.xlu0 %v7345
        %v7347 = vpop.xlane.xlu0 %7346
        %v7348 = vsel %vm4495, %v7316, 0.0
        %7349 = vadd.xlane.f32.xlu0 %v7348
        %v7350 = vpop.xlane.xlu0 %7349
        %v7351 = vsel %vm4495, %v7317, 0.0
        %7352 = vadd.xlane.f32.xlu0 %v7351
        %v7353 = vpop.xlane.xlu0 %7352
        %v7354 = vsel %vm4495, %v7318, 0.0
        %7355 = vadd.xlane.f32.xlu0 %v7354
        %v7356 = vpop.xlane.xlu0 %7355
        %v7357 = vsel %vm4495, %v7319, 0.0
        %7358 = vadd.xlane.f32.xlu0 %v7357
        %v7359 = vpop.xlane.xlu0 %7358
        %v7360 = vsel %vm4495, %v7320, 0.0
        %7361 = vadd.xlane.f32.xlu0 %v7360
        %v7362 = vpop.xlane.xlu0 %7361
        %v7363 = vsel %vm4495, %v7321, 0.0
        %7364 = vadd.xlane.f32.xlu0 %v7363
        %v7365 = vpop.xlane.xlu0 %7364
        %v7366 = vsel %vm4495, %v7322, 0.0
        %7367 = vadd.xlane.f32.xlu0 %v7366
        %v7368 = vpop.xlane.xlu0 %7367
        %v7369 = vsel %vm4495, %v7323, 0.0
        %7370 = vadd.xlane.f32.xlu0 %v7369
        %v7371 = vpop.xlane.xlu0 %7370
        %v7372 = vsel %vm4495, %v7324, 0.0
        %7373 = vadd.xlane.f32.xlu0 %v7372
        %v7374 = vpop.xlane.xlu0 %7373
        %v7375 = vmul.f32 %v7329, %v4544
        %v7376 = vmul.f32 %v7332, %v4544
        %v7377 = vmul.f32 %v7335, %v4544
        %v7378 = vmul.f32 %v7338, %v4544
        %v7379 = vmul.f32 %v7341, %v4544
        %v7380 = vmul.f32 %v7344, %v4544
        %v7381 = vmul.f32 %v7347, %v4544
        %v7382 = vmul.f32 %v7350, %v4544
        %v7383 = vmul.f32 %v7353, %v4544
        %v7384 = vmul.f32 %v7356, %v4544
        %v7385 = vmul.f32 %v7359, %v4544
        %v7386 = vmul.f32 %v7362, %v4544
        %v7387 = vmul.f32 %v7365, %v4544
        %v7388 = vmul.f32 %v7368, %v4544
        %v7389 = vmul.f32 %v7371, %v4544
        %v7390 = vmul.f32 %v7374, %v4544
        %v7391 = vsub.f32 %v7309, %v7375
        %v7392 = vsub.f32 %v7310, %v7376
        %v7393 = vsub.f32 %v7311, %v7377
        %v7394 = vsub.f32 %v7312, %v7378
        %v7395 = vsub.f32 %v7313, %v7379
        %v7396 = vsub.f32 %v7314, %v7380
        %v7397 = vsub.f32 %v7315, %v7381
        %v7398 = vsub.f32 %v7316, %v7382
        %v7399 = vsub.f32 %v7317, %v7383
        %v7400 = vsub.f32 %v7318, %v7384
        %v7401 = vsub.f32 %v7319, %v7385
        %v7402 = vsub.f32 %v7320, %v7386
        %v7403 = vsub.f32 %v7321, %v7387
        %v7404 = vsub.f32 %v7322, %v7388
        %v7405 = vsub.f32 %v7323, %v7389
        %v7406 = vsub.f32 %v7324, %v7390
        %v7407 = vmul.f32 %v7391, %v7391
        %v7408 = vmul.f32 %v7392, %v7392
        %v7409 = vmul.f32 %v7393, %v7393
        %v7410 = vmul.f32 %v7394, %v7394
        %v7411 = vmul.f32 %v7395, %v7395
        %v7412 = vmul.f32 %v7396, %v7396
        %v7413 = vmul.f32 %v7397, %v7397
        %v7414 = vmul.f32 %v7398, %v7398
        %v7415 = vmul.f32 %v7399, %v7399
        %v7416 = vmul.f32 %v7400, %v7400
        %v7417 = vmul.f32 %v7401, %v7401
        %v7418 = vmul.f32 %v7402, %v7402
        %v7419 = vmul.f32 %v7403, %v7403
        %v7420 = vmul.f32 %v7404, %v7404
        %v7421 = vmul.f32 %v7405, %v7405
        %v7422 = vmul.f32 %v7406, %v7406
        %v7423 = vsel %vm4495, %v7407, 0.0
        %7424 = vadd.xlane.f32.xlu0 %v7423
        %v7425 = vpop.xlane.xlu0 %7424
        %v7426 = vsel %vm4495, %v7408, 0.0
        %7427 = vadd.xlane.f32.xlu0 %v7426
        %v7428 = vpop.xlane.xlu0 %7427
        %v7429 = vsel %vm4495, %v7409, 0.0
        %7430 = vadd.xlane.f32.xlu0 %v7429
        %v7431 = vpop.xlane.xlu0 %7430
        %v7432 = vsel %vm4495, %v7410, 0.0
        %7433 = vadd.xlane.f32.xlu0 %v7432
        %v7434 = vpop.xlane.xlu0 %7433
        %v7435 = vsel %vm4495, %v7411, 0.0
        %7436 = vadd.xlane.f32.xlu0 %v7435
        %v7437 = vpop.xlane.xlu0 %7436
        %v7438 = vsel %vm4495, %v7412, 0.0
        %7439 = vadd.xlane.f32.xlu0 %v7438
        %v7440 = vpop.xlane.xlu0 %7439
        %v7441 = vsel %vm4495, %v7413, 0.0
        %7442 = vadd.xlane.f32.xlu0 %v7441
        %v7443 = vpop.xlane.xlu0 %7442
        %v7444 = vsel %vm4495, %v7414, 0.0
        %7445 = vadd.xlane.f32.xlu0 %v7444
        %v7446 = vpop.xlane.xlu0 %7445
        %v7447 = vsel %vm4495, %v7415, 0.0
        %7448 = vadd.xlane.f32.xlu0 %v7447
        %v7449 = vpop.xlane.xlu0 %7448
        %v7450 = vsel %vm4495, %v7416, 0.0
        %7451 = vadd.xlane.f32.xlu0 %v7450
        %v7452 = vpop.xlane.xlu0 %7451
        %v7453 = vsel %vm4495, %v7417, 0.0
        %7454 = vadd.xlane.f32.xlu0 %v7453
        %v7455 = vpop.xlane.xlu0 %7454
        %v7456 = vsel %vm4495, %v7418, 0.0
        %7457 = vadd.xlane.f32.xlu0 %v7456
        %v7458 = vpop.xlane.xlu0 %7457
        %v7459 = vsel %vm4495, %v7419, 0.0
        %7460 = vadd.xlane.f32.xlu0 %v7459
        %v7461 = vpop.xlane.xlu0 %7460
        %v7462 = vsel %vm4495, %v7420, 0.0
        %7463 = vadd.xlane.f32.xlu0 %v7462
        %v7464 = vpop.xlane.xlu0 %7463
        %v7465 = vsel %vm4495, %v7421, 0.0
        %7466 = vadd.xlane.f32.xlu0 %v7465
        %v7467 = vpop.xlane.xlu0 %7466
        %v7468 = vsel %vm4495, %v7422, 0.0
        %7469 = vadd.xlane.f32.xlu0 %v7468
        %v7470 = vpop.xlane.xlu0 %7469
        %v7471 = vmul.f32 %v7425, %v4544
        %v7472 = vmul.f32 %v7428, %v4544
        %v7473 = vmul.f32 %v7431, %v4544
        %v7474 = vmul.f32 %v7434, %v4544
        %v7475 = vmul.f32 %v7437, %v4544
        %v7476 = vmul.f32 %v7440, %v4544
        %v7477 = vmul.f32 %v7443, %v4544
        %v7478 = vmul.f32 %v7446, %v4544
        %v7479 = vmul.f32 %v7449, %v4544
        %v7480 = vmul.f32 %v7452, %v4544
        %v7481 = vmul.f32 %v7455, %v4544
        %v7482 = vmul.f32 %v7458, %v4544
        %v7483 = vmul.f32 %v7461, %v4544
        %v7484 = vmul.f32 %v7464, %v4544
        %v7485 = vmul.f32 %v7467, %v4544
        %v7486 = vmul.f32 %v7470, %v4544
        %v7487 = vadd.f32 %v7471, 1e-05
        %v7488 = vadd.f32 %v7472, 1e-05
        %v7489 = vadd.f32 %v7473, 1e-05
        %v7490 = vadd.f32 %v7474, 1e-05
        %v7491 = vadd.f32 %v7475, 1e-05
        %v7492 = vadd.f32 %v7476, 1e-05
        %v7493 = vadd.f32 %v7477, 1e-05
        %v7494 = vadd.f32 %v7478, 1e-05
        %v7495 = vadd.f32 %v7479, 1e-05
        %v7496 = vadd.f32 %v7480, 1e-05
        %v7497 = vadd.f32 %v7481, 1e-05
        %v7498 = vadd.f32 %v7482, 1e-05
        %v7499 = vadd.f32 %v7483, 1e-05
        %v7500 = vadd.f32 %v7484, 1e-05
        %v7501 = vadd.f32 %v7485, 1e-05
        %v7502 = vadd.f32 %v7486, 1e-05
        %v7503 = vrsqrt.pop %v7487
        %v7504 = vrsqrt.pop %v7488
        %v7505 = vrsqrt.pop %v7489
        %v7506 = vrsqrt.pop %v7490
        %v7507 = vrsqrt.pop %v7491
        %v7508 = vrsqrt.pop %v7492
        %v7509 = vrsqrt.pop %v7493
        %v7510 = vrsqrt.pop %v7494
        %v7511 = vrsqrt.pop %v7495
        %v7512 = vrsqrt.pop %v7496
        %v7513 = vrsqrt.pop %v7497
        %v7514 = vrsqrt.pop %v7498
        %v7515 = vrsqrt.pop %v7499
        %v7516 = vrsqrt.pop %v7500
        %v7517 = vrsqrt.pop %v7501
        %v7518 = vrsqrt.pop %v7502
        %v7519 = vmul.f32 %v7391, %v7503
        %v7520 = vmul.f32 %v7392, %v7504
        %v7521 = vmul.f32 %v7393, %v7505
        %v7522 = vmul.f32 %v7394, %v7506
        %v7523 = vmul.f32 %v7395, %v7507
        %v7524 = vmul.f32 %v7396, %v7508
        %v7525 = vmul.f32 %v7397, %v7509
        %v7526 = vmul.f32 %v7398, %v7510
        %v7527 = vmul.f32 %v7399, %v7511
        %v7528 = vmul.f32 %v7400, %v7512
        %v7529 = vmul.f32 %v7401, %v7513
        %v7530 = vmul.f32 %v7402, %v7514
        %v7531 = vmul.f32 %v7403, %v7515
        %v7532 = vmul.f32 %v7404, %v7516
        %v7533 = vmul.f32 %v7405, %v7517
        %v7534 = vmul.f32 %v7406, %v7518
        %v7536 = vlaneseq
        %v7537 = vshrl.u32 %v7536, 7
        %v7538 = vsub.s32 0, %v7537
        %v7539 = vrot.slane %v7325, %v7538
        %v7541 = vmul.f32 %v7519, %v7539
        %v7542 = vmul.f32 %v7520, %v7539
        %v7543 = vmul.f32 %v7521, %v7539
        %v7544 = vmul.f32 %v7522, %v7539
        %v7545 = vmul.f32 %v7523, %v7539
        %v7546 = vmul.f32 %v7524, %v7539
        %v7547 = vmul.f32 %v7525, %v7539
        %v7548 = vmul.f32 %v7526, %v7539
        %v7549 = vmul.f32 %v7527, %v7539
        %v7550 = vmul.f32 %v7528, %v7539
        %v7551 = vmul.f32 %v7529, %v7539
        %v7552 = vmul.f32 %v7530, %v7539
        %v7553 = vmul.f32 %v7531, %v7539
        %v7554 = vmul.f32 %v7532, %v7539
        %v7555 = vmul.f32 %v7533, %v7539
        %v7556 = vmul.f32 %v7534, %v7539
        %v7558 = vlaneseq
        %v7559 = vshrl.u32 %v7558, 7
        %v7560 = vsub.s32 0, %v7559
        %v7561 = vrot.slane %v7326, %v7560
        %v7563 = vadd.f32 %v7541, %v7561
        %v7564 = vadd.f32 %v7542, %v7561
        %v7565 = vadd.f32 %v7543, %v7561
        %v7566 = vadd.f32 %v7544, %v7561
        %v7567 = vadd.f32 %v7545, %v7561
        %v7568 = vadd.f32 %v7546, %v7561
        %v7569 = vadd.f32 %v7547, %v7561
        %v7570 = vadd.f32 %v7548, %v7561
        %v7571 = vadd.f32 %v7549, %v7561
        %v7572 = vadd.f32 %v7550, %v7561
        %v7573 = vadd.f32 %v7551, %v7561
        %v7574 = vadd.f32 %v7552, %v7561
        %v7575 = vadd.f32 %v7553, %v7561
        %v7576 = vadd.f32 %v7554, %v7561
        %v7577 = vadd.f32 %v7555, %v7561
        %v7578 = vadd.f32 %v7556, %v7561
        %v7579 = vld [vmem:[%s14] sm:$0xf]
        %v7580 = vld [vmem:[%s14 + $0x4] sm:$0xf]
        %v7581 = vld [vmem:[%s14 + $0x8] sm:$0xf]
        %v7582 = vld [vmem:[%s14 + $0xc] sm:$0xf]
        %v7583 = vpack.c.bf16 %v7564, %v7563
        %v7584 = vpack.c.bf16 %v7566, %v7565
        %v7585 = vpack.c.bf16 %v7568, %v7567
        %v7586 = vpack.c.bf16 %v7570, %v7569
        %v7587 = vpack.c.bf16 %v7572, %v7571
        %v7588 = vpack.c.bf16 %v7574, %v7573
        %v7589 = vpack.c.bf16 %v7576, %v7575
        %v7590 = vpack.c.bf16 %v7578, %v7577
        %v7591 = vld [vmem:[%s15] sm:$0x1]
        %v7593 = vlaneseq
        %v7594 = vshrl.u32 %v7593, 7
        %v7595 = vsub.s32 0, %v7594
        %v7596 = vrot.slane %v7591, %v7595
        %v7602 = vunpack.c.l.b16 %v7579
        %v7603 = vunpack.c.l.b16 %v7580
        %v7604 = vunpack.c.l.b16 %v7581
        %v7605 = vunpack.c.l.b16 %v7582
        %v7606 = vpack.c.b16 %v7603, %v7602
        %v7607 = vpack.c.b16 %v7605, %v7604
        %v7609 = vsel %vm4495, %v7583, 0
        %v7612 = vsel %vm4495, %v7584, 0
        %v7615 = vsel %vm4495, %v7585, 0
        %v7618 = vsel %vm4495, %v7586, 0
        %v7621 = vsel %vm4495, %v7587, 0
        %v7624 = vsel %vm4495, %v7588, 0
        %v7627 = vsel %vm4495, %v7589, 0
        %v7630 = vsel %vm4495, %v7590, 0
        %v7633 = vsel %vm4495, %v7606, 0
        %v7636 = vsel %vm4495, %v7607, 0
        %7638 = vmatprep.subr.bf16.mxu0 0
        %7639 = vmatpush1.bf16.xpose.msra.mxu0 %v7633
        %7640 = vmatprep.subr.bf16.mxu0 0
        %7641 = vmatpush1.bf16.xpose.msra.mxu0 %v7636
        %7642 = vmatprep.subr.bf16.mxu0 0
        %7643 = vmatpush1.bf16.xpose.msra.mxu0 0
        %7644 = vmatprep.subr.bf16.mxu0 0
        %7645 = vmatpush1.bf16.xpose.msra.mxu0 0
        %7646 = vmatprep.subr.bf16.mxu0 0
        %7647 = vmatpush1.bf16.xpose.msra.mxu0 0
        %7648 = vmatprep.subr.bf16.mxu0 0
        %7649 = vmatpush1.bf16.xpose.msra.mxu0 0
        %7650 = vmatprep.subr.bf16.mxu0 0
        %7651 = vmatpush1.bf16.xpose.msra.mxu0 0
        %7652 = vmatprep.subr.bf16.mxu0 0
        %7653 = vmatpush1.bf16.xpose.msra.mxu0 0
        %7654 = vmatprep.subr.bf16.mxu0 0
        %7655 = vmatpush1.bf16.xpose.msra.mxu0 0
        %7656 = vmatprep.subr.bf16.mxu0 0
        %7657 = vmatpush1.bf16.xpose.msra.mxu0 0
        %7658 = vmatprep.subr.bf16.mxu0 0
        %7659 = vmatpush1.bf16.xpose.msra.mxu0 0
        %7660 = vmatprep.subr.bf16.mxu0 0
        %7661 = vmatpush1.bf16.xpose.msra.mxu0 0
        %7662 = vmatprep.subr.bf16.mxu0 0
        %7663 = vmatpush1.bf16.xpose.msra.mxu0 0
        %7664 = vmatprep.subr.bf16.mxu0 0
        %7665 = vmatpush1.bf16.xpose.msra.mxu0 0
        %7666 = vmatprep.subr.bf16.mxu0 0
        %7667 = vmatpush1.bf16.xpose.msra.mxu0 0
        %7668 = vmatprep.subr.bf16.mxu0 0
        %7669 = vmatpush1.bf16.xpose.msra.mxu0 0
        %7670 = vmatprep.mubr.bf16.mxu0 0
        %7671 = vmatmul.mubr.bf16.gmra.mrb[0].mxu0 %v7609
        %v7672 = vpop.f32.mrb[0].mxu0
        %v7673 = vadd.f32 %v7596, %v7672
        %v7674 = vpop.f32.mrb[0].mxu0
        %v7675 = vpop.f32.mrb[0].mxu0
        %v7676 = vadd.f32 %v7596, %v7675
        %v7677 = vpop.f32.mrb[0].mxu0
        %7678 = vmatprep.mubr.bf16.mxu0 0
        %7679 = vmatmul.mubr.bf16.gmra.mrb[0].mxu0 %v7612
        %v7680 = vpop.f32.mrb[0].mxu0
        %v7681 = vadd.f32 %v7596, %v7680
        %v7682 = vpop.f32.mrb[0].mxu0
        %v7683 = vpop.f32.mrb[0].mxu0
        %v7684 = vadd.f32 %v7596, %v7683
        %v7685 = vpop.f32.mrb[0].mxu0
        %7686 = vmatprep.mubr.bf16.mxu0 0
        %7687 = vmatmul.mubr.bf16.gmra.mrb[0].mxu0 %v7615
        %v7688 = vpop.f32.mrb[0].mxu0
        %v7689 = vadd.f32 %v7596, %v7688
        %v7690 = vpop.f32.mrb[0].mxu0
        %v7691 = vpop.f32.mrb[0].mxu0
        %v7692 = vadd.f32 %v7596, %v7691
        %v7693 = vpop.f32.mrb[0].mxu0
        %7694 = vmatprep.mubr.bf16.mxu0 0
        %7695 = vmatmul.mubr.bf16.gmra.mrb[0].mxu0 %v7618
        %v7696 = vpop.f32.mrb[0].mxu0
        %v7697 = vadd.f32 %v7596, %v7696
        %v7698 = vpop.f32.mrb[0].mxu0
        %v7699 = vpop.f32.mrb[0].mxu0
        %v7700 = vadd.f32 %v7596, %v7699
        %v7701 = vpop.f32.mrb[0].mxu0
        %7702 = vmatprep.mubr.bf16.mxu0 0
        %7703 = vmatmul.mubr.bf16.gmra.mrb[0].mxu0 %v7621
        %v7704 = vpop.f32.mrb[0].mxu0
        %v7705 = vadd.f32 %v7596, %v7704
        %v7706 = vpop.f32.mrb[0].mxu0
        %v7707 = vpop.f32.mrb[0].mxu0
        %v7708 = vadd.f32 %v7596, %v7707
        %v7709 = vpop.f32.mrb[0].mxu0
        %7710 = vmatprep.mubr.bf16.mxu0 0
        %7711 = vmatmul.mubr.bf16.gmra.mrb[0].mxu0 %v7624
        %v7712 = vpop.f32.mrb[0].mxu0
        %v7713 = vadd.f32 %v7596, %v7712
        %v7714 = vpop.f32.mrb[0].mxu0
        %v7715 = vpop.f32.mrb[0].mxu0
        %v7716 = vadd.f32 %v7596, %v7715
        %v7717 = vpop.f32.mrb[0].mxu0
        %7718 = vmatprep.mubr.bf16.mxu0 0
        %7719 = vmatmul.mubr.bf16.gmra.mrb[0].mxu0 %v7627
        %v7720 = vpop.f32.mrb[0].mxu0
        %v7721 = vadd.f32 %v7596, %v7720
        %v7722 = vpop.f32.mrb[0].mxu0
        %v7723 = vpop.f32.mrb[0].mxu0
        %v7724 = vadd.f32 %v7596, %v7723
        %v7725 = vpop.f32.mrb[0].mxu0
        %7726 = vmatprep.mubr.bf16.mxu0 0
        %7727 = vmatmul.mubr.bf16.gmra.mrb[0].mxu0 %v7630
        %v7728 = vpop.f32.mrb[0].mxu0
        %v7729 = vadd.f32 %v7596, %v7728
        %v7730 = vpop.f32.mrb[0].mxu0
        %v7731 = vpop.f32.mrb[0].mxu0
        %v7732 = vadd.f32 %v7596, %v7731
        %v7733 = vpop.f32.mrb[0].mxu0
        %7734 = vdwg.mxu0
        %v7735 = vmul.f32 %v7673, 0.5
        %v7736 = vmul.f32 %v7676, 0.5
        %v7737 = vmul.f32 %v7681, 0.5
        %v7738 = vmul.f32 %v7684, 0.5
        %v7739 = vmul.f32 %v7689, 0.5
        %v7740 = vmul.f32 %v7692, 0.5
        %v7741 = vmul.f32 %v7697, 0.5
        %v7742 = vmul.f32 %v7700, 0.5
        %v7743 = vmul.f32 %v7705, 0.5
        %v7744 = vmul.f32 %v7708, 0.5
        %v7745 = vmul.f32 %v7713, 0.5
        %v7746 = vmul.f32 %v7716, 0.5
        %v7747 = vmul.f32 %v7721, 0.5
        %v7748 = vmul.f32 %v7724, 0.5
        %v7749 = vmul.f32 %v7729, 0.5
        %v7750 = vmul.f32 %v7732, 0.5
        %v7751 = vmul.f32 %v7673, 0.70710677
        %v7752 = vmul.f32 %v7676, 0.70710677
        %v7753 = vmul.f32 %v7681, 0.70710677
        %v7754 = vmul.f32 %v7684, 0.70710677
        %v7755 = vmul.f32 %v7689, 0.70710677
        %v7756 = vmul.f32 %v7692, 0.70710677
        %v7757 = vmul.f32 %v7697, 0.70710677
        %v7758 = vmul.f32 %v7700, 0.70710677
        %v7759 = vmul.f32 %v7705, 0.70710677
        %v7760 = vmul.f32 %v7708, 0.70710677
        %v7761 = vmul.f32 %v7713, 0.70710677
        %v7762 = vmul.f32 %v7716, 0.70710677
        %v7763 = vmul.f32 %v7721, 0.70710677
        %v7764 = vmul.f32 %v7724, 0.70710677
        %v7765 = vmul.f32 %v7729, 0.70710677
        %v7766 = vmul.f32 %v7732, 0.70710677
        %vm7767 = vcmp.ge.f32.partialorder %v7751, 0.0
        %vm7768 = vcmp.ge.f32.partialorder %v7752, 0.0
        %vm7769 = vcmp.ge.f32.partialorder %v7753, 0.0
        %vm7770 = vcmp.ge.f32.partialorder %v7754, 0.0
        %vm7771 = vcmp.ge.f32.partialorder %v7755, 0.0
        %vm7772 = vcmp.ge.f32.partialorder %v7756, 0.0
        %vm7773 = vcmp.ge.f32.partialorder %v7757, 0.0
        %vm7774 = vcmp.ge.f32.partialorder %v7758, 0.0
        %vm7775 = vcmp.ge.f32.partialorder %v7759, 0.0
        %vm7776 = vcmp.ge.f32.partialorder %v7760, 0.0
        %vm7777 = vcmp.ge.f32.partialorder %v7761, 0.0
        %vm7778 = vcmp.ge.f32.partialorder %v7762, 0.0
        %vm7779 = vcmp.ge.f32.partialorder %v7763, 0.0
        %vm7780 = vcmp.ge.f32.partialorder %v7764, 0.0
        %vm7781 = vcmp.ge.f32.partialorder %v7765, 0.0
        %vm7782 = vcmp.ge.f32.partialorder %v7766, 0.0
        %v7783 = vsel %vm7767, 1.0, -1.0
        %v7784 = vsel %vm7768, 1.0, -1.0
        %v7785 = vsel %vm7769, 1.0, -1.0
        %v7786 = vsel %vm7770, 1.0, -1.0
        %v7787 = vsel %vm7771, 1.0, -1.0
        %v7788 = vsel %vm7772, 1.0, -1.0
        %v7789 = vsel %vm7773, 1.0, -1.0
        %v7790 = vsel %vm7774, 1.0, -1.0
        %v7791 = vsel %vm7775, 1.0, -1.0
        %v7792 = vsel %vm7776, 1.0, -1.0
        %v7793 = vsel %vm7777, 1.0, -1.0
        %v7794 = vsel %vm7778, 1.0, -1.0
        %v7795 = vsel %vm7779, 1.0, -1.0
        %v7796 = vsel %vm7780, 1.0, -1.0
        %v7797 = vsel %vm7781, 1.0, -1.0
        %v7798 = vsel %vm7782, 1.0, -1.0
        %v7799 = vand.u32 2147483647, %v7751
        %v7800 = vand.u32 2147483647, %v7752
        %v7801 = vand.u32 2147483647, %v7753
        %v7802 = vand.u32 2147483647, %v7754
        %v7803 = vand.u32 2147483647, %v7755
        %v7804 = vand.u32 2147483647, %v7756
        %v7805 = vand.u32 2147483647, %v7757
        %v7806 = vand.u32 2147483647, %v7758
        %v7807 = vand.u32 2147483647, %v7759
        %v7808 = vand.u32 2147483647, %v7760
        %v7809 = vand.u32 2147483647, %v7761
        %v7810 = vand.u32 2147483647, %v7762
        %v7811 = vand.u32 2147483647, %v7763
        %v7812 = vand.u32 2147483647, %v7764
        %v7813 = vand.u32 2147483647, %v7765
        %v7814 = vand.u32 2147483647, %v7766
        %v7815 = vmul.f32 %v7799, 0.3275911
        %v7816 = vmul.f32 %v7800, 0.3275911
        %v7817 = vmul.f32 %v7801, 0.3275911
        %v7818 = vmul.f32 %v7802, 0.3275911
        %v7819 = vmul.f32 %v7803, 0.3275911
        %v7820 = vmul.f32 %v7804, 0.3275911
        %v7821 = vmul.f32 %v7805, 0.3275911
        %v7822 = vmul.f32 %v7806, 0.3275911
        %v7823 = vmul.f32 %v7807, 0.3275911
        %v7824 = vmul.f32 %v7808, 0.3275911
        %v7825 = vmul.f32 %v7809, 0.3275911
        %v7826 = vmul.f32 %v7810, 0.3275911
        %v7827 = vmul.f32 %v7811, 0.3275911
        %v7828 = vmul.f32 %v7812, 0.3275911
        %v7829 = vmul.f32 %v7813, 0.3275911
        %v7830 = vmul.f32 %v7814, 0.3275911
        %v7831 = vadd.f32 %v7815, 1.0
        %v7832 = vadd.f32 %v7816, 1.0
        %v7833 = vadd.f32 %v7817, 1.0
        %v7834 = vadd.f32 %v7818, 1.0
        %v7835 = vadd.f32 %v7819, 1.0
        %v7836 = vadd.f32 %v7820, 1.0
        %v7837 = vadd.f32 %v7821, 1.0
        %v7838 = vadd.f32 %v7822, 1.0
        %v7839 = vadd.f32 %v7823, 1.0
        %v7840 = vadd.f32 %v7824, 1.0
        %v7841 = vadd.f32 %v7825, 1.0
        %v7842 = vadd.f32 %v7826, 1.0
        %v7843 = vadd.f32 %v7827, 1.0
        %v7844 = vadd.f32 %v7828, 1.0
        %v7845 = vadd.f32 %v7829, 1.0
        %v7846 = vadd.f32 %v7830, 1.0
        %v7847 = vrcp.pop %v7831
        %v7848 = vmul.f32 1.0, %v7847
        %v7849 = vrcp.pop %v7832
        %v7850 = vmul.f32 1.0, %v7849
        %v7851 = vrcp.pop %v7833
        %v7852 = vmul.f32 1.0, %v7851
        %v7853 = vrcp.pop %v7834
        %v7854 = vmul.f32 1.0, %v7853
        %v7855 = vrcp.pop %v7835
        %v7856 = vmul.f32 1.0, %v7855
        %v7857 = vrcp.pop %v7836
        %v7858 = vmul.f32 1.0, %v7857
        %v7859 = vrcp.pop %v7837
        %v7860 = vmul.f32 1.0, %v7859
        %v7861 = vrcp.pop %v7838
        %v7862 = vmul.f32 1.0, %v7861
        %v7863 = vrcp.pop %v7839
        %v7864 = vmul.f32 1.0, %v7863
        %v7865 = vrcp.pop %v7840
        %v7866 = vmul.f32 1.0, %v7865
        %v7867 = vrcp.pop %v7841
        %v7868 = vmul.f32 1.0, %v7867
        %v7869 = vrcp.pop %v7842
        %v7870 = vmul.f32 1.0, %v7869
        %v7871 = vrcp.pop %v7843
        %v7872 = vmul.f32 1.0, %v7871
        %v7873 = vrcp.pop %v7844
        %v7874 = vmul.f32 1.0, %v7873
        %v7875 = vrcp.pop %v7845
        %v7876 = vmul.f32 1.0, %v7875
        %v7877 = vrcp.pop %v7846
        %v7878 = vmul.f32 1.0, %v7877
        %v7879 = vmul.f32 %v7848, 1.0614054
        %v7880 = vmul.f32 %v7850, 1.0614054
        %v7881 = vmul.f32 %v7852, 1.0614054
        %v7882 = vmul.f32 %v7854, 1.0614054
        %v7883 = vmul.f32 %v7856, 1.0614054
        %v7884 = vmul.f32 %v7858, 1.0614054
        %v7885 = vmul.f32 %v7860, 1.0614054
        %v7886 = vmul.f32 %v7862, 1.0614054
        %v7887 = vmul.f32 %v7864, 1.0614054
        %v7888 = vmul.f32 %v7866, 1.0614054
        %v7889 = vmul.f32 %v7868, 1.0614054
        %v7890 = vmul.f32 %v7870, 1.0614054
        %v7891 = vmul.f32 %v7872, 1.0614054
        %v7892 = vmul.f32 %v7874, 1.0614054
        %v7893 = vmul.f32 %v7876, 1.0614054
        %v7894 = vmul.f32 %v7878, 1.0614054
        %v7895 = vadd.f32 %v7879, -1.4531521
        %v7896 = vadd.f32 %v7880, -1.4531521
        %v7897 = vadd.f32 %v7881, -1.4531521
        %v7898 = vadd.f32 %v7882, -1.4531521
        %v7899 = vadd.f32 %v7883, -1.4531521
        %v7900 = vadd.f32 %v7884, -1.4531521
        %v7901 = vadd.f32 %v7885, -1.4531521
        %v7902 = vadd.f32 %v7886, -1.4531521
        %v7903 = vadd.f32 %v7887, -1.4531521
        %v7904 = vadd.f32 %v7888, -1.4531521
        %v7905 = vadd.f32 %v7889, -1.4531521
        %v7906 = vadd.f32 %v7890, -1.4531521
        %v7907 = vadd.f32 %v7891, -1.4531521
        %v7908 = vadd.f32 %v7892, -1.4531521
        %v7909 = vadd.f32 %v7893, -1.4531521
        %v7910 = vadd.f32 %v7894, -1.4531521
        %v7911 = vmul.f32 %v7895, %v7848
        %v7912 = vmul.f32 %v7896, %v7850
        %v7913 = vmul.f32 %v7897, %v7852
        %v7914 = vmul.f32 %v7898, %v7854
        %v7915 = vmul.f32 %v7899, %v7856
        %v7916 = vmul.f32 %v7900, %v7858
        %v7917 = vmul.f32 %v7901, %v7860
        %v7918 = vmul.f32 %v7902, %v7862
        %v7919 = vmul.f32 %v7903, %v7864
        %v7920 = vmul.f32 %v7904, %v7866
        %v7921 = vmul.f32 %v7905, %v7868
        %v7922 = vmul.f32 %v7906, %v7870
        %v7923 = vmul.f32 %v7907, %v7872
        %v7924 = vmul.f32 %v7908, %v7874
        %v7925 = vmul.f32 %v7909, %v7876
        %v7926 = vmul.f32 %v7910, %v7878
        %v7927 = vadd.f32 %v7911, 1.4214138
        %v7928 = vadd.f32 %v7912, 1.4214138
        %v7929 = vadd.f32 %v7913, 1.4214138
        %v7930 = vadd.f32 %v7914, 1.4214138
        %v7931 = vadd.f32 %v7915, 1.4214138
        %v7932 = vadd.f32 %v7916, 1.4214138
        %v7933 = vadd.f32 %v7917, 1.4214138
        %v7934 = vadd.f32 %v7918, 1.4214138
        %v7935 = vadd.f32 %v7919, 1.4214138
        %v7936 = vadd.f32 %v7920, 1.4214138
        %v7937 = vadd.f32 %v7921, 1.4214138
        %v7938 = vadd.f32 %v7922, 1.4214138
        %v7939 = vadd.f32 %v7923, 1.4214138
        %v7940 = vadd.f32 %v7924, 1.4214138
        %v7941 = vadd.f32 %v7925, 1.4214138
        %v7942 = vadd.f32 %v7926, 1.4214138
        %v7943 = vmul.f32 %v7927, %v7848
        %v7944 = vmul.f32 %v7928, %v7850
        %v7945 = vmul.f32 %v7929, %v7852
        %v7946 = vmul.f32 %v7930, %v7854
        %v7947 = vmul.f32 %v7931, %v7856
        %v7948 = vmul.f32 %v7932, %v7858
        %v7949 = vmul.f32 %v7933, %v7860
        %v7950 = vmul.f32 %v7934, %v7862
        %v7951 = vmul.f32 %v7935, %v7864
        %v7952 = vmul.f32 %v7936, %v7866
        %v7953 = vmul.f32 %v7937, %v7868
        %v7954 = vmul.f32 %v7938, %v7870
        %v7955 = vmul.f32 %v7939, %v7872
        %v7956 = vmul.f32 %v7940, %v7874
        %v7957 = vmul.f32 %v7941, %v7876
        %v7958 = vmul.f32 %v7942, %v7878
        %v7959 = vadd.f32 %v7943, -0.28449672
        %v7960 = vadd.f32 %v7944, -0.28449672
        %v7961 = vadd.f32 %v7945, -0.28449672
        %v7962 = vadd.f32 %v7946, -0.28449672
        %v7963 = vadd.f32 %v7947, -0.28449672
        %v7964 = vadd.f32 %v7948, -0.28449672
        %v7965 = vadd.f32 %v7949, -0.28449672
        %v7966 = vadd.f32 %v7950, -0.28449672
        %v7967 = vadd.f32 %v7951, -0.28449672
        %v7968 = vadd.f32 %v7952, -0.28449672
        %v7969 = vadd.f32 %v7953, -0.28449672
        %v7970 = vadd.f32 %v7954, -0.28449672
        %v7971 = vadd.f32 %v7955, -0.28449672
        %v7972 = vadd.f32 %v7956, -0.28449672
        %v7973 = vadd.f32 %v7957, -0.28449672
        %v7974 = vadd.f32 %v7958, -0.28449672
        %v7975 = vmul.f32 %v7959, %v7848
        %v7976 = vmul.f32 %v7960, %v7850
        %v7977 = vmul.f32 %v7961, %v7852
        %v7978 = vmul.f32 %v7962, %v7854
        %v7979 = vmul.f32 %v7963, %v7856
        %v7980 = vmul.f32 %v7964, %v7858
        %v7981 = vmul.f32 %v7965, %v7860
        %v7982 = vmul.f32 %v7966, %v7862
        %v7983 = vmul.f32 %v7967, %v7864
        %v7984 = vmul.f32 %v7968, %v7866
        %v7985 = vmul.f32 %v7969, %v7868
        %v7986 = vmul.f32 %v7970, %v7870
        %v7987 = vmul.f32 %v7971, %v7872
        %v7988 = vmul.f32 %v7972, %v7874
        %v7989 = vmul.f32 %v7973, %v7876
        %v7990 = vmul.f32 %v7974, %v7878
        %v7991 = vadd.f32 %v7975, 0.2548296
        %v7992 = vadd.f32 %v7976, 0.2548296
        %v7993 = vadd.f32 %v7977, 0.2548296
        %v7994 = vadd.f32 %v7978, 0.2548296
        %v7995 = vadd.f32 %v7979, 0.2548296
        %v7996 = vadd.f32 %v7980, 0.2548296
        %v7997 = vadd.f32 %v7981, 0.2548296
        %v7998 = vadd.f32 %v7982, 0.2548296
        %v7999 = vadd.f32 %v7983, 0.2548296
        %v8000 = vadd.f32 %v7984, 0.2548296
        %v8001 = vadd.f32 %v7985, 0.2548296
        %v8002 = vadd.f32 %v7986, 0.2548296
        %v8003 = vadd.f32 %v7987, 0.2548296
        %v8004 = vadd.f32 %v7988, 0.2548296
        %v8005 = vadd.f32 %v7989, 0.2548296
        %v8006 = vadd.f32 %v7990, 0.2548296
        %v8007 = vmul.f32 %v7991, %v7848
        %v8008 = vmul.f32 %v7992, %v7850
        %v8009 = vmul.f32 %v7993, %v7852
        %v8010 = vmul.f32 %v7994, %v7854
        %v8011 = vmul.f32 %v7995, %v7856
        %v8012 = vmul.f32 %v7996, %v7858
        %v8013 = vmul.f32 %v7997, %v7860
        %v8014 = vmul.f32 %v7998, %v7862
        %v8015 = vmul.f32 %v7999, %v7864
        %v8016 = vmul.f32 %v8000, %v7866
        %v8017 = vmul.f32 %v8001, %v7868
        %v8018 = vmul.f32 %v8002, %v7870
        %v8019 = vmul.f32 %v8003, %v7872
        %v8020 = vmul.f32 %v8004, %v7874
        %v8021 = vmul.f32 %v8005, %v7876
        %v8022 = vmul.f32 %v8006, %v7878
        %v8023 = vsub.f32 0.0, %v7799
        %v8024 = vsub.f32 0.0, %v7800
        %v8025 = vsub.f32 0.0, %v7801
        %v8026 = vsub.f32 0.0, %v7802
        %v8027 = vsub.f32 0.0, %v7803
        %v8028 = vsub.f32 0.0, %v7804
        %v8029 = vsub.f32 0.0, %v7805
        %v8030 = vsub.f32 0.0, %v7806
        %v8031 = vsub.f32 0.0, %v7807
        %v8032 = vsub.f32 0.0, %v7808
        %v8033 = vsub.f32 0.0, %v7809
        %v8034 = vsub.f32 0.0, %v7810
        %v8035 = vsub.f32 0.0, %v7811
        %v8036 = vsub.f32 0.0, %v7812
        %v8037 = vsub.f32 0.0, %v7813
        %v8038 = vsub.f32 0.0, %v7814
        %v8039 = vmul.f32 %v8023, %v7799
        %v8040 = vmul.f32 %v8024, %v7800
        %v8041 = vmul.f32 %v8025, %v7801
        %v8042 = vmul.f32 %v8026, %v7802
        %v8043 = vmul.f32 %v8027, %v7803
        %v8044 = vmul.f32 %v8028, %v7804
        %v8045 = vmul.f32 %v8029, %v7805
        %v8046 = vmul.f32 %v8030, %v7806
        %v8047 = vmul.f32 %v8031, %v7807
        %v8048 = vmul.f32 %v8032, %v7808
        %v8049 = vmul.f32 %v8033, %v7809
        %v8050 = vmul.f32 %v8034, %v7810
        %v8051 = vmul.f32 %v8035, %v7811
        %v8052 = vmul.f32 %v8036, %v7812
        %v8053 = vmul.f32 %v8037, %v7813
        %v8054 = vmul.f32 %v8038, %v7814
        %v8055 = vmul.f32 %v8039, 1.442695
        %v8056 = vpow.pop %v8055
        %v8057 = vmul.f32 %v8040, 1.442695
        %v8058 = vpow.pop %v8057
        %v8059 = vmul.f32 %v8041, 1.442695
        %v8060 = vpow.pop %v8059
        %v8061 = vmul.f32 %v8042, 1.442695
        %v8062 = vpow.pop %v8061
        %v8063 = vmul.f32 %v8043, 1.442695
        %v8064 = vpow.pop %v8063
        %v8065 = vmul.f32 %v8044, 1.442695
        %v8066 = vpow.pop %v8065
        %v8067 = vmul.f32 %v8045, 1.442695
        %v8068 = vpow.pop %v8067
        %v8069 = vmul.f32 %v8046, 1.442695
        %v8070 = vpow.pop %v8069
        %v8071 = vmul.f32 %v8047, 1.442695
        %v8072 = vpow.pop %v8071
        %v8073 = vmul.f32 %v8048, 1.442695
        %v8074 = vpow.pop %v8073
        %v8075 = vmul.f32 %v8049, 1.442695
        %v8076 = vpow.pop %v8075
        %v8077 = vmul.f32 %v8050, 1.442695
        %v8078 = vpow.pop %v8077
        %v8079 = vmul.f32 %v8051, 1.442695
        %v8080 = vpow.pop %v8079
        %v8081 = vmul.f32 %v8052, 1.442695
        %v8082 = vpow.pop %v8081
        %v8083 = vmul.f32 %v8053, 1.442695
        %v8084 = vpow.pop %v8083
        %v8085 = vmul.f32 %v8054, 1.442695
        %v8086 = vpow.pop %v8085
        %v8087 = vmul.f32 %v8007, %v8056
        %v8088 = vmul.f32 %v8008, %v8058
        %v8089 = vmul.f32 %v8009, %v8060
        %v8090 = vmul.f32 %v8010, %v8062
        %v8091 = vmul.f32 %v8011, %v8064
        %v8092 = vmul.f32 %v8012, %v8066
        %v8093 = vmul.f32 %v8013, %v8068
        %v8094 = vmul.f32 %v8014, %v8070
        %v8095 = vmul.f32 %v8015, %v8072
        %v8096 = vmul.f32 %v8016, %v8074
        %v8097 = vmul.f32 %v8017, %v8076
        %v8098 = vmul.f32 %v8018, %v8078
        %v8099 = vmul.f32 %v8019, %v8080
        %v8100 = vmul.f32 %v8020, %v8082
        %v8101 = vmul.f32 %v8021, %v8084
        %v8102 = vmul.f32 %v8022, %v8086
        %v8103 = vsub.f32 1.0, %v8087
        %v8104 = vsub.f32 1.0, %v8088
        %v8105 = vsub.f32 1.0, %v8089
        %v8106 = vsub.f32 1.0, %v8090
        %v8107 = vsub.f32 1.0, %v8091
        %v8108 = vsub.f32 1.0, %v8092
        %v8109 = vsub.f32 1.0, %v8093
        %v8110 = vsub.f32 1.0, %v8094
        %v8111 = vsub.f32 1.0, %v8095
        %v8112 = vsub.f32 1.0, %v8096
        %v8113 = vsub.f32 1.0, %v8097
        %v8114 = vsub.f32 1.0, %v8098
        %v8115 = vsub.f32 1.0, %v8099
        %v8116 = vsub.f32 1.0, %v8100
        %v8117 = vsub.f32 1.0, %v8101
        %v8118 = vsub.f32 1.0, %v8102
        %v8119 = vmul.f32 %v7783, %v8103
        %v8120 = vmul.f32 %v7784, %v8104
        %v8121 = vmul.f32 %v7785, %v8105
        %v8122 = vmul.f32 %v7786, %v8106
        %v8123 = vmul.f32 %v7787, %v8107
        %v8124 = vmul.f32 %v7788, %v8108
        %v8125 = vmul.f32 %v7789, %v8109
        %v8126 = vmul.f32 %v7790, %v8110
        %v8127 = vmul.f32 %v7791, %v8111
        %v8128 = vmul.f32 %v7792, %v8112
        %v8129 = vmul.f32 %v7793, %v8113
        %v8130 = vmul.f32 %v7794, %v8114
        %v8131 = vmul.f32 %v7795, %v8115
        %v8132 = vmul.f32 %v7796, %v8116
        %v8133 = vmul.f32 %v7797, %v8117
        %v8134 = vmul.f32 %v7798, %v8118
        %v8135 = vadd.f32 %v8119, 1.0
        %v8136 = vadd.f32 %v8120, 1.0
        %v8137 = vadd.f32 %v8121, 1.0
        %v8138 = vadd.f32 %v8122, 1.0
        %v8139 = vadd.f32 %v8123, 1.0
        %v8140 = vadd.f32 %v8124, 1.0
        %v8141 = vadd.f32 %v8125, 1.0
        %v8142 = vadd.f32 %v8126, 1.0
        %v8143 = vadd.f32 %v8127, 1.0
        %v8144 = vadd.f32 %v8128, 1.0
        %v8145 = vadd.f32 %v8129, 1.0
        %v8146 = vadd.f32 %v8130, 1.0
        %v8147 = vadd.f32 %v8131, 1.0
        %v8148 = vadd.f32 %v8132, 1.0
        %v8149 = vadd.f32 %v8133, 1.0
        %v8150 = vadd.f32 %v8134, 1.0
        %v8151 = vmul.f32 %v7735, %v8135
        %v8152 = vmul.f32 %v7736, %v8136
        %v8153 = vmul.f32 %v7737, %v8137
        %v8154 = vmul.f32 %v7738, %v8138
        %v8155 = vmul.f32 %v7739, %v8139
        %v8156 = vmul.f32 %v7740, %v8140
        %v8157 = vmul.f32 %v7741, %v8141
        %v8158 = vmul.f32 %v7742, %v8142
        %v8159 = vmul.f32 %v7743, %v8143
        %v8160 = vmul.f32 %v7744, %v8144
        %v8161 = vmul.f32 %v7745, %v8145
        %v8162 = vmul.f32 %v7746, %v8146
        %v8163 = vmul.f32 %v7747, %v8147
        %v8164 = vmul.f32 %v7748, %v8148
        %v8165 = vmul.f32 %v7749, %v8149
        %v8166 = vmul.f32 %v7750, %v8150
        %v8167 = vld [vmem:[%s16] sm:$0xf]
        %v8168 = vld [vmem:[%s16 + $0x4] sm:$0xf]
        %v8169 = vld [vmem:[%s16 + $0x8] sm:$0xf]
        %v8170 = vld [vmem:[%s16 + $0xc] sm:$0xf]
        %v8171 = vpack.c.bf16 %v8152, %v8151
        %v8172 = vpack.c.bf16 %v8154, %v8153
        %v8173 = vpack.c.bf16 %v8156, %v8155
        %v8174 = vpack.c.bf16 %v8158, %v8157
        %v8175 = vpack.c.bf16 %v8160, %v8159
        %v8176 = vpack.c.bf16 %v8162, %v8161
        %v8177 = vpack.c.bf16 %v8164, %v8163
        %v8178 = vpack.c.bf16 %v8166, %v8165
        %v8179 = vld [vmem:[%s17] sm:$0x1]
        %v8181 = vlaneseq
        %v8182 = vshrl.u32 %v8181, 7
        %v8183 = vsub.s32 0, %v8182
        %v8184 = vrot.slane %v8179, %v8183
        %v8190 = vunpack.c.l.b16 %v8167
        %v8191 = vunpack.c.l.b16 %v8168
        %v8192 = vunpack.c.l.b16 %v8169
        %v8193 = vunpack.c.l.b16 %v8170
        %v8194 = vpack.c.b16 %v8191, %v8190
        %v8195 = vpack.c.b16 %v8193, %v8192
        %v8197 = vsel %vm4495, %v8171, 0
        %v8200 = vsel %vm4495, %v8172, 0
        %v8203 = vsel %vm4495, %v8173, 0
        %v8206 = vsel %vm4495, %v8174, 0
        %v8209 = vsel %vm4495, %v8175, 0
        %v8212 = vsel %vm4495, %v8176, 0
        %v8215 = vsel %vm4495, %v8177, 0
        %v8218 = vsel %vm4495, %v8178, 0
        %v8221 = vsel %vm4495, %v8194, 0
        %v8224 = vsel %vm4495, %v8195, 0
        %8226 = vmatprep.subr.bf16.mxu0 0
        %8227 = vmatpush1.bf16.xpose.msra.mxu0 %v8221
        %8228 = vmatprep.subr.bf16.mxu0 0
        %8229 = vmatpush1.bf16.xpose.msra.mxu0 %v8224
        %8230 = vmatprep.subr.bf16.mxu0 0
        %8231 = vmatpush1.bf16.xpose.msra.mxu0 0
        %8232 = vmatprep.subr.bf16.mxu0 0
        %8233 = vmatpush1.bf16.xpose.msra.mxu0 0
        %8234 = vmatprep.subr.bf16.mxu0 0
        %8235 = vmatpush1.bf16.xpose.msra.mxu0 0
        %8236 = vmatprep.subr.bf16.mxu0 0
        %8237 = vmatpush1.bf16.xpose.msra.mxu0 0
        %8238 = vmatprep.subr.bf16.mxu0 0
        %8239 = vmatpush1.bf16.xpose.msra.mxu0 0
        %8240 = vmatprep.subr.bf16.mxu0 0
        %8241 = vmatpush1.bf16.xpose.msra.mxu0 0
        %8242 = vmatprep.subr.bf16.mxu0 0
        %8243 = vmatpush1.bf16.xpose.msra.mxu0 0
        %8244 = vmatprep.subr.bf16.mxu0 0
        %8245 = vmatpush1.bf16.xpose.msra.mxu0 0
        %8246 = vmatprep.subr.bf16.mxu0 0
        %8247 = vmatpush1.bf16.xpose.msra.mxu0 0
        %8248 = vmatprep.subr.bf16.mxu0 0
        %8249 = vmatpush1.bf16.xpose.msra.mxu0 0
        %8250 = vmatprep.subr.bf16.mxu0 0
        %8251 = vmatpush1.bf16.xpose.msra.mxu0 0
        %8252 = vmatprep.subr.bf16.mxu0 0
        %8253 = vmatpush1.bf16.xpose.msra.mxu0 0
        %8254 = vmatprep.subr.bf16.mxu0 0
        %8255 = vmatpush1.bf16.xpose.msra.mxu0 0
        %8256 = vmatprep.subr.bf16.mxu0 0
        %8257 = vmatpush1.bf16.xpose.msra.mxu0 0
        %8258 = vmatprep.mubr.bf16.mxu0 0
        %8259 = vmatmul.mubr.bf16.gmra.mrb[0].mxu0 %v8197
        %v8260 = vpop.f32.mrb[0].mxu0
        %v8261 = vadd.f32 %v8184, %v8260
        %v8262 = vpop.f32.mrb[0].mxu0
        %v8263 = vpop.f32.mrb[0].mxu0
        %v8264 = vadd.f32 %v8184, %v8263
        %v8265 = vpop.f32.mrb[0].mxu0
        %8266 = vmatprep.mubr.bf16.mxu0 0
        %8267 = vmatmul.mubr.bf16.gmra.mrb[0].mxu0 %v8200
        %v8268 = vpop.f32.mrb[0].mxu0
        %v8269 = vadd.f32 %v8184, %v8268
        %v8270 = vpop.f32.mrb[0].mxu0
        %v8271 = vpop.f32.mrb[0].mxu0
        %v8272 = vadd.f32 %v8184, %v8271
        %v8273 = vpop.f32.mrb[0].mxu0
        %8274 = vmatprep.mubr.bf16.mxu0 0
        %8275 = vmatmul.mubr.bf16.gmra.mrb[0].mxu0 %v8203
        %v8276 = vpop.f32.mrb[0].mxu0
        %v8277 = vadd.f32 %v8184, %v8276
        %v8278 = vpop.f32.mrb[0].mxu0
        %v8279 = vpop.f32.mrb[0].mxu0
        %v8280 = vadd.f32 %v8184, %v8279
        %v8281 = vpop.f32.mrb[0].mxu0
        %8282 = vmatprep.mubr.bf16.mxu0 0
        %8283 = vmatmul.mubr.bf16.gmra.mrb[0].mxu0 %v8206
        %v8284 = vpop.f32.mrb[0].mxu0
        %v8285 = vadd.f32 %v8184, %v8284
        %v8286 = vpop.f32.mrb[0].mxu0
        %v8287 = vpop.f32.mrb[0].mxu0
        %v8288 = vadd.f32 %v8184, %v8287
        %v8289 = vpop.f32.mrb[0].mxu0
        %8290 = vmatprep.mubr.bf16.mxu0 0
        %8291 = vmatmul.mubr.bf16.gmra.mrb[0].mxu0 %v8209
        %v8292 = vpop.f32.mrb[0].mxu0
        %v8293 = vadd.f32 %v8184, %v8292
        %v8294 = vpop.f32.mrb[0].mxu0
        %v8295 = vpop.f32.mrb[0].mxu0
        %v8296 = vadd.f32 %v8184, %v8295
        %v8297 = vpop.f32.mrb[0].mxu0
        %8298 = vmatprep.mubr.bf16.mxu0 0
        %8299 = vmatmul.mubr.bf16.gmra.mrb[0].mxu0 %v8212
        %v8300 = vpop.f32.mrb[0].mxu0
        %v8301 = vadd.f32 %v8184, %v8300
        %v8302 = vpop.f32.mrb[0].mxu0
        %v8303 = vpop.f32.mrb[0].mxu0
        %v8304 = vadd.f32 %v8184, %v8303
        %v8305 = vpop.f32.mrb[0].mxu0
        %8306 = vmatprep.mubr.bf16.mxu0 0
        %8307 = vmatmul.mubr.bf16.gmra.mrb[0].mxu0 %v8215
        %v8308 = vpop.f32.mrb[0].mxu0
        %v8309 = vadd.f32 %v8184, %v8308
        %v8310 = vpop.f32.mrb[0].mxu0
        %v8311 = vpop.f32.mrb[0].mxu0
        %v8312 = vadd.f32 %v8184, %v8311
        %v8313 = vpop.f32.mrb[0].mxu0
        %8314 = vmatprep.mubr.bf16.mxu0 0
        %8315 = vmatmul.mubr.bf16.gmra.mrb[0].mxu0 %v8218
        %v8316 = vpop.f32.mrb[0].mxu0
        %v8317 = vadd.f32 %v8184, %v8316
        %v8318 = vpop.f32.mrb[0].mxu0
        %v8319 = vpop.f32.mrb[0].mxu0
        %v8320 = vadd.f32 %v8184, %v8319
        %v8321 = vpop.f32.mrb[0].mxu0
        %8322 = vdwg.mxu0
        %v8323 = vadd.f32 %v7309, %v8261
        %v8324 = vadd.f32 %v7310, %v8264
        %v8325 = vadd.f32 %v7311, %v8269
        %v8326 = vadd.f32 %v7312, %v8272
        %v8327 = vadd.f32 %v7313, %v8277
        %v8328 = vadd.f32 %v7314, %v8280
        %v8329 = vadd.f32 %v7315, %v8285
        %v8330 = vadd.f32 %v7316, %v8288
        %v8331 = vadd.f32 %v7317, %v8293
        %v8332 = vadd.f32 %v7318, %v8296
        %v8333 = vadd.f32 %v7319, %v8301
        %v8334 = vadd.f32 %v7320, %v8304
        %v8335 = vadd.f32 %v7321, %v8309
        %v8336 = vadd.f32 %v7322, %v8312
        %v8337 = vadd.f32 %v7323, %v8317
        %v8338 = vadd.f32 %v7324, %v8320
        %8339 = vmatprep.subr.mxu0 0.0
        %8340 = vmatpush1.msra.mxu0 %v8323
        %8341 = vmatprep.subr.mxu0 0.0
        %8342 = vmatpush1.msra.mxu0 %v8324
        %8343 = vmatprep.subr.mxu0 0.0
        %8344 = vmatpush1.msra.mxu0 %v8325
        %8345 = vmatprep.subr.mxu0 0.0
        %8346 = vmatpush1.msra.mxu0 %v8326
        %8347 = vmatprep.subr.mxu0 0.0
        %8348 = vmatpush1.msra.mxu0 %v8327
        %8349 = vmatprep.subr.mxu0 0.0
        %8350 = vmatpush1.msra.mxu0 %v8328
        %8351 = vmatprep.subr.mxu0 0.0
        %8352 = vmatpush1.msra.mxu0 %v8329
        %8353 = vmatprep.subr.mxu0 0.0
        %8354 = vmatpush1.msra.mxu0 %v8330
        %8355 = vmatprep.subr.mxu0 0.0
        %8356 = vmatpush1.msra.mxu0 %v8331
        %8357 = vmatprep.subr.mxu0 0.0
        %8358 = vmatpush1.msra.mxu0 %v8332
        %8359 = vmatprep.subr.mxu0 0.0
        %8360 = vmatpush1.msra.mxu0 %v8333
        %8361 = vmatprep.subr.mxu0 0.0
        %8362 = vmatpush1.msra.mxu0 %v8334
        %8363 = vmatprep.subr.mxu0 0.0
        %8364 = vmatpush1.msra.mxu0 %v8335
        %8365 = vmatprep.subr.mxu0 0.0
        %8366 = vmatpush1.msra.mxu0 %v8336
        %8367 = vmatprep.subr.mxu0 0.0
        %8368 = vmatpush1.msra.mxu0 %v8337
        %8369 = vmatprep.subr.mxu0 0.0
        %8370 = vmatpush1.msra.mxu0 %v8338
        %8371 = vmatprep.subr.mxu0 0.0
        %8372 = vmatpush1.msra.mxu0 0.0
        %8373 = vmatprep.subr.mxu0 0.0
        %8374 = vmatpush1.msra.mxu0 0.0
        %8375 = vmatprep.subr.mxu0 0.0
        %8376 = vmatpush1.msra.mxu0 0.0
        %8377 = vmatprep.subr.mxu0 0.0
        %8378 = vmatpush1.msra.mxu0 0.0
        %8379 = vmatprep.subr.mxu0 0.0
        %8380 = vmatpush1.msra.mxu0 0.0
        %8381 = vmatprep.subr.mxu0 0.0
        %8382 = vmatpush1.msra.mxu0 0.0
        %8383 = vmatprep.subr.mxu0 0.0
        %8384 = vmatpush1.msra.mxu0 0.0
        %8385 = vmatprep.subr.mxu0 0.0
        %8386 = vmatpush1.msra.mxu0 0.0
        %8387 = vmatprep.subr.mxu0 0.0
        %8388 = vmatpush1.msra.mxu0 0.0
        %8389 = vmatprep.subr.mxu0 0.0
        %8390 = vmatpush1.msra.mxu0 0.0
        %8391 = vmatprep.subr.mxu0 0.0
        %8392 = vmatpush1.msra.mxu0 0.0
        %8393 = vmatprep.subr.mxu0 0.0
        %8394 = vmatpush1.msra.mxu0 0.0
        %8395 = vmatprep.subr.mxu0 0.0
        %8396 = vmatpush1.msra.mxu0 0.0
        %8397 = vmatprep.subr.mxu0 0.0
        %8398 = vmatpush1.msra.mxu0 0.0
        %8399 = vmatprep.subr.mxu0 0.0
        %8400 = vmatpush1.msra.mxu0 0.0
        %8401 = vmatprep.subr.mxu0 0.0
        %8402 = vmatpush1.msra.mxu0 0.0
        %8403 = vmatprep.mubr.f32.mxu0 0.0
        %8404 = vmatmul.mubr.f32.gmra.mrb[0].mxu0 %v604
        %v8405 = vpop.f32.mrb[0].mxu0
        %v8406 = vadd.f32 0.0, %v8405
        %v8407 = vpop.f32.mrb[0].mxu0
        %8408 = vdwg.mxu0
        %vm8409 = vcmask 253952
        %8410 = vst.msk [vmem:[%s578] sm:$0x1] %vm8409, %v8406
        %s8411 = sand.u32 %s428, 1
        %s8412 = scalar_lea.sflag [#allocation4], %s8411
        %s8413 = sand.u32 %s428, 1
        %s8414 = scalar_lea.vmem [#allocation3], %s8413
        // Predicated region
        $region93: #{tpu_custom_call.1} parent=91 // pred_check
          %p8415 = pneg %p438
        $region94: #{tpu_custom_call.1} parent=91 // pred_check_branch
          %8417 = sbr.rel (%p8415) target = $region96
        $region95: #{tpu_custom_call.1} parent=91 // pred_region
          %s8419 = ssub.s32 16, 16
          %8420 = vsyncadd %s8412, %s8419
          %s8421 = smul.addr %s32, 16
          %s8422 = scalar_lea.hbm %s18, %s8421
          %s8424 = sshll.u32 %s8414, 4
          %s8425 = int_to_ptr.vmem [resolvable:$true] %s8424
          %8427 = dma.vmem_to_hbm [thread:$0]  %s8425, 16, %s8422, %s8412
        $region96: #{tpu_custom_call.1} parent=91 // pred_fallthru
          _
      $region92: #{tpu_custom_call.1} parent=5 // pred_fallthru
        _
      %p8428 = scmp.le.s32.totalorder 2, %s27
      // Predicated region
      $region97: #{tpu_custom_call.1} parent=5 // pred_check
        %p8429 = pneg %p8428
      $region98: #{tpu_custom_call.1} parent=5 // pred_check_branch
        %8431 = sbr.rel (%p8429) target = $region100
      $region99: #{tpu_custom_call.1} parent=5 // pred_region
        %s8432 = ssub.s32 %s27, 2
        // Predicated region
        $region101: #{tpu_custom_call.1} parent=99 // pred_check
          %p8433 = pneg %p444
        $region102: #{tpu_custom_call.1} parent=99 // pred_check_branch
          %8435 = sbr.rel (%p8433) target = $region104
        $region103: #{tpu_custom_call.1} parent=99 // pred_region
          %s8436 = sand.u32 %s429, 1
          %s8437 = scalar_lea.sflag [#allocation4], %s8436
          %s8438 = sand.u32 %s429, 1
          %s8439 = scalar_lea.vmem [#allocation3], %s8438
          %8440 = dma.done %s8437, 16
        $region104: #{tpu_custom_call.1} parent=99 // pred_fallthru
          _
      $region100: #{tpu_custom_call.1} parent=5 // pred_fallthru
        _
    $region6: #{tpu_custom_call.1} parent=1 // loop_footer
      %s31 = sadd.s32 1, %s27
    $region7: #{tpu_custom_call.1} parent=1 // loop_footer_branch
      %26 = sbr.rel target = $region3
    $region8: #{tpu_custom_call.1} parent=1 // loop_exit
      _
    %8441 = vsyncpa [#allocation4], 1
    %s8442 = scalar_lea.sflag [#allocation4], 1
    %8443 = vsyncpa %s8442, 1

</llo_original>
